<compile_context>
chip_gen: v7x
topology: tpu7x:2x2x1
jax: 0.10.0
libtpu: 0.0.40
codegen_flags: <defaults>
</compile_context>

<pallas_src>
import functools
import math

import jax
import jax.numpy as jnp
from jax import lax
from jax.experimental import pallas as pl
from jax.experimental.pallas import tpu as pltpu


def _round_up(x, m):
    return ((x + m - 1) // m) * m


def _largest_tile(extent, pref, align):
    """Largest t <= pref with t % align == 0 and extent % t == 0."""
    t = min(pref, extent)
    t -= t % align
    t = max(t, align)
    while extent % t:
        t -= align
    return t


def _vmem_capacity_bytes():
    try:
        cap = getattr(pltpu.get_tpu_info(), "vmem_capacity_bytes", None)
        if cap:
            return int(cap)
    except Exception:
        pass
    return 64 * 1024 * 1024     # conservative (v7x-sized) fallback


# --------------------- tiled graph matmul (LightGCN) -------------------------

def _matmul_kernel(a_ref, b_ref, o_ref, acc_ref):
    @pl.when(pl.program_id(2) == 0)
    def _init():
        acc_ref[...] = jnp.zeros_like(acc_ref)

    acc_ref[...] += jnp.dot(a_ref[...], b_ref[...],
                            preferred_element_type=jnp.float32)

    @pl.when(pl.program_id(2) == pl.num_programs(2) - 1)
    def _store():
        o_ref[...] = acc_ref[...].astype(o_ref.dtype)


def graph_matmul(a_p, b_p, *, tm, tk, tn, vmem_limit):
    """(Mp,Kp) @ (Kp,Np) on pre-padded, pre-cast operands.

    f32 accumulation in VMEM scratch; output stored in the operand dtype
    (bf16) so LightGCN embeddings stay bf16 between layers.
    """
    M, K = a_p.shape
    K2, N = b_p.shape
    assert K == K2 and M % tm == 0 and K % tk == 0 and N % tn == 0
    return pl.pallas_call(
        _matmul_kernel,
        grid=(M // tm, N // tn, K // tk),
        in_specs=[
            pl.BlockSpec((tm, tk), lambda i, j, k: (i, k)),
            pl.BlockSpec((tk, tn), lambda i, j, k: (k, j)),
        ],
        out_specs=pl.BlockSpec((tm, tn), lambda i, j, k: (i, j)),
        out_shape=jax.ShapeDtypeStruct((M, N), a_p.dtype),
        scratch_shapes=[pltpu.VMEM((tm, tn), jnp.float32)],
        compiler_params=pltpu.CompilerParams(
            dimension_semantics=("parallel", "parallel", "arbitrary"),
            vmem_limit_bytes=vmem_limit,
        ),
    )(a_p, b_p)


def _graph_plan(n_nodes, d):
    """Generation-aware tile plan for the (n,n)@(n,d) LightGCN matmul."""
    small_vmem = _vmem_capacity_bytes() <= 64 * 1024 * 1024   # v7x per-TC VMEM
    tm_pref = 1024 if small_vmem else 2048
    tk_pref = 512 if small_vmem else 1024
    vmem_limit = (48 if small_vmem else 96) * 1024 * 1024
    if n_nodes >= tm_pref:
        node_p = _round_up(n_nodes, tm_pref)       # tk_pref divides tm_pref
        tm, tk = tm_pref, tk_pref
    else:
        node_p = _round_up(n_nodes, 128)
        tm = node_p
        tk = _largest_tile(node_p, tk_pref, 128)
    d_p = _round_up(d, 128)
    tn = _largest_tile(d_p, 512, 128)
    return node_p, d_p, tm, tk, tn, vmem_limit


def computer(graph_p, emb0_p, n_layers, n_nodes, d, num_student, mm_kw):
    """LightGCN propagation on a pre-padded, pre-cast (bf16) adjacency."""
    embs = [emb0_p]                                   # layer-0 kept in f32
    emb = emb0_p.astype(graph_p.dtype)
    for _ in range(n_layers):
        emb = graph_matmul(graph_p, emb, **mm_kw)     # bf16 in/out, f32 acc
        embs.append(emb.astype(jnp.float32))
    light_out = jnp.mean(jnp.stack(embs, axis=1), axis=1)[:n_nodes, :d]
    return light_out[:num_student], light_out[num_student:]


# ------------------- fused transformer-layer kernel --------------------------

def _ln2d(x, g, b):
    mean = jnp.mean(x, axis=-1, keepdims=True)
    var = jnp.mean((x - mean) ** 2, axis=-1, keepdims=True)
    return (x - mean) * lax.rsqrt(var + 1e-5) * g + b


def _transformer_kernel(x_ref, dec_ref, kw_ref, kb_ref, vw_ref, vb_ref,
                        ow_ref, ob_ref, g1_ref, be1_ref, w1_ref, c1_ref,
                        w2_ref, c2_ref, g2_ref, be2_ref, y_ref, att_ref,
                        *, B, S, D, H, DK, S_VALID, scale):
    x = x_ref[...]                                                  # (B*S, D)

    # NOTE: the reference module uses k_linear for BOTH q and k projections.
    kq = jnp.dot(x, kw_ref[...], preferred_element_type=jnp.float32) + kb_ref[...]
    v = jnp.dot(x, vw_ref[...], preferred_element_type=jnp.float32) + vb_ref[...]
    kq3 = kq.reshape(B, S, D)
    v3 = v.reshape(B, S, D)

    # Batched heads: stack the H head slices along the batch axis (head-major)
    # so attention is two batched einsums instead of an unrolled per-head loop.
    q_bh = jnp.concatenate(
        [kq3[:, :, h * DK:(h + 1) * DK] for h in range(H)], axis=0)   # (H*B,S,DK)
    v_bh = jnp.concatenate(
        [v3[:, :, h * DK:(h + 1) * DK] for h in range(H)], axis=0)

    row = lax.broadcasted_iota(jnp.int32, (S, S), 0)   # query index
    col = lax.broadcasted_iota(jnp.int32, (S, S), 1)   # key index
    keep = (col <= row) & (col < S_VALID)              # causal + key validity

    s = jnp.einsum("bqd,bkd->bqk", q_bh, q_bh,
                   preferred_element_type=jnp.float32) * scale
    s = s * dec_ref[...]                               # precomputed decay (H*B,S,S)
    s = jnp.where(keep[None, :, :], s, -1e32)
    s = s - jnp.max(s, axis=-1, keepdims=True)
    p = jnp.exp(s)
    p = p / jnp.sum(p, axis=-1, keepdims=True)         # exact softmax (returned)
    att_ref[...] = p.reshape(H * B, S * S)             # lane-dense slab store

    o = jnp.einsum("bqk,bkd->bqd", p, v_bh,
                   preferred_element_type=jnp.float32)  # (H*B, S, DK)

    # output projection:  sum_h  head_h @ W_out[h*DK:(h+1)*DK, :]
    o_h = o.reshape(H, B * S, DK)
    w_h = ow_ref[...].reshape(H, DK, D)
    attn = jnp.sum(jnp.einsum("hnd,hdf->hnf", o_h, w_h,
                              preferred_element_type=jnp.float32), axis=0)
    attn = attn + ob_ref[...]

    # residual -> LN1 -> FFN -> residual -> LN2 (dropouts are identity in eval)
    h1 = _ln2d(x + attn, g1_ref[...], be1_ref[...])
    ff = jnp.dot(h1, w1_ref[...], preferred_element_type=jnp.float32) + c1_ref[...]
    ff = jnp.maximum(ff, 0.0)
    ff = jnp.dot(ff, w2_ref[...], preferred_element_type=jnp.float32) + c2_ref[...]
    y_ref[...] = _ln2d(h1 + ff, g2_ref[...], be2_ref[...])


def transformer_layer(x, p, cfg):
    # TODO(synk): add a batch grid axis before scaling B so v7x's two
    # TensorCores can split the work; at demo sizes a single block is cheaper.
    b, s1, d = x.shape
    h, dk = cfg["H"], cfg["d_k"]
    s1p = _round_up(s1, 16)                  # pad seq so in-kernel tiles align
    x_pad = jnp.pad(x, ((0, 0), (0, s1p - s1), (0, 0)))
    x2d = x_pad.reshape(b * s1p, d)

    # Decay exp(+|i-j|/21 * softplus(gamma_h)): torch negates softplus and then
    # negates position_effect again, so the effective sign is +, clipped [1e-5,1e5].
    idx = jnp.arange(s1p, dtype=jnp.float32)
    position_effect = jnp.abs(idx[None, :] - idx[:, None]) / 21.0
    gamma_sp = jax.nn.softplus(p["gammas"]).reshape(h, 1, 1)
    decay = jnp.clip(jnp.exp(position_effect[None, :, :] * gamma_sp), 1e-5, 1e5)
    decay_hb = jnp.repeat(decay, b, axis=0)              # (H*B, S, S), head-major

    dff = p["lin1_w"].shape[1]
    y2d, att_slab = pl.pallas_call(
        functools.partial(_transformer_kernel, B=b, S=s1p, D=d, H=h, DK=dk,
                          S_VALID=s1, scale=1.0 / math.sqrt(dk)),
        out_shape=[jax.ShapeDtypeStruct((b * s1p, d), jnp.float32),
                   jax.ShapeDtypeStruct((h * b, s1p * s1p), jnp.float32)],
    )(x2d, decay_hb,
      p["k_w"], p["k_b"].reshape(1, d), p["v_w"], p["v_b"].reshape(1, d),
      p["out_w"], p["out_b"].reshape(1, d),
      p["ln1_g"].reshape(1, d), p["ln1_b"].reshape(1, d),
      p["lin1_w"], p["lin1_b"].reshape(1, dff),
      p["lin2_w"], p["lin2_b"].reshape(1, d),
      p["ln2_g"].reshape(1, d), p["ln2_b"].reshape(1, d))

    y = y2d.reshape(b, s1p, d)[:, :s1, :]
    att = att_slab.reshape(h, b, s1p, s1p)               # head-major slab
    att_weight = jnp.transpose(att, (1, 0, 2, 3))[:, :, :s1, :s1]
    return y, att_weight


# -------------------------- fused MLP head kernel ----------------------------

def _mlp_head_kernel(x_ref, w1_ref, b1_ref, w2_ref, b2_ref, w3_ref, b3_ref,
                     w4_ref, b4_ref, o_ref):
    def leaky(t):                       # nn.LeakyReLU default slope 0.01
        return jnp.where(t >= 0, t, 0.01 * t)

    h = leaky(jnp.dot(x_ref[...], w1_ref[...],
                      preferred_element_type=jnp.float32) + b1_ref[...])
    h = leaky(jnp.dot(h, w2_ref[...],
                      preferred_element_type=jnp.float32) + b2_ref[...])
    h = leaky(jnp.dot(h, w3_ref[...],
                      preferred_element_type=jnp.float32) + b3_ref[...])
    # last (256 -> 1) layer as a lane reduction instead of a (m,1) MXU matmul
    logits = jnp.sum(h * w4_ref[...], axis=-1, keepdims=True) + b4_ref[...]
    prob = 1.0 / (1.0 + jnp.exp(-logits))               # fused sigmoid
    o_ref[...] = prob.reshape(1, prob.shape[0])         # lane-dense (1, m) store


def mlp_head(features, p):
    m = features.shape[0]
    out = pl.pallas_call(
        _mlp_head_kernel,
        out_shape=jax.ShapeDtypeStruct((1, m), jnp.float32),
    )(features,
      p["mlp_w1"], p["mlp_b1"].reshape(1, -1),
      p["mlp_w2"], p["mlp_b2"].reshape(1, -1),
      p["mlp_w3"], p["mlp_b3"].reshape(1, -1),
      p["mlp_w4"].reshape(1, -1), p["mlp_b4"].reshape(1, 1))
    return out.reshape(m, 1)


# ----------------------------- model pieces ---------------------------------

def barlow_twins_loss(z1, z2, lambd=5e-3):
    # TODO(synk): BarlowTwinsLoss class definition was not provided in the
    # source module; implementing the standard Barlow Twins cross-correlation.
    eps = 1e-5
    z1n = (z1 - jnp.mean(z1, axis=0)) / (jnp.std(z1, axis=0, ddof=1) + eps)
    z2n = (z2 - jnp.mean(z2, axis=0)) / (jnp.std(z2, axis=0, ddof=1) + eps)
    n = z1.shape[0]
    # tiny GEMM: plain einsum (no Pallas launch / tile padding, no z1n.T copy)
    c = jnp.einsum("nd,ne->de", z1n, z2n) / n
    diag = jnp.diagonal(c)
    on_diag = jnp.sum((diag - 1.0) ** 2)
    off_diag = jnp.sum(c * c) - jnp.sum(diag * diag)
    return on_diag + lambd * off_diag


def clgadn_forward(params, graph1, graph2, student, courses, category,
                   candidate, candidate_cate, cfg):
    num_student, n_layers = cfg["num_student"], cfg["n_layers"]
    b, s = courses.shape
    d = cfg["D"]

    # ---- getEmbedding: LightGCN on both graphs + contrastive loss ----
    all_emb0 = jnp.concatenate([params["stu_emb"], params["course_emb"]], axis=0)
    n_nodes = all_emb0.shape[0]
    node_p, d_p, tm, tk, tn, vmem_limit = _graph_plan(n_nodes, d)
    mm_kw = dict(tm=tm, tk=tk, tn=tn, vmem_limit=vmem_limit)

    # pad + bf16-cast the graphs ONCE (hoisted out of the per-layer loop)
    pad_n = node_p - n_nodes
    g1_p = jnp.pad(graph1.astype(jnp.bfloat16), ((0, pad_n), (0, pad_n)))
    g2_p = jnp.pad(graph2.astype(jnp.bfloat16), ((0, pad_n), (0, pad_n)))
    emb0_p = jnp.pad(all_emb0, ((0, pad_n), (0, d_p - d)))

    users1, items1 = computer(g1_p, emb0_p, n_layers, n_nodes, d, num_student, mm_kw)
    users2, items2 = computer(g2_p, emb0_p, n_layers, n_nodes, d, num_student, mm_kw)
    cl_loss = barlow_twins_loss(users1, users2) + barlow_twins_loss(items1, items2)
    all_users = 0.5 * users1 + 0.5 * users2
    all_items = 0.5 * items1 + 0.5 * items2

    user_features_emb = all_users[student]                     # (B, D)
    courses_history_emb = all_items[courses]                   # (B, S, D)
    candidate_course_emb = all_items[candidate]                # (B, D)

    category_history = params["cat_emb"][category]             # (B, S, D)
    course_history_feature = courses_history_emb + category_history
    candidate_cate_emb = params["cat_emb"][candidate_cate]     # (B, D)
    candidate_course_feature = candidate_course_emb + candidate_cate_emb

    # ---- transformer branch (single fused Pallas kernel) ----
    positions = params["pos_emb"]                              # (S+1, D)
    sequence_features = jnp.concatenate(
        [course_history_feature, candidate_course_feature[:, None, :]], axis=1)
    x = sequence_features + positions[None, :, :]
    sequence_output, att_weight = transformer_layer(x, params, cfg)
    sequence_output = sequence_output.reshape(b, (s + 1) * d)

    # ---- final MLP ("liner") + sigmoid, fused in one kernel ----
    features = jnp.concatenate([user_features_emb, sequence_output], axis=1)
    prob = mlp_head(features, params)
    return student, candidate, prob, att_weight, cl_loss


# ----------------------------- parameter init -------------------------------

def init_params(key, cfg):
    d, h, s, d_ff = cfg["D"], cfg["H"], cfg["S"], cfg["d_ff"]
    num_student, num_course, num_category = (cfg["num_student"],
                                             cfg["num_course"],
                                             cfg["num_category"])
    mlp_in = d * (s + 2)
    mlp_dims = [mlp_in, 1024, 512, 256, 1]
    ks = jax.random.split(key, 16)

    def normal(k, shape, std=0.001):
        return std * jax.random.normal(k, shape, jnp.float32)

    def xavier(k, fan_in, fan_out, shape=None):
        shape = shape if shape is not None else (fan_in, fan_out)
        bound = math.sqrt(6.0 / (fan_in + fan_out))
        return jax.random.uniform(k, shape, jnp.float32, -bound, bound)

    p = {}
    p["stu_emb"] = normal(ks[0], (num_student, d))
    p["course_emb"] = normal(ks[1], (num_course + 1, d)).at[0].set(0.0)   # padding_idx=0
    p["cat_emb"] = normal(ks[2], (num_category + 1, d)).at[0].set(0.0)    # padding_idx=0
    p["pos_emb"] = normal(ks[3], (s + 1, d))

    # multi-head attention (weights stored as (in, out))
    p["k_w"] = xavier(ks[4], d, d)
    p["k_b"] = jnp.zeros((d,), jnp.float32)
    p["v_w"] = xavier(ks[5], d, d)
    p["v_b"] = jnp.zeros((d,), jnp.float32)
    p["out_w"] = xavier(ks[6], d, d)
    p["out_b"] = jnp.zeros((d,), jnp.float32)
    p["gammas"] = xavier(ks[7], 1, h, shape=(h,))

    # transformer FFN + layer norms
    p["ln1_g"] = jnp.ones((d,), jnp.float32)
    p["ln1_b"] = jnp.zeros((d,), jnp.float32)
    p["lin1_w"] = xavier(ks[8], d, d_ff)
    p["lin1_b"] = jnp.zeros((d_ff,), jnp.float32)
    p["lin2_w"] = xavier(ks[9], d_ff, d)
    p["lin2_b"] = jnp.zeros((d,), jnp.float32)
    p["ln2_g"] = jnp.ones((d,), jnp.float32)
    p["ln2_b"] = jnp.zeros((d,), jnp.float32)

    # final MLP ("liner")
    for i in range(4):
        p[f"mlp_w{i+1}"] = xavier(ks[10 + i], mlp_dims[i], mlp_dims[i + 1])
        p[f"mlp_b{i+1}"] = jnp.zeros((mlp_dims[i + 1],), jnp.float32)
    return p


# ---------------------------------- main -------------------------------------

if __name__ == "__main__":
    cfg = {
        "num_student": 16,
        "num_course": 12,
        "num_category": 6,
        "S": 8,           # sequence_length
        "D": 32,          # recdim / latent_dim
        "H": 4,           # n_heads
        "d_k": 8,         # D // H
        "d_ff": 64,
        "n_layers": 2,
    }
    B = 4
    n_nodes = cfg["num_student"] + cfg["num_course"] + 1

    root = jax.random.PRNGKey(0)
    k_params, k_g1, k_g2, k_s, k_c, k_cat, k_cand, k_ccat = jax.random.split(root, 8)

    params = init_params(k_params, cfg)

    # dense stand-ins for the sparse normalized adjacency graphs
    g1 = jax.random.uniform(k_g1, (n_nodes, n_nodes), jnp.float32)
    graph1 = g1 / jnp.sum(g1, axis=1, keepdims=True)
    g2 = jax.random.uniform(k_g2, (n_nodes, n_nodes), jnp.float32)
    graph2 = g2 / jnp.sum(g2, axis=1, keepdims=True)

    student = jax.random.randint(k_s, (B,), 0, cfg["num_student"])
    courses = jax.random.randint(k_c, (B, cfg["S"]), 0, cfg["num_course"] + 1)
    category = jax.random.randint(k_cat, (B, cfg["S"]), 0, cfg["num_category"] + 1)
    candidate = jax.random.randint(k_cand, (B,), 1, cfg["num_course"] + 1)
    candidate_cate = jax.random.randint(k_ccat, (B,), 1, cfg["num_category"] + 1)

    fwd = jax.jit(functools.partial(clgadn_forward, cfg=cfg))
    stu_out, cand_out, prob, att_weight, cl_loss = fwd(
        params, graph1, graph2, student, courses, category, candidate,
        candidate_cate)

    jax.block_until_ready((stu_out, cand_out, prob, att_weight, cl_loss))

    assert prob.shape == (B, 1)
    assert att_weight.shape == (B, cfg["H"], cfg["S"] + 1, cfg["S"] + 1)
    assert bool(jnp.all(jnp.isfinite(prob)))
    assert bool(jnp.isfinite(cl_loss))
    print("KERNEL_OK")
</pallas_src>

<mosaic_0001>
module attributes {stable_mosaic.version = 11 : i64} {
  func.func @_matmul_kernel(%arg0: i32, %arg1: i32, %arg2: i32, %arg3: memref<128x128xbf16, #tpu.memory_space<vmem>>, %arg4: memref<128x128xbf16, #tpu.memory_space<vmem>>, %arg5: memref<128x128xbf16, #tpu.memory_space<vmem>>, %arg6: memref<128x128xf32, #tpu.memory_space<vmem>>) attributes {dimension_semantics = [#tpu.dimension_semantics<parallel>, #tpu.dimension_semantics<parallel>, #tpu.dimension_semantics<arbitrary>], iteration_bounds = array<i64: 1, 1, 1>, scalar_prefetch = 0 : i64, scratch_operands = 1 : i64, tpu.core_type = #tpu.core_type<tc>, window_params = [{transform_indices = @transform_0, window_bounds = array<i64: 128, 128>}, {transform_indices = @transform_1, window_bounds = array<i64: 128, 128>}, {transform_indices = @transform_2, window_bounds = array<i64: 128, 128>}]} {
    %c0_i32 = arith.constant 0 : i32
    %0 = arith.cmpi eq, %arg2, %c0_i32 : i32
    %1 = arith.extui %0 : i1 to i32
    %c0_i32_0 = arith.constant 0 : i32
    %2 = arith.cmpi ne, %1, %c0_i32_0 : i32
    scf.if %2 {
      %cst_10 = arith.constant 0.000000e+00 : f32
      %12 = vector.broadcast %cst_10 : f32 to vector<128x128xf32>
      %c0_11 = arith.constant 0 : index
      %c0_12 = arith.constant 0 : index
      %13 = vector.load %arg6[%c0_11, %c0_12] : memref<128x128xf32, #tpu.memory_space<vmem>>, vector<128x128xf32>
      tpu.vector_store %arg6[%c0_11, %c0_12], %12 {strides = array<i32>} : memref<128x128xf32, #tpu.memory_space<vmem>>, vector<128x128xf32>,
    } else {
    }
    %c0 = arith.constant 0 : index
    %c0_1 = arith.constant 0 : index
    %3 = vector.load %arg6[%c0, %c0_1] : memref<128x128xf32, #tpu.memory_space<vmem>>, vector<128x128xf32>
    %c0_2 = arith.constant 0 : index
    %c0_3 = arith.constant 0 : index
    %4 = vector.load %arg3[%c0_2, %c0_3] : memref<128x128xbf16, #tpu.memory_space<vmem>>, vector<128x128xbf16>
    %c0_4 = arith.constant 0 : index
    %c0_5 = arith.constant 0 : index
    %5 = vector.load %arg4[%c0_4, %c0_5] : memref<128x128xbf16, #tpu.memory_space<vmem>>, vector<128x128xbf16>
    %cst = arith.constant dense<0.000000e+00> : vector<128x128xf32>
    %6 = tpu.matmul %4, %5, %cst {dimension_numbers = #tpu.dot_dimension_numbers<[1], [0], [0], [1], [0, 0, 1, 1], [], []>} : vector<128x128xbf16>, vector<128x128xbf16>, vector<128x128xf32> -> vector<128x128xf32>
    %7 = arith.addf %3, %6 : vector<128x128xf32>
    %c0_6 = arith.constant 0 : index
    %c0_7 = arith.constant 0 : index
    %8 = vector.load %arg6[%c0_6, %c0_7] : memref<128x128xf32, #tpu.memory_space<vmem>>, vector<128x128xf32>
    tpu.vector_store %arg6[%c0_6, %c0_7], %7 {strides = array<i32>} : memref<128x128xf32, #tpu.memory_space<vmem>>, vector<128x128xf32>,
    %c0_i32_8 = arith.constant 0 : i32
    %9 = arith.cmpi eq, %arg2, %c0_i32_8 : i32
    %10 = arith.extui %9 : i1 to i32
    %c0_i32_9 = arith.constant 0 : i32
    %11 = arith.cmpi ne, %10, %c0_i32_9 : i32
    scf.if %11 {
      %c0_10 = arith.constant 0 : index
      %c0_11 = arith.constant 0 : index
      %12 = vector.load %arg6[%c0_10, %c0_11] : memref<128x128xf32, #tpu.memory_space<vmem>>, vector<128x128xf32>
      %13 = arith.truncf %12 : vector<128x128xf32> to vector<128x128xbf16>
      %c0_12 = arith.constant 0 : index
      %c0_13 = arith.constant 0 : index
      %14 = vector.load %arg5[%c0_12, %c0_13] : memref<128x128xbf16, #tpu.memory_space<vmem>>, vector<128x128xbf16>
      tpu.vector_store %arg5[%c0_12, %c0_13], %13 {strides = array<i32>} : memref<128x128xbf16, #tpu.memory_space<vmem>>, vector<128x128xbf16>,
    } else {
    }
    return
  }
  func.func @transform_0(%arg0: i32, %arg1: i32, %arg2: i32) -> (i32, i32) {
    %c0_i32 = arith.constant 0 : i32
    return %arg0, %arg2 : i32, i32
  }
  func.func @transform_1(%arg0: i32, %arg1: i32, %arg2: i32) -> (i32, i32) {
    %c0_i32 = arith.constant 0 : i32
    return %arg2, %arg1 : i32, i32
  }
  func.func @transform_2(%arg0: i32, %arg1: i32, %arg2: i32) -> (i32, i32) {
    %c0_i32 = arith.constant 0 : i32
    return %arg0, %arg1 : i32, i32
  }
}

module attributes {stable_mosaic.version = 11 : i64} {
  func.func @_transformer_kernel(%arg0: memref<64x32xf32, #tpu.memory_space<vmem>>, %arg1: memref<16x16x16xf32, #tpu.memory_space<vmem>>, %arg2: memref<32x32xf32, #tpu.memory_space<vmem>>, %arg3: memref<1x32xf32, #tpu.memory_space<vmem>>, %arg4: memref<32x32xf32, #tpu.memory_space<vmem>>, %arg5: memref<1x32xf32, #tpu.memory_space<vmem>>, %arg6: memref<32x32xf32, #tpu.memory_space<vmem>>, %arg7: memref<1x32xf32, #tpu.memory_space<vmem>>, %arg8: memref<1x32xf32, #tpu.memory_space<vmem>>, %arg9: memref<1x32xf32, #tpu.memory_space<vmem>>, %arg10: memref<32x64xf32, #tpu.memory_space<vmem>>, %arg11: memref<1x64xf32, #tpu.memory_space<vmem>>, %arg12: memref<64x32xf32, #tpu.memory_space<vmem>>, %arg13: memref<1x32xf32, #tpu.memory_space<vmem>>, %arg14: memref<1x32xf32, #tpu.memory_space<vmem>>, %arg15: memref<1x32xf32, #tpu.memory_space<vmem>>, %arg16: memref<64x32xf32, #tpu.memory_space<vmem>>, %arg17: memref<16x256xf32, #tpu.memory_space<vmem>>) attributes {dimension_semantics = [], scalar_prefetch = 0 : i64, scratch_operands = 0 : i64, tpu.core_type = #tpu.core_type<tc>} {
    %c0 = arith.constant 0 : index
    %c0_0 = arith.constant 0 : index
    %0 = vector.load %arg0[%c0, %c0_0] : memref<64x32xf32, #tpu.memory_space<vmem>>, vector<64x32xf32>
    %c0_1 = arith.constant 0 : index
    %c0_2 = arith.constant 0 : index
    %1 = vector.load %arg2[%c0_1, %c0_2] : memref<32x32xf32, #tpu.memory_space<vmem>>, vector<32x32xf32>
    %cst = arith.constant dense<0.000000e+00> : vector<64x32xf32>
    %2 = tpu.matmul %0, %1, %cst {dimension_numbers = #tpu.dot_dimension_numbers<[1], [0], [0], [1], [0, 0, 1, 1], [], []>} : vector<64x32xf32>, vector<32x32xf32>, vector<64x32xf32> -> vector<64x32xf32>
    %c0_3 = arith.constant 0 : index
    %c0_4 = arith.constant 0 : index
    %3 = vector.load %arg3[%c0_3, %c0_4] : memref<1x32xf32, #tpu.memory_space<vmem>>, vector<1x32xf32>
    %4 = vector.broadcast %3 : vector<1x32xf32> to vector<64x32xf32>
    %5 = arith.addf %2, %4 : vector<64x32xf32>
    %c0_5 = arith.constant 0 : index
    %c0_6 = arith.constant 0 : index
    %6 = vector.load %arg4[%c0_5, %c0_6] : memref<32x32xf32, #tpu.memory_space<vmem>>, vector<32x32xf32>
    %cst_7 = arith.constant dense<0.000000e+00> : vector<64x32xf32>
    %7 = tpu.matmul %0, %6, %cst_7 {dimension_numbers = #tpu.dot_dimension_numbers<[1], [0], [0], [1], [0, 0, 1, 1], [], []>} : vector<64x32xf32>, vector<32x32xf32>, vector<64x32xf32> -> vector<64x32xf32>
    %c0_8 = arith.constant 0 : index
    %c0_9 = arith.constant 0 : index
    %8 = vector.load %arg5[%c0_8, %c0_9] : memref<1x32xf32, #tpu.memory_space<vmem>>, vector<1x32xf32>
    %9 = vector.broadcast %8 : vector<1x32xf32> to vector<64x32xf32>
    %10 = arith.addf %7, %9 : vector<64x32xf32>
    %11 = vector.shape_cast %5 : vector<64x32xf32> to vector<4x16x32xf32>
    %12 = vector.shape_cast %10 : vector<64x32xf32> to vector<4x16x32xf32>
    %13 = vector.extract_strided_slice %11 {offsets = [0, 0, 0], sizes = [4, 16, 8], strides = [1, 1, 1]} : vector<4x16x32xf32> to vector<4x16x8xf32>
    %14 = vector.extract_strided_slice %11 {offsets = [0, 0, 8], sizes = [4, 16, 8], strides = [1, 1, 1]} : vector<4x16x32xf32> to vector<4x16x8xf32>
    %15 = vector.extract_strided_slice %11 {offsets = [0, 0, 16], sizes = [4, 16, 8], strides = [1, 1, 1]} : vector<4x16x32xf32> to vector<4x16x8xf32>
    %16 = vector.extract_strided_slice %11 {offsets = [0, 0, 24], sizes = [4, 16, 8], strides = [1, 1, 1]} : vector<4x16x32xf32> to vector<4x16x8xf32>
    %17 = tpu.concatenate %13, %14, %15, %16 in 0 : vector<4x16x8xf32>, vector<4x16x8xf32>, vector<4x16x8xf32>, vector<4x16x8xf32> -> vector<16x16x8xf32>
    %18 = vector.extract_strided_slice %12 {offsets = [0, 0, 0], sizes = [4, 16, 8], strides = [1, 1, 1]} : vector<4x16x32xf32> to vector<4x16x8xf32>
    %19 = vector.extract_strided_slice %12 {offsets = [0, 0, 8], sizes = [4, 16, 8], strides = [1, 1, 1]} : vector<4x16x32xf32> to vector<4x16x8xf32>
    %20 = vector.extract_strided_slice %12 {offsets = [0, 0, 16], sizes = [4, 16, 8], strides = [1, 1, 1]} : vector<4x16x32xf32> to vector<4x16x8xf32>
    %21 = vector.extract_strided_slice %12 {offsets = [0, 0, 24], sizes = [4, 16, 8], strides = [1, 1, 1]} : vector<4x16x32xf32> to vector<4x16x8xf32>
    %22 = tpu.concatenate %18, %19, %20, %21 in 0 : vector<4x16x8xf32>, vector<4x16x8xf32>, vector<4x16x8xf32>, vector<4x16x8xf32> -> vector<16x16x8xf32>
    %23 = tpu.iota {dimensions = array<i32: 0>} : vector<16x16xi32>
    %24 = tpu.iota {dimensions = array<i32: 1>} : vector<16x16xi32>
    %25 = arith.cmpi sle, %24, %23 : vector<16x16xi32>
    %c9_i32 = arith.constant 9 : i32
    %26 = vector.broadcast %c9_i32 : i32 to vector<16x16xi32>
    %27 = arith.cmpi slt, %24, %26 : vector<16x16xi32>
    %28 = arith.andi %25, %27 : vector<16x16xi1>
    "tpu.trace_start"() <{level = 10 : i32, message = "bqd,bkd->bqk"}> : () -> ()
    %cst_10 = arith.constant dense<0.000000e+00> : vector<16x16x16xf32>
    %29 = tpu.matmul %17, %17, %cst_10 {dimension_numbers = #tpu.dot_dimension_numbers<[2], [2], [1], [1], [0, 0, 0, 1, 1, 1], [0], [0]>} : vector<16x16x8xf32>, vector<16x16x8xf32>, vector<16x16x16xf32> -> vector<16x16x16xf32>
    "tpu.trace_stop"() : () -> ()
    %cst_11 = arith.constant 0.353553385 : f32
    %30 = vector.broadcast %cst_11 : f32 to vector<16x16x16xf32>
    %31 = arith.mulf %29, %30 : vector<16x16x16xf32>
    %c0_12 = arith.constant 0 : index
    %c0_13 = arith.constant 0 : index
    %c0_14 = arith.constant 0 : index
    %32 = vector.load %arg1[%c0_12, %c0_13, %c0_14] : memref<16x16x16xf32, #tpu.memory_space<vmem>>, vector<16x16x16xf32>
    %33 = arith.mulf %31, %32 : vector<16x16x16xf32>
    %34 = vector.shape_cast %28 : vector<16x16xi1> to vector<1x16x16xi1>
    %cst_15 = arith.constant -1.000000e+32 : f32
    %35 = vector.shape_cast %34 : vector<1x16x16xi1> to vector<1x16x16xi1>
    %36 = vector.broadcast %35 : vector<1x16x16xi1> to vector<16x16x16xi1>
    %37 = vector.broadcast %cst_15 : f32 to vector<16x16x16xf32>
    %38 = arith.select %36, %33, %37 : vector<16x16x16xi1>, vector<16x16x16xf32>
    %cst_16 = arith.constant dense<0xFF800000> : vector<16x16xf32>
    %39 = vector.multi_reduction <maximumf>, %38, %cst_16 [2] : vector<16x16x16xf32> to vector<16x16xf32>
    %40 = vector.shape_cast %39 : vector<16x16xf32> to vector<16x16x1xf32>
    %41 = vector.broadcast %40 : vector<16x16x1xf32> to vector<16x16x16xf32>
    %42 = arith.subf %38, %41 : vector<16x16x16xf32>
    %43 = math.exp %42 : vector<16x16x16xf32>
    %cst_17 = arith.constant dense<0.000000e+00> : vector<16x16xf32>
    %44 = vector.multi_reduction <add>, %43, %cst_17 [2] : vector<16x16x16xf32> to vector<16x16xf32>
    %45 = vector.shape_cast %44 : vector<16x16xf32> to vector<16x16x1xf32>
    %46 = vector.broadcast %45 : vector<16x16x1xf32> to vector<16x16x16xf32>
    %47 = arith.divf %43, %46 : vector<16x16x16xf32>
    %48 = vector.shape_cast %47 : vector<16x16x16xf32> to vector<16x256xf32>
    %c0_18 = arith.constant 0 : index
    %c0_19 = arith.constant 0 : index
    %49 = vector.load %arg17[%c0_18, %c0_19] : memref<16x256xf32, #tpu.memory_space<vmem>>, vector<16x256xf32>
    tpu.vector_store %arg17[%c0_18, %c0_19], %48 {strides = array<i32>} : memref<16x256xf32, #tpu.memory_space<vmem>>, vector<16x256xf32>,
    "tpu.trace_start"() <{level = 10 : i32, message = "bqk,bkd->bqd"}> : () -> ()
    %cst_20 = arith.constant dense<0.000000e+00> : vector<16x16x8xf32>
    %50 = tpu.matmul %47, %22, %cst_20 {dimension_numbers = #tpu.dot_dimension_numbers<[2], [1], [1], [2], [0, 0, 0, 1, 1, 2], [0], [0]>} : vector<16x16x16xf32>, vector<16x16x8xf32>, vector<16x16x8xf32> -> vector<16x16x8xf32>
    "tpu.trace_stop"() : () -> ()
    %51 = vector.shape_cast %50 : vector<16x16x8xf32> to vector<4x64x8xf32>
    %c0_21 = arith.constant 0 : index
    %c0_22 = arith.constant 0 : index
    %52 = vector.load %arg6[%c0_21, %c0_22] : memref<32x32xf32, #tpu.memory_space<vmem>>, vector<32x32xf32>
    %53 = vector.shape_cast %52 : vector<32x32xf32> to vector<4x8x32xf32>
    "tpu.trace_start"() <{level = 10 : i32, message = "hnd,hdf->hnf"}> : () -> ()
    %cst_23 = arith.constant dense<0.000000e+00> : vector<4x64x32xf32>
    %54 = tpu.matmul %51, %53, %cst_23 {dimension_numbers = #tpu.dot_dimension_numbers<[2], [1], [1], [2], [0, 0, 0, 1, 1, 2], [0], [0]>} : vector<4x64x8xf32>, vector<4x8x32xf32>, vector<4x64x32xf32> -> vector<4x64x32xf32>
    "tpu.trace_stop"() : () -> ()
    %cst_24 = arith.constant dense<0.000000e+00> : vector<64x32xf32>
    %55 = vector.multi_reduction <add>, %54, %cst_24 [0] : vector<4x64x32xf32> to vector<64x32xf32>
    %c0_25 = arith.constant 0 : index
    %c0_26 = arith.constant 0 : index
    %56 = vector.load %arg7[%c0_25, %c0_26] : memref<1x32xf32, #tpu.memory_space<vmem>>, vector<1x32xf32>
    %57 = vector.broadcast %56 : vector<1x32xf32> to vector<64x32xf32>
    %58 = arith.addf %55, %57 : vector<64x32xf32>
    %59 = arith.addf %0, %58 : vector<64x32xf32>
    %c0_27 = arith.constant 0 : index
    %c0_28 = arith.constant 0 : index
    %60 = vector.load %arg8[%c0_27, %c0_28] : memref<1x32xf32, #tpu.memory_space<vmem>>, vector<1x32xf32>
    %c0_29 = arith.constant 0 : index
    %c0_30 = arith.constant 0 : index
    %61 = vector.load %arg9[%c0_29, %c0_30] : memref<1x32xf32, #tpu.memory_space<vmem>>, vector<1x32xf32>
    %cst_31 = arith.constant dense<0.000000e+00> : vector<64xf32>
    %62 = vector.multi_reduction <add>, %59, %cst_31 [1] : vector<64x32xf32> to vector<64xf32>
    %63 = vector.shape_cast %62 : vector<64xf32> to vector<64x1xf32>
    %cst_32 = arith.constant 3.200000e+01 : f32
    %64 = vector.broadcast %cst_32 : f32 to vector<64x1xf32>
    %65 = arith.divf %63, %64 : vector<64x1xf32>
    %66 = vector.broadcast %65 : vector<64x1xf32> to vector<64x32xf32>
    %67 = arith.subf %59, %66 : vector<64x32xf32>
    %68 = arith.mulf %67, %67 : vector<64x32xf32>
    %cst_33 = arith.constant dense<0.000000e+00> : vector<64xf32>
    %69 = vector.multi_reduction <add>, %68, %cst_33 [1] : vector<64x32xf32> to vector<64xf32>
    %70 = vector.shape_cast %69 : vector<64xf32> to vector<64x1xf32>
    %cst_34 = arith.constant 3.200000e+01 : f32
    %71 = vector.broadcast %cst_34 : f32 to vector<64x1xf32>
    %72 = arith.divf %70, %71 : vector<64x1xf32>
    %73 = vector.broadcast %65 : vector<64x1xf32> to vector<64x32xf32>
    %74 = arith.subf %59, %73 : vector<64x32xf32>
    %cst_35 = arith.constant 9.99999974E-6 : f32
    %75 = vector.broadcast %cst_35 : f32 to vector<64x1xf32>
    %76 = arith.addf %72, %75 : vector<64x1xf32>
    %77 = math.rsqrt %76 : vector<64x1xf32>
    %78 = vector.broadcast %77 : vector<64x1xf32> to vector<64x32xf32>
    %79 = arith.mulf %74, %78 : vector<64x32xf32>
    %80 = vector.broadcast %60 : vector<1x32xf32> to vector<64x32xf32>
    %81 = arith.mulf %79, %80 : vector<64x32xf32>
    %82 = vector.broadcast %61 : vector<1x32xf32> to vector<64x32xf32>
    %83 = arith.addf %81, %82 : vector<64x32xf32>
    %c0_36 = arith.constant 0 : index
    %c0_37 = arith.constant 0 : index
    %84 = vector.load %arg10[%c0_36, %c0_37] : memref<32x64xf32, #tpu.memory_space<vmem>>, vector<32x64xf32>
    %cst_38 = arith.constant dense<0.000000e+00> : vector<64x64xf32>
    %85 = tpu.matmul %83, %84, %cst_38 {dimension_numbers = #tpu.dot_dimension_numbers<[1], [0], [0], [1], [0, 0, 1, 1], [], []>} : vector<64x32xf32>, vector<32x64xf32>, vector<64x64xf32> -> vector<64x64xf32>
    %c0_39 = arith.constant 0 : index
    %c0_40 = arith.constant 0 : index
    %86 = vector.load %arg11[%c0_39, %c0_40] : memref<1x64xf32, #tpu.memory_space<vmem>>, vector<1x64xf32>
    %87 = vector.broadcast %86 : vector<1x64xf32> to vector<64x64xf32>
    %88 = arith.addf %85, %87 : vector<64x64xf32>
    %cst_41 = arith.constant 0.000000e+00 : f32
    %89 = vector.broadcast %cst_41 : f32 to vector<64x64xf32>
    %90 = arith.maximumf %88, %89 : vector<64x64xf32>
    %c0_42 = arith.constant 0 : index
    %c0_43 = arith.constant 0 : index
    %91 = vector.load %arg12[%c0_42, %c0_43] : memref<64x32xf32, #tpu.memory_space<vmem>>, vector<64x32xf32>
    %cst_44 = arith.constant dense<0.000000e+00> : vector<64x32xf32>
    %92 = tpu.matmul %90, %91, %cst_44 {dimension_numbers = #tpu.dot_dimension_numbers<[1], [0], [0], [1], [0, 0, 1, 1], [], []>} : vector<64x64xf32>, vector<64x32xf32>, vector<64x32xf32> -> vector<64x32xf32>
    %c0_45 = arith.constant 0 : index
    %c0_46 = arith.constant 0 : index
    %93 = vector.load %arg13[%c0_45, %c0_46] : memref<1x32xf32, #tpu.memory_space<vmem>>, vector<1x32xf32>
    %94 = vector.broadcast %93 : vector<1x32xf32> to vector<64x32xf32>
    %95 = arith.addf %92, %94 : vector<64x32xf32>
    %96 = arith.addf %83, %95 : vector<64x32xf32>
    %c0_47 = arith.constant 0 : index
    %c0_48 = arith.constant 0 : index
    %97 = vector.load %arg14[%c0_47, %c0_48] : memref<1x32xf32, #tpu.memory_space<vmem>>, vector<1x32xf32>
    %c0_49 = arith.constant 0 : index
    %c0_50 = arith.constant 0 : index
    %98 = vector.load %arg15[%c0_49, %c0_50] : memref<1x32xf32, #tpu.memory_space<vmem>>, vector<1x32xf32>
    %cst_51 = arith.constant dense<0.000000e+00> : vector<64xf32>
    %99 = vector.multi_reduction <add>, %96, %cst_51 [1] : vector<64x32xf32> to vector<64xf32>
    %100 = vector.shape_cast %99 : vector<64xf32> to vector<64x1xf32>
    %cst_52 = arith.constant 3.200000e+01 : f32
    %101 = vector.broadcast %cst_52 : f32 to vector<64x1xf32>
    %102 = arith.divf %100, %101 : vector<64x1xf32>
    %103 = vector.broadcast %102 : vector<64x1xf32> to vector<64x32xf32>
    %104 = arith.subf %96, %103 : vector<64x32xf32>
    %105 = arith.mulf %104, %104 : vector<64x32xf32>
    %cst_53 = arith.constant dense<0.000000e+00> : vector<64xf32>
    %106 = vector.multi_reduction <add>, %105, %cst_53 [1] : vector<64x32xf32> to vector<64xf32>
    %107 = vector.shape_cast %106 : vector<64xf32> to vector<64x1xf32>
    %cst_54 = arith.constant 3.200000e+01 : f32
    %108 = vector.broadcast %cst_54 : f32 to vector<64x1xf32>
    %109 = arith.divf %107, %108 : vector<64x1xf32>
    %110 = vector.broadcast %102 : vector<64x1xf32> to vector<64x32xf32>
    %111 = arith.subf %96, %110 : vector<64x32xf32>
    %cst_55 = arith.constant 9.99999974E-6 : f32
    %112 = vector.broadcast %cst_55 : f32 to vector<64x1xf32>
    %113 = arith.addf %109, %112 : vector<64x1xf32>
    %114 = math.rsqrt %113 : vector<64x1xf32>
    %115 = vector.broadcast %114 : vector<64x1xf32> to vector<64x32xf32>
    %116 = arith.mulf %111, %115 : vector<64x32xf32>
    %117 = vector.broadcast %97 : vector<1x32xf32> to vector<64x32xf32>
    %118 = arith.mulf %116, %117 : vector<64x32xf32>
    %119 = vector.broadcast %98 : vector<1x32xf32> to vector<64x32xf32>
    %120 = arith.addf %118, %119 : vector<64x32xf32>
    %c0_56 = arith.constant 0 : index
    %c0_57 = arith.constant 0 : index
    %121 = vector.load %arg16[%c0_56, %c0_57] : memref<64x32xf32, #tpu.memory_space<vmem>>, vector<64x32xf32>
    tpu.vector_store %arg16[%c0_56, %c0_57], %120 {strides = array<i32>} : memref<64x32xf32, #tpu.memory_space<vmem>>, vector<64x32xf32>,
    return
  }
}

module attributes {stable_mosaic.version = 11 : i64} {
  func.func @_mlp_head_kernel(%arg0: memref<4x320xf32, #tpu.memory_space<vmem>>, %arg1: memref<320x1024xf32, #tpu.memory_space<vmem>>, %arg2: memref<1x1024xf32, #tpu.memory_space<vmem>>, %arg3: memref<1024x512xf32, #tpu.memory_space<vmem>>, %arg4: memref<1x512xf32, #tpu.memory_space<vmem>>, %arg5: memref<512x256xf32, #tpu.memory_space<vmem>>, %arg6: memref<1x256xf32, #tpu.memory_space<vmem>>, %arg7: memref<1x256xf32, #tpu.memory_space<vmem>>, %arg8: memref<1x1xf32, #tpu.memory_space<vmem>>, %arg9: memref<1x4xf32, #tpu.memory_space<vmem>>) attributes {dimension_semantics = [], scalar_prefetch = 0 : i64, scratch_operands = 0 : i64, tpu.core_type = #tpu.core_type<tc>} {
    %c0 = arith.constant 0 : index
    %c0_0 = arith.constant 0 : index
    %0 = vector.load %arg0[%c0, %c0_0] : memref<4x320xf32, #tpu.memory_space<vmem>>, vector<4x320xf32>
    %c0_1 = arith.constant 0 : index
    %c0_2 = arith.constant 0 : index
    %1 = vector.load %arg1[%c0_1, %c0_2] : memref<320x1024xf32, #tpu.memory_space<vmem>>, vector<320x1024xf32>
    %cst = arith.constant dense<0.000000e+00> : vector<4x1024xf32>
    %2 = tpu.matmul %0, %1, %cst {dimension_numbers = #tpu.dot_dimension_numbers<[1], [0], [0], [1], [0, 0, 1, 1], [], []>} : vector<4x320xf32>, vector<320x1024xf32>, vector<4x1024xf32> -> vector<4x1024xf32>
    %c0_3 = arith.constant 0 : index
    %c0_4 = arith.constant 0 : index
    %3 = vector.load %arg2[%c0_3, %c0_4] : memref<1x1024xf32, #tpu.memory_space<vmem>>, vector<1x1024xf32>
    %4 = vector.broadcast %3 : vector<1x1024xf32> to vector<4x1024xf32>
    %5 = arith.addf %2, %4 : vector<4x1024xf32>
    %cst_5 = arith.constant 0.000000e+00 : f32
    %6 = vector.broadcast %cst_5 : f32 to vector<4x1024xf32>
    %7 = arith.cmpf oge, %5, %6 : vector<4x1024xf32>
    %cst_6 = arith.constant 0.00999999977 : f32
    %8 = vector.broadcast %cst_6 : f32 to vector<4x1024xf32>
    %9 = arith.mulf %8, %5 : vector<4x1024xf32>
    %10 = arith.select %7, %5, %9 : vector<4x1024xi1>, vector<4x1024xf32>
    %c0_7 = arith.constant 0 : index
    %c0_8 = arith.constant 0 : index
    %11 = vector.load %arg3[%c0_7, %c0_8] : memref<1024x512xf32, #tpu.memory_space<vmem>>, vector<1024x512xf32>
    %cst_9 = arith.constant dense<0.000000e+00> : vector<4x512xf32>
    %12 = tpu.matmul %10, %11, %cst_9 {dimension_numbers = #tpu.dot_dimension_numbers<[1], [0], [0], [1], [0, 0, 1, 1], [], []>} : vector<4x1024xf32>, vector<1024x512xf32>, vector<4x512xf32> -> vector<4x512xf32>
    %c0_10 = arith.constant 0 : index
    %c0_11 = arith.constant 0 : index
    %13 = vector.load %arg4[%c0_10, %c0_11] : memref<1x512xf32, #tpu.memory_space<vmem>>, vector<1x512xf32>
    %14 = vector.broadcast %13 : vector<1x512xf32> to vector<4x512xf32>
    %15 = arith.addf %12, %14 : vector<4x512xf32>
    %cst_12 = arith.constant 0.000000e+00 : f32
    %16 = vector.broadcast %cst_12 : f32 to vector<4x512xf32>
    %17 = arith.cmpf oge, %15, %16 : vector<4x512xf32>
    %cst_13 = arith.constant 0.00999999977 : f32
    %18 = vector.broadcast %cst_13 : f32 to vector<4x512xf32>
    %19 = arith.mulf %18, %15 : vector<4x512xf32>
    %20 = arith.select %17, %15, %19 : vector<4x512xi1>, vector<4x512xf32>
    %c0_14 = arith.constant 0 : index
    %c0_15 = arith.constant 0 : index
    %21 = vector.load %arg5[%c0_14, %c0_15] : memref<512x256xf32, #tpu.memory_space<vmem>>, vector<512x256xf32>
    %cst_16 = arith.constant dense<0.000000e+00> : vector<4x256xf32>
    %22 = tpu.matmul %20, %21, %cst_16 {dimension_numbers = #tpu.dot_dimension_numbers<[1], [0], [0], [1], [0, 0, 1, 1], [], []>} : vector<4x512xf32>, vector<512x256xf32>, vector<4x256xf32> -> vector<4x256xf32>
    %c0_17 = arith.constant 0 : index
    %c0_18 = arith.constant 0 : index
    %23 = vector.load %arg6[%c0_17, %c0_18] : memref<1x256xf32, #tpu.memory_space<vmem>>, vector<1x256xf32>
    %24 = vector.broadcast %23 : vector<1x256xf32> to vector<4x256xf32>
    %25 = arith.addf %22, %24 : vector<4x256xf32>
    %cst_19 = arith.constant 0.000000e+00 : f32
    %26 = vector.broadcast %cst_19 : f32 to vector<4x256xf32>
    %27 = arith.cmpf oge, %25, %26 : vector<4x256xf32>
    %cst_20 = arith.constant 0.00999999977 : f32
    %28 = vector.broadcast %cst_20 : f32 to vector<4x256xf32>
    %29 = arith.mulf %28, %25 : vector<4x256xf32>
    %30 = arith.select %27, %25, %29 : vector<4x256xi1>, vector<4x256xf32>
    %c0_21 = arith.constant 0 : index
    %c0_22 = arith.constant 0 : index
    %31 = vector.load %arg7[%c0_21, %c0_22] : memref<1x256xf32, #tpu.memory_space<vmem>>, vector<1x256xf32>
    %32 = vector.broadcast %31 : vector<1x256xf32> to vector<4x256xf32>
    %33 = arith.mulf %30, %32 : vector<4x256xf32>
    %cst_23 = arith.constant dense<0.000000e+00> : vector<4xf32>
    %34 = vector.multi_reduction <add>, %33, %cst_23 [1] : vector<4x256xf32> to vector<4xf32>
    %35 = vector.shape_cast %34 : vector<4xf32> to vector<4x1xf32>
    %c0_24 = arith.constant 0 : index
    %c0_25 = arith.constant 0 : index
    %36 = vector.load %arg8[%c0_24, %c0_25] : memref<1x1xf32, #tpu.memory_space<vmem>>, vector<1x1xf32>
    %37 = vector.broadcast %36 : vector<1x1xf32> to vector<4x1xf32>
    %38 = arith.addf %35, %37 : vector<4x1xf32>
    %cst_26 = arith.constant 0.000000e+00 : f32
    %39 = vector.broadcast %cst_26 : f32 to vector<4x1xf32>
    %40 = arith.subf %39, %38 : vector<4x1xf32>
    %41 = math.exp %40 : vector<4x1xf32>
    %cst_27 = arith.constant 1.000000e+00 : f32
    %42 = vector.broadcast %cst_27 : f32 to vector<4x1xf32>
    %43 = arith.addf %42, %41 : vector<4x1xf32>
    %cst_28 = arith.constant 1.000000e+00 : f32
    %44 = vector.broadcast %cst_28 : f32 to vector<4x1xf32>
    %45 = arith.divf %44, %43 : vector<4x1xf32>
    %46 = vector.shape_cast %45 : vector<4x1xf32> to vector<1x4xf32>
    %c0_29 = arith.constant 0 : index
    %c0_30 = arith.constant 0 : index
    %47 = vector.load %arg9[%c0_29, %c0_30] : memref<1x4xf32, #tpu.memory_space<vmem>>, vector<1x4xf32>
    tpu.vector_store %arg9[%c0_29, %c0_30], %46 {strides = array<i32>} : memref<1x4xf32, #tpu.memory_space<vmem>>, vector<1x4xf32>,
    return
  }
}

</mosaic_0001>

<llo_original>
// kernel: clgadn_forward.8
$region0: #{clgadn_forward.8}
  #allocation0 [shape = 'u32[]', space=smem, size = 0x4, offset = 0x4, fixed_abs, tag = 'smem constant byte address 0x4 - core index']
  #allocation1 [shape = 'u32[144,128]{1,0:T(1,128)}', space=vmem, size = 0x12000, scoped, tag = 'internal scratch']
  #allocation2 [shape = 'f32[128,128]{1,0:T(8,128)}', space=vmem, size = 0x10000, scoped, tag = 'scratch operand']
  %s0 = inlined_call_operand.vmem [shape: bf16[128,128], index: 0, kind: input, shape index: {}]
  %s1 = inlined_call_operand.vmem [shape: bf16[128,128], index: 1, kind: input, shape index: {}]
  %s2 = inlined_call_operand.vmem [shape: bf16[128,128], index: 2, kind: output, shape index: {}]
  %s3 = sld [smem:[#allocation0]]
  $region26: #{clgadn_forward.8} parent=0
    _
  %s5 = ssub.s32 1, %s3
  %s6 = scalar_select 0, %s5, %s3
  // Predicated region
  $region2: #{clgadn_forward.8} parent=0 // pred_check
    _
  $region3: #{clgadn_forward.8} parent=0 // pred_check_branch
    %8 = sbr.rel (0) target = $region5
  $region4: #{clgadn_forward.8} parent=0 // pred_region
    _
  $region5: #{clgadn_forward.8} parent=0 // pred_fallthru
    _
  // Predicated region
  $region6: #{clgadn_forward.8} parent=0 // pred_check
    _
  $region7: #{clgadn_forward.8} parent=0 // pred_check_branch
    %10 = sbr.rel (0) target = $region9
  $region8: #{clgadn_forward.8} parent=0 // pred_region
    _
  $region9: #{clgadn_forward.8} parent=0 // pred_fallthru
    _
  %p12 = scmp.eq.s32.totalorder 0, 0
  // Predicated region
  $region10: #{clgadn_forward.8} parent=0 // pred_check
    %p13 = pneg %p12
  $region11: #{clgadn_forward.8} parent=0 // pred_check_branch
    %15 = sbr.rel (%p13) target = $region13
  $region12: #{clgadn_forward.8} parent=0 // pred_region
    %16 = vst [vmem:[#allocation2] sm:$0xff] 0.0
    %17 = vst [vmem:[#allocation2 + $0x8] sm:$0xff] 0.0
    %18 = vst [vmem:[#allocation2 + $0x10] sm:$0xff] 0.0
    %19 = vst [vmem:[#allocation2 + $0x18] sm:$0xff] 0.0
    %20 = vst [vmem:[#allocation2 + $0x20] sm:$0xff] 0.0
    %21 = vst [vmem:[#allocation2 + $0x28] sm:$0xff] 0.0
    %22 = vst [vmem:[#allocation2 + $0x30] sm:$0xff] 0.0
    %23 = vst [vmem:[#allocation2 + $0x38] sm:$0xff] 0.0
    %24 = vst [vmem:[#allocation2 + $0x40] sm:$0xff] 0.0
    %25 = vst [vmem:[#allocation2 + $0x48] sm:$0xff] 0.0
    %26 = vst [vmem:[#allocation2 + $0x50] sm:$0xff] 0.0
    %27 = vst [vmem:[#allocation2 + $0x58] sm:$0xff] 0.0
    %28 = vst [vmem:[#allocation2 + $0x60] sm:$0xff] 0.0
    %29 = vst [vmem:[#allocation2 + $0x68] sm:$0xff] 0.0
    %30 = vst [vmem:[#allocation2 + $0x70] sm:$0xff] 0.0
    %31 = vst [vmem:[#allocation2 + $0x78] sm:$0xff] 0.0
  $region13: #{clgadn_forward.8} parent=0 // pred_fallthru
    _
  %v32 = vld [vmem:[#allocation2] sm:$0xff]
  %v33 = vld [vmem:[#allocation2 + $0x8] sm:$0xff]
  %v34 = vld [vmem:[#allocation2 + $0x10] sm:$0xff]
  %v35 = vld [vmem:[#allocation2 + $0x18] sm:$0xff]
  %v36 = vld [vmem:[#allocation2 + $0x20] sm:$0xff]
  %v37 = vld [vmem:[#allocation2 + $0x28] sm:$0xff]
  %v38 = vld [vmem:[#allocation2 + $0x30] sm:$0xff]
  %v39 = vld [vmem:[#allocation2 + $0x38] sm:$0xff]
  %v40 = vld [vmem:[#allocation2 + $0x40] sm:$0xff]
  %v41 = vld [vmem:[#allocation2 + $0x48] sm:$0xff]
  %v42 = vld [vmem:[#allocation2 + $0x50] sm:$0xff]
  %v43 = vld [vmem:[#allocation2 + $0x58] sm:$0xff]
  %v44 = vld [vmem:[#allocation2 + $0x60] sm:$0xff]
  %v45 = vld [vmem:[#allocation2 + $0x68] sm:$0xff]
  %v46 = vld [vmem:[#allocation2 + $0x70] sm:$0xff]
  %v47 = vld [vmem:[#allocation2 + $0x78] sm:$0xff]
  %v48 = vld [vmem:[%s0] sm:$0xf]
  %v49 = vld [vmem:[%s0 + $0x4] sm:$0xf]
  %v50 = vld [vmem:[%s0 + $0x8] sm:$0xf]
  %v51 = vld [vmem:[%s0 + $0xc] sm:$0xf]
  %v52 = vld [vmem:[%s0 + $0x10] sm:$0xf]
  %v53 = vld [vmem:[%s0 + $0x14] sm:$0xf]
  %v54 = vld [vmem:[%s0 + $0x18] sm:$0xf]
  %v55 = vld [vmem:[%s0 + $0x1c] sm:$0xf]
  %v56 = vld [vmem:[%s0 + $0x20] sm:$0xf]
  %v57 = vld [vmem:[%s0 + $0x24] sm:$0xf]
  %v58 = vld [vmem:[%s0 + $0x28] sm:$0xf]
  %v59 = vld [vmem:[%s0 + $0x2c] sm:$0xf]
  %v60 = vld [vmem:[%s0 + $0x30] sm:$0xf]
  %v61 = vld [vmem:[%s0 + $0x34] sm:$0xf]
  %v62 = vld [vmem:[%s0 + $0x38] sm:$0xf]
  %v63 = vld [vmem:[%s0 + $0x3c] sm:$0xf]
  %v64 = vld [vmem:[%s1] sm:$0xf]
  %v65 = vld [vmem:[%s1 + $0x4] sm:$0xf]
  %v66 = vld [vmem:[%s1 + $0x8] sm:$0xf]
  %v67 = vld [vmem:[%s1 + $0xc] sm:$0xf]
  %v68 = vld [vmem:[%s1 + $0x10] sm:$0xf]
  %v69 = vld [vmem:[%s1 + $0x14] sm:$0xf]
  %v70 = vld [vmem:[%s1 + $0x18] sm:$0xf]
  %v71 = vld [vmem:[%s1 + $0x1c] sm:$0xf]
  %v72 = vld [vmem:[%s1 + $0x20] sm:$0xf]
  %v73 = vld [vmem:[%s1 + $0x24] sm:$0xf]
  %v74 = vld [vmem:[%s1 + $0x28] sm:$0xf]
  %v75 = vld [vmem:[%s1 + $0x2c] sm:$0xf]
  %v76 = vld [vmem:[%s1 + $0x30] sm:$0xf]
  %v77 = vld [vmem:[%s1 + $0x34] sm:$0xf]
  %v78 = vld [vmem:[%s1 + $0x38] sm:$0xf]
  %v79 = vld [vmem:[%s1 + $0x3c] sm:$0xf]
  %v96 = vunpack.c.l.b16 %v48
  %v97 = vunpack.c.l.b16 %v49
  %v98 = vunpack.c.l.b16 %v50
  %v99 = vunpack.c.l.b16 %v51
  %v100 = vunpack.c.l.b16 %v52
  %v101 = vunpack.c.l.b16 %v53
  %v102 = vunpack.c.l.b16 %v54
  %v103 = vunpack.c.l.b16 %v55
  %v104 = vunpack.c.l.b16 %v56
  %v105 = vunpack.c.l.b16 %v57
  %v106 = vunpack.c.l.b16 %v58
  %v107 = vunpack.c.l.b16 %v59
  %v108 = vunpack.c.l.b16 %v60
  %v109 = vunpack.c.l.b16 %v61
  %v110 = vunpack.c.l.b16 %v62
  %v111 = vunpack.c.l.b16 %v63
  %v112 = vpack.c.b16 %v97, %v96
  %v113 = vpack.c.b16 %v99, %v98
  %v114 = vpack.c.b16 %v101, %v100
  %v115 = vpack.c.b16 %v103, %v102
  %v116 = vpack.c.b16 %v105, %v104
  %v117 = vpack.c.b16 %v107, %v106
  %v118 = vpack.c.b16 %v109, %v108
  %v119 = vpack.c.b16 %v111, %v110
  %v144 = vunpack.c.l.b16 %v64
  %v145 = vunpack.c.l.b16 %v65
  %v146 = vunpack.c.l.b16 %v66
  %v147 = vunpack.c.l.b16 %v67
  %v148 = vunpack.c.l.b16 %v68
  %v149 = vunpack.c.l.b16 %v69
  %v150 = vunpack.c.l.b16 %v70
  %v151 = vunpack.c.l.b16 %v71
  %v152 = vunpack.c.l.b16 %v72
  %v153 = vunpack.c.l.b16 %v73
  %v154 = vunpack.c.l.b16 %v74
  %v155 = vunpack.c.l.b16 %v75
  %v156 = vunpack.c.l.b16 %v76
  %v157 = vunpack.c.l.b16 %v77
  %v158 = vunpack.c.l.b16 %v78
  %v159 = vunpack.c.l.b16 %v79
  %v160 = vpack.c.b16 %v145, %v144
  %v161 = vpack.c.b16 %v147, %v146
  %v162 = vpack.c.b16 %v149, %v148
  %v163 = vpack.c.b16 %v151, %v150
  %v164 = vpack.c.b16 %v153, %v152
  %v165 = vpack.c.b16 %v155, %v154
  %v166 = vpack.c.b16 %v157, %v156
  %v167 = vpack.c.b16 %v159, %v158
  %176 = vmatprep.subr.bf16.mxu0 0
  %177 = vmatpush1.bf16.msra.mxu0 %v160
  %178 = vmatprep.subr.bf16.mxu0 0
  %179 = vmatpush1.bf16.msra.mxu0 %v161
  %180 = vmatprep.subr.bf16.mxu0 0
  %181 = vmatpush1.bf16.msra.mxu0 %v162
  %182 = vmatprep.subr.bf16.mxu0 0
  %183 = vmatpush1.bf16.msra.mxu0 %v163
  %184 = vmatprep.subr.bf16.mxu0 0
  %185 = vmatpush1.bf16.msra.mxu0 %v164
  %186 = vmatprep.subr.bf16.mxu0 0
  %187 = vmatpush1.bf16.msra.mxu0 %v165
  %188 = vmatprep.subr.bf16.mxu0 0
  %189 = vmatpush1.bf16.msra.mxu0 %v166
  %190 = vmatprep.subr.bf16.mxu0 0
  %191 = vmatpush1.bf16.msra.mxu0 %v167
  %192 = vmatprep.subr.bf16.mxu0 0
  %193 = vmatpush1.bf16.msra.mxu0 0
  %194 = vmatprep.subr.bf16.mxu0 0
  %195 = vmatpush1.bf16.msra.mxu0 0
  %196 = vmatprep.subr.bf16.mxu0 0
  %197 = vmatpush1.bf16.msra.mxu0 0
  %198 = vmatprep.subr.bf16.mxu0 0
  %199 = vmatpush1.bf16.msra.mxu0 0
  %200 = vmatprep.subr.bf16.mxu0 0
  %201 = vmatpush1.bf16.msra.mxu0 0
  %202 = vmatprep.subr.bf16.mxu0 0
  %203 = vmatpush1.bf16.msra.mxu0 0
  %204 = vmatprep.subr.bf16.mxu0 0
  %205 = vmatpush1.bf16.msra.mxu0 0
  %206 = vmatprep.subr.bf16.mxu0 0
  %207 = vmatpush1.bf16.msra.mxu0 0
  %208 = vmatprep.mubr.bf16.mxu0 0
  %209 = vmatmul.mubr.bf16.gmra.mrb[0].mxu0 %v112
  %v210 = vpop.f32.mrb[0].mxu0
  %v211 = vadd.f32 0.0, %v210
  %v212 = vpop.f32.mrb[0].mxu0
  %v213 = vpop.f32.mrb[0].mxu0
  %v214 = vadd.f32 0.0, %v213
  %v215 = vpop.f32.mrb[0].mxu0
  %216 = vmatprep.mubr.bf16.mxu0 0
  %217 = vmatmul.mubr.bf16.gmra.mrb[0].mxu0 %v113
  %v218 = vpop.f32.mrb[0].mxu0
  %v219 = vadd.f32 0.0, %v218
  %v220 = vpop.f32.mrb[0].mxu0
  %v221 = vpop.f32.mrb[0].mxu0
  %v222 = vadd.f32 0.0, %v221
  %v223 = vpop.f32.mrb[0].mxu0
  %224 = vmatprep.mubr.bf16.mxu0 0
  %225 = vmatmul.mubr.bf16.gmra.mrb[0].mxu0 %v114
  %v226 = vpop.f32.mrb[0].mxu0
  %v227 = vadd.f32 0.0, %v226
  %v228 = vpop.f32.mrb[0].mxu0
  %v229 = vpop.f32.mrb[0].mxu0
  %v230 = vadd.f32 0.0, %v229
  %v231 = vpop.f32.mrb[0].mxu0
  %232 = vmatprep.mubr.bf16.mxu0 0
  %233 = vmatmul.mubr.bf16.gmra.mrb[0].mxu0 %v115
  %v234 = vpop.f32.mrb[0].mxu0
  %v235 = vadd.f32 0.0, %v234
  %v236 = vpop.f32.mrb[0].mxu0
  %v237 = vpop.f32.mrb[0].mxu0
  %v238 = vadd.f32 0.0, %v237
  %v239 = vpop.f32.mrb[0].mxu0
  %240 = vmatprep.mubr.bf16.mxu0 0
  %241 = vmatmul.mubr.bf16.gmra.mrb[0].mxu0 %v116
  %v242 = vpop.f32.mrb[0].mxu0
  %v243 = vadd.f32 0.0, %v242
  %v244 = vpop.f32.mrb[0].mxu0
  %v245 = vpop.f32.mrb[0].mxu0
  %v246 = vadd.f32 0.0, %v245
  %v247 = vpop.f32.mrb[0].mxu0
  %248 = vmatprep.mubr.bf16.mxu0 0
  %249 = vmatmul.mubr.bf16.gmra.mrb[0].mxu0 %v117
  %v250 = vpop.f32.mrb[0].mxu0
  %v251 = vadd.f32 0.0, %v250
  %v252 = vpop.f32.mrb[0].mxu0
  %v253 = vpop.f32.mrb[0].mxu0
  %v254 = vadd.f32 0.0, %v253
  %v255 = vpop.f32.mrb[0].mxu0
  %256 = vmatprep.mubr.bf16.mxu0 0
  %257 = vmatmul.mubr.bf16.gmra.mrb[0].mxu0 %v118
  %v258 = vpop.f32.mrb[0].mxu0
  %v259 = vadd.f32 0.0, %v258
  %v260 = vpop.f32.mrb[0].mxu0
  %v261 = vpop.f32.mrb[0].mxu0
  %v262 = vadd.f32 0.0, %v261
  %v263 = vpop.f32.mrb[0].mxu0
  %264 = vmatprep.mubr.bf16.mxu0 0
  %265 = vmatmul.mubr.bf16.gmra.mrb[0].mxu0 %v119
  %v266 = vpop.f32.mrb[0].mxu0
  %v267 = vadd.f32 0.0, %v266
  %v268 = vpop.f32.mrb[0].mxu0
  %v269 = vpop.f32.mrb[0].mxu0
  %v270 = vadd.f32 0.0, %v269
  %v271 = vpop.f32.mrb[0].mxu0
  %272 = vdwg.mxu0
  %v273 = vadd.f32 %v32, %v211
  %v274 = vadd.f32 %v33, %v214
  %v275 = vadd.f32 %v34, %v219
  %v276 = vadd.f32 %v35, %v222
  %v277 = vadd.f32 %v36, %v227
  %v278 = vadd.f32 %v37, %v230
  %v279 = vadd.f32 %v38, %v235
  %v280 = vadd.f32 %v39, %v238
  %v281 = vadd.f32 %v40, %v243
  %v282 = vadd.f32 %v41, %v246
  %v283 = vadd.f32 %v42, %v251
  %v284 = vadd.f32 %v43, %v254
  %v285 = vadd.f32 %v44, %v259
  %v286 = vadd.f32 %v45, %v262
  %v287 = vadd.f32 %v46, %v267
  %v288 = vadd.f32 %v47, %v270
  %289 = vst [vmem:[#allocation2] sm:$0xff] %v273
  %290 = vst [vmem:[#allocation2 + $0x8] sm:$0xff] %v274
  %291 = vst [vmem:[#allocation2 + $0x10] sm:$0xff] %v275
  %292 = vst [vmem:[#allocation2 + $0x18] sm:$0xff] %v276
  %293 = vst [vmem:[#allocation2 + $0x20] sm:$0xff] %v277
  %294 = vst [vmem:[#allocation2 + $0x28] sm:$0xff] %v278
  %295 = vst [vmem:[#allocation2 + $0x30] sm:$0xff] %v279
  %296 = vst [vmem:[#allocation2 + $0x38] sm:$0xff] %v280
  %297 = vst [vmem:[#allocation2 + $0x40] sm:$0xff] %v281
  %298 = vst [vmem:[#allocation2 + $0x48] sm:$0xff] %v282
  %299 = vst [vmem:[#allocation2 + $0x50] sm:$0xff] %v283
  %300 = vst [vmem:[#allocation2 + $0x58] sm:$0xff] %v284
  %301 = vst [vmem:[#allocation2 + $0x60] sm:$0xff] %v285
  %302 = vst [vmem:[#allocation2 + $0x68] sm:$0xff] %v286
  %303 = vst [vmem:[#allocation2 + $0x70] sm:$0xff] %v287
  %304 = vst [vmem:[#allocation2 + $0x78] sm:$0xff] %v288
  // Predicated region
  $region14: #{clgadn_forward.8} parent=0 // pred_check
    %p305 = pneg %p12
  $region15: #{clgadn_forward.8} parent=0 // pred_check_branch
    %307 = sbr.rel (%p305) target = $region17
  $region16: #{clgadn_forward.8} parent=0 // pred_region
    %v308 = vld [vmem:[#allocation2] sm:$0xff]
    %v309 = vld [vmem:[#allocation2 + $0x8] sm:$0xff]
    %v310 = vld [vmem:[#allocation2 + $0x10] sm:$0xff]
    %v311 = vld [vmem:[#allocation2 + $0x18] sm:$0xff]
    %v312 = vld [vmem:[#allocation2 + $0x20] sm:$0xff]
    %v313 = vld [vmem:[#allocation2 + $0x28] sm:$0xff]
    %v314 = vld [vmem:[#allocation2 + $0x30] sm:$0xff]
    %v315 = vld [vmem:[#allocation2 + $0x38] sm:$0xff]
    %v316 = vld [vmem:[#allocation2 + $0x40] sm:$0xff]
    %v317 = vld [vmem:[#allocation2 + $0x48] sm:$0xff]
    %v318 = vld [vmem:[#allocation2 + $0x50] sm:$0xff]
    %v319 = vld [vmem:[#allocation2 + $0x58] sm:$0xff]
    %v320 = vld [vmem:[#allocation2 + $0x60] sm:$0xff]
    %v321 = vld [vmem:[#allocation2 + $0x68] sm:$0xff]
    %v322 = vld [vmem:[#allocation2 + $0x70] sm:$0xff]
    %v323 = vld [vmem:[#allocation2 + $0x78] sm:$0xff]
    %v324 = vpack.c.bf16 %v309, %v308
    %v325 = vpack.c.bf16 %v311, %v310
    %v326 = vpack.c.bf16 %v313, %v312
    %v327 = vpack.c.bf16 %v315, %v314
    %v328 = vpack.c.bf16 %v317, %v316
    %v329 = vpack.c.bf16 %v319, %v318
    %v330 = vpack.c.bf16 %v321, %v320
    %v331 = vpack.c.bf16 %v323, %v322
    %v340 = vunpack.c.l.b16 %v324
    %v341 = vunpack.c.h.b16 %v324
    %v342 = vunpack.c.l.b16 %v325
    %v343 = vunpack.c.h.b16 %v325
    %v344 = vunpack.c.l.b16 %v326
    %v345 = vunpack.c.h.b16 %v326
    %v346 = vunpack.c.l.b16 %v327
    %v347 = vunpack.c.h.b16 %v327
    %v348 = vunpack.c.l.b16 %v328
    %v349 = vunpack.c.h.b16 %v328
    %v350 = vunpack.c.l.b16 %v329
    %v351 = vunpack.c.h.b16 %v329
    %v352 = vunpack.c.l.b16 %v330
    %v353 = vunpack.c.h.b16 %v330
    %v354 = vunpack.c.l.b16 %v331
    %v355 = vunpack.c.h.b16 %v331
    %v356 = vpack.c.b16 %v340, %v340
    %v357 = vpack.c.b16 %v341, %v341
    %v358 = vpack.c.b16 %v342, %v342
    %v359 = vpack.c.b16 %v343, %v343
    %v360 = vpack.c.b16 %v344, %v344
    %v361 = vpack.c.b16 %v345, %v345
    %v362 = vpack.c.b16 %v346, %v346
    %v363 = vpack.c.b16 %v347, %v347
    %v364 = vpack.c.b16 %v348, %v348
    %v365 = vpack.c.b16 %v349, %v349
    %v366 = vpack.c.b16 %v350, %v350
    %v367 = vpack.c.b16 %v351, %v351
    %v368 = vpack.c.b16 %v352, %v352
    %v369 = vpack.c.b16 %v353, %v353
    %v370 = vpack.c.b16 %v354, %v354
    %v371 = vpack.c.b16 %v355, %v355
    %388 = vst [vmem:[%s2] sm:$0xf] %v356
    %389 = vst [vmem:[%s2 + $0x4] sm:$0xf] %v357
    %390 = vst [vmem:[%s2 + $0x8] sm:$0xf] %v358
    %391 = vst [vmem:[%s2 + $0xc] sm:$0xf] %v359
    %392 = vst [vmem:[%s2 + $0x10] sm:$0xf] %v360
    %393 = vst [vmem:[%s2 + $0x14] sm:$0xf] %v361
    %394 = vst [vmem:[%s2 + $0x18] sm:$0xf] %v362
    %395 = vst [vmem:[%s2 + $0x1c] sm:$0xf] %v363
    %396 = vst [vmem:[%s2 + $0x20] sm:$0xf] %v364
    %397 = vst [vmem:[%s2 + $0x24] sm:$0xf] %v365
    %398 = vst [vmem:[%s2 + $0x28] sm:$0xf] %v366
    %399 = vst [vmem:[%s2 + $0x2c] sm:$0xf] %v367
    %400 = vst [vmem:[%s2 + $0x30] sm:$0xf] %v368
    %401 = vst [vmem:[%s2 + $0x34] sm:$0xf] %v369
    %402 = vst [vmem:[%s2 + $0x38] sm:$0xf] %v370
    %403 = vst [vmem:[%s2 + $0x3c] sm:$0xf] %v371
  $region17: #{clgadn_forward.8} parent=0 // pred_fallthru
    _
  // Predicated region
  $region18: #{clgadn_forward.8} parent=0 // pred_check
    _
  $region19: #{clgadn_forward.8} parent=0 // pred_check_branch
    %405 = sbr.rel (0) target = $region21
  $region20: #{clgadn_forward.8} parent=0 // pred_region
    _
  $region21: #{clgadn_forward.8} parent=0 // pred_fallthru
    _
  // Predicated region
  $region22: #{clgadn_forward.8} parent=0 // pred_check
    _
  $region23: #{clgadn_forward.8} parent=0 // pred_check_branch
    %407 = sbr.rel (0) target = $region25
  $region24: #{clgadn_forward.8} parent=0 // pred_region
    _
  $region25: #{clgadn_forward.8} parent=0 // pred_fallthru
    _

// kernel: clgadn_forward.10
$region0: #{clgadn_forward.10}
  #allocation0 [shape = 'u32[]', space=smem, size = 0x4, offset = 0x4, fixed_abs, tag = 'smem constant byte address 0x4 - core index']
  #allocation1 [shape = 'u32[144,128]{1,0:T(1,128)}', space=vmem, size = 0x12000, scoped, tag = 'internal scratch']
  %s0 = inlined_call_operand.vmem [shape: f32[64,32], index: 0, kind: input, shape index: {}]
  %s1 = inlined_call_operand.vmem [shape: f32[16,16,16], index: 1, kind: input, shape index: {}]
  %s2 = inlined_call_operand.vmem [shape: f32[32,32], index: 2, kind: input, shape index: {}]
  %s3 = inlined_call_operand.vmem [shape: f32[1,32], index: 3, kind: input, shape index: {}]
  %s4 = inlined_call_operand.vmem [shape: f32[32,32], index: 4, kind: input, shape index: {}]
  %s5 = inlined_call_operand.vmem [shape: f32[1,32], index: 5, kind: input, shape index: {}]
  %s6 = inlined_call_operand.vmem [shape: f32[32,32], index: 6, kind: input, shape index: {}]
  %s7 = inlined_call_operand.vmem [shape: f32[1,32], index: 7, kind: input, shape index: {}]
  %s8 = inlined_call_operand.vmem [shape: f32[1,32], index: 8, kind: input, shape index: {}]
  %s9 = inlined_call_operand.vmem [shape: f32[1,32], index: 9, kind: input, shape index: {}]
  %s10 = inlined_call_operand.vmem [shape: f32[32,64], index: 10, kind: input, shape index: {}]
  %s11 = inlined_call_operand.vmem [shape: f32[1,64], index: 11, kind: input, shape index: {}]
  %s12 = inlined_call_operand.vmem [shape: f32[64,32], index: 12, kind: input, shape index: {}]
  %s13 = inlined_call_operand.vmem [shape: f32[1,32], index: 13, kind: input, shape index: {}]
  %s14 = inlined_call_operand.vmem [shape: f32[1,32], index: 14, kind: input, shape index: {}]
  %s15 = inlined_call_operand.vmem [shape: f32[1,32], index: 15, kind: input, shape index: {}]
  %s16 = inlined_call_operand.vmem [shape: f32[64,32], index: 16, kind: output, shape index: {0}]
  %s17 = inlined_call_operand.vmem [shape: f32[16,256], index: 17, kind: output, shape index: {1}]
  %18 = xla_tuple %s16, %s17
  %s19 = sld [smem:[#allocation0]]
  $region82: #{clgadn_forward.10} parent=0
    _
  %s21 = ssub.s32 1, %s19
  %s22 = scalar_select 0, %s21, %s19
  // Predicated region
  $region2: #{clgadn_forward.10} parent=0 // pred_check
    _
  $region3: #{clgadn_forward.10} parent=0 // pred_check_branch
    %24 = sbr.rel (0) target = $region5
  $region4: #{clgadn_forward.10} parent=0 // pred_region
    _
  $region5: #{clgadn_forward.10} parent=0 // pred_fallthru
    _
  // Predicated region
  $region6: #{clgadn_forward.10} parent=0 // pred_check
    _
  $region7: #{clgadn_forward.10} parent=0 // pred_check_branch
    %26 = sbr.rel (0) target = $region9
  $region8: #{clgadn_forward.10} parent=0 // pred_region
    _
  $region9: #{clgadn_forward.10} parent=0 // pred_fallthru
    _
  // Predicated region
  $region10: #{clgadn_forward.10} parent=0 // pred_check
    _
  $region11: #{clgadn_forward.10} parent=0 // pred_check_branch
    %28 = sbr.rel (0) target = $region13
  $region12: #{clgadn_forward.10} parent=0 // pred_region
    _
  $region13: #{clgadn_forward.10} parent=0 // pred_fallthru
    _
  // Predicated region
  $region14: #{clgadn_forward.10} parent=0 // pred_check
    _
  $region15: #{clgadn_forward.10} parent=0 // pred_check_branch
    %30 = sbr.rel (0) target = $region17
  $region16: #{clgadn_forward.10} parent=0 // pred_region
    _
  $region17: #{clgadn_forward.10} parent=0 // pred_fallthru
    _
  // Predicated region
  $region18: #{clgadn_forward.10} parent=0 // pred_check
    _
  $region19: #{clgadn_forward.10} parent=0 // pred_check_branch
    %32 = sbr.rel (0) target = $region21
  $region20: #{clgadn_forward.10} parent=0 // pred_region
    _
  $region21: #{clgadn_forward.10} parent=0 // pred_fallthru
    _
  // Predicated region
  $region22: #{clgadn_forward.10} parent=0 // pred_check
    _
  $region23: #{clgadn_forward.10} parent=0 // pred_check_branch
    %34 = sbr.rel (0) target = $region25
  $region24: #{clgadn_forward.10} parent=0 // pred_region
    _
  $region25: #{clgadn_forward.10} parent=0 // pred_fallthru
    _
  // Predicated region
  $region26: #{clgadn_forward.10} parent=0 // pred_check
    _
  $region27: #{clgadn_forward.10} parent=0 // pred_check_branch
    %36 = sbr.rel (0) target = $region29
  $region28: #{clgadn_forward.10} parent=0 // pred_region
    _
  $region29: #{clgadn_forward.10} parent=0 // pred_fallthru
    _
  // Predicated region
  $region30: #{clgadn_forward.10} parent=0 // pred_check
    _
  $region31: #{clgadn_forward.10} parent=0 // pred_check_branch
    %38 = sbr.rel (0) target = $region33
  $region32: #{clgadn_forward.10} parent=0 // pred_region
    _
  $region33: #{clgadn_forward.10} parent=0 // pred_fallthru
    _
  // Predicated region
  $region34: #{clgadn_forward.10} parent=0 // pred_check
    _
  $region35: #{clgadn_forward.10} parent=0 // pred_check_branch
    %40 = sbr.rel (0) target = $region37
  $region36: #{clgadn_forward.10} parent=0 // pred_region
    _
  $region37: #{clgadn_forward.10} parent=0 // pred_fallthru
    _
  // Predicated region
  $region38: #{clgadn_forward.10} parent=0 // pred_check
    _
  $region39: #{clgadn_forward.10} parent=0 // pred_check_branch
    %42 = sbr.rel (0) target = $region41
  $region40: #{clgadn_forward.10} parent=0 // pred_region
    _
  $region41: #{clgadn_forward.10} parent=0 // pred_fallthru
    _
  // Predicated region
  $region42: #{clgadn_forward.10} parent=0 // pred_check
    _
  $region43: #{clgadn_forward.10} parent=0 // pred_check_branch
    %44 = sbr.rel (0) target = $region45
  $region44: #{clgadn_forward.10} parent=0 // pred_region
    _
  $region45: #{clgadn_forward.10} parent=0 // pred_fallthru
    _
  // Predicated region
  $region46: #{clgadn_forward.10} parent=0 // pred_check
    _
  $region47: #{clgadn_forward.10} parent=0 // pred_check_branch
    %46 = sbr.rel (0) target = $region49
  $region48: #{clgadn_forward.10} parent=0 // pred_region
    _
  $region49: #{clgadn_forward.10} parent=0 // pred_fallthru
    _
  // Predicated region
  $region50: #{clgadn_forward.10} parent=0 // pred_check
    _
  $region51: #{clgadn_forward.10} parent=0 // pred_check_branch
    %48 = sbr.rel (0) target = $region53
  $region52: #{clgadn_forward.10} parent=0 // pred_region
    _
  $region53: #{clgadn_forward.10} parent=0 // pred_fallthru
    _
  // Predicated region
  $region54: #{clgadn_forward.10} parent=0 // pred_check
    _
  $region55: #{clgadn_forward.10} parent=0 // pred_check_branch
    %50 = sbr.rel (0) target = $region57
  $region56: #{clgadn_forward.10} parent=0 // pred_region
    _
  $region57: #{clgadn_forward.10} parent=0 // pred_fallthru
    _
  // Predicated region
  $region58: #{clgadn_forward.10} parent=0 // pred_check
    _
  $region59: #{clgadn_forward.10} parent=0 // pred_check_branch
    %52 = sbr.rel (0) target = $region61
  $region60: #{clgadn_forward.10} parent=0 // pred_region
    _
  $region61: #{clgadn_forward.10} parent=0 // pred_fallthru
    _
  // Predicated region
  $region62: #{clgadn_forward.10} parent=0 // pred_check
    _
  $region63: #{clgadn_forward.10} parent=0 // pred_check_branch
    %54 = sbr.rel (0) target = $region65
  $region64: #{clgadn_forward.10} parent=0 // pred_region
    _
  $region65: #{clgadn_forward.10} parent=0 // pred_fallthru
    _
  %v55 = vld [vmem:[%s0] sm:$0xff]
  %v56 = vld [vmem:[%s0 + $0x8] sm:$0xff]
  %v57 = vld [vmem:[%s0 + $0x10] sm:$0xff]
  %v58 = vld [vmem:[%s0 + $0x18] sm:$0xff]
  %v59 = vld [vmem:[%s0 + $0x20] sm:$0xff]
  %v60 = vld [vmem:[%s0 + $0x28] sm:$0xff]
  %v61 = vld [vmem:[%s0 + $0x30] sm:$0xff]
  %v62 = vld [vmem:[%s0 + $0x38] sm:$0xff]
  %v63 = vld [vmem:[%s2] sm:$0xff]
  %v64 = vld [vmem:[%s2 + $0x8] sm:$0xff]
  %v65 = vld [vmem:[%s2 + $0x10] sm:$0xff]
  %v66 = vld [vmem:[%s2 + $0x18] sm:$0xff]
  %v67 = vld [vmem:[%s3] sm:$0x1]
  %v69 = vlaneseq
  %v70 = vshrl.u32 %v69, 7
  %v71 = vsub.s32 0, %v70
  %v72 = vrot.slane %v67, %v71
  %vm74 = vcmask 261120
  %v76 = vsel %vm74, %v55, 0
  %v79 = vsel %vm74, %v56, 0
  %v82 = vsel %vm74, %v57, 0
  %v85 = vsel %vm74, %v58, 0
  %v88 = vsel %vm74, %v59, 0
  %v91 = vsel %vm74, %v60, 0
  %v94 = vsel %vm74, %v61, 0
  %v97 = vsel %vm74, %v62, 0
  %99 = vmatprep.subr.mxu0 0.0
  %100 = vmatpush1.msra.mxu0 %v63
  %101 = vmatprep.subr.mxu0 0.0
  %102 = vmatpush1.msra.mxu0 %v64
  %103 = vmatprep.subr.mxu0 0.0
  %104 = vmatpush1.msra.mxu0 %v65
  %105 = vmatprep.subr.mxu0 0.0
  %106 = vmatpush1.msra.mxu0 %v66
  %107 = vmatprep.subr.mxu0 0.0
  %108 = vmatpush1.msra.mxu0 0.0
  %109 = vmatprep.subr.mxu0 0.0
  %110 = vmatpush1.msra.mxu0 0.0
  %111 = vmatprep.subr.mxu0 0.0
  %112 = vmatpush1.msra.mxu0 0.0
  %113 = vmatprep.subr.mxu0 0.0
  %114 = vmatpush1.msra.mxu0 0.0
  %115 = vmatprep.subr.mxu0 0.0
  %116 = vmatpush1.msra.mxu0 0.0
  %117 = vmatprep.subr.mxu0 0.0
  %118 = vmatpush1.msra.mxu0 0.0
  %119 = vmatprep.subr.mxu0 0.0
  %120 = vmatpush1.msra.mxu0 0.0
  %121 = vmatprep.subr.mxu0 0.0
  %122 = vmatpush1.msra.mxu0 0.0
  %123 = vmatprep.subr.mxu0 0.0
  %124 = vmatpush1.msra.mxu0 0.0
  %125 = vmatprep.subr.mxu0 0.0
  %126 = vmatpush1.msra.mxu0 0.0
  %127 = vmatprep.subr.mxu0 0.0
  %128 = vmatpush1.msra.mxu0 0.0
  %129 = vmatprep.subr.mxu0 0.0
  %130 = vmatpush1.msra.mxu0 0.0
  %131 = vmatprep.subr.mxu0 0.0
  %132 = vmatpush1.msra.mxu0 0.0
  %133 = vmatprep.subr.mxu0 0.0
  %134 = vmatpush1.msra.mxu0 0.0
  %135 = vmatprep.subr.mxu0 0.0
  %136 = vmatpush1.msra.mxu0 0.0
  %137 = vmatprep.subr.mxu0 0.0
  %138 = vmatpush1.msra.mxu0 0.0
  %139 = vmatprep.subr.mxu0 0.0
  %140 = vmatpush1.msra.mxu0 0.0
  %141 = vmatprep.subr.mxu0 0.0
  %142 = vmatpush1.msra.mxu0 0.0
  %143 = vmatprep.subr.mxu0 0.0
  %144 = vmatpush1.msra.mxu0 0.0
  %145 = vmatprep.subr.mxu0 0.0
  %146 = vmatpush1.msra.mxu0 0.0
  %147 = vmatprep.subr.mxu0 0.0
  %148 = vmatpush1.msra.mxu0 0.0
  %149 = vmatprep.subr.mxu0 0.0
  %150 = vmatpush1.msra.mxu0 0.0
  %151 = vmatprep.subr.mxu0 0.0
  %152 = vmatpush1.msra.mxu0 0.0
  %153 = vmatprep.subr.mxu0 0.0
  %154 = vmatpush1.msra.mxu0 0.0
  %155 = vmatprep.subr.mxu0 0.0
  %156 = vmatpush1.msra.mxu0 0.0
  %157 = vmatprep.subr.mxu0 0.0
  %158 = vmatpush1.msra.mxu0 0.0
  %159 = vmatprep.subr.mxu0 0.0
  %160 = vmatpush1.msra.mxu0 0.0
  %161 = vmatprep.subr.mxu0 0.0
  %162 = vmatpush1.msra.mxu0 0.0
  %163 = vmatprep.mubr.f32.mxu0 0.0
  %164 = vmatmul.mubr.f32.gmra.mrb[0].mxu0 %v76
  %v165 = vpop.f32.mrb[0].mxu0
  %v166 = vadd.f32 %v72, %v165
  %v167 = vpop.f32.mrb[0].mxu0
  %168 = vmatprep.mubr.f32.mxu0 0.0
  %169 = vmatmul.mubr.f32.gmra.mrb[0].mxu0 %v79
  %v170 = vpop.f32.mrb[0].mxu0
  %v171 = vadd.f32 %v72, %v170
  %v172 = vpop.f32.mrb[0].mxu0
  %173 = vmatprep.mubr.f32.mxu0 0.0
  %174 = vmatmul.mubr.f32.gmra.mrb[0].mxu0 %v82
  %v175 = vpop.f32.mrb[0].mxu0
  %v176 = vadd.f32 %v72, %v175
  %v177 = vpop.f32.mrb[0].mxu0
  %178 = vmatprep.mubr.f32.mxu0 0.0
  %179 = vmatmul.mubr.f32.gmra.mrb[0].mxu0 %v85
  %v180 = vpop.f32.mrb[0].mxu0
  %v181 = vadd.f32 %v72, %v180
  %v182 = vpop.f32.mrb[0].mxu0
  %183 = vmatprep.mubr.f32.mxu0 0.0
  %184 = vmatmul.mubr.f32.gmra.mrb[0].mxu0 %v88
  %v185 = vpop.f32.mrb[0].mxu0
  %v186 = vadd.f32 %v72, %v185
  %v187 = vpop.f32.mrb[0].mxu0
  %188 = vmatprep.mubr.f32.mxu0 0.0
  %189 = vmatmul.mubr.f32.gmra.mrb[0].mxu0 %v91
  %v190 = vpop.f32.mrb[0].mxu0
  %v191 = vadd.f32 %v72, %v190
  %v192 = vpop.f32.mrb[0].mxu0
  %193 = vmatprep.mubr.f32.mxu0 0.0
  %194 = vmatmul.mubr.f32.gmra.mrb[0].mxu0 %v94
  %v195 = vpop.f32.mrb[0].mxu0
  %v196 = vadd.f32 %v72, %v195
  %v197 = vpop.f32.mrb[0].mxu0
  %198 = vmatprep.mubr.f32.mxu0 0.0
  %199 = vmatmul.mubr.f32.gmra.mrb[0].mxu0 %v97
  %v200 = vpop.f32.mrb[0].mxu0
  %v201 = vadd.f32 %v72, %v200
  %v202 = vpop.f32.mrb[0].mxu0
  %203 = vdwg.mxu0
  %v204 = vld [vmem:[%s4] sm:$0xff]
  %v205 = vld [vmem:[%s4 + $0x8] sm:$0xff]
  %v206 = vld [vmem:[%s4 + $0x10] sm:$0xff]
  %v207 = vld [vmem:[%s4 + $0x18] sm:$0xff]
  %v208 = vld [vmem:[%s5] sm:$0x1]
  %v210 = vlaneseq
  %v211 = vshrl.u32 %v210, 7
  %v212 = vsub.s32 0, %v211
  %v213 = vrot.slane %v208, %v212
  %215 = vmatprep.subr.mxu0 0.0
  %216 = vmatpush1.msra.mxu0 %v204
  %217 = vmatprep.subr.mxu0 0.0
  %218 = vmatpush1.msra.mxu0 %v205
  %219 = vmatprep.subr.mxu0 0.0
  %220 = vmatpush1.msra.mxu0 %v206
  %221 = vmatprep.subr.mxu0 0.0
  %222 = vmatpush1.msra.mxu0 %v207
  %223 = vmatprep.subr.mxu0 0.0
  %224 = vmatpush1.msra.mxu0 0.0
  %225 = vmatprep.subr.mxu0 0.0
  %226 = vmatpush1.msra.mxu0 0.0
  %227 = vmatprep.subr.mxu0 0.0
  %228 = vmatpush1.msra.mxu0 0.0
  %229 = vmatprep.subr.mxu0 0.0
  %230 = vmatpush1.msra.mxu0 0.0
  %231 = vmatprep.subr.mxu0 0.0
  %232 = vmatpush1.msra.mxu0 0.0
  %233 = vmatprep.subr.mxu0 0.0
  %234 = vmatpush1.msra.mxu0 0.0
  %235 = vmatprep.subr.mxu0 0.0
  %236 = vmatpush1.msra.mxu0 0.0
  %237 = vmatprep.subr.mxu0 0.0
  %238 = vmatpush1.msra.mxu0 0.0
  %239 = vmatprep.subr.mxu0 0.0
  %240 = vmatpush1.msra.mxu0 0.0
  %241 = vmatprep.subr.mxu0 0.0
  %242 = vmatpush1.msra.mxu0 0.0
  %243 = vmatprep.subr.mxu0 0.0
  %244 = vmatpush1.msra.mxu0 0.0
  %245 = vmatprep.subr.mxu0 0.0
  %246 = vmatpush1.msra.mxu0 0.0
  %247 = vmatprep.subr.mxu0 0.0
  %248 = vmatpush1.msra.mxu0 0.0
  %249 = vmatprep.subr.mxu0 0.0
  %250 = vmatpush1.msra.mxu0 0.0
  %251 = vmatprep.subr.mxu0 0.0
  %252 = vmatpush1.msra.mxu0 0.0
  %253 = vmatprep.subr.mxu0 0.0
  %254 = vmatpush1.msra.mxu0 0.0
  %255 = vmatprep.subr.mxu0 0.0
  %256 = vmatpush1.msra.mxu0 0.0
  %257 = vmatprep.subr.mxu0 0.0
  %258 = vmatpush1.msra.mxu0 0.0
  %259 = vmatprep.subr.mxu0 0.0
  %260 = vmatpush1.msra.mxu0 0.0
  %261 = vmatprep.subr.mxu0 0.0
  %262 = vmatpush1.msra.mxu0 0.0
  %263 = vmatprep.subr.mxu0 0.0
  %264 = vmatpush1.msra.mxu0 0.0
  %265 = vmatprep.subr.mxu0 0.0
  %266 = vmatpush1.msra.mxu0 0.0
  %267 = vmatprep.subr.mxu0 0.0
  %268 = vmatpush1.msra.mxu0 0.0
  %269 = vmatprep.subr.mxu0 0.0
  %270 = vmatpush1.msra.mxu0 0.0
  %271 = vmatprep.subr.mxu0 0.0
  %272 = vmatpush1.msra.mxu0 0.0
  %273 = vmatprep.subr.mxu0 0.0
  %274 = vmatpush1.msra.mxu0 0.0
  %275 = vmatprep.subr.mxu0 0.0
  %276 = vmatpush1.msra.mxu0 0.0
  %277 = vmatprep.subr.mxu0 0.0
  %278 = vmatpush1.msra.mxu0 0.0
  %279 = vmatprep.mubr.f32.mxu0 0.0
  %280 = vmatmul.mubr.f32.gmra.mrb[0].mxu0 %v76
  %v281 = vpop.f32.mrb[0].mxu0
  %v282 = vadd.f32 %v213, %v281
  %v283 = vpop.f32.mrb[0].mxu0
  %284 = vmatprep.mubr.f32.mxu0 0.0
  %285 = vmatmul.mubr.f32.gmra.mrb[0].mxu0 %v79
  %v286 = vpop.f32.mrb[0].mxu0
  %v287 = vadd.f32 %v213, %v286
  %v288 = vpop.f32.mrb[0].mxu0
  %289 = vmatprep.mubr.f32.mxu0 0.0
  %290 = vmatmul.mubr.f32.gmra.mrb[0].mxu0 %v82
  %v291 = vpop.f32.mrb[0].mxu0
  %v292 = vadd.f32 %v213, %v291
  %v293 = vpop.f32.mrb[0].mxu0
  %294 = vmatprep.mubr.f32.mxu0 0.0
  %295 = vmatmul.mubr.f32.gmra.mrb[0].mxu0 %v85
  %v296 = vpop.f32.mrb[0].mxu0
  %v297 = vadd.f32 %v213, %v296
  %v298 = vpop.f32.mrb[0].mxu0
  %299 = vmatprep.mubr.f32.mxu0 0.0
  %300 = vmatmul.mubr.f32.gmra.mrb[0].mxu0 %v88
  %v301 = vpop.f32.mrb[0].mxu0
  %v302 = vadd.f32 %v213, %v301
  %v303 = vpop.f32.mrb[0].mxu0
  %304 = vmatprep.mubr.f32.mxu0 0.0
  %305 = vmatmul.mubr.f32.gmra.mrb[0].mxu0 %v91
  %v306 = vpop.f32.mrb[0].mxu0
  %v307 = vadd.f32 %v213, %v306
  %v308 = vpop.f32.mrb[0].mxu0
  %309 = vmatprep.mubr.f32.mxu0 0.0
  %310 = vmatmul.mubr.f32.gmra.mrb[0].mxu0 %v94
  %v311 = vpop.f32.mrb[0].mxu0
  %v312 = vadd.f32 %v213, %v311
  %v313 = vpop.f32.mrb[0].mxu0
  %314 = vmatprep.mubr.f32.mxu0 0.0
  %315 = vmatmul.mubr.f32.gmra.mrb[0].mxu0 %v97
  %v316 = vpop.f32.mrb[0].mxu0
  %v317 = vadd.f32 %v213, %v316
  %v318 = vpop.f32.mrb[0].mxu0
  %319 = vdwg.mxu0
  %328 = vrot.lane.b32.xlu0 %v166, 120
  %v329 = vpop.permute.xlu0 %328
  %330 = vrot.lane.b32.xlu0 %v171, 120
  %v331 = vpop.permute.xlu0 %330
  %332 = vrot.lane.b32.xlu0 %v176, 120
  %v333 = vpop.permute.xlu0 %332
  %334 = vrot.lane.b32.xlu0 %v181, 120
  %v335 = vpop.permute.xlu0 %334
  %336 = vrot.lane.b32.xlu0 %v186, 120
  %v337 = vpop.permute.xlu0 %336
  %338 = vrot.lane.b32.xlu0 %v191, 120
  %v339 = vpop.permute.xlu0 %338
  %340 = vrot.lane.b32.xlu0 %v196, 120
  %v341 = vpop.permute.xlu0 %340
  %342 = vrot.lane.b32.xlu0 %v201, 120
  %v343 = vpop.permute.xlu0 %342
  %344 = vrot.lane.b32.xlu0 %v166, 112
  %v345 = vpop.permute.xlu0 %344
  %346 = vrot.lane.b32.xlu0 %v171, 112
  %v347 = vpop.permute.xlu0 %346
  %348 = vrot.lane.b32.xlu0 %v176, 112
  %v349 = vpop.permute.xlu0 %348
  %350 = vrot.lane.b32.xlu0 %v181, 112
  %v351 = vpop.permute.xlu0 %350
  %352 = vrot.lane.b32.xlu0 %v186, 112
  %v353 = vpop.permute.xlu0 %352
  %354 = vrot.lane.b32.xlu0 %v191, 112
  %v355 = vpop.permute.xlu0 %354
  %356 = vrot.lane.b32.xlu0 %v196, 112
  %v357 = vpop.permute.xlu0 %356
  %358 = vrot.lane.b32.xlu0 %v201, 112
  %v359 = vpop.permute.xlu0 %358
  %360 = vrot.lane.b32.xlu0 %v166, 104
  %v361 = vpop.permute.xlu0 %360
  %362 = vrot.lane.b32.xlu0 %v171, 104
  %v363 = vpop.permute.xlu0 %362
  %364 = vrot.lane.b32.xlu0 %v176, 104
  %v365 = vpop.permute.xlu0 %364
  %366 = vrot.lane.b32.xlu0 %v181, 104
  %v367 = vpop.permute.xlu0 %366
  %368 = vrot.lane.b32.xlu0 %v186, 104
  %v369 = vpop.permute.xlu0 %368
  %370 = vrot.lane.b32.xlu0 %v191, 104
  %v371 = vpop.permute.xlu0 %370
  %372 = vrot.lane.b32.xlu0 %v196, 104
  %v373 = vpop.permute.xlu0 %372
  %374 = vrot.lane.b32.xlu0 %v201, 104
  %v375 = vpop.permute.xlu0 %374
  %384 = vrot.lane.b32.xlu0 %v282, 120
  %v385 = vpop.permute.xlu0 %384
  %386 = vrot.lane.b32.xlu0 %v287, 120
  %v387 = vpop.permute.xlu0 %386
  %388 = vrot.lane.b32.xlu0 %v292, 120
  %v389 = vpop.permute.xlu0 %388
  %390 = vrot.lane.b32.xlu0 %v297, 120
  %v391 = vpop.permute.xlu0 %390
  %392 = vrot.lane.b32.xlu0 %v302, 120
  %v393 = vpop.permute.xlu0 %392
  %394 = vrot.lane.b32.xlu0 %v307, 120
  %v395 = vpop.permute.xlu0 %394
  %396 = vrot.lane.b32.xlu0 %v312, 120
  %v397 = vpop.permute.xlu0 %396
  %398 = vrot.lane.b32.xlu0 %v317, 120
  %v399 = vpop.permute.xlu0 %398
  %408 = vrot.lane.b32.xlu0 %v282, 112
  %v409 = vpop.permute.xlu0 %408
  %410 = vrot.lane.b32.xlu0 %v287, 112
  %v411 = vpop.permute.xlu0 %410
  %412 = vrot.lane.b32.xlu0 %v292, 112
  %v413 = vpop.permute.xlu0 %412
  %414 = vrot.lane.b32.xlu0 %v297, 112
  %v415 = vpop.permute.xlu0 %414
  %416 = vrot.lane.b32.xlu0 %v302, 112
  %v417 = vpop.permute.xlu0 %416
  %418 = vrot.lane.b32.xlu0 %v307, 112
  %v419 = vpop.permute.xlu0 %418
  %420 = vrot.lane.b32.xlu0 %v312, 112
  %v421 = vpop.permute.xlu0 %420
  %422 = vrot.lane.b32.xlu0 %v317, 112
  %v423 = vpop.permute.xlu0 %422
  %432 = vrot.lane.b32.xlu0 %v282, 104
  %v433 = vpop.permute.xlu0 %432
  %434 = vrot.lane.b32.xlu0 %v287, 104
  %v435 = vpop.permute.xlu0 %434
  %436 = vrot.lane.b32.xlu0 %v292, 104
  %v437 = vpop.permute.xlu0 %436
  %438 = vrot.lane.b32.xlu0 %v297, 104
  %v439 = vpop.permute.xlu0 %438
  %440 = vrot.lane.b32.xlu0 %v302, 104
  %v441 = vpop.permute.xlu0 %440
  %442 = vrot.lane.b32.xlu0 %v307, 104
  %v443 = vpop.permute.xlu0 %442
  %444 = vrot.lane.b32.xlu0 %v312, 104
  %v445 = vpop.permute.xlu0 %444
  %446 = vrot.lane.b32.xlu0 %v317, 104
  %v447 = vpop.permute.xlu0 %446
  %v456 = vlaneseq
  %v457 = vshrl.u32 %v456, 7
  %v458 = vadd.s32 %v457, 8
  %v459 = vlaneseq
  %v460 = vand.u32 %v459, 127
  %vm461 = vcmp.le.s32.totalorder %v460, %v457
  %vm462 = vcmp.le.s32.totalorder %v460, %v458
  %vm463 = vcmp.lt.s32.totalorder %v460, 9
  %vm464 = vmand %vm461, %vm463
  %vm465 = vmand %vm462, %vm463
  %vm466 = vcmask 64512
  %v467 = vsel %vm466, %v166, 0
  %v469 = vsel %vm466, %v171, 0
  %471 = vmatprep.subr.mxu0 0.0
  %472 = vmatpush1.xpose.msra.mxu0 %v467
  %473 = vmatprep.subr.mxu0 0.0
  %474 = vmatpush1.xpose.msra.mxu0 %v469
  %475 = vmatprep.subr.mxu0 0.0
  %476 = vmatpush1.xpose.msra.mxu0 0.0
  %477 = vmatprep.subr.mxu0 0.0
  %478 = vmatpush1.xpose.msra.mxu0 0.0
  %479 = vmatprep.subr.mxu0 0.0
  %480 = vmatpush1.xpose.msra.mxu0 0.0
  %481 = vmatprep.subr.mxu0 0.0
  %482 = vmatpush1.xpose.msra.mxu0 0.0
  %483 = vmatprep.subr.mxu0 0.0
  %484 = vmatpush1.xpose.msra.mxu0 0.0
  %485 = vmatprep.subr.mxu0 0.0
  %486 = vmatpush1.xpose.msra.mxu0 0.0
  %487 = vmatprep.subr.mxu0 0.0
  %488 = vmatpush1.xpose.msra.mxu0 0.0
  %489 = vmatprep.subr.mxu0 0.0
  %490 = vmatpush1.xpose.msra.mxu0 0.0
  %491 = vmatprep.subr.mxu0 0.0
  %492 = vmatpush1.xpose.msra.mxu0 0.0
  %493 = vmatprep.subr.mxu0 0.0
  %494 = vmatpush1.xpose.msra.mxu0 0.0
  %495 = vmatprep.subr.mxu0 0.0
  %496 = vmatpush1.xpose.msra.mxu0 0.0
  %497 = vmatprep.subr.mxu0 0.0
  %498 = vmatpush1.xpose.msra.mxu0 0.0
  %499 = vmatprep.subr.mxu0 0.0
  %500 = vmatpush1.xpose.msra.mxu0 0.0
  %501 = vmatprep.subr.mxu0 0.0
  %502 = vmatpush1.xpose.msra.mxu0 0.0
  %503 = vmatprep.subr.mxu0 0.0
  %504 = vmatpush1.xpose.msra.mxu0 0.0
  %505 = vmatprep.subr.mxu0 0.0
  %506 = vmatpush1.xpose.msra.mxu0 0.0
  %507 = vmatprep.subr.mxu0 0.0
  %508 = vmatpush1.xpose.msra.mxu0 0.0
  %509 = vmatprep.subr.mxu0 0.0
  %510 = vmatpush1.xpose.msra.mxu0 0.0
  %511 = vmatprep.subr.mxu0 0.0
  %512 = vmatpush1.xpose.msra.mxu0 0.0
  %513 = vmatprep.subr.mxu0 0.0
  %514 = vmatpush1.xpose.msra.mxu0 0.0
  %515 = vmatprep.subr.mxu0 0.0
  %516 = vmatpush1.xpose.msra.mxu0 0.0
  %517 = vmatprep.subr.mxu0 0.0
  %518 = vmatpush1.xpose.msra.mxu0 0.0
  %519 = vmatprep.subr.mxu0 0.0
  %520 = vmatpush1.xpose.msra.mxu0 0.0
  %521 = vmatprep.subr.mxu0 0.0
  %522 = vmatpush1.xpose.msra.mxu0 0.0
  %523 = vmatprep.subr.mxu0 0.0
  %524 = vmatpush1.xpose.msra.mxu0 0.0
  %525 = vmatprep.subr.mxu0 0.0
  %526 = vmatpush1.xpose.msra.mxu0 0.0
  %527 = vmatprep.subr.mxu0 0.0
  %528 = vmatpush1.xpose.msra.mxu0 0.0
  %529 = vmatprep.subr.mxu0 0.0
  %530 = vmatpush1.xpose.msra.mxu0 0.0
  %531 = vmatprep.subr.mxu0 0.0
  %532 = vmatpush1.xpose.msra.mxu0 0.0
  %533 = vmatprep.subr.mxu0 0.0
  %534 = vmatpush1.xpose.msra.mxu0 0.0
  %535 = vmatprep.mubr.f32.mxu0 0.0
  %536 = vmatmul.mubr.f32.gmra.mrb[0].mxu0 %v467
  %v537 = vpop.f32.mrb[0].mxu0
  %v538 = vadd.f32 0.0, %v537
  %v539 = vpop.f32.mrb[0].mxu0
  %540 = vmatprep.mubr.f32.mxu0 0.0
  %541 = vmatmul.mubr.f32.gmra.mrb[0].mxu0 %v469
  %v542 = vpop.f32.mrb[0].mxu0
  %v543 = vadd.f32 0.0, %v542
  %v544 = vpop.f32.mrb[0].mxu0
  %545 = vdwg.mxu0
  %v546 = vsel %vm466, %v176, 0
  %v548 = vsel %vm466, %v181, 0
  %550 = vmatprep.subr.mxu0 0.0
  %551 = vmatpush1.xpose.msra.mxu0 %v546
  %552 = vmatprep.subr.mxu0 0.0
  %553 = vmatpush1.xpose.msra.mxu0 %v548
  %554 = vmatprep.subr.mxu0 0.0
  %555 = vmatpush1.xpose.msra.mxu0 0.0
  %556 = vmatprep.subr.mxu0 0.0
  %557 = vmatpush1.xpose.msra.mxu0 0.0
  %558 = vmatprep.subr.mxu0 0.0
  %559 = vmatpush1.xpose.msra.mxu0 0.0
  %560 = vmatprep.subr.mxu0 0.0
  %561 = vmatpush1.xpose.msra.mxu0 0.0
  %562 = vmatprep.subr.mxu0 0.0
  %563 = vmatpush1.xpose.msra.mxu0 0.0
  %564 = vmatprep.subr.mxu0 0.0
  %565 = vmatpush1.xpose.msra.mxu0 0.0
  %566 = vmatprep.subr.mxu0 0.0
  %567 = vmatpush1.xpose.msra.mxu0 0.0
  %568 = vmatprep.subr.mxu0 0.0
  %569 = vmatpush1.xpose.msra.mxu0 0.0
  %570 = vmatprep.subr.mxu0 0.0
  %571 = vmatpush1.xpose.msra.mxu0 0.0
  %572 = vmatprep.subr.mxu0 0.0
  %573 = vmatpush1.xpose.msra.mxu0 0.0
  %574 = vmatprep.subr.mxu0 0.0
  %575 = vmatpush1.xpose.msra.mxu0 0.0
  %576 = vmatprep.subr.mxu0 0.0
  %577 = vmatpush1.xpose.msra.mxu0 0.0
  %578 = vmatprep.subr.mxu0 0.0
  %579 = vmatpush1.xpose.msra.mxu0 0.0
  %580 = vmatprep.subr.mxu0 0.0
  %581 = vmatpush1.xpose.msra.mxu0 0.0
  %582 = vmatprep.subr.mxu0 0.0
  %583 = vmatpush1.xpose.msra.mxu0 0.0
  %584 = vmatprep.subr.mxu0 0.0
  %585 = vmatpush1.xpose.msra.mxu0 0.0
  %586 = vmatprep.subr.mxu0 0.0
  %587 = vmatpush1.xpose.msra.mxu0 0.0
  %588 = vmatprep.subr.mxu0 0.0
  %589 = vmatpush1.xpose.msra.mxu0 0.0
  %590 = vmatprep.subr.mxu0 0.0
  %591 = vmatpush1.xpose.msra.mxu0 0.0
  %592 = vmatprep.subr.mxu0 0.0
  %593 = vmatpush1.xpose.msra.mxu0 0.0
  %594 = vmatprep.subr.mxu0 0.0
  %595 = vmatpush1.xpose.msra.mxu0 0.0
  %596 = vmatprep.subr.mxu0 0.0
  %597 = vmatpush1.xpose.msra.mxu0 0.0
  %598 = vmatprep.subr.mxu0 0.0
  %599 = vmatpush1.xpose.msra.mxu0 0.0
  %600 = vmatprep.subr.mxu0 0.0
  %601 = vmatpush1.xpose.msra.mxu0 0.0
  %602 = vmatprep.subr.mxu0 0.0
  %603 = vmatpush1.xpose.msra.mxu0 0.0
  %604 = vmatprep.subr.mxu0 0.0
  %605 = vmatpush1.xpose.msra.mxu0 0.0
  %606 = vmatprep.subr.mxu0 0.0
  %607 = vmatpush1.xpose.msra.mxu0 0.0
  %608 = vmatprep.subr.mxu0 0.0
  %609 = vmatpush1.xpose.msra.mxu0 0.0
  %610 = vmatprep.subr.mxu0 0.0
  %611 = vmatpush1.xpose.msra.mxu0 0.0
  %612 = vmatprep.subr.mxu0 0.0
  %613 = vmatpush1.xpose.msra.mxu0 0.0
  %614 = vmatprep.mubr.f32.mxu0 0.0
  %615 = vmatmul.mubr.f32.gmra.mrb[0].mxu0 %v546
  %v616 = vpop.f32.mrb[0].mxu0
  %v617 = vadd.f32 0.0, %v616
  %v618 = vpop.f32.mrb[0].mxu0
  %619 = vmatprep.mubr.f32.mxu0 0.0
  %620 = vmatmul.mubr.f32.gmra.mrb[0].mxu0 %v548
  %v621 = vpop.f32.mrb[0].mxu0
  %v622 = vadd.f32 0.0, %v621
  %v623 = vpop.f32.mrb[0].mxu0
  %624 = vdwg.mxu0
  %v625 = vsel %vm466, %v186, 0
  %v627 = vsel %vm466, %v191, 0
  %629 = vmatprep.subr.mxu0 0.0
  %630 = vmatpush1.xpose.msra.mxu0 %v625
  %631 = vmatprep.subr.mxu0 0.0
  %632 = vmatpush1.xpose.msra.mxu0 %v627
  %633 = vmatprep.subr.mxu0 0.0
  %634 = vmatpush1.xpose.msra.mxu0 0.0
  %635 = vmatprep.subr.mxu0 0.0
  %636 = vmatpush1.xpose.msra.mxu0 0.0
  %637 = vmatprep.subr.mxu0 0.0
  %638 = vmatpush1.xpose.msra.mxu0 0.0
  %639 = vmatprep.subr.mxu0 0.0
  %640 = vmatpush1.xpose.msra.mxu0 0.0
  %641 = vmatprep.subr.mxu0 0.0
  %642 = vmatpush1.xpose.msra.mxu0 0.0
  %643 = vmatprep.subr.mxu0 0.0
  %644 = vmatpush1.xpose.msra.mxu0 0.0
  %645 = vmatprep.subr.mxu0 0.0
  %646 = vmatpush1.xpose.msra.mxu0 0.0
  %647 = vmatprep.subr.mxu0 0.0
  %648 = vmatpush1.xpose.msra.mxu0 0.0
  %649 = vmatprep.subr.mxu0 0.0
  %650 = vmatpush1.xpose.msra.mxu0 0.0
  %651 = vmatprep.subr.mxu0 0.0
  %652 = vmatpush1.xpose.msra.mxu0 0.0
  %653 = vmatprep.subr.mxu0 0.0
  %654 = vmatpush1.xpose.msra.mxu0 0.0
  %655 = vmatprep.subr.mxu0 0.0
  %656 = vmatpush1.xpose.msra.mxu0 0.0
  %657 = vmatprep.subr.mxu0 0.0
  %658 = vmatpush1.xpose.msra.mxu0 0.0
  %659 = vmatprep.subr.mxu0 0.0
  %660 = vmatpush1.xpose.msra.mxu0 0.0
  %661 = vmatprep.subr.mxu0 0.0
  %662 = vmatpush1.xpose.msra.mxu0 0.0
  %663 = vmatprep.subr.mxu0 0.0
  %664 = vmatpush1.xpose.msra.mxu0 0.0
  %665 = vmatprep.subr.mxu0 0.0
  %666 = vmatpush1.xpose.msra.mxu0 0.0
  %667 = vmatprep.subr.mxu0 0.0
  %668 = vmatpush1.xpose.msra.mxu0 0.0
  %669 = vmatprep.subr.mxu0 0.0
  %670 = vmatpush1.xpose.msra.mxu0 0.0
  %671 = vmatprep.subr.mxu0 0.0
  %672 = vmatpush1.xpose.msra.mxu0 0.0
  %673 = vmatprep.subr.mxu0 0.0
  %674 = vmatpush1.xpose.msra.mxu0 0.0
  %675 = vmatprep.subr.mxu0 0.0
  %676 = vmatpush1.xpose.msra.mxu0 0.0
  %677 = vmatprep.subr.mxu0 0.0
  %678 = vmatpush1.xpose.msra.mxu0 0.0
  %679 = vmatprep.subr.mxu0 0.0
  %680 = vmatpush1.xpose.msra.mxu0 0.0
  %681 = vmatprep.subr.mxu0 0.0
  %682 = vmatpush1.xpose.msra.mxu0 0.0
  %683 = vmatprep.subr.mxu0 0.0
  %684 = vmatpush1.xpose.msra.mxu0 0.0
  %685 = vmatprep.subr.mxu0 0.0
  %686 = vmatpush1.xpose.msra.mxu0 0.0
  %687 = vmatprep.subr.mxu0 0.0
  %688 = vmatpush1.xpose.msra.mxu0 0.0
  %689 = vmatprep.subr.mxu0 0.0
  %690 = vmatpush1.xpose.msra.mxu0 0.0
  %691 = vmatprep.subr.mxu0 0.0
  %692 = vmatpush1.xpose.msra.mxu0 0.0
  %693 = vmatprep.mubr.f32.mxu0 0.0
  %694 = vmatmul.mubr.f32.gmra.mrb[0].mxu0 %v625
  %v695 = vpop.f32.mrb[0].mxu0
  %v696 = vadd.f32 0.0, %v695
  %v697 = vpop.f32.mrb[0].mxu0
  %698 = vmatprep.mubr.f32.mxu0 0.0
  %699 = vmatmul.mubr.f32.gmra.mrb[0].mxu0 %v627
  %v700 = vpop.f32.mrb[0].mxu0
  %v701 = vadd.f32 0.0, %v700
  %v702 = vpop.f32.mrb[0].mxu0
  %703 = vdwg.mxu0
  %v704 = vsel %vm466, %v196, 0
  %v706 = vsel %vm466, %v201, 0
  %708 = vmatprep.subr.mxu0 0.0
  %709 = vmatpush1.xpose.msra.mxu0 %v704
  %710 = vmatprep.subr.mxu0 0.0
  %711 = vmatpush1.xpose.msra.mxu0 %v706
  %712 = vmatprep.subr.mxu0 0.0
  %713 = vmatpush1.xpose.msra.mxu0 0.0
  %714 = vmatprep.subr.mxu0 0.0
  %715 = vmatpush1.xpose.msra.mxu0 0.0
  %716 = vmatprep.subr.mxu0 0.0
  %717 = vmatpush1.xpose.msra.mxu0 0.0
  %718 = vmatprep.subr.mxu0 0.0
  %719 = vmatpush1.xpose.msra.mxu0 0.0
  %720 = vmatprep.subr.mxu0 0.0
  %721 = vmatpush1.xpose.msra.mxu0 0.0
  %722 = vmatprep.subr.mxu0 0.0
  %723 = vmatpush1.xpose.msra.mxu0 0.0
  %724 = vmatprep.subr.mxu0 0.0
  %725 = vmatpush1.xpose.msra.mxu0 0.0
  %726 = vmatprep.subr.mxu0 0.0
  %727 = vmatpush1.xpose.msra.mxu0 0.0
  %728 = vmatprep.subr.mxu0 0.0
  %729 = vmatpush1.xpose.msra.mxu0 0.0
  %730 = vmatprep.subr.mxu0 0.0
  %731 = vmatpush1.xpose.msra.mxu0 0.0
  %732 = vmatprep.subr.mxu0 0.0
  %733 = vmatpush1.xpose.msra.mxu0 0.0
  %734 = vmatprep.subr.mxu0 0.0
  %735 = vmatpush1.xpose.msra.mxu0 0.0
  %736 = vmatprep.subr.mxu0 0.0
  %737 = vmatpush1.xpose.msra.mxu0 0.0
  %738 = vmatprep.subr.mxu0 0.0
  %739 = vmatpush1.xpose.msra.mxu0 0.0
  %740 = vmatprep.subr.mxu0 0.0
  %741 = vmatpush1.xpose.msra.mxu0 0.0
  %742 = vmatprep.subr.mxu0 0.0
  %743 = vmatpush1.xpose.msra.mxu0 0.0
  %744 = vmatprep.subr.mxu0 0.0
  %745 = vmatpush1.xpose.msra.mxu0 0.0
  %746 = vmatprep.subr.mxu0 0.0
  %747 = vmatpush1.xpose.msra.mxu0 0.0
  %748 = vmatprep.subr.mxu0 0.0
  %749 = vmatpush1.xpose.msra.mxu0 0.0
  %750 = vmatprep.subr.mxu0 0.0
  %751 = vmatpush1.xpose.msra.mxu0 0.0
  %752 = vmatprep.subr.mxu0 0.0
  %753 = vmatpush1.xpose.msra.mxu0 0.0
  %754 = vmatprep.subr.mxu0 0.0
  %755 = vmatpush1.xpose.msra.mxu0 0.0
  %756 = vmatprep.subr.mxu0 0.0
  %757 = vmatpush1.xpose.msra.mxu0 0.0
  %758 = vmatprep.subr.mxu0 0.0
  %759 = vmatpush1.xpose.msra.mxu0 0.0
  %760 = vmatprep.subr.mxu0 0.0
  %761 = vmatpush1.xpose.msra.mxu0 0.0
  %762 = vmatprep.subr.mxu0 0.0
  %763 = vmatpush1.xpose.msra.mxu0 0.0
  %764 = vmatprep.subr.mxu0 0.0
  %765 = vmatpush1.xpose.msra.mxu0 0.0
  %766 = vmatprep.subr.mxu0 0.0
  %767 = vmatpush1.xpose.msra.mxu0 0.0
  %768 = vmatprep.subr.mxu0 0.0
  %769 = vmatpush1.xpose.msra.mxu0 0.0
  %770 = vmatprep.subr.mxu0 0.0
  %771 = vmatpush1.xpose.msra.mxu0 0.0
  %772 = vmatprep.mubr.f32.mxu0 0.0
  %773 = vmatmul.mubr.f32.gmra.mrb[0].mxu0 %v704
  %v774 = vpop.f32.mrb[0].mxu0
  %v775 = vadd.f32 0.0, %v774
  %v776 = vpop.f32.mrb[0].mxu0
  %777 = vmatprep.mubr.f32.mxu0 0.0
  %778 = vmatmul.mubr.f32.gmra.mrb[0].mxu0 %v706
  %v779 = vpop.f32.mrb[0].mxu0
  %v780 = vadd.f32 0.0, %v779
  %v781 = vpop.f32.mrb[0].mxu0
  %782 = vdwg.mxu0
  %v783 = vsel %vm466, %v329, 0
  %v785 = vsel %vm466, %v331, 0
  %787 = vmatprep.subr.mxu0 0.0
  %788 = vmatpush1.xpose.msra.mxu0 %v783
  %789 = vmatprep.subr.mxu0 0.0
  %790 = vmatpush1.xpose.msra.mxu0 %v785
  %791 = vmatprep.subr.mxu0 0.0
  %792 = vmatpush1.xpose.msra.mxu0 0.0
  %793 = vmatprep.subr.mxu0 0.0
  %794 = vmatpush1.xpose.msra.mxu0 0.0
  %795 = vmatprep.subr.mxu0 0.0
  %796 = vmatpush1.xpose.msra.mxu0 0.0
  %797 = vmatprep.subr.mxu0 0.0
  %798 = vmatpush1.xpose.msra.mxu0 0.0
  %799 = vmatprep.subr.mxu0 0.0
  %800 = vmatpush1.xpose.msra.mxu0 0.0
  %801 = vmatprep.subr.mxu0 0.0
  %802 = vmatpush1.xpose.msra.mxu0 0.0
  %803 = vmatprep.subr.mxu0 0.0
  %804 = vmatpush1.xpose.msra.mxu0 0.0
  %805 = vmatprep.subr.mxu0 0.0
  %806 = vmatpush1.xpose.msra.mxu0 0.0
  %807 = vmatprep.subr.mxu0 0.0
  %808 = vmatpush1.xpose.msra.mxu0 0.0
  %809 = vmatprep.subr.mxu0 0.0
  %810 = vmatpush1.xpose.msra.mxu0 0.0
  %811 = vmatprep.subr.mxu0 0.0
  %812 = vmatpush1.xpose.msra.mxu0 0.0
  %813 = vmatprep.subr.mxu0 0.0
  %814 = vmatpush1.xpose.msra.mxu0 0.0
  %815 = vmatprep.subr.mxu0 0.0
  %816 = vmatpush1.xpose.msra.mxu0 0.0
  %817 = vmatprep.subr.mxu0 0.0
  %818 = vmatpush1.xpose.msra.mxu0 0.0
  %819 = vmatprep.subr.mxu0 0.0
  %820 = vmatpush1.xpose.msra.mxu0 0.0
  %821 = vmatprep.subr.mxu0 0.0
  %822 = vmatpush1.xpose.msra.mxu0 0.0
  %823 = vmatprep.subr.mxu0 0.0
  %824 = vmatpush1.xpose.msra.mxu0 0.0
  %825 = vmatprep.subr.mxu0 0.0
  %826 = vmatpush1.xpose.msra.mxu0 0.0
  %827 = vmatprep.subr.mxu0 0.0
  %828 = vmatpush1.xpose.msra.mxu0 0.0
  %829 = vmatprep.subr.mxu0 0.0
  %830 = vmatpush1.xpose.msra.mxu0 0.0
  %831 = vmatprep.subr.mxu0 0.0
  %832 = vmatpush1.xpose.msra.mxu0 0.0
  %833 = vmatprep.subr.mxu0 0.0
  %834 = vmatpush1.xpose.msra.mxu0 0.0
  %835 = vmatprep.subr.mxu0 0.0
  %836 = vmatpush1.xpose.msra.mxu0 0.0
  %837 = vmatprep.subr.mxu0 0.0
  %838 = vmatpush1.xpose.msra.mxu0 0.0
  %839 = vmatprep.subr.mxu0 0.0
  %840 = vmatpush1.xpose.msra.mxu0 0.0
  %841 = vmatprep.subr.mxu0 0.0
  %842 = vmatpush1.xpose.msra.mxu0 0.0
  %843 = vmatprep.subr.mxu0 0.0
  %844 = vmatpush1.xpose.msra.mxu0 0.0
  %845 = vmatprep.subr.mxu0 0.0
  %846 = vmatpush1.xpose.msra.mxu0 0.0
  %847 = vmatprep.subr.mxu0 0.0
  %848 = vmatpush1.xpose.msra.mxu0 0.0
  %849 = vmatprep.subr.mxu0 0.0
  %850 = vmatpush1.xpose.msra.mxu0 0.0
  %851 = vmatprep.mubr.f32.mxu0 0.0
  %852 = vmatmul.mubr.f32.gmra.mrb[0].mxu0 %v783
  %v853 = vpop.f32.mrb[0].mxu0
  %v854 = vadd.f32 0.0, %v853
  %v855 = vpop.f32.mrb[0].mxu0
  %856 = vmatprep.mubr.f32.mxu0 0.0
  %857 = vmatmul.mubr.f32.gmra.mrb[0].mxu0 %v785
  %v858 = vpop.f32.mrb[0].mxu0
  %v859 = vadd.f32 0.0, %v858
  %v860 = vpop.f32.mrb[0].mxu0
  %861 = vdwg.mxu0
  %v862 = vsel %vm466, %v333, 0
  %v864 = vsel %vm466, %v335, 0
  %866 = vmatprep.subr.mxu0 0.0
  %867 = vmatpush1.xpose.msra.mxu0 %v862
  %868 = vmatprep.subr.mxu0 0.0
  %869 = vmatpush1.xpose.msra.mxu0 %v864
  %870 = vmatprep.subr.mxu0 0.0
  %871 = vmatpush1.xpose.msra.mxu0 0.0
  %872 = vmatprep.subr.mxu0 0.0
  %873 = vmatpush1.xpose.msra.mxu0 0.0
  %874 = vmatprep.subr.mxu0 0.0
  %875 = vmatpush1.xpose.msra.mxu0 0.0
  %876 = vmatprep.subr.mxu0 0.0
  %877 = vmatpush1.xpose.msra.mxu0 0.0
  %878 = vmatprep.subr.mxu0 0.0
  %879 = vmatpush1.xpose.msra.mxu0 0.0
  %880 = vmatprep.subr.mxu0 0.0
  %881 = vmatpush1.xpose.msra.mxu0 0.0
  %882 = vmatprep.subr.mxu0 0.0
  %883 = vmatpush1.xpose.msra.mxu0 0.0
  %884 = vmatprep.subr.mxu0 0.0
  %885 = vmatpush1.xpose.msra.mxu0 0.0
  %886 = vmatprep.subr.mxu0 0.0
  %887 = vmatpush1.xpose.msra.mxu0 0.0
  %888 = vmatprep.subr.mxu0 0.0
  %889 = vmatpush1.xpose.msra.mxu0 0.0
  %890 = vmatprep.subr.mxu0 0.0
  %891 = vmatpush1.xpose.msra.mxu0 0.0
  %892 = vmatprep.subr.mxu0 0.0
  %893 = vmatpush1.xpose.msra.mxu0 0.0
  %894 = vmatprep.subr.mxu0 0.0
  %895 = vmatpush1.xpose.msra.mxu0 0.0
  %896 = vmatprep.subr.mxu0 0.0
  %897 = vmatpush1.xpose.msra.mxu0 0.0
  %898 = vmatprep.subr.mxu0 0.0
  %899 = vmatpush1.xpose.msra.mxu0 0.0
  %900 = vmatprep.subr.mxu0 0.0
  %901 = vmatpush1.xpose.msra.mxu0 0.0
  %902 = vmatprep.subr.mxu0 0.0
  %903 = vmatpush1.xpose.msra.mxu0 0.0
  %904 = vmatprep.subr.mxu0 0.0
  %905 = vmatpush1.xpose.msra.mxu0 0.0
  %906 = vmatprep.subr.mxu0 0.0
  %907 = vmatpush1.xpose.msra.mxu0 0.0
  %908 = vmatprep.subr.mxu0 0.0
  %909 = vmatpush1.xpose.msra.mxu0 0.0
  %910 = vmatprep.subr.mxu0 0.0
  %911 = vmatpush1.xpose.msra.mxu0 0.0
  %912 = vmatprep.subr.mxu0 0.0
  %913 = vmatpush1.xpose.msra.mxu0 0.0
  %914 = vmatprep.subr.mxu0 0.0
  %915 = vmatpush1.xpose.msra.mxu0 0.0
  %916 = vmatprep.subr.mxu0 0.0
  %917 = vmatpush1.xpose.msra.mxu0 0.0
  %918 = vmatprep.subr.mxu0 0.0
  %919 = vmatpush1.xpose.msra.mxu0 0.0
  %920 = vmatprep.subr.mxu0 0.0
  %921 = vmatpush1.xpose.msra.mxu0 0.0
  %922 = vmatprep.subr.mxu0 0.0
  %923 = vmatpush1.xpose.msra.mxu0 0.0
  %924 = vmatprep.subr.mxu0 0.0
  %925 = vmatpush1.xpose.msra.mxu0 0.0
  %926 = vmatprep.subr.mxu0 0.0
  %927 = vmatpush1.xpose.msra.mxu0 0.0
  %928 = vmatprep.subr.mxu0 0.0
  %929 = vmatpush1.xpose.msra.mxu0 0.0
  %930 = vmatprep.mubr.f32.mxu0 0.0
  %931 = vmatmul.mubr.f32.gmra.mrb[0].mxu0 %v862
  %v932 = vpop.f32.mrb[0].mxu0
  %v933 = vadd.f32 0.0, %v932
  %v934 = vpop.f32.mrb[0].mxu0
  %935 = vmatprep.mubr.f32.mxu0 0.0
  %936 = vmatmul.mubr.f32.gmra.mrb[0].mxu0 %v864
  %v937 = vpop.f32.mrb[0].mxu0
  %v938 = vadd.f32 0.0, %v937
  %v939 = vpop.f32.mrb[0].mxu0
  %940 = vdwg.mxu0
  %v941 = vsel %vm466, %v337, 0
  %v943 = vsel %vm466, %v339, 0
  %945 = vmatprep.subr.mxu0 0.0
  %946 = vmatpush1.xpose.msra.mxu0 %v941
  %947 = vmatprep.subr.mxu0 0.0
  %948 = vmatpush1.xpose.msra.mxu0 %v943
  %949 = vmatprep.subr.mxu0 0.0
  %950 = vmatpush1.xpose.msra.mxu0 0.0
  %951 = vmatprep.subr.mxu0 0.0
  %952 = vmatpush1.xpose.msra.mxu0 0.0
  %953 = vmatprep.subr.mxu0 0.0
  %954 = vmatpush1.xpose.msra.mxu0 0.0
  %955 = vmatprep.subr.mxu0 0.0
  %956 = vmatpush1.xpose.msra.mxu0 0.0
  %957 = vmatprep.subr.mxu0 0.0
  %958 = vmatpush1.xpose.msra.mxu0 0.0
  %959 = vmatprep.subr.mxu0 0.0
  %960 = vmatpush1.xpose.msra.mxu0 0.0
  %961 = vmatprep.subr.mxu0 0.0
  %962 = vmatpush1.xpose.msra.mxu0 0.0
  %963 = vmatprep.subr.mxu0 0.0
  %964 = vmatpush1.xpose.msra.mxu0 0.0
  %965 = vmatprep.subr.mxu0 0.0
  %966 = vmatpush1.xpose.msra.mxu0 0.0
  %967 = vmatprep.subr.mxu0 0.0
  %968 = vmatpush1.xpose.msra.mxu0 0.0
  %969 = vmatprep.subr.mxu0 0.0
  %970 = vmatpush1.xpose.msra.mxu0 0.0
  %971 = vmatprep.subr.mxu0 0.0
  %972 = vmatpush1.xpose.msra.mxu0 0.0
  %973 = vmatprep.subr.mxu0 0.0
  %974 = vmatpush1.xpose.msra.mxu0 0.0
  %975 = vmatprep.subr.mxu0 0.0
  %976 = vmatpush1.xpose.msra.mxu0 0.0
  %977 = vmatprep.subr.mxu0 0.0
  %978 = vmatpush1.xpose.msra.mxu0 0.0
  %979 = vmatprep.subr.mxu0 0.0
  %980 = vmatpush1.xpose.msra.mxu0 0.0
  %981 = vmatprep.subr.mxu0 0.0
  %982 = vmatpush1.xpose.msra.mxu0 0.0
  %983 = vmatprep.subr.mxu0 0.0
  %984 = vmatpush1.xpose.msra.mxu0 0.0
  %985 = vmatprep.subr.mxu0 0.0
  %986 = vmatpush1.xpose.msra.mxu0 0.0
  %987 = vmatprep.subr.mxu0 0.0
  %988 = vmatpush1.xpose.msra.mxu0 0.0
  %989 = vmatprep.subr.mxu0 0.0
  %990 = vmatpush1.xpose.msra.mxu0 0.0
  %991 = vmatprep.subr.mxu0 0.0
  %992 = vmatpush1.xpose.msra.mxu0 0.0
  %993 = vmatprep.subr.mxu0 0.0
  %994 = vmatpush1.xpose.msra.mxu0 0.0
  %995 = vmatprep.subr.mxu0 0.0
  %996 = vmatpush1.xpose.msra.mxu0 0.0
  %997 = vmatprep.subr.mxu0 0.0
  %998 = vmatpush1.xpose.msra.mxu0 0.0
  %999 = vmatprep.subr.mxu0 0.0
  %1000 = vmatpush1.xpose.msra.mxu0 0.0
  %1001 = vmatprep.subr.mxu0 0.0
  %1002 = vmatpush1.xpose.msra.mxu0 0.0
  %1003 = vmatprep.subr.mxu0 0.0
  %1004 = vmatpush1.xpose.msra.mxu0 0.0
  %1005 = vmatprep.subr.mxu0 0.0
  %1006 = vmatpush1.xpose.msra.mxu0 0.0
  %1007 = vmatprep.subr.mxu0 0.0
  %1008 = vmatpush1.xpose.msra.mxu0 0.0
  %1009 = vmatprep.mubr.f32.mxu0 0.0
  %1010 = vmatmul.mubr.f32.gmra.mrb[0].mxu0 %v941
  %v1011 = vpop.f32.mrb[0].mxu0
  %v1012 = vadd.f32 0.0, %v1011
  %v1013 = vpop.f32.mrb[0].mxu0
  %1014 = vmatprep.mubr.f32.mxu0 0.0
  %1015 = vmatmul.mubr.f32.gmra.mrb[0].mxu0 %v943
  %v1016 = vpop.f32.mrb[0].mxu0
  %v1017 = vadd.f32 0.0, %v1016
  %v1018 = vpop.f32.mrb[0].mxu0
  %1019 = vdwg.mxu0
  %v1020 = vsel %vm466, %v341, 0
  %v1022 = vsel %vm466, %v343, 0
  %1024 = vmatprep.subr.mxu0 0.0
  %1025 = vmatpush1.xpose.msra.mxu0 %v1020
  %1026 = vmatprep.subr.mxu0 0.0
  %1027 = vmatpush1.xpose.msra.mxu0 %v1022
  %1028 = vmatprep.subr.mxu0 0.0
  %1029 = vmatpush1.xpose.msra.mxu0 0.0
  %1030 = vmatprep.subr.mxu0 0.0
  %1031 = vmatpush1.xpose.msra.mxu0 0.0
  %1032 = vmatprep.subr.mxu0 0.0
  %1033 = vmatpush1.xpose.msra.mxu0 0.0
  %1034 = vmatprep.subr.mxu0 0.0
  %1035 = vmatpush1.xpose.msra.mxu0 0.0
  %1036 = vmatprep.subr.mxu0 0.0
  %1037 = vmatpush1.xpose.msra.mxu0 0.0
  %1038 = vmatprep.subr.mxu0 0.0
  %1039 = vmatpush1.xpose.msra.mxu0 0.0
  %1040 = vmatprep.subr.mxu0 0.0
  %1041 = vmatpush1.xpose.msra.mxu0 0.0
  %1042 = vmatprep.subr.mxu0 0.0
  %1043 = vmatpush1.xpose.msra.mxu0 0.0
  %1044 = vmatprep.subr.mxu0 0.0
  %1045 = vmatpush1.xpose.msra.mxu0 0.0
  %1046 = vmatprep.subr.mxu0 0.0
  %1047 = vmatpush1.xpose.msra.mxu0 0.0
  %1048 = vmatprep.subr.mxu0 0.0
  %1049 = vmatpush1.xpose.msra.mxu0 0.0
  %1050 = vmatprep.subr.mxu0 0.0
  %1051 = vmatpush1.xpose.msra.mxu0 0.0
  %1052 = vmatprep.subr.mxu0 0.0
  %1053 = vmatpush1.xpose.msra.mxu0 0.0
  %1054 = vmatprep.subr.mxu0 0.0
  %1055 = vmatpush1.xpose.msra.mxu0 0.0
  %1056 = vmatprep.subr.mxu0 0.0
  %1057 = vmatpush1.xpose.msra.mxu0 0.0
  %1058 = vmatprep.subr.mxu0 0.0
  %1059 = vmatpush1.xpose.msra.mxu0 0.0
  %1060 = vmatprep.subr.mxu0 0.0
  %1061 = vmatpush1.xpose.msra.mxu0 0.0
  %1062 = vmatprep.subr.mxu0 0.0
  %1063 = vmatpush1.xpose.msra.mxu0 0.0
  %1064 = vmatprep.subr.mxu0 0.0
  %1065 = vmatpush1.xpose.msra.mxu0 0.0
  %1066 = vmatprep.subr.mxu0 0.0
  %1067 = vmatpush1.xpose.msra.mxu0 0.0
  %1068 = vmatprep.subr.mxu0 0.0
  %1069 = vmatpush1.xpose.msra.mxu0 0.0
  %1070 = vmatprep.subr.mxu0 0.0
  %1071 = vmatpush1.xpose.msra.mxu0 0.0
  %1072 = vmatprep.subr.mxu0 0.0
  %1073 = vmatpush1.xpose.msra.mxu0 0.0
  %1074 = vmatprep.subr.mxu0 0.0
  %1075 = vmatpush1.xpose.msra.mxu0 0.0
  %1076 = vmatprep.subr.mxu0 0.0
  %1077 = vmatpush1.xpose.msra.mxu0 0.0
  %1078 = vmatprep.subr.mxu0 0.0
  %1079 = vmatpush1.xpose.msra.mxu0 0.0
  %1080 = vmatprep.subr.mxu0 0.0
  %1081 = vmatpush1.xpose.msra.mxu0 0.0
  %1082 = vmatprep.subr.mxu0 0.0
  %1083 = vmatpush1.xpose.msra.mxu0 0.0
  %1084 = vmatprep.subr.mxu0 0.0
  %1085 = vmatpush1.xpose.msra.mxu0 0.0
  %1086 = vmatprep.subr.mxu0 0.0
  %1087 = vmatpush1.xpose.msra.mxu0 0.0
  %1088 = vmatprep.mubr.f32.mxu0 0.0
  %1089 = vmatmul.mubr.f32.gmra.mrb[0].mxu0 %v1020
  %v1090 = vpop.f32.mrb[0].mxu0
  %v1091 = vadd.f32 0.0, %v1090
  %v1092 = vpop.f32.mrb[0].mxu0
  %1093 = vmatprep.mubr.f32.mxu0 0.0
  %1094 = vmatmul.mubr.f32.gmra.mrb[0].mxu0 %v1022
  %v1095 = vpop.f32.mrb[0].mxu0
  %v1096 = vadd.f32 0.0, %v1095
  %v1097 = vpop.f32.mrb[0].mxu0
  %1098 = vdwg.mxu0
  %v1099 = vsel %vm466, %v345, 0
  %v1101 = vsel %vm466, %v347, 0
  %1103 = vmatprep.subr.mxu0 0.0
  %1104 = vmatpush1.xpose.msra.mxu0 %v1099
  %1105 = vmatprep.subr.mxu0 0.0
  %1106 = vmatpush1.xpose.msra.mxu0 %v1101
  %1107 = vmatprep.subr.mxu0 0.0
  %1108 = vmatpush1.xpose.msra.mxu0 0.0
  %1109 = vmatprep.subr.mxu0 0.0
  %1110 = vmatpush1.xpose.msra.mxu0 0.0
  %1111 = vmatprep.subr.mxu0 0.0
  %1112 = vmatpush1.xpose.msra.mxu0 0.0
  %1113 = vmatprep.subr.mxu0 0.0
  %1114 = vmatpush1.xpose.msra.mxu0 0.0
  %1115 = vmatprep.subr.mxu0 0.0
  %1116 = vmatpush1.xpose.msra.mxu0 0.0
  %1117 = vmatprep.subr.mxu0 0.0
  %1118 = vmatpush1.xpose.msra.mxu0 0.0
  %1119 = vmatprep.subr.mxu0 0.0
  %1120 = vmatpush1.xpose.msra.mxu0 0.0
  %1121 = vmatprep.subr.mxu0 0.0
  %1122 = vmatpush1.xpose.msra.mxu0 0.0
  %1123 = vmatprep.subr.mxu0 0.0
  %1124 = vmatpush1.xpose.msra.mxu0 0.0
  %1125 = vmatprep.subr.mxu0 0.0
  %1126 = vmatpush1.xpose.msra.mxu0 0.0
  %1127 = vmatprep.subr.mxu0 0.0
  %1128 = vmatpush1.xpose.msra.mxu0 0.0
  %1129 = vmatprep.subr.mxu0 0.0
  %1130 = vmatpush1.xpose.msra.mxu0 0.0
  %1131 = vmatprep.subr.mxu0 0.0
  %1132 = vmatpush1.xpose.msra.mxu0 0.0
  %1133 = vmatprep.subr.mxu0 0.0
  %1134 = vmatpush1.xpose.msra.mxu0 0.0
  %1135 = vmatprep.subr.mxu0 0.0
  %1136 = vmatpush1.xpose.msra.mxu0 0.0
  %1137 = vmatprep.subr.mxu0 0.0
  %1138 = vmatpush1.xpose.msra.mxu0 0.0
  %1139 = vmatprep.subr.mxu0 0.0
  %1140 = vmatpush1.xpose.msra.mxu0 0.0
  %1141 = vmatprep.subr.mxu0 0.0
  %1142 = vmatpush1.xpose.msra.mxu0 0.0
  %1143 = vmatprep.subr.mxu0 0.0
  %1144 = vmatpush1.xpose.msra.mxu0 0.0
  %1145 = vmatprep.subr.mxu0 0.0
  %1146 = vmatpush1.xpose.msra.mxu0 0.0
  %1147 = vmatprep.subr.mxu0 0.0
  %1148 = vmatpush1.xpose.msra.mxu0 0.0
  %1149 = vmatprep.subr.mxu0 0.0
  %1150 = vmatpush1.xpose.msra.mxu0 0.0
  %1151 = vmatprep.subr.mxu0 0.0
  %1152 = vmatpush1.xpose.msra.mxu0 0.0
  %1153 = vmatprep.subr.mxu0 0.0
  %1154 = vmatpush1.xpose.msra.mxu0 0.0
  %1155 = vmatprep.subr.mxu0 0.0
  %1156 = vmatpush1.xpose.msra.mxu0 0.0
  %1157 = vmatprep.subr.mxu0 0.0
  %1158 = vmatpush1.xpose.msra.mxu0 0.0
  %1159 = vmatprep.subr.mxu0 0.0
  %1160 = vmatpush1.xpose.msra.mxu0 0.0
  %1161 = vmatprep.subr.mxu0 0.0
  %1162 = vmatpush1.xpose.msra.mxu0 0.0
  %1163 = vmatprep.subr.mxu0 0.0
  %1164 = vmatpush1.xpose.msra.mxu0 0.0
  %1165 = vmatprep.subr.mxu0 0.0
  %1166 = vmatpush1.xpose.msra.mxu0 0.0
  %1167 = vmatprep.mubr.f32.mxu0 0.0
  %1168 = vmatmul.mubr.f32.gmra.mrb[0].mxu0 %v1099
  %v1169 = vpop.f32.mrb[0].mxu0
  %v1170 = vadd.f32 0.0, %v1169
  %v1171 = vpop.f32.mrb[0].mxu0
  %1172 = vmatprep.mubr.f32.mxu0 0.0
  %1173 = vmatmul.mubr.f32.gmra.mrb[0].mxu0 %v1101
  %v1174 = vpop.f32.mrb[0].mxu0
  %v1175 = vadd.f32 0.0, %v1174
  %v1176 = vpop.f32.mrb[0].mxu0
  %1177 = vdwg.mxu0
  %v1178 = vsel %vm466, %v349, 0
  %v1180 = vsel %vm466, %v351, 0
  %1182 = vmatprep.subr.mxu0 0.0
  %1183 = vmatpush1.xpose.msra.mxu0 %v1178
  %1184 = vmatprep.subr.mxu0 0.0
  %1185 = vmatpush1.xpose.msra.mxu0 %v1180
  %1186 = vmatprep.subr.mxu0 0.0
  %1187 = vmatpush1.xpose.msra.mxu0 0.0
  %1188 = vmatprep.subr.mxu0 0.0
  %1189 = vmatpush1.xpose.msra.mxu0 0.0
  %1190 = vmatprep.subr.mxu0 0.0
  %1191 = vmatpush1.xpose.msra.mxu0 0.0
  %1192 = vmatprep.subr.mxu0 0.0
  %1193 = vmatpush1.xpose.msra.mxu0 0.0
  %1194 = vmatprep.subr.mxu0 0.0
  %1195 = vmatpush1.xpose.msra.mxu0 0.0
  %1196 = vmatprep.subr.mxu0 0.0
  %1197 = vmatpush1.xpose.msra.mxu0 0.0
  %1198 = vmatprep.subr.mxu0 0.0
  %1199 = vmatpush1.xpose.msra.mxu0 0.0
  %1200 = vmatprep.subr.mxu0 0.0
  %1201 = vmatpush1.xpose.msra.mxu0 0.0
  %1202 = vmatprep.subr.mxu0 0.0
  %1203 = vmatpush1.xpose.msra.mxu0 0.0
  %1204 = vmatprep.subr.mxu0 0.0
  %1205 = vmatpush1.xpose.msra.mxu0 0.0
  %1206 = vmatprep.subr.mxu0 0.0
  %1207 = vmatpush1.xpose.msra.mxu0 0.0
  %1208 = vmatprep.subr.mxu0 0.0
  %1209 = vmatpush1.xpose.msra.mxu0 0.0
  %1210 = vmatprep.subr.mxu0 0.0
  %1211 = vmatpush1.xpose.msra.mxu0 0.0
  %1212 = vmatprep.subr.mxu0 0.0
  %1213 = vmatpush1.xpose.msra.mxu0 0.0
  %1214 = vmatprep.subr.mxu0 0.0
  %1215 = vmatpush1.xpose.msra.mxu0 0.0
  %1216 = vmatprep.subr.mxu0 0.0
  %1217 = vmatpush1.xpose.msra.mxu0 0.0
  %1218 = vmatprep.subr.mxu0 0.0
  %1219 = vmatpush1.xpose.msra.mxu0 0.0
  %1220 = vmatprep.subr.mxu0 0.0
  %1221 = vmatpush1.xpose.msra.mxu0 0.0
  %1222 = vmatprep.subr.mxu0 0.0
  %1223 = vmatpush1.xpose.msra.mxu0 0.0
  %1224 = vmatprep.subr.mxu0 0.0
  %1225 = vmatpush1.xpose.msra.mxu0 0.0
  %1226 = vmatprep.subr.mxu0 0.0
  %1227 = vmatpush1.xpose.msra.mxu0 0.0
  %1228 = vmatprep.subr.mxu0 0.0
  %1229 = vmatpush1.xpose.msra.mxu0 0.0
  %1230 = vmatprep.subr.mxu0 0.0
  %1231 = vmatpush1.xpose.msra.mxu0 0.0
  %1232 = vmatprep.subr.mxu0 0.0
  %1233 = vmatpush1.xpose.msra.mxu0 0.0
  %1234 = vmatprep.subr.mxu0 0.0
  %1235 = vmatpush1.xpose.msra.mxu0 0.0
  %1236 = vmatprep.subr.mxu0 0.0
  %1237 = vmatpush1.xpose.msra.mxu0 0.0
  %1238 = vmatprep.subr.mxu0 0.0
  %1239 = vmatpush1.xpose.msra.mxu0 0.0
  %1240 = vmatprep.subr.mxu0 0.0
  %1241 = vmatpush1.xpose.msra.mxu0 0.0
  %1242 = vmatprep.subr.mxu0 0.0
  %1243 = vmatpush1.xpose.msra.mxu0 0.0
  %1244 = vmatprep.subr.mxu0 0.0
  %1245 = vmatpush1.xpose.msra.mxu0 0.0
  %1246 = vmatprep.mubr.f32.mxu0 0.0
  %1247 = vmatmul.mubr.f32.gmra.mrb[0].mxu0 %v1178
  %v1248 = vpop.f32.mrb[0].mxu0
  %v1249 = vadd.f32 0.0, %v1248
  %v1250 = vpop.f32.mrb[0].mxu0
  %1251 = vmatprep.mubr.f32.mxu0 0.0
  %1252 = vmatmul.mubr.f32.gmra.mrb[0].mxu0 %v1180
  %v1253 = vpop.f32.mrb[0].mxu0
  %v1254 = vadd.f32 0.0, %v1253
  %v1255 = vpop.f32.mrb[0].mxu0
  %1256 = vdwg.mxu0
  %v1257 = vsel %vm466, %v353, 0
  %v1259 = vsel %vm466, %v355, 0
  %1261 = vmatprep.subr.mxu0 0.0
  %1262 = vmatpush1.xpose.msra.mxu0 %v1257
  %1263 = vmatprep.subr.mxu0 0.0
  %1264 = vmatpush1.xpose.msra.mxu0 %v1259
  %1265 = vmatprep.subr.mxu0 0.0
  %1266 = vmatpush1.xpose.msra.mxu0 0.0
  %1267 = vmatprep.subr.mxu0 0.0
  %1268 = vmatpush1.xpose.msra.mxu0 0.0
  %1269 = vmatprep.subr.mxu0 0.0
  %1270 = vmatpush1.xpose.msra.mxu0 0.0
  %1271 = vmatprep.subr.mxu0 0.0
  %1272 = vmatpush1.xpose.msra.mxu0 0.0
  %1273 = vmatprep.subr.mxu0 0.0
  %1274 = vmatpush1.xpose.msra.mxu0 0.0
  %1275 = vmatprep.subr.mxu0 0.0
  %1276 = vmatpush1.xpose.msra.mxu0 0.0
  %1277 = vmatprep.subr.mxu0 0.0
  %1278 = vmatpush1.xpose.msra.mxu0 0.0
  %1279 = vmatprep.subr.mxu0 0.0
  %1280 = vmatpush1.xpose.msra.mxu0 0.0
  %1281 = vmatprep.subr.mxu0 0.0
  %1282 = vmatpush1.xpose.msra.mxu0 0.0
  %1283 = vmatprep.subr.mxu0 0.0
  %1284 = vmatpush1.xpose.msra.mxu0 0.0
  %1285 = vmatprep.subr.mxu0 0.0
  %1286 = vmatpush1.xpose.msra.mxu0 0.0
  %1287 = vmatprep.subr.mxu0 0.0
  %1288 = vmatpush1.xpose.msra.mxu0 0.0
  %1289 = vmatprep.subr.mxu0 0.0
  %1290 = vmatpush1.xpose.msra.mxu0 0.0
  %1291 = vmatprep.subr.mxu0 0.0
  %1292 = vmatpush1.xpose.msra.mxu0 0.0
  %1293 = vmatprep.subr.mxu0 0.0
  %1294 = vmatpush1.xpose.msra.mxu0 0.0
  %1295 = vmatprep.subr.mxu0 0.0
  %1296 = vmatpush1.xpose.msra.mxu0 0.0
  %1297 = vmatprep.subr.mxu0 0.0
  %1298 = vmatpush1.xpose.msra.mxu0 0.0
  %1299 = vmatprep.subr.mxu0 0.0
  %1300 = vmatpush1.xpose.msra.mxu0 0.0
  %1301 = vmatprep.subr.mxu0 0.0
  %1302 = vmatpush1.xpose.msra.mxu0 0.0
  %1303 = vmatprep.subr.mxu0 0.0
  %1304 = vmatpush1.xpose.msra.mxu0 0.0
  %1305 = vmatprep.subr.mxu0 0.0
  %1306 = vmatpush1.xpose.msra.mxu0 0.0
  %1307 = vmatprep.subr.mxu0 0.0
  %1308 = vmatpush1.xpose.msra.mxu0 0.0
  %1309 = vmatprep.subr.mxu0 0.0
  %1310 = vmatpush1.xpose.msra.mxu0 0.0
  %1311 = vmatprep.subr.mxu0 0.0
  %1312 = vmatpush1.xpose.msra.mxu0 0.0
  %1313 = vmatprep.subr.mxu0 0.0
  %1314 = vmatpush1.xpose.msra.mxu0 0.0
  %1315 = vmatprep.subr.mxu0 0.0
  %1316 = vmatpush1.xpose.msra.mxu0 0.0
  %1317 = vmatprep.subr.mxu0 0.0
  %1318 = vmatpush1.xpose.msra.mxu0 0.0
  %1319 = vmatprep.subr.mxu0 0.0
  %1320 = vmatpush1.xpose.msra.mxu0 0.0
  %1321 = vmatprep.subr.mxu0 0.0
  %1322 = vmatpush1.xpose.msra.mxu0 0.0
  %1323 = vmatprep.subr.mxu0 0.0
  %1324 = vmatpush1.xpose.msra.mxu0 0.0
  %1325 = vmatprep.mubr.f32.mxu0 0.0
  %1326 = vmatmul.mubr.f32.gmra.mrb[0].mxu0 %v1257
  %v1327 = vpop.f32.mrb[0].mxu0
  %v1328 = vadd.f32 0.0, %v1327
  %v1329 = vpop.f32.mrb[0].mxu0
  %1330 = vmatprep.mubr.f32.mxu0 0.0
  %1331 = vmatmul.mubr.f32.gmra.mrb[0].mxu0 %v1259
  %v1332 = vpop.f32.mrb[0].mxu0
  %v1333 = vadd.f32 0.0, %v1332
  %v1334 = vpop.f32.mrb[0].mxu0
  %1335 = vdwg.mxu0
  %v1336 = vsel %vm466, %v357, 0
  %v1338 = vsel %vm466, %v359, 0
  %1340 = vmatprep.subr.mxu0 0.0
  %1341 = vmatpush1.xpose.msra.mxu0 %v1336
  %1342 = vmatprep.subr.mxu0 0.0
  %1343 = vmatpush1.xpose.msra.mxu0 %v1338
  %1344 = vmatprep.subr.mxu0 0.0
  %1345 = vmatpush1.xpose.msra.mxu0 0.0
  %1346 = vmatprep.subr.mxu0 0.0
  %1347 = vmatpush1.xpose.msra.mxu0 0.0
  %1348 = vmatprep.subr.mxu0 0.0
  %1349 = vmatpush1.xpose.msra.mxu0 0.0
  %1350 = vmatprep.subr.mxu0 0.0
  %1351 = vmatpush1.xpose.msra.mxu0 0.0
  %1352 = vmatprep.subr.mxu0 0.0
  %1353 = vmatpush1.xpose.msra.mxu0 0.0
  %1354 = vmatprep.subr.mxu0 0.0
  %1355 = vmatpush1.xpose.msra.mxu0 0.0
  %1356 = vmatprep.subr.mxu0 0.0
  %1357 = vmatpush1.xpose.msra.mxu0 0.0
  %1358 = vmatprep.subr.mxu0 0.0
  %1359 = vmatpush1.xpose.msra.mxu0 0.0
  %1360 = vmatprep.subr.mxu0 0.0
  %1361 = vmatpush1.xpose.msra.mxu0 0.0
  %1362 = vmatprep.subr.mxu0 0.0
  %1363 = vmatpush1.xpose.msra.mxu0 0.0
  %1364 = vmatprep.subr.mxu0 0.0
  %1365 = vmatpush1.xpose.msra.mxu0 0.0
  %1366 = vmatprep.subr.mxu0 0.0
  %1367 = vmatpush1.xpose.msra.mxu0 0.0
  %1368 = vmatprep.subr.mxu0 0.0
  %1369 = vmatpush1.xpose.msra.mxu0 0.0
  %1370 = vmatprep.subr.mxu0 0.0
  %1371 = vmatpush1.xpose.msra.mxu0 0.0
  %1372 = vmatprep.subr.mxu0 0.0
  %1373 = vmatpush1.xpose.msra.mxu0 0.0
  %1374 = vmatprep.subr.mxu0 0.0
  %1375 = vmatpush1.xpose.msra.mxu0 0.0
  %1376 = vmatprep.subr.mxu0 0.0
  %1377 = vmatpush1.xpose.msra.mxu0 0.0
  %1378 = vmatprep.subr.mxu0 0.0
  %1379 = vmatpush1.xpose.msra.mxu0 0.0
  %1380 = vmatprep.subr.mxu0 0.0
  %1381 = vmatpush1.xpose.msra.mxu0 0.0
  %1382 = vmatprep.subr.mxu0 0.0
  %1383 = vmatpush1.xpose.msra.mxu0 0.0
  %1384 = vmatprep.subr.mxu0 0.0
  %1385 = vmatpush1.xpose.msra.mxu0 0.0
  %1386 = vmatprep.subr.mxu0 0.0
  %1387 = vmatpush1.xpose.msra.mxu0 0.0
  %1388 = vmatprep.subr.mxu0 0.0
  %1389 = vmatpush1.xpose.msra.mxu0 0.0
  %1390 = vmatprep.subr.mxu0 0.0
  %1391 = vmatpush1.xpose.msra.mxu0 0.0
  %1392 = vmatprep.subr.mxu0 0.0
  %1393 = vmatpush1.xpose.msra.mxu0 0.0
  %1394 = vmatprep.subr.mxu0 0.0
  %1395 = vmatpush1.xpose.msra.mxu0 0.0
  %1396 = vmatprep.subr.mxu0 0.0
  %1397 = vmatpush1.xpose.msra.mxu0 0.0
  %1398 = vmatprep.subr.mxu0 0.0
  %1399 = vmatpush1.xpose.msra.mxu0 0.0
  %1400 = vmatprep.subr.mxu0 0.0
  %1401 = vmatpush1.xpose.msra.mxu0 0.0
  %1402 = vmatprep.subr.mxu0 0.0
  %1403 = vmatpush1.xpose.msra.mxu0 0.0
  %1404 = vmatprep.mubr.f32.mxu0 0.0
  %1405 = vmatmul.mubr.f32.gmra.mrb[0].mxu0 %v1336
  %v1406 = vpop.f32.mrb[0].mxu0
  %v1407 = vadd.f32 0.0, %v1406
  %v1408 = vpop.f32.mrb[0].mxu0
  %1409 = vmatprep.mubr.f32.mxu0 0.0
  %1410 = vmatmul.mubr.f32.gmra.mrb[0].mxu0 %v1338
  %v1411 = vpop.f32.mrb[0].mxu0
  %v1412 = vadd.f32 0.0, %v1411
  %v1413 = vpop.f32.mrb[0].mxu0
  %1414 = vdwg.mxu0
  %v1415 = vsel %vm466, %v361, 0
  %v1417 = vsel %vm466, %v363, 0
  %1419 = vmatprep.subr.mxu0 0.0
  %1420 = vmatpush1.xpose.msra.mxu0 %v1415
  %1421 = vmatprep.subr.mxu0 0.0
  %1422 = vmatpush1.xpose.msra.mxu0 %v1417
  %1423 = vmatprep.subr.mxu0 0.0
  %1424 = vmatpush1.xpose.msra.mxu0 0.0
  %1425 = vmatprep.subr.mxu0 0.0
  %1426 = vmatpush1.xpose.msra.mxu0 0.0
  %1427 = vmatprep.subr.mxu0 0.0
  %1428 = vmatpush1.xpose.msra.mxu0 0.0
  %1429 = vmatprep.subr.mxu0 0.0
  %1430 = vmatpush1.xpose.msra.mxu0 0.0
  %1431 = vmatprep.subr.mxu0 0.0
  %1432 = vmatpush1.xpose.msra.mxu0 0.0
  %1433 = vmatprep.subr.mxu0 0.0
  %1434 = vmatpush1.xpose.msra.mxu0 0.0
  %1435 = vmatprep.subr.mxu0 0.0
  %1436 = vmatpush1.xpose.msra.mxu0 0.0
  %1437 = vmatprep.subr.mxu0 0.0
  %1438 = vmatpush1.xpose.msra.mxu0 0.0
  %1439 = vmatprep.subr.mxu0 0.0
  %1440 = vmatpush1.xpose.msra.mxu0 0.0
  %1441 = vmatprep.subr.mxu0 0.0
  %1442 = vmatpush1.xpose.msra.mxu0 0.0
  %1443 = vmatprep.subr.mxu0 0.0
  %1444 = vmatpush1.xpose.msra.mxu0 0.0
  %1445 = vmatprep.subr.mxu0 0.0
  %1446 = vmatpush1.xpose.msra.mxu0 0.0
  %1447 = vmatprep.subr.mxu0 0.0
  %1448 = vmatpush1.xpose.msra.mxu0 0.0
  %1449 = vmatprep.subr.mxu0 0.0
  %1450 = vmatpush1.xpose.msra.mxu0 0.0
  %1451 = vmatprep.subr.mxu0 0.0
  %1452 = vmatpush1.xpose.msra.mxu0 0.0
  %1453 = vmatprep.subr.mxu0 0.0
  %1454 = vmatpush1.xpose.msra.mxu0 0.0
  %1455 = vmatprep.subr.mxu0 0.0
  %1456 = vmatpush1.xpose.msra.mxu0 0.0
  %1457 = vmatprep.subr.mxu0 0.0
  %1458 = vmatpush1.xpose.msra.mxu0 0.0
  %1459 = vmatprep.subr.mxu0 0.0
  %1460 = vmatpush1.xpose.msra.mxu0 0.0
  %1461 = vmatprep.subr.mxu0 0.0
  %1462 = vmatpush1.xpose.msra.mxu0 0.0
  %1463 = vmatprep.subr.mxu0 0.0
  %1464 = vmatpush1.xpose.msra.mxu0 0.0
  %1465 = vmatprep.subr.mxu0 0.0
  %1466 = vmatpush1.xpose.msra.mxu0 0.0
  %1467 = vmatprep.subr.mxu0 0.0
  %1468 = vmatpush1.xpose.msra.mxu0 0.0
  %1469 = vmatprep.subr.mxu0 0.0
  %1470 = vmatpush1.xpose.msra.mxu0 0.0
  %1471 = vmatprep.subr.mxu0 0.0
  %1472 = vmatpush1.xpose.msra.mxu0 0.0
  %1473 = vmatprep.subr.mxu0 0.0
  %1474 = vmatpush1.xpose.msra.mxu0 0.0
  %1475 = vmatprep.subr.mxu0 0.0
  %1476 = vmatpush1.xpose.msra.mxu0 0.0
  %1477 = vmatprep.subr.mxu0 0.0
  %1478 = vmatpush1.xpose.msra.mxu0 0.0
  %1479 = vmatprep.subr.mxu0 0.0
  %1480 = vmatpush1.xpose.msra.mxu0 0.0
  %1481 = vmatprep.subr.mxu0 0.0
  %1482 = vmatpush1.xpose.msra.mxu0 0.0
  %1483 = vmatprep.mubr.f32.mxu0 0.0
  %1484 = vmatmul.mubr.f32.gmra.mrb[0].mxu0 %v1415
  %v1485 = vpop.f32.mrb[0].mxu0
  %v1486 = vadd.f32 0.0, %v1485
  %v1487 = vpop.f32.mrb[0].mxu0
  %1488 = vmatprep.mubr.f32.mxu0 0.0
  %1489 = vmatmul.mubr.f32.gmra.mrb[0].mxu0 %v1417
  %v1490 = vpop.f32.mrb[0].mxu0
  %v1491 = vadd.f32 0.0, %v1490
  %v1492 = vpop.f32.mrb[0].mxu0
  %1493 = vdwg.mxu0
  %v1494 = vsel %vm466, %v365, 0
  %v1496 = vsel %vm466, %v367, 0
  %1498 = vmatprep.subr.mxu0 0.0
  %1499 = vmatpush1.xpose.msra.mxu0 %v1494
  %1500 = vmatprep.subr.mxu0 0.0
  %1501 = vmatpush1.xpose.msra.mxu0 %v1496
  %1502 = vmatprep.subr.mxu0 0.0
  %1503 = vmatpush1.xpose.msra.mxu0 0.0
  %1504 = vmatprep.subr.mxu0 0.0
  %1505 = vmatpush1.xpose.msra.mxu0 0.0
  %1506 = vmatprep.subr.mxu0 0.0
  %1507 = vmatpush1.xpose.msra.mxu0 0.0
  %1508 = vmatprep.subr.mxu0 0.0
  %1509 = vmatpush1.xpose.msra.mxu0 0.0
  %1510 = vmatprep.subr.mxu0 0.0
  %1511 = vmatpush1.xpose.msra.mxu0 0.0
  %1512 = vmatprep.subr.mxu0 0.0
  %1513 = vmatpush1.xpose.msra.mxu0 0.0
  %1514 = vmatprep.subr.mxu0 0.0
  %1515 = vmatpush1.xpose.msra.mxu0 0.0
  %1516 = vmatprep.subr.mxu0 0.0
  %1517 = vmatpush1.xpose.msra.mxu0 0.0
  %1518 = vmatprep.subr.mxu0 0.0
  %1519 = vmatpush1.xpose.msra.mxu0 0.0
  %1520 = vmatprep.subr.mxu0 0.0
  %1521 = vmatpush1.xpose.msra.mxu0 0.0
  %1522 = vmatprep.subr.mxu0 0.0
  %1523 = vmatpush1.xpose.msra.mxu0 0.0
  %1524 = vmatprep.subr.mxu0 0.0
  %1525 = vmatpush1.xpose.msra.mxu0 0.0
  %1526 = vmatprep.subr.mxu0 0.0
  %1527 = vmatpush1.xpose.msra.mxu0 0.0
  %1528 = vmatprep.subr.mxu0 0.0
  %1529 = vmatpush1.xpose.msra.mxu0 0.0
  %1530 = vmatprep.subr.mxu0 0.0
  %1531 = vmatpush1.xpose.msra.mxu0 0.0
  %1532 = vmatprep.subr.mxu0 0.0
  %1533 = vmatpush1.xpose.msra.mxu0 0.0
  %1534 = vmatprep.subr.mxu0 0.0
  %1535 = vmatpush1.xpose.msra.mxu0 0.0
  %1536 = vmatprep.subr.mxu0 0.0
  %1537 = vmatpush1.xpose.msra.mxu0 0.0
  %1538 = vmatprep.subr.mxu0 0.0
  %1539 = vmatpush1.xpose.msra.mxu0 0.0
  %1540 = vmatprep.subr.mxu0 0.0
  %1541 = vmatpush1.xpose.msra.mxu0 0.0
  %1542 = vmatprep.subr.mxu0 0.0
  %1543 = vmatpush1.xpose.msra.mxu0 0.0
  %1544 = vmatprep.subr.mxu0 0.0
  %1545 = vmatpush1.xpose.msra.mxu0 0.0
  %1546 = vmatprep.subr.mxu0 0.0
  %1547 = vmatpush1.xpose.msra.mxu0 0.0
  %1548 = vmatprep.subr.mxu0 0.0
  %1549 = vmatpush1.xpose.msra.mxu0 0.0
  %1550 = vmatprep.subr.mxu0 0.0
  %1551 = vmatpush1.xpose.msra.mxu0 0.0
  %1552 = vmatprep.subr.mxu0 0.0
  %1553 = vmatpush1.xpose.msra.mxu0 0.0
  %1554 = vmatprep.subr.mxu0 0.0
  %1555 = vmatpush1.xpose.msra.mxu0 0.0
  %1556 = vmatprep.subr.mxu0 0.0
  %1557 = vmatpush1.xpose.msra.mxu0 0.0
  %1558 = vmatprep.subr.mxu0 0.0
  %1559 = vmatpush1.xpose.msra.mxu0 0.0
  %1560 = vmatprep.subr.mxu0 0.0
  %1561 = vmatpush1.xpose.msra.mxu0 0.0
  %1562 = vmatprep.mubr.f32.mxu0 0.0
  %1563 = vmatmul.mubr.f32.gmra.mrb[0].mxu0 %v1494
  %v1564 = vpop.f32.mrb[0].mxu0
  %v1565 = vadd.f32 0.0, %v1564
  %v1566 = vpop.f32.mrb[0].mxu0
  %1567 = vmatprep.mubr.f32.mxu0 0.0
  %1568 = vmatmul.mubr.f32.gmra.mrb[0].mxu0 %v1496
  %v1569 = vpop.f32.mrb[0].mxu0
  %v1570 = vadd.f32 0.0, %v1569
  %v1571 = vpop.f32.mrb[0].mxu0
  %1572 = vdwg.mxu0
  %v1573 = vsel %vm466, %v369, 0
  %v1575 = vsel %vm466, %v371, 0
  %1577 = vmatprep.subr.mxu0 0.0
  %1578 = vmatpush1.xpose.msra.mxu0 %v1573
  %1579 = vmatprep.subr.mxu0 0.0
  %1580 = vmatpush1.xpose.msra.mxu0 %v1575
  %1581 = vmatprep.subr.mxu0 0.0
  %1582 = vmatpush1.xpose.msra.mxu0 0.0
  %1583 = vmatprep.subr.mxu0 0.0
  %1584 = vmatpush1.xpose.msra.mxu0 0.0
  %1585 = vmatprep.subr.mxu0 0.0
  %1586 = vmatpush1.xpose.msra.mxu0 0.0
  %1587 = vmatprep.subr.mxu0 0.0
  %1588 = vmatpush1.xpose.msra.mxu0 0.0
  %1589 = vmatprep.subr.mxu0 0.0
  %1590 = vmatpush1.xpose.msra.mxu0 0.0
  %1591 = vmatprep.subr.mxu0 0.0
  %1592 = vmatpush1.xpose.msra.mxu0 0.0
  %1593 = vmatprep.subr.mxu0 0.0
  %1594 = vmatpush1.xpose.msra.mxu0 0.0
  %1595 = vmatprep.subr.mxu0 0.0
  %1596 = vmatpush1.xpose.msra.mxu0 0.0
  %1597 = vmatprep.subr.mxu0 0.0
  %1598 = vmatpush1.xpose.msra.mxu0 0.0
  %1599 = vmatprep.subr.mxu0 0.0
  %1600 = vmatpush1.xpose.msra.mxu0 0.0
  %1601 = vmatprep.subr.mxu0 0.0
  %1602 = vmatpush1.xpose.msra.mxu0 0.0
  %1603 = vmatprep.subr.mxu0 0.0
  %1604 = vmatpush1.xpose.msra.mxu0 0.0
  %1605 = vmatprep.subr.mxu0 0.0
  %1606 = vmatpush1.xpose.msra.mxu0 0.0
  %1607 = vmatprep.subr.mxu0 0.0
  %1608 = vmatpush1.xpose.msra.mxu0 0.0
  %1609 = vmatprep.subr.mxu0 0.0
  %1610 = vmatpush1.xpose.msra.mxu0 0.0
  %1611 = vmatprep.subr.mxu0 0.0
  %1612 = vmatpush1.xpose.msra.mxu0 0.0
  %1613 = vmatprep.subr.mxu0 0.0
  %1614 = vmatpush1.xpose.msra.mxu0 0.0
  %1615 = vmatprep.subr.mxu0 0.0
  %1616 = vmatpush1.xpose.msra.mxu0 0.0
  %1617 = vmatprep.subr.mxu0 0.0
  %1618 = vmatpush1.xpose.msra.mxu0 0.0
  %1619 = vmatprep.subr.mxu0 0.0
  %1620 = vmatpush1.xpose.msra.mxu0 0.0
  %1621 = vmatprep.subr.mxu0 0.0
  %1622 = vmatpush1.xpose.msra.mxu0 0.0
  %1623 = vmatprep.subr.mxu0 0.0
  %1624 = vmatpush1.xpose.msra.mxu0 0.0
  %1625 = vmatprep.subr.mxu0 0.0
  %1626 = vmatpush1.xpose.msra.mxu0 0.0
  %1627 = vmatprep.subr.mxu0 0.0
  %1628 = vmatpush1.xpose.msra.mxu0 0.0
  %1629 = vmatprep.subr.mxu0 0.0
  %1630 = vmatpush1.xpose.msra.mxu0 0.0
  %1631 = vmatprep.subr.mxu0 0.0
  %1632 = vmatpush1.xpose.msra.mxu0 0.0
  %1633 = vmatprep.subr.mxu0 0.0
  %1634 = vmatpush1.xpose.msra.mxu0 0.0
  %1635 = vmatprep.subr.mxu0 0.0
  %1636 = vmatpush1.xpose.msra.mxu0 0.0
  %1637 = vmatprep.subr.mxu0 0.0
  %1638 = vmatpush1.xpose.msra.mxu0 0.0
  %1639 = vmatprep.subr.mxu0 0.0
  %1640 = vmatpush1.xpose.msra.mxu0 0.0
  %1641 = vmatprep.mubr.f32.mxu0 0.0
  %1642 = vmatmul.mubr.f32.gmra.mrb[0].mxu0 %v1573
  %v1643 = vpop.f32.mrb[0].mxu0
  %v1644 = vadd.f32 0.0, %v1643
  %v1645 = vpop.f32.mrb[0].mxu0
  %1646 = vmatprep.mubr.f32.mxu0 0.0
  %1647 = vmatmul.mubr.f32.gmra.mrb[0].mxu0 %v1575
  %v1648 = vpop.f32.mrb[0].mxu0
  %v1649 = vadd.f32 0.0, %v1648
  %v1650 = vpop.f32.mrb[0].mxu0
  %1651 = vdwg.mxu0
  %v1652 = vsel %vm466, %v373, 0
  %v1654 = vsel %vm466, %v375, 0
  %1656 = vmatprep.subr.mxu0 0.0
  %1657 = vmatpush1.xpose.msra.mxu0 %v1652
  %1658 = vmatprep.subr.mxu0 0.0
  %1659 = vmatpush1.xpose.msra.mxu0 %v1654
  %1660 = vmatprep.subr.mxu0 0.0
  %1661 = vmatpush1.xpose.msra.mxu0 0.0
  %1662 = vmatprep.subr.mxu0 0.0
  %1663 = vmatpush1.xpose.msra.mxu0 0.0
  %1664 = vmatprep.subr.mxu0 0.0
  %1665 = vmatpush1.xpose.msra.mxu0 0.0
  %1666 = vmatprep.subr.mxu0 0.0
  %1667 = vmatpush1.xpose.msra.mxu0 0.0
  %1668 = vmatprep.subr.mxu0 0.0
  %1669 = vmatpush1.xpose.msra.mxu0 0.0
  %1670 = vmatprep.subr.mxu0 0.0
  %1671 = vmatpush1.xpose.msra.mxu0 0.0
  %1672 = vmatprep.subr.mxu0 0.0
  %1673 = vmatpush1.xpose.msra.mxu0 0.0
  %1674 = vmatprep.subr.mxu0 0.0
  %1675 = vmatpush1.xpose.msra.mxu0 0.0
  %1676 = vmatprep.subr.mxu0 0.0
  %1677 = vmatpush1.xpose.msra.mxu0 0.0
  %1678 = vmatprep.subr.mxu0 0.0
  %1679 = vmatpush1.xpose.msra.mxu0 0.0
  %1680 = vmatprep.subr.mxu0 0.0
  %1681 = vmatpush1.xpose.msra.mxu0 0.0
  %1682 = vmatprep.subr.mxu0 0.0
  %1683 = vmatpush1.xpose.msra.mxu0 0.0
  %1684 = vmatprep.subr.mxu0 0.0
  %1685 = vmatpush1.xpose.msra.mxu0 0.0
  %1686 = vmatprep.subr.mxu0 0.0
  %1687 = vmatpush1.xpose.msra.mxu0 0.0
  %1688 = vmatprep.subr.mxu0 0.0
  %1689 = vmatpush1.xpose.msra.mxu0 0.0
  %1690 = vmatprep.subr.mxu0 0.0
  %1691 = vmatpush1.xpose.msra.mxu0 0.0
  %1692 = vmatprep.subr.mxu0 0.0
  %1693 = vmatpush1.xpose.msra.mxu0 0.0
  %1694 = vmatprep.subr.mxu0 0.0
  %1695 = vmatpush1.xpose.msra.mxu0 0.0
  %1696 = vmatprep.subr.mxu0 0.0
  %1697 = vmatpush1.xpose.msra.mxu0 0.0
  %1698 = vmatprep.subr.mxu0 0.0
  %1699 = vmatpush1.xpose.msra.mxu0 0.0
  %1700 = vmatprep.subr.mxu0 0.0
  %1701 = vmatpush1.xpose.msra.mxu0 0.0
  %1702 = vmatprep.subr.mxu0 0.0
  %1703 = vmatpush1.xpose.msra.mxu0 0.0
  %1704 = vmatprep.subr.mxu0 0.0
  %1705 = vmatpush1.xpose.msra.mxu0 0.0
  %1706 = vmatprep.subr.mxu0 0.0
  %1707 = vmatpush1.xpose.msra.mxu0 0.0
  %1708 = vmatprep.subr.mxu0 0.0
  %1709 = vmatpush1.xpose.msra.mxu0 0.0
  %1710 = vmatprep.subr.mxu0 0.0
  %1711 = vmatpush1.xpose.msra.mxu0 0.0
  %1712 = vmatprep.subr.mxu0 0.0
  %1713 = vmatpush1.xpose.msra.mxu0 0.0
  %1714 = vmatprep.subr.mxu0 0.0
  %1715 = vmatpush1.xpose.msra.mxu0 0.0
  %1716 = vmatprep.subr.mxu0 0.0
  %1717 = vmatpush1.xpose.msra.mxu0 0.0
  %1718 = vmatprep.subr.mxu0 0.0
  %1719 = vmatpush1.xpose.msra.mxu0 0.0
  %1720 = vmatprep.mubr.f32.mxu0 0.0
  %1721 = vmatmul.mubr.f32.gmra.mrb[0].mxu0 %v1652
  %v1722 = vpop.f32.mrb[0].mxu0
  %v1723 = vadd.f32 0.0, %v1722
  %v1724 = vpop.f32.mrb[0].mxu0
  %1725 = vmatprep.mubr.f32.mxu0 0.0
  %1726 = vmatmul.mubr.f32.gmra.mrb[0].mxu0 %v1654
  %v1727 = vpop.f32.mrb[0].mxu0
  %v1728 = vadd.f32 0.0, %v1727
  %v1729 = vpop.f32.mrb[0].mxu0
  %1730 = vdwg.mxu0
  %v1731 = vmul.f32 %v538, 0.35355338
  %v1732 = vmul.f32 %v543, 0.35355338
  %v1733 = vmul.f32 %v617, 0.35355338
  %v1734 = vmul.f32 %v622, 0.35355338
  %v1735 = vmul.f32 %v696, 0.35355338
  %v1736 = vmul.f32 %v701, 0.35355338
  %v1737 = vmul.f32 %v775, 0.35355338
  %v1738 = vmul.f32 %v780, 0.35355338
  %v1739 = vmul.f32 %v854, 0.35355338
  %v1740 = vmul.f32 %v859, 0.35355338
  %v1741 = vmul.f32 %v933, 0.35355338
  %v1742 = vmul.f32 %v938, 0.35355338
  %v1743 = vmul.f32 %v1012, 0.35355338
  %v1744 = vmul.f32 %v1017, 0.35355338
  %v1745 = vmul.f32 %v1091, 0.35355338
  %v1746 = vmul.f32 %v1096, 0.35355338
  %v1747 = vmul.f32 %v1170, 0.35355338
  %v1748 = vmul.f32 %v1175, 0.35355338
  %v1749 = vmul.f32 %v1249, 0.35355338
  %v1750 = vmul.f32 %v1254, 0.35355338
  %v1751 = vmul.f32 %v1328, 0.35355338
  %v1752 = vmul.f32 %v1333, 0.35355338
  %v1753 = vmul.f32 %v1407, 0.35355338
  %v1754 = vmul.f32 %v1412, 0.35355338
  %v1755 = vmul.f32 %v1486, 0.35355338
  %v1756 = vmul.f32 %v1491, 0.35355338
  %v1757 = vmul.f32 %v1565, 0.35355338
  %v1758 = vmul.f32 %v1570, 0.35355338
  %v1759 = vmul.f32 %v1644, 0.35355338
  %v1760 = vmul.f32 %v1649, 0.35355338
  %v1761 = vmul.f32 %v1723, 0.35355338
  %v1762 = vmul.f32 %v1728, 0.35355338
  %v1763 = vld [vmem:[%s1] sm:$0xff]
  %v1764 = vld [vmem:[%s1 + $0x8] sm:$0xff]
  %v1765 = vld [vmem:[%s1 + $0x10] sm:$0xff]
  %v1766 = vld [vmem:[%s1 + $0x18] sm:$0xff]
  %v1767 = vld [vmem:[%s1 + $0x20] sm:$0xff]
  %v1768 = vld [vmem:[%s1 + $0x28] sm:$0xff]
  %v1769 = vld [vmem:[%s1 + $0x30] sm:$0xff]
  %v1770 = vld [vmem:[%s1 + $0x38] sm:$0xff]
  %v1771 = vld [vmem:[%s1 + $0x40] sm:$0xff]
  %v1772 = vld [vmem:[%s1 + $0x48] sm:$0xff]
  %v1773 = vld [vmem:[%s1 + $0x50] sm:$0xff]
  %v1774 = vld [vmem:[%s1 + $0x58] sm:$0xff]
  %v1775 = vld [vmem:[%s1 + $0x60] sm:$0xff]
  %v1776 = vld [vmem:[%s1 + $0x68] sm:$0xff]
  %v1777 = vld [vmem:[%s1 + $0x70] sm:$0xff]
  %v1778 = vld [vmem:[%s1 + $0x78] sm:$0xff]
  %v1779 = vld [vmem:[%s1 + $0x80] sm:$0xff]
  %v1780 = vld [vmem:[%s1 + $0x88] sm:$0xff]
  %v1781 = vld [vmem:[%s1 + $0x90] sm:$0xff]
  %v1782 = vld [vmem:[%s1 + $0x98] sm:$0xff]
  %v1783 = vld [vmem:[%s1 + $0xa0] sm:$0xff]
  %v1784 = vld [vmem:[%s1 + $0xa8] sm:$0xff]
  %v1785 = vld [vmem:[%s1 + $0xb0] sm:$0xff]
  %v1786 = vld [vmem:[%s1 + $0xb8] sm:$0xff]
  %v1787 = vld [vmem:[%s1 + $0xc0] sm:$0xff]
  %v1788 = vld [vmem:[%s1 + $0xc8] sm:$0xff]
  %v1789 = vld [vmem:[%s1 + $0xd0] sm:$0xff]
  %v1790 = vld [vmem:[%s1 + $0xd8] sm:$0xff]
  %v1791 = vld [vmem:[%s1 + $0xe0] sm:$0xff]
  %v1792 = vld [vmem:[%s1 + $0xe8] sm:$0xff]
  %v1793 = vld [vmem:[%s1 + $0xf0] sm:$0xff]
  %v1794 = vld [vmem:[%s1 + $0xf8] sm:$0xff]
  %v1795 = vmul.f32 %v1731, %v1763
  %v1796 = vmul.f32 %v1732, %v1764
  %v1797 = vmul.f32 %v1733, %v1765
  %v1798 = vmul.f32 %v1734, %v1766
  %v1799 = vmul.f32 %v1735, %v1767
  %v1800 = vmul.f32 %v1736, %v1768
  %v1801 = vmul.f32 %v1737, %v1769
  %v1802 = vmul.f32 %v1738, %v1770
  %v1803 = vmul.f32 %v1739, %v1771
  %v1804 = vmul.f32 %v1740, %v1772
  %v1805 = vmul.f32 %v1741, %v1773
  %v1806 = vmul.f32 %v1742, %v1774
  %v1807 = vmul.f32 %v1743, %v1775
  %v1808 = vmul.f32 %v1744, %v1776
  %v1809 = vmul.f32 %v1745, %v1777
  %v1810 = vmul.f32 %v1746, %v1778
  %v1811 = vmul.f32 %v1747, %v1779
  %v1812 = vmul.f32 %v1748, %v1780
  %v1813 = vmul.f32 %v1749, %v1781
  %v1814 = vmul.f32 %v1750, %v1782
  %v1815 = vmul.f32 %v1751, %v1783
  %v1816 = vmul.f32 %v1752, %v1784
  %v1817 = vmul.f32 %v1753, %v1785
  %v1818 = vmul.f32 %v1754, %v1786
  %v1819 = vmul.f32 %v1755, %v1787
  %v1820 = vmul.f32 %v1756, %v1788
  %v1821 = vmul.f32 %v1757, %v1789
  %v1822 = vmul.f32 %v1758, %v1790
  %v1823 = vmul.f32 %v1759, %v1791
  %v1824 = vmul.f32 %v1760, %v1792
  %v1825 = vmul.f32 %v1761, %v1793
  %v1826 = vmul.f32 %v1762, %v1794
  %v1827 = vsel %vm464, 1, 0
  %v1828 = vsel %vm465, 1, 0
  %vm1829 = vcmp.eq.s32.totalorder %v1827, 1
  %vm1830 = vcmp.eq.s32.totalorder %v1828, 1
  %v1831 = vsel %vm1829, %v1795, -1e+32
  %v1832 = vsel %vm1830, %v1796, -1e+32
  %v1833 = vsel %vm1829, %v1797, -1e+32
  %v1834 = vsel %vm1830, %v1798, -1e+32
  %v1835 = vsel %vm1829, %v1799, -1e+32
  %v1836 = vsel %vm1830, %v1800, -1e+32
  %v1837 = vsel %vm1829, %v1801, -1e+32
  %v1838 = vsel %vm1830, %v1802, -1e+32
  %v1839 = vsel %vm1829, %v1803, -1e+32
  %v1840 = vsel %vm1830, %v1804, -1e+32
  %v1841 = vsel %vm1829, %v1805, -1e+32
  %v1842 = vsel %vm1830, %v1806, -1e+32
  %v1843 = vsel %vm1829, %v1807, -1e+32
  %v1844 = vsel %vm1830, %v1808, -1e+32
  %v1845 = vsel %vm1829, %v1809, -1e+32
  %v1846 = vsel %vm1830, %v1810, -1e+32
  %v1847 = vsel %vm1829, %v1811, -1e+32
  %v1848 = vsel %vm1830, %v1812, -1e+32
  %v1849 = vsel %vm1829, %v1813, -1e+32
  %v1850 = vsel %vm1830, %v1814, -1e+32
  %v1851 = vsel %vm1829, %v1815, -1e+32
  %v1852 = vsel %vm1830, %v1816, -1e+32
  %v1853 = vsel %vm1829, %v1817, -1e+32
  %v1854 = vsel %vm1830, %v1818, -1e+32
  %v1855 = vsel %vm1829, %v1819, -1e+32
  %v1856 = vsel %vm1830, %v1820, -1e+32
  %v1857 = vsel %vm1829, %v1821, -1e+32
  %v1858 = vsel %vm1830, %v1822, -1e+32
  %v1859 = vsel %vm1829, %v1823, -1e+32
  %v1860 = vsel %vm1830, %v1824, -1e+32
  %v1861 = vsel %vm1829, %v1825, -1e+32
  %v1862 = vsel %vm1830, %v1826, -1e+32
  %vm1863 = vcmask 130048
  %v1864 = vsel %vm1863, %v1831, -inf
  %1865 = vmax.xlane.f32.xlu0 %v1864
  %v1866 = vpop.xlane.xlu0 %1865
  %v1867 = vsel %vm1863, %v1832, -inf
  %1868 = vmax.xlane.f32.xlu0 %v1867
  %v1869 = vpop.xlane.xlu0 %1868
  %v1870 = vsel %vm1863, %v1833, -inf
  %1871 = vmax.xlane.f32.xlu0 %v1870
  %v1872 = vpop.xlane.xlu0 %1871
  %v1873 = vsel %vm1863, %v1834, -inf
  %1874 = vmax.xlane.f32.xlu0 %v1873
  %v1875 = vpop.xlane.xlu0 %1874
  %v1876 = vsel %vm1863, %v1835, -inf
  %1877 = vmax.xlane.f32.xlu0 %v1876
  %v1878 = vpop.xlane.xlu0 %1877
  %v1879 = vsel %vm1863, %v1836, -inf
  %1880 = vmax.xlane.f32.xlu0 %v1879
  %v1881 = vpop.xlane.xlu0 %1880
  %v1882 = vsel %vm1863, %v1837, -inf
  %1883 = vmax.xlane.f32.xlu0 %v1882
  %v1884 = vpop.xlane.xlu0 %1883
  %v1885 = vsel %vm1863, %v1838, -inf
  %1886 = vmax.xlane.f32.xlu0 %v1885
  %v1887 = vpop.xlane.xlu0 %1886
  %v1888 = vsel %vm1863, %v1839, -inf
  %1889 = vmax.xlane.f32.xlu0 %v1888
  %v1890 = vpop.xlane.xlu0 %1889
  %v1891 = vsel %vm1863, %v1840, -inf
  %1892 = vmax.xlane.f32.xlu0 %v1891
  %v1893 = vpop.xlane.xlu0 %1892
  %v1894 = vsel %vm1863, %v1841, -inf
  %1895 = vmax.xlane.f32.xlu0 %v1894
  %v1896 = vpop.xlane.xlu0 %1895
  %v1897 = vsel %vm1863, %v1842, -inf
  %1898 = vmax.xlane.f32.xlu0 %v1897
  %v1899 = vpop.xlane.xlu0 %1898
  %v1900 = vsel %vm1863, %v1843, -inf
  %1901 = vmax.xlane.f32.xlu0 %v1900
  %v1902 = vpop.xlane.xlu0 %1901
  %v1903 = vsel %vm1863, %v1844, -inf
  %1904 = vmax.xlane.f32.xlu0 %v1903
  %v1905 = vpop.xlane.xlu0 %1904
  %v1906 = vsel %vm1863, %v1845, -inf
  %1907 = vmax.xlane.f32.xlu0 %v1906
  %v1908 = vpop.xlane.xlu0 %1907
  %v1909 = vsel %vm1863, %v1846, -inf
  %1910 = vmax.xlane.f32.xlu0 %v1909
  %v1911 = vpop.xlane.xlu0 %1910
  %v1912 = vsel %vm1863, %v1847, -inf
  %1913 = vmax.xlane.f32.xlu0 %v1912
  %v1914 = vpop.xlane.xlu0 %1913
  %v1915 = vsel %vm1863, %v1848, -inf
  %1916 = vmax.xlane.f32.xlu0 %v1915
  %v1917 = vpop.xlane.xlu0 %1916
  %v1918 = vsel %vm1863, %v1849, -inf
  %1919 = vmax.xlane.f32.xlu0 %v1918
  %v1920 = vpop.xlane.xlu0 %1919
  %v1921 = vsel %vm1863, %v1850, -inf
  %1922 = vmax.xlane.f32.xlu0 %v1921
  %v1923 = vpop.xlane.xlu0 %1922
  %v1924 = vsel %vm1863, %v1851, -inf
  %1925 = vmax.xlane.f32.xlu0 %v1924
  %v1926 = vpop.xlane.xlu0 %1925
  %v1927 = vsel %vm1863, %v1852, -inf
  %1928 = vmax.xlane.f32.xlu0 %v1927
  %v1929 = vpop.xlane.xlu0 %1928
  %v1930 = vsel %vm1863, %v1853, -inf
  %1931 = vmax.xlane.f32.xlu0 %v1930
  %v1932 = vpop.xlane.xlu0 %1931
  %v1933 = vsel %vm1863, %v1854, -inf
  %1934 = vmax.xlane.f32.xlu0 %v1933
  %v1935 = vpop.xlane.xlu0 %1934
  %v1936 = vsel %vm1863, %v1855, -inf
  %1937 = vmax.xlane.f32.xlu0 %v1936
  %v1938 = vpop.xlane.xlu0 %1937
  %v1939 = vsel %vm1863, %v1856, -inf
  %1940 = vmax.xlane.f32.xlu0 %v1939
  %v1941 = vpop.xlane.xlu0 %1940
  %v1942 = vsel %vm1863, %v1857, -inf
  %1943 = vmax.xlane.f32.xlu0 %v1942
  %v1944 = vpop.xlane.xlu0 %1943
  %v1945 = vsel %vm1863, %v1858, -inf
  %1946 = vmax.xlane.f32.xlu0 %v1945
  %v1947 = vpop.xlane.xlu0 %1946
  %v1948 = vsel %vm1863, %v1859, -inf
  %1949 = vmax.xlane.f32.xlu0 %v1948
  %v1950 = vpop.xlane.xlu0 %1949
  %v1951 = vsel %vm1863, %v1860, -inf
  %1952 = vmax.xlane.f32.xlu0 %v1951
  %v1953 = vpop.xlane.xlu0 %1952
  %v1954 = vsel %vm1863, %v1861, -inf
  %1955 = vmax.xlane.f32.xlu0 %v1954
  %v1956 = vpop.xlane.xlu0 %1955
  %v1957 = vsel %vm1863, %v1862, -inf
  %1958 = vmax.xlane.f32.xlu0 %v1957
  %v1959 = vpop.xlane.xlu0 %1958
  %v1960 = vsub.f32 %v1831, %v1866
  %v1961 = vsub.f32 %v1832, %v1869
  %v1962 = vsub.f32 %v1833, %v1872
  %v1963 = vsub.f32 %v1834, %v1875
  %v1964 = vsub.f32 %v1835, %v1878
  %v1965 = vsub.f32 %v1836, %v1881
  %v1966 = vsub.f32 %v1837, %v1884
  %v1967 = vsub.f32 %v1838, %v1887
  %v1968 = vsub.f32 %v1839, %v1890
  %v1969 = vsub.f32 %v1840, %v1893
  %v1970 = vsub.f32 %v1841, %v1896
  %v1971 = vsub.f32 %v1842, %v1899
  %v1972 = vsub.f32 %v1843, %v1902
  %v1973 = vsub.f32 %v1844, %v1905
  %v1974 = vsub.f32 %v1845, %v1908
  %v1975 = vsub.f32 %v1846, %v1911
  %v1976 = vsub.f32 %v1847, %v1914
  %v1977 = vsub.f32 %v1848, %v1917
  %v1978 = vsub.f32 %v1849, %v1920
  %v1979 = vsub.f32 %v1850, %v1923
  %v1980 = vsub.f32 %v1851, %v1926
  %v1981 = vsub.f32 %v1852, %v1929
  %v1982 = vsub.f32 %v1853, %v1932
  %v1983 = vsub.f32 %v1854, %v1935
  %v1984 = vsub.f32 %v1855, %v1938
  %v1985 = vsub.f32 %v1856, %v1941
  %v1986 = vsub.f32 %v1857, %v1944
  %v1987 = vsub.f32 %v1858, %v1947
  %v1988 = vsub.f32 %v1859, %v1950
  %v1989 = vsub.f32 %v1860, %v1953
  %v1990 = vsub.f32 %v1861, %v1956
  %v1991 = vsub.f32 %v1862, %v1959
  %v1992 = vmul.f32 %v1960, 1.442695
  %v1993 = vpow.pop %v1992
  %v1994 = vmul.f32 %v1961, 1.442695
  %v1995 = vpow.pop %v1994
  %v1996 = vmul.f32 %v1962, 1.442695
  %v1997 = vpow.pop %v1996
  %v1998 = vmul.f32 %v1963, 1.442695
  %v1999 = vpow.pop %v1998
  %v2000 = vmul.f32 %v1964, 1.442695
  %v2001 = vpow.pop %v2000
  %v2002 = vmul.f32 %v1965, 1.442695
  %v2003 = vpow.pop %v2002
  %v2004 = vmul.f32 %v1966, 1.442695
  %v2005 = vpow.pop %v2004
  %v2006 = vmul.f32 %v1967, 1.442695
  %v2007 = vpow.pop %v2006
  %v2008 = vmul.f32 %v1968, 1.442695
  %v2009 = vpow.pop %v2008
  %v2010 = vmul.f32 %v1969, 1.442695
  %v2011 = vpow.pop %v2010
  %v2012 = vmul.f32 %v1970, 1.442695
  %v2013 = vpow.pop %v2012
  %v2014 = vmul.f32 %v1971, 1.442695
  %v2015 = vpow.pop %v2014
  %v2016 = vmul.f32 %v1972, 1.442695
  %v2017 = vpow.pop %v2016
  %v2018 = vmul.f32 %v1973, 1.442695
  %v2019 = vpow.pop %v2018
  %v2020 = vmul.f32 %v1974, 1.442695
  %v2021 = vpow.pop %v2020
  %v2022 = vmul.f32 %v1975, 1.442695
  %v2023 = vpow.pop %v2022
  %v2024 = vmul.f32 %v1976, 1.442695
  %v2025 = vpow.pop %v2024
  %v2026 = vmul.f32 %v1977, 1.442695
  %v2027 = vpow.pop %v2026
  %v2028 = vmul.f32 %v1978, 1.442695
  %v2029 = vpow.pop %v2028
  %v2030 = vmul.f32 %v1979, 1.442695
  %v2031 = vpow.pop %v2030
  %v2032 = vmul.f32 %v1980, 1.442695
  %v2033 = vpow.pop %v2032
  %v2034 = vmul.f32 %v1981, 1.442695
  %v2035 = vpow.pop %v2034
  %v2036 = vmul.f32 %v1982, 1.442695
  %v2037 = vpow.pop %v2036
  %v2038 = vmul.f32 %v1983, 1.442695
  %v2039 = vpow.pop %v2038
  %v2040 = vmul.f32 %v1984, 1.442695
  %v2041 = vpow.pop %v2040
  %v2042 = vmul.f32 %v1985, 1.442695
  %v2043 = vpow.pop %v2042
  %v2044 = vmul.f32 %v1986, 1.442695
  %v2045 = vpow.pop %v2044
  %v2046 = vmul.f32 %v1987, 1.442695
  %v2047 = vpow.pop %v2046
  %v2048 = vmul.f32 %v1988, 1.442695
  %v2049 = vpow.pop %v2048
  %v2050 = vmul.f32 %v1989, 1.442695
  %v2051 = vpow.pop %v2050
  %v2052 = vmul.f32 %v1990, 1.442695
  %v2053 = vpow.pop %v2052
  %v2054 = vmul.f32 %v1991, 1.442695
  %v2055 = vpow.pop %v2054
  %v2056 = vsel %vm1863, %v1993, 0.0
  %2057 = vadd.xlane.f32.xlu0 %v2056
  %v2058 = vpop.xlane.xlu0 %2057
  %v2059 = vsel %vm1863, %v1995, 0.0
  %2060 = vadd.xlane.f32.xlu0 %v2059
  %v2061 = vpop.xlane.xlu0 %2060
  %v2062 = vsel %vm1863, %v1997, 0.0
  %2063 = vadd.xlane.f32.xlu0 %v2062
  %v2064 = vpop.xlane.xlu0 %2063
  %v2065 = vsel %vm1863, %v1999, 0.0
  %2066 = vadd.xlane.f32.xlu0 %v2065
  %v2067 = vpop.xlane.xlu0 %2066
  %v2068 = vsel %vm1863, %v2001, 0.0
  %2069 = vadd.xlane.f32.xlu0 %v2068
  %v2070 = vpop.xlane.xlu0 %2069
  %v2071 = vsel %vm1863, %v2003, 0.0
  %2072 = vadd.xlane.f32.xlu0 %v2071
  %v2073 = vpop.xlane.xlu0 %2072
  %v2074 = vsel %vm1863, %v2005, 0.0
  %2075 = vadd.xlane.f32.xlu0 %v2074
  %v2076 = vpop.xlane.xlu0 %2075
  %v2077 = vsel %vm1863, %v2007, 0.0
  %2078 = vadd.xlane.f32.xlu0 %v2077
  %v2079 = vpop.xlane.xlu0 %2078
  %v2080 = vsel %vm1863, %v2009, 0.0
  %2081 = vadd.xlane.f32.xlu0 %v2080
  %v2082 = vpop.xlane.xlu0 %2081
  %v2083 = vsel %vm1863, %v2011, 0.0
  %2084 = vadd.xlane.f32.xlu0 %v2083
  %v2085 = vpop.xlane.xlu0 %2084
  %v2086 = vsel %vm1863, %v2013, 0.0
  %2087 = vadd.xlane.f32.xlu0 %v2086
  %v2088 = vpop.xlane.xlu0 %2087
  %v2089 = vsel %vm1863, %v2015, 0.0
  %2090 = vadd.xlane.f32.xlu0 %v2089
  %v2091 = vpop.xlane.xlu0 %2090
  %v2092 = vsel %vm1863, %v2017, 0.0
  %2093 = vadd.xlane.f32.xlu0 %v2092
  %v2094 = vpop.xlane.xlu0 %2093
  %v2095 = vsel %vm1863, %v2019, 0.0
  %2096 = vadd.xlane.f32.xlu0 %v2095
  %v2097 = vpop.xlane.xlu0 %2096
  %v2098 = vsel %vm1863, %v2021, 0.0
  %2099 = vadd.xlane.f32.xlu0 %v2098
  %v2100 = vpop.xlane.xlu0 %2099
  %v2101 = vsel %vm1863, %v2023, 0.0
  %2102 = vadd.xlane.f32.xlu0 %v2101
  %v2103 = vpop.xlane.xlu0 %2102
  %v2104 = vsel %vm1863, %v2025, 0.0
  %2105 = vadd.xlane.f32.xlu0 %v2104
  %v2106 = vpop.xlane.xlu0 %2105
  %v2107 = vsel %vm1863, %v2027, 0.0
  %2108 = vadd.xlane.f32.xlu0 %v2107
  %v2109 = vpop.xlane.xlu0 %2108
  %v2110 = vsel %vm1863, %v2029, 0.0
  %2111 = vadd.xlane.f32.xlu0 %v2110
  %v2112 = vpop.xlane.xlu0 %2111
  %v2113 = vsel %vm1863, %v2031, 0.0
  %2114 = vadd.xlane.f32.xlu0 %v2113
  %v2115 = vpop.xlane.xlu0 %2114
  %v2116 = vsel %vm1863, %v2033, 0.0
  %2117 = vadd.xlane.f32.xlu0 %v2116
  %v2118 = vpop.xlane.xlu0 %2117
  %v2119 = vsel %vm1863, %v2035, 0.0
  %2120 = vadd.xlane.f32.xlu0 %v2119
  %v2121 = vpop.xlane.xlu0 %2120
  %v2122 = vsel %vm1863, %v2037, 0.0
  %2123 = vadd.xlane.f32.xlu0 %v2122
  %v2124 = vpop.xlane.xlu0 %2123
  %v2125 = vsel %vm1863, %v2039, 0.0
  %2126 = vadd.xlane.f32.xlu0 %v2125
  %v2127 = vpop.xlane.xlu0 %2126
  %v2128 = vsel %vm1863, %v2041, 0.0
  %2129 = vadd.xlane.f32.xlu0 %v2128
  %v2130 = vpop.xlane.xlu0 %2129
  %v2131 = vsel %vm1863, %v2043, 0.0
  %2132 = vadd.xlane.f32.xlu0 %v2131
  %v2133 = vpop.xlane.xlu0 %2132
  %v2134 = vsel %vm1863, %v2045, 0.0
  %2135 = vadd.xlane.f32.xlu0 %v2134
  %v2136 = vpop.xlane.xlu0 %2135
  %v2137 = vsel %vm1863, %v2047, 0.0
  %2138 = vadd.xlane.f32.xlu0 %v2137
  %v2139 = vpop.xlane.xlu0 %2138
  %v2140 = vsel %vm1863, %v2049, 0.0
  %2141 = vadd.xlane.f32.xlu0 %v2140
  %v2142 = vpop.xlane.xlu0 %2141
  %v2143 = vsel %vm1863, %v2051, 0.0
  %2144 = vadd.xlane.f32.xlu0 %v2143
  %v2145 = vpop.xlane.xlu0 %2144
  %v2146 = vsel %vm1863, %v2053, 0.0
  %2147 = vadd.xlane.f32.xlu0 %v2146
  %v2148 = vpop.xlane.xlu0 %2147
  %v2149 = vsel %vm1863, %v2055, 0.0
  %2150 = vadd.xlane.f32.xlu0 %v2149
  %v2151 = vpop.xlane.xlu0 %2150
  %v2152 = vrcp.pop %v2058
  %v2153 = vmul.f32 %v1993, %v2152
  %v2154 = vrcp.pop %v2061
  %v2155 = vmul.f32 %v1995, %v2154
  %v2156 = vrcp.pop %v2064
  %v2157 = vmul.f32 %v1997, %v2156
  %v2158 = vrcp.pop %v2067
  %v2159 = vmul.f32 %v1999, %v2158
  %v2160 = vrcp.pop %v2070
  %v2161 = vmul.f32 %v2001, %v2160
  %v2162 = vrcp.pop %v2073
  %v2163 = vmul.f32 %v2003, %v2162
  %v2164 = vrcp.pop %v2076
  %v2165 = vmul.f32 %v2005, %v2164
  %v2166 = vrcp.pop %v2079
  %v2167 = vmul.f32 %v2007, %v2166
  %v2168 = vrcp.pop %v2082
  %v2169 = vmul.f32 %v2009, %v2168
  %v2170 = vrcp.pop %v2085
  %v2171 = vmul.f32 %v2011, %v2170
  %v2172 = vrcp.pop %v2088
  %v2173 = vmul.f32 %v2013, %v2172
  %v2174 = vrcp.pop %v2091
  %v2175 = vmul.f32 %v2015, %v2174
  %v2176 = vrcp.pop %v2094
  %v2177 = vmul.f32 %v2017, %v2176
  %v2178 = vrcp.pop %v2097
  %v2179 = vmul.f32 %v2019, %v2178
  %v2180 = vrcp.pop %v2100
  %v2181 = vmul.f32 %v2021, %v2180
  %v2182 = vrcp.pop %v2103
  %v2183 = vmul.f32 %v2023, %v2182
  %v2184 = vrcp.pop %v2106
  %v2185 = vmul.f32 %v2025, %v2184
  %v2186 = vrcp.pop %v2109
  %v2187 = vmul.f32 %v2027, %v2186
  %v2188 = vrcp.pop %v2112
  %v2189 = vmul.f32 %v2029, %v2188
  %v2190 = vrcp.pop %v2115
  %v2191 = vmul.f32 %v2031, %v2190
  %v2192 = vrcp.pop %v2118
  %v2193 = vmul.f32 %v2033, %v2192
  %v2194 = vrcp.pop %v2121
  %v2195 = vmul.f32 %v2035, %v2194
  %v2196 = vrcp.pop %v2124
  %v2197 = vmul.f32 %v2037, %v2196
  %v2198 = vrcp.pop %v2127
  %v2199 = vmul.f32 %v2039, %v2198
  %v2200 = vrcp.pop %v2130
  %v2201 = vmul.f32 %v2041, %v2200
  %v2202 = vrcp.pop %v2133
  %v2203 = vmul.f32 %v2043, %v2202
  %v2204 = vrcp.pop %v2136
  %v2205 = vmul.f32 %v2045, %v2204
  %v2206 = vrcp.pop %v2139
  %v2207 = vmul.f32 %v2047, %v2206
  %v2208 = vrcp.pop %v2142
  %v2209 = vmul.f32 %v2049, %v2208
  %v2210 = vrcp.pop %v2145
  %v2211 = vmul.f32 %v2051, %v2210
  %v2212 = vrcp.pop %v2148
  %v2213 = vmul.f32 %v2053, %v2212
  %v2214 = vrcp.pop %v2151
  %v2215 = vmul.f32 %v2055, %v2214
  %v2216 = vcombine.low %v2153, %v2161
  %v2217 = vcombine.high %v2153, %v2161
  %v2219 = vunpack.c.l.s4 1983009808
  %v2220 = vunpack.c.0.s8 %v2219
  %v2221 = vlaneseq
  %v2222 = vshrl.u32 %v2221, 7
  %v2223 = vsub.s32 %v2220, %v2222
  %v2224 = vrot.slane %v2216, %v2223
  %v2226 = vunpack.c.l.s4 1983009808
  %v2227 = vunpack.c.0.s8 %v2226
  %v2228 = vlaneseq
  %v2229 = vshrl.u32 %v2228, 7
  %v2230 = vsub.s32 %v2227, %v2229
  %v2231 = vrot.slane %v2217, %v2230
  %v2232 = vcombine.low %v2157, %v2165
  %v2233 = vcombine.high %v2157, %v2165
  %v2235 = vunpack.c.l.s4 1983009808
  %v2236 = vunpack.c.0.s8 %v2235
  %v2237 = vlaneseq
  %v2238 = vshrl.u32 %v2237, 7
  %v2239 = vsub.s32 %v2236, %v2238
  %v2240 = vrot.slane %v2232, %v2239
  %v2242 = vunpack.c.l.s4 1983009808
  %v2243 = vunpack.c.0.s8 %v2242
  %v2244 = vlaneseq
  %v2245 = vshrl.u32 %v2244, 7
  %v2246 = vsub.s32 %v2243, %v2245
  %v2247 = vrot.slane %v2233, %v2246
  %v2248 = vcombine.low %v2169, %v2177
  %v2249 = vcombine.high %v2169, %v2177
  %v2251 = vunpack.c.l.s4 1983009808
  %v2252 = vunpack.c.0.s8 %v2251
  %v2253 = vlaneseq
  %v2254 = vshrl.u32 %v2253, 7
  %v2255 = vsub.s32 %v2252, %v2254
  %v2256 = vrot.slane %v2248, %v2255
  %v2258 = vunpack.c.l.s4 1983009808
  %v2259 = vunpack.c.0.s8 %v2258
  %v2260 = vlaneseq
  %v2261 = vshrl.u32 %v2260, 7
  %v2262 = vsub.s32 %v2259, %v2261
  %v2263 = vrot.slane %v2249, %v2262
  %v2264 = vcombine.low %v2173, %v2181
  %v2265 = vcombine.high %v2173, %v2181
  %v2267 = vunpack.c.l.s4 1983009808
  %v2268 = vunpack.c.0.s8 %v2267
  %v2269 = vlaneseq
  %v2270 = vshrl.u32 %v2269, 7
  %v2271 = vsub.s32 %v2268, %v2270
  %v2272 = vrot.slane %v2264, %v2271
  %v2274 = vunpack.c.l.s4 1983009808
  %v2275 = vunpack.c.0.s8 %v2274
  %v2276 = vlaneseq
  %v2277 = vshrl.u32 %v2276, 7
  %v2278 = vsub.s32 %v2275, %v2277
  %v2279 = vrot.slane %v2265, %v2278
  %v2280 = vcombine.low %v2224, %v2240
  %v2281 = vcombine.high %v2224, %v2240
  %v2283 = vunpack.c.l.s4 1934713408
  %v2284 = vunpack.c.0.s8 %v2283
  %v2285 = vlaneseq
  %v2286 = vshrl.u32 %v2285, 7
  %v2287 = vsub.s32 %v2284, %v2286
  %v2288 = vrot.slane %v2280, %v2287
  %v2290 = vunpack.c.l.s4 1934713408
  %v2291 = vunpack.c.0.s8 %v2290
  %v2292 = vlaneseq
  %v2293 = vshrl.u32 %v2292, 7
  %v2294 = vsub.s32 %v2291, %v2293
  %v2295 = vrot.slane %v2281, %v2294
  %v2296 = vcombine.low %v2231, %v2247
  %v2297 = vcombine.high %v2231, %v2247
  %v2299 = vunpack.c.l.s4 1934713408
  %v2300 = vunpack.c.0.s8 %v2299
  %v2301 = vlaneseq
  %v2302 = vshrl.u32 %v2301, 7
  %v2303 = vsub.s32 %v2300, %v2302
  %v2304 = vrot.slane %v2296, %v2303
  %v2306 = vunpack.c.l.s4 1934713408
  %v2307 = vunpack.c.0.s8 %v2306
  %v2308 = vlaneseq
  %v2309 = vshrl.u32 %v2308, 7
  %v2310 = vsub.s32 %v2307, %v2309
  %v2311 = vrot.slane %v2297, %v2310
  %v2312 = vcombine.low %v2256, %v2272
  %v2313 = vcombine.high %v2256, %v2272
  %v2315 = vunpack.c.l.s4 1934713408
  %v2316 = vunpack.c.0.s8 %v2315
  %v2317 = vlaneseq
  %v2318 = vshrl.u32 %v2317, 7
  %v2319 = vsub.s32 %v2316, %v2318
  %v2320 = vrot.slane %v2312, %v2319
  %v2322 = vunpack.c.l.s4 1934713408
  %v2323 = vunpack.c.0.s8 %v2322
  %v2324 = vlaneseq
  %v2325 = vshrl.u32 %v2324, 7
  %v2326 = vsub.s32 %v2323, %v2325
  %v2327 = vrot.slane %v2313, %v2326
  %v2328 = vcombine.low %v2263, %v2279
  %v2329 = vcombine.high %v2263, %v2279
  %v2331 = vunpack.c.l.s4 1934713408
  %v2332 = vunpack.c.0.s8 %v2331
  %v2333 = vlaneseq
  %v2334 = vshrl.u32 %v2333, 7
  %v2335 = vsub.s32 %v2332, %v2334
  %v2336 = vrot.slane %v2328, %v2335
  %v2338 = vunpack.c.l.s4 1934713408
  %v2339 = vunpack.c.0.s8 %v2338
  %v2340 = vlaneseq
  %v2341 = vshrl.u32 %v2340, 7
  %v2342 = vsub.s32 %v2339, %v2341
  %v2343 = vrot.slane %v2329, %v2342
  %v2344 = vcombine.low %v2288, %v2320
  %v2345 = vcombine.high %v2288, %v2320
  %v2346 = vcombine.low %v2295, %v2327
  %v2347 = vcombine.high %v2295, %v2327
  %v2348 = vcombine.low %v2304, %v2336
  %v2349 = vcombine.high %v2304, %v2336
  %v2350 = vcombine.low %v2311, %v2343
  %v2351 = vcombine.high %v2311, %v2343
  %v2352 = vcombine.low %v2185, %v2193
  %v2353 = vcombine.high %v2185, %v2193
  %v2355 = vunpack.c.l.s4 1983009808
  %v2356 = vunpack.c.0.s8 %v2355
  %v2357 = vlaneseq
  %v2358 = vshrl.u32 %v2357, 7
  %v2359 = vsub.s32 %v2356, %v2358
  %v2360 = vrot.slane %v2352, %v2359
  %v2362 = vunpack.c.l.s4 1983009808
  %v2363 = vunpack.c.0.s8 %v2362
  %v2364 = vlaneseq
  %v2365 = vshrl.u32 %v2364, 7
  %v2366 = vsub.s32 %v2363, %v2365
  %v2367 = vrot.slane %v2353, %v2366
  %v2368 = vcombine.low %v2189, %v2197
  %v2369 = vcombine.high %v2189, %v2197
  %v2371 = vunpack.c.l.s4 1983009808
  %v2372 = vunpack.c.0.s8 %v2371
  %v2373 = vlaneseq
  %v2374 = vshrl.u32 %v2373, 7
  %v2375 = vsub.s32 %v2372, %v2374
  %v2376 = vrot.slane %v2368, %v2375
  %v2378 = vunpack.c.l.s4 1983009808
  %v2379 = vunpack.c.0.s8 %v2378
  %v2380 = vlaneseq
  %v2381 = vshrl.u32 %v2380, 7
  %v2382 = vsub.s32 %v2379, %v2381
  %v2383 = vrot.slane %v2369, %v2382
  %v2384 = vcombine.low %v2201, %v2209
  %v2385 = vcombine.high %v2201, %v2209
  %v2387 = vunpack.c.l.s4 1983009808
  %v2388 = vunpack.c.0.s8 %v2387
  %v2389 = vlaneseq
  %v2390 = vshrl.u32 %v2389, 7
  %v2391 = vsub.s32 %v2388, %v2390
  %v2392 = vrot.slane %v2384, %v2391
  %v2394 = vunpack.c.l.s4 1983009808
  %v2395 = vunpack.c.0.s8 %v2394
  %v2396 = vlaneseq
  %v2397 = vshrl.u32 %v2396, 7
  %v2398 = vsub.s32 %v2395, %v2397
  %v2399 = vrot.slane %v2385, %v2398
  %v2400 = vcombine.low %v2205, %v2213
  %v2401 = vcombine.high %v2205, %v2213
  %v2403 = vunpack.c.l.s4 1983009808
  %v2404 = vunpack.c.0.s8 %v2403
  %v2405 = vlaneseq
  %v2406 = vshrl.u32 %v2405, 7
  %v2407 = vsub.s32 %v2404, %v2406
  %v2408 = vrot.slane %v2400, %v2407
  %v2410 = vunpack.c.l.s4 1983009808
  %v2411 = vunpack.c.0.s8 %v2410
  %v2412 = vlaneseq
  %v2413 = vshrl.u32 %v2412, 7
  %v2414 = vsub.s32 %v2411, %v2413
  %v2415 = vrot.slane %v2401, %v2414
  %v2416 = vcombine.low %v2360, %v2376
  %v2417 = vcombine.high %v2360, %v2376
  %v2419 = vunpack.c.l.s4 1934713408
  %v2420 = vunpack.c.0.s8 %v2419
  %v2421 = vlaneseq
  %v2422 = vshrl.u32 %v2421, 7
  %v2423 = vsub.s32 %v2420, %v2422
  %v2424 = vrot.slane %v2416, %v2423
  %v2426 = vunpack.c.l.s4 1934713408
  %v2427 = vunpack.c.0.s8 %v2426
  %v2428 = vlaneseq
  %v2429 = vshrl.u32 %v2428, 7
  %v2430 = vsub.s32 %v2427, %v2429
  %v2431 = vrot.slane %v2417, %v2430
  %v2432 = vcombine.low %v2367, %v2383
  %v2433 = vcombine.high %v2367, %v2383
  %v2435 = vunpack.c.l.s4 1934713408
  %v2436 = vunpack.c.0.s8 %v2435
  %v2437 = vlaneseq
  %v2438 = vshrl.u32 %v2437, 7
  %v2439 = vsub.s32 %v2436, %v2438
  %v2440 = vrot.slane %v2432, %v2439
  %v2442 = vunpack.c.l.s4 1934713408
  %v2443 = vunpack.c.0.s8 %v2442
  %v2444 = vlaneseq
  %v2445 = vshrl.u32 %v2444, 7
  %v2446 = vsub.s32 %v2443, %v2445
  %v2447 = vrot.slane %v2433, %v2446
  %v2448 = vcombine.low %v2392, %v2408
  %v2449 = vcombine.high %v2392, %v2408
  %v2451 = vunpack.c.l.s4 1934713408
  %v2452 = vunpack.c.0.s8 %v2451
  %v2453 = vlaneseq
  %v2454 = vshrl.u32 %v2453, 7
  %v2455 = vsub.s32 %v2452, %v2454
  %v2456 = vrot.slane %v2448, %v2455
  %v2458 = vunpack.c.l.s4 1934713408
  %v2459 = vunpack.c.0.s8 %v2458
  %v2460 = vlaneseq
  %v2461 = vshrl.u32 %v2460, 7
  %v2462 = vsub.s32 %v2459, %v2461
  %v2463 = vrot.slane %v2449, %v2462
  %v2464 = vcombine.low %v2399, %v2415
  %v2465 = vcombine.high %v2399, %v2415
  %v2467 = vunpack.c.l.s4 1934713408
  %v2468 = vunpack.c.0.s8 %v2467
  %v2469 = vlaneseq
  %v2470 = vshrl.u32 %v2469, 7
  %v2471 = vsub.s32 %v2468, %v2470
  %v2472 = vrot.slane %v2464, %v2471
  %v2474 = vunpack.c.l.s4 1934713408
  %v2475 = vunpack.c.0.s8 %v2474
  %v2476 = vlaneseq
  %v2477 = vshrl.u32 %v2476, 7
  %v2478 = vsub.s32 %v2475, %v2477
  %v2479 = vrot.slane %v2465, %v2478
  %v2480 = vcombine.low %v2424, %v2456
  %v2481 = vcombine.high %v2424, %v2456
  %v2482 = vcombine.low %v2431, %v2463
  %v2483 = vcombine.high %v2431, %v2463
  %v2484 = vcombine.low %v2440, %v2472
  %v2485 = vcombine.high %v2440, %v2472
  %v2486 = vcombine.low %v2447, %v2479
  %v2487 = vcombine.high %v2447, %v2479
  %v2488 = vcombine.low %v2155, %v2163
  %v2489 = vcombine.high %v2155, %v2163
  %v2491 = vunpack.c.l.s4 1983009808
  %v2492 = vunpack.c.0.s8 %v2491
  %v2493 = vlaneseq
  %v2494 = vshrl.u32 %v2493, 7
  %v2495 = vsub.s32 %v2492, %v2494
  %v2496 = vrot.slane %v2488, %v2495
  %v2498 = vunpack.c.l.s4 1983009808
  %v2499 = vunpack.c.0.s8 %v2498
  %v2500 = vlaneseq
  %v2501 = vshrl.u32 %v2500, 7
  %v2502 = vsub.s32 %v2499, %v2501
  %v2503 = vrot.slane %v2489, %v2502
  %v2504 = vcombine.low %v2159, %v2167
  %v2505 = vcombine.high %v2159, %v2167
  %v2507 = vunpack.c.l.s4 1983009808
  %v2508 = vunpack.c.0.s8 %v2507
  %v2509 = vlaneseq
  %v2510 = vshrl.u32 %v2509, 7
  %v2511 = vsub.s32 %v2508, %v2510
  %v2512 = vrot.slane %v2504, %v2511
  %v2514 = vunpack.c.l.s4 1983009808
  %v2515 = vunpack.c.0.s8 %v2514
  %v2516 = vlaneseq
  %v2517 = vshrl.u32 %v2516, 7
  %v2518 = vsub.s32 %v2515, %v2517
  %v2519 = vrot.slane %v2505, %v2518
  %v2520 = vcombine.low %v2171, %v2179
  %v2521 = vcombine.high %v2171, %v2179
  %v2523 = vunpack.c.l.s4 1983009808
  %v2524 = vunpack.c.0.s8 %v2523
  %v2525 = vlaneseq
  %v2526 = vshrl.u32 %v2525, 7
  %v2527 = vsub.s32 %v2524, %v2526
  %v2528 = vrot.slane %v2520, %v2527
  %v2530 = vunpack.c.l.s4 1983009808
  %v2531 = vunpack.c.0.s8 %v2530
  %v2532 = vlaneseq
  %v2533 = vshrl.u32 %v2532, 7
  %v2534 = vsub.s32 %v2531, %v2533
  %v2535 = vrot.slane %v2521, %v2534
  %v2536 = vcombine.low %v2175, %v2183
  %v2537 = vcombine.high %v2175, %v2183
  %v2539 = vunpack.c.l.s4 1983009808
  %v2540 = vunpack.c.0.s8 %v2539
  %v2541 = vlaneseq
  %v2542 = vshrl.u32 %v2541, 7
  %v2543 = vsub.s32 %v2540, %v2542
  %v2544 = vrot.slane %v2536, %v2543
  %v2546 = vunpack.c.l.s4 1983009808
  %v2547 = vunpack.c.0.s8 %v2546
  %v2548 = vlaneseq
  %v2549 = vshrl.u32 %v2548, 7
  %v2550 = vsub.s32 %v2547, %v2549
  %v2551 = vrot.slane %v2537, %v2550
  %v2552 = vcombine.low %v2496, %v2512
  %v2553 = vcombine.high %v2496, %v2512
  %v2555 = vunpack.c.l.s4 1934713408
  %v2556 = vunpack.c.0.s8 %v2555
  %v2557 = vlaneseq
  %v2558 = vshrl.u32 %v2557, 7
  %v2559 = vsub.s32 %v2556, %v2558
  %v2560 = vrot.slane %v2552, %v2559
  %v2562 = vunpack.c.l.s4 1934713408
  %v2563 = vunpack.c.0.s8 %v2562
  %v2564 = vlaneseq
  %v2565 = vshrl.u32 %v2564, 7
  %v2566 = vsub.s32 %v2563, %v2565
  %v2567 = vrot.slane %v2553, %v2566
  %v2568 = vcombine.low %v2503, %v2519
  %v2569 = vcombine.high %v2503, %v2519
  %v2571 = vunpack.c.l.s4 1934713408
  %v2572 = vunpack.c.0.s8 %v2571
  %v2573 = vlaneseq
  %v2574 = vshrl.u32 %v2573, 7
  %v2575 = vsub.s32 %v2572, %v2574
  %v2576 = vrot.slane %v2568, %v2575
  %v2578 = vunpack.c.l.s4 1934713408
  %v2579 = vunpack.c.0.s8 %v2578
  %v2580 = vlaneseq
  %v2581 = vshrl.u32 %v2580, 7
  %v2582 = vsub.s32 %v2579, %v2581
  %v2583 = vrot.slane %v2569, %v2582
  %v2584 = vcombine.low %v2528, %v2544
  %v2585 = vcombine.high %v2528, %v2544
  %v2587 = vunpack.c.l.s4 1934713408
  %v2588 = vunpack.c.0.s8 %v2587
  %v2589 = vlaneseq
  %v2590 = vshrl.u32 %v2589, 7
  %v2591 = vsub.s32 %v2588, %v2590
  %v2592 = vrot.slane %v2584, %v2591
  %v2594 = vunpack.c.l.s4 1934713408
  %v2595 = vunpack.c.0.s8 %v2594
  %v2596 = vlaneseq
  %v2597 = vshrl.u32 %v2596, 7
  %v2598 = vsub.s32 %v2595, %v2597
  %v2599 = vrot.slane %v2585, %v2598
  %v2600 = vcombine.low %v2535, %v2551
  %v2601 = vcombine.high %v2535, %v2551
  %v2603 = vunpack.c.l.s4 1934713408
  %v2604 = vunpack.c.0.s8 %v2603
  %v2605 = vlaneseq
  %v2606 = vshrl.u32 %v2605, 7
  %v2607 = vsub.s32 %v2604, %v2606
  %v2608 = vrot.slane %v2600, %v2607
  %v2610 = vunpack.c.l.s4 1934713408
  %v2611 = vunpack.c.0.s8 %v2610
  %v2612 = vlaneseq
  %v2613 = vshrl.u32 %v2612, 7
  %v2614 = vsub.s32 %v2611, %v2613
  %v2615 = vrot.slane %v2601, %v2614
  %v2616 = vcombine.low %v2560, %v2592
  %v2617 = vcombine.high %v2560, %v2592
  %v2618 = vcombine.low %v2567, %v2599
  %v2619 = vcombine.high %v2567, %v2599
  %v2620 = vcombine.low %v2576, %v2608
  %v2621 = vcombine.high %v2576, %v2608
  %v2622 = vcombine.low %v2583, %v2615
  %v2623 = vcombine.high %v2583, %v2615
  %v2624 = vcombine.low %v2187, %v2195
  %v2625 = vcombine.high %v2187, %v2195
  %v2627 = vunpack.c.l.s4 1983009808
  %v2628 = vunpack.c.0.s8 %v2627
  %v2629 = vlaneseq
  %v2630 = vshrl.u32 %v2629, 7
  %v2631 = vsub.s32 %v2628, %v2630
  %v2632 = vrot.slane %v2624, %v2631
  %v2634 = vunpack.c.l.s4 1983009808
  %v2635 = vunpack.c.0.s8 %v2634
  %v2636 = vlaneseq
  %v2637 = vshrl.u32 %v2636, 7
  %v2638 = vsub.s32 %v2635, %v2637
  %v2639 = vrot.slane %v2625, %v2638
  %v2640 = vcombine.low %v2191, %v2199
  %v2641 = vcombine.high %v2191, %v2199
  %v2643 = vunpack.c.l.s4 1983009808
  %v2644 = vunpack.c.0.s8 %v2643
  %v2645 = vlaneseq
  %v2646 = vshrl.u32 %v2645, 7
  %v2647 = vsub.s32 %v2644, %v2646
  %v2648 = vrot.slane %v2640, %v2647
  %v2650 = vunpack.c.l.s4 1983009808
  %v2651 = vunpack.c.0.s8 %v2650
  %v2652 = vlaneseq
  %v2653 = vshrl.u32 %v2652, 7
  %v2654 = vsub.s32 %v2651, %v2653
  %v2655 = vrot.slane %v2641, %v2654
  %v2656 = vcombine.low %v2203, %v2211
  %v2657 = vcombine.high %v2203, %v2211
  %v2659 = vunpack.c.l.s4 1983009808
  %v2660 = vunpack.c.0.s8 %v2659
  %v2661 = vlaneseq
  %v2662 = vshrl.u32 %v2661, 7
  %v2663 = vsub.s32 %v2660, %v2662
  %v2664 = vrot.slane %v2656, %v2663
  %v2666 = vunpack.c.l.s4 1983009808
  %v2667 = vunpack.c.0.s8 %v2666
  %v2668 = vlaneseq
  %v2669 = vshrl.u32 %v2668, 7
  %v2670 = vsub.s32 %v2667, %v2669
  %v2671 = vrot.slane %v2657, %v2670
  %v2672 = vcombine.low %v2207, %v2215
  %v2673 = vcombine.high %v2207, %v2215
  %v2675 = vunpack.c.l.s4 1983009808
  %v2676 = vunpack.c.0.s8 %v2675
  %v2677 = vlaneseq
  %v2678 = vshrl.u32 %v2677, 7
  %v2679 = vsub.s32 %v2676, %v2678
  %v2680 = vrot.slane %v2672, %v2679
  %v2682 = vunpack.c.l.s4 1983009808
  %v2683 = vunpack.c.0.s8 %v2682
  %v2684 = vlaneseq
  %v2685 = vshrl.u32 %v2684, 7
  %v2686 = vsub.s32 %v2683, %v2685
  %v2687 = vrot.slane %v2673, %v2686
  %v2688 = vcombine.low %v2632, %v2648
  %v2689 = vcombine.high %v2632, %v2648
  %v2691 = vunpack.c.l.s4 1934713408
  %v2692 = vunpack.c.0.s8 %v2691
  %v2693 = vlaneseq
  %v2694 = vshrl.u32 %v2693, 7
  %v2695 = vsub.s32 %v2692, %v2694
  %v2696 = vrot.slane %v2688, %v2695
  %v2698 = vunpack.c.l.s4 1934713408
  %v2699 = vunpack.c.0.s8 %v2698
  %v2700 = vlaneseq
  %v2701 = vshrl.u32 %v2700, 7
  %v2702 = vsub.s32 %v2699, %v2701
  %v2703 = vrot.slane %v2689, %v2702
  %v2704 = vcombine.low %v2639, %v2655
  %v2705 = vcombine.high %v2639, %v2655
  %v2707 = vunpack.c.l.s4 1934713408
  %v2708 = vunpack.c.0.s8 %v2707
  %v2709 = vlaneseq
  %v2710 = vshrl.u32 %v2709, 7
  %v2711 = vsub.s32 %v2708, %v2710
  %v2712 = vrot.slane %v2704, %v2711
  %v2714 = vunpack.c.l.s4 1934713408
  %v2715 = vunpack.c.0.s8 %v2714
  %v2716 = vlaneseq
  %v2717 = vshrl.u32 %v2716, 7
  %v2718 = vsub.s32 %v2715, %v2717
  %v2719 = vrot.slane %v2705, %v2718
  %v2720 = vcombine.low %v2664, %v2680
  %v2721 = vcombine.high %v2664, %v2680
  %v2723 = vunpack.c.l.s4 1934713408
  %v2724 = vunpack.c.0.s8 %v2723
  %v2725 = vlaneseq
  %v2726 = vshrl.u32 %v2725, 7
  %v2727 = vsub.s32 %v2724, %v2726
  %v2728 = vrot.slane %v2720, %v2727
  %v2730 = vunpack.c.l.s4 1934713408
  %v2731 = vunpack.c.0.s8 %v2730
  %v2732 = vlaneseq
  %v2733 = vshrl.u32 %v2732, 7
  %v2734 = vsub.s32 %v2731, %v2733
  %v2735 = vrot.slane %v2721, %v2734
  %v2736 = vcombine.low %v2671, %v2687
  %v2737 = vcombine.high %v2671, %v2687
  %v2739 = vunpack.c.l.s4 1934713408
  %v2740 = vunpack.c.0.s8 %v2739
  %v2741 = vlaneseq
  %v2742 = vshrl.u32 %v2741, 7
  %v2743 = vsub.s32 %v2740, %v2742
  %v2744 = vrot.slane %v2736, %v2743
  %v2746 = vunpack.c.l.s4 1934713408
  %v2747 = vunpack.c.0.s8 %v2746
  %v2748 = vlaneseq
  %v2749 = vshrl.u32 %v2748, 7
  %v2750 = vsub.s32 %v2747, %v2749
  %v2751 = vrot.slane %v2737, %v2750
  %v2752 = vcombine.low %v2696, %v2728
  %v2753 = vcombine.high %v2696, %v2728
  %v2754 = vcombine.low %v2703, %v2735
  %v2755 = vcombine.high %v2703, %v2735
  %v2756 = vcombine.low %v2712, %v2744
  %v2757 = vcombine.high %v2712, %v2744
  %v2758 = vcombine.low %v2719, %v2751
  %v2759 = vcombine.high %v2719, %v2751
  %2762 = vrot.lane.b32.xlu0 %v2345, 16
  %v2763 = vpop.permute.xlu0 %2762
  %2764 = vrot.lane.b32.xlu0 %v2481, 16
  %v2765 = vpop.permute.xlu0 %2764
  %2770 = vrot.lane.b32.xlu0 %v2346, 32
  %v2771 = vpop.permute.xlu0 %2770
  %2772 = vrot.lane.b32.xlu0 %v2482, 32
  %v2773 = vpop.permute.xlu0 %2772
  %2778 = vrot.lane.b32.xlu0 %v2347, 48
  %v2779 = vpop.permute.xlu0 %2778
  %2780 = vrot.lane.b32.xlu0 %v2483, 48
  %v2781 = vpop.permute.xlu0 %2780
  %2786 = vrot.lane.b32.xlu0 %v2348, 64
  %v2787 = vpop.permute.xlu0 %2786
  %2788 = vrot.lane.b32.xlu0 %v2484, 64
  %v2789 = vpop.permute.xlu0 %2788
  %2794 = vrot.lane.b32.xlu0 %v2349, 80
  %v2795 = vpop.permute.xlu0 %2794
  %2796 = vrot.lane.b32.xlu0 %v2485, 80
  %v2797 = vpop.permute.xlu0 %2796
  %2802 = vrot.lane.b32.xlu0 %v2350, 96
  %v2803 = vpop.permute.xlu0 %2802
  %2804 = vrot.lane.b32.xlu0 %v2486, 96
  %v2805 = vpop.permute.xlu0 %2804
  %2810 = vrot.lane.b32.xlu0 %v2351, 112
  %v2811 = vpop.permute.xlu0 %2810
  %2812 = vrot.lane.b32.xlu0 %v2487, 112
  %v2813 = vpop.permute.xlu0 %2812
  %2818 = vrot.lane.b32.xlu0 %v2617, 16
  %v2819 = vpop.permute.xlu0 %2818
  %2820 = vrot.lane.b32.xlu0 %v2753, 16
  %v2821 = vpop.permute.xlu0 %2820
  %2826 = vrot.lane.b32.xlu0 %v2618, 32
  %v2827 = vpop.permute.xlu0 %2826
  %2828 = vrot.lane.b32.xlu0 %v2754, 32
  %v2829 = vpop.permute.xlu0 %2828
  %2834 = vrot.lane.b32.xlu0 %v2619, 48
  %v2835 = vpop.permute.xlu0 %2834
  %2836 = vrot.lane.b32.xlu0 %v2755, 48
  %v2837 = vpop.permute.xlu0 %2836
  %2842 = vrot.lane.b32.xlu0 %v2620, 64
  %v2843 = vpop.permute.xlu0 %2842
  %2844 = vrot.lane.b32.xlu0 %v2756, 64
  %v2845 = vpop.permute.xlu0 %2844
  %2850 = vrot.lane.b32.xlu0 %v2621, 80
  %v2851 = vpop.permute.xlu0 %2850
  %2852 = vrot.lane.b32.xlu0 %v2757, 80
  %v2853 = vpop.permute.xlu0 %2852
  %2858 = vrot.lane.b32.xlu0 %v2622, 96
  %v2859 = vpop.permute.xlu0 %2858
  %2860 = vrot.lane.b32.xlu0 %v2758, 96
  %v2861 = vpop.permute.xlu0 %2860
  %2866 = vrot.lane.b32.xlu0 %v2623, 112
  %v2867 = vpop.permute.xlu0 %2866
  %2868 = vrot.lane.b32.xlu0 %v2759, 112
  %v2869 = vpop.permute.xlu0 %2868
  %v2872 = vsel %vm1863, %v2344, %v2763
  %v2873 = vsel %vm1863, %v2480, %v2765
  %v2874 = vsel %vm74, %v2872, %v2771
  %v2875 = vsel %vm74, %v2873, %v2773
  %vm2876 = vcmask 392192
  %v2877 = vsel %vm2876, %v2874, %v2779
  %v2878 = vsel %vm2876, %v2875, %v2781
  %vm2879 = vcmask 523264
  %v2880 = vsel %vm2879, %v2877, %v2787
  %v2881 = vsel %vm2879, %v2878, %v2789
  %vm2882 = vcmask 654336
  %v2883 = vsel %vm2882, %v2880, %v2795
  %v2884 = vsel %vm2882, %v2881, %v2797
  %vm2885 = vcmask 785408
  %v2886 = vsel %vm2885, %v2883, %v2803
  %v2887 = vsel %vm2885, %v2884, %v2805
  %vm2888 = vcmask 916480
  %v2889 = vsel %vm2888, %v2886, %v2811
  %v2890 = vsel %vm2888, %v2887, %v2813
  %v2891 = vsel %vm1863, %v2616, %v2819
  %v2892 = vsel %vm1863, %v2752, %v2821
  %v2893 = vsel %vm74, %v2891, %v2827
  %v2894 = vsel %vm74, %v2892, %v2829
  %v2895 = vsel %vm2876, %v2893, %v2835
  %v2896 = vsel %vm2876, %v2894, %v2837
  %v2897 = vsel %vm2879, %v2895, %v2843
  %v2898 = vsel %vm2879, %v2896, %v2845
  %v2899 = vsel %vm2882, %v2897, %v2851
  %v2900 = vsel %vm2882, %v2898, %v2853
  %v2901 = vsel %vm2885, %v2899, %v2859
  %v2902 = vsel %vm2885, %v2900, %v2861
  %v2903 = vsel %vm2888, %v2901, %v2867
  %v2904 = vsel %vm2888, %v2902, %v2869
  %2905 = vst [vmem:[%s17] sm:$0xff] %v2889
  %2906 = vst [vmem:[%s17 + $0x8] sm:$0xff] %v2903
  %2907 = vst [vmem:[%s17 + $0x10] sm:$0xff] %v2890
  %2908 = vst [vmem:[%s17 + $0x18] sm:$0xff] %v2904
  %v2910 = vsel %vm1863, %v2153, 0
  %v2913 = vsel %vm1863, %v2155, 0
  %2915 = vmatprep.subr.mxu0 0.0
  %2916 = vmatpush1.msra.mxu0 %v282
  %2917 = vmatprep.subr.mxu0 0.0
  %2918 = vmatpush1.msra.mxu0 %v287
  %2919 = vmatprep.subr.mxu0 0.0
  %2920 = vmatpush1.msra.mxu0 0.0
  %2921 = vmatprep.subr.mxu0 0.0
  %2922 = vmatpush1.msra.mxu0 0.0
  %2923 = vmatprep.subr.mxu0 0.0
  %2924 = vmatpush1.msra.mxu0 0.0
  %2925 = vmatprep.subr.mxu0 0.0
  %2926 = vmatpush1.msra.mxu0 0.0
  %2927 = vmatprep.subr.mxu0 0.0
  %2928 = vmatpush1.msra.mxu0 0.0
  %2929 = vmatprep.subr.mxu0 0.0
  %2930 = vmatpush1.msra.mxu0 0.0
  %2931 = vmatprep.subr.mxu0 0.0
  %2932 = vmatpush1.msra.mxu0 0.0
  %2933 = vmatprep.subr.mxu0 0.0
  %2934 = vmatpush1.msra.mxu0 0.0
  %2935 = vmatprep.subr.mxu0 0.0
  %2936 = vmatpush1.msra.mxu0 0.0
  %2937 = vmatprep.subr.mxu0 0.0
  %2938 = vmatpush1.msra.mxu0 0.0
  %2939 = vmatprep.subr.mxu0 0.0
  %2940 = vmatpush1.msra.mxu0 0.0
  %2941 = vmatprep.subr.mxu0 0.0
  %2942 = vmatpush1.msra.mxu0 0.0
  %2943 = vmatprep.subr.mxu0 0.0
  %2944 = vmatpush1.msra.mxu0 0.0
  %2945 = vmatprep.subr.mxu0 0.0
  %2946 = vmatpush1.msra.mxu0 0.0
  %2947 = vmatprep.subr.mxu0 0.0
  %2948 = vmatpush1.msra.mxu0 0.0
  %2949 = vmatprep.subr.mxu0 0.0
  %2950 = vmatpush1.msra.mxu0 0.0
  %2951 = vmatprep.subr.mxu0 0.0
  %2952 = vmatpush1.msra.mxu0 0.0
  %2953 = vmatprep.subr.mxu0 0.0
  %2954 = vmatpush1.msra.mxu0 0.0
  %2955 = vmatprep.subr.mxu0 0.0
  %2956 = vmatpush1.msra.mxu0 0.0
  %2957 = vmatprep.subr.mxu0 0.0
  %2958 = vmatpush1.msra.mxu0 0.0
  %2959 = vmatprep.subr.mxu0 0.0
  %2960 = vmatpush1.msra.mxu0 0.0
  %2961 = vmatprep.subr.mxu0 0.0
  %2962 = vmatpush1.msra.mxu0 0.0
  %2963 = vmatprep.subr.mxu0 0.0
  %2964 = vmatpush1.msra.mxu0 0.0
  %2965 = vmatprep.subr.mxu0 0.0
  %2966 = vmatpush1.msra.mxu0 0.0
  %2967 = vmatprep.subr.mxu0 0.0
  %2968 = vmatpush1.msra.mxu0 0.0
  %2969 = vmatprep.subr.mxu0 0.0
  %2970 = vmatpush1.msra.mxu0 0.0
  %2971 = vmatprep.subr.mxu0 0.0
  %2972 = vmatpush1.msra.mxu0 0.0
  %2973 = vmatprep.subr.mxu0 0.0
  %2974 = vmatpush1.msra.mxu0 0.0
  %2975 = vmatprep.subr.mxu0 0.0
  %2976 = vmatpush1.msra.mxu0 0.0
  %2977 = vmatprep.subr.mxu0 0.0
  %2978 = vmatpush1.msra.mxu0 0.0
  %2979 = vmatprep.mubr.f32.mxu0 0.0
  %2980 = vmatmul.mubr.f32.gmra.mrb[0].mxu0 %v2910
  %v2981 = vpop.f32.mrb[0].mxu0
  %v2982 = vadd.f32 0.0, %v2981
  %v2983 = vpop.f32.mrb[0].mxu0
  %2984 = vmatprep.mubr.f32.mxu0 0.0
  %2985 = vmatmul.mubr.f32.gmra.mrb[0].mxu0 %v2913
  %v2986 = vpop.f32.mrb[0].mxu0
  %v2987 = vadd.f32 0.0, %v2986
  %v2988 = vpop.f32.mrb[0].mxu0
  %2989 = vdwg.mxu0
  %v2991 = vsel %vm1863, %v2157, 0
  %v2994 = vsel %vm1863, %v2159, 0
  %2996 = vmatprep.subr.mxu0 0.0
  %2997 = vmatpush1.msra.mxu0 %v292
  %2998 = vmatprep.subr.mxu0 0.0
  %2999 = vmatpush1.msra.mxu0 %v297
  %3000 = vmatprep.subr.mxu0 0.0
  %3001 = vmatpush1.msra.mxu0 0.0
  %3002 = vmatprep.subr.mxu0 0.0
  %3003 = vmatpush1.msra.mxu0 0.0
  %3004 = vmatprep.subr.mxu0 0.0
  %3005 = vmatpush1.msra.mxu0 0.0
  %3006 = vmatprep.subr.mxu0 0.0
  %3007 = vmatpush1.msra.mxu0 0.0
  %3008 = vmatprep.subr.mxu0 0.0
  %3009 = vmatpush1.msra.mxu0 0.0
  %3010 = vmatprep.subr.mxu0 0.0
  %3011 = vmatpush1.msra.mxu0 0.0
  %3012 = vmatprep.subr.mxu0 0.0
  %3013 = vmatpush1.msra.mxu0 0.0
  %3014 = vmatprep.subr.mxu0 0.0
  %3015 = vmatpush1.msra.mxu0 0.0
  %3016 = vmatprep.subr.mxu0 0.0
  %3017 = vmatpush1.msra.mxu0 0.0
  %3018 = vmatprep.subr.mxu0 0.0
  %3019 = vmatpush1.msra.mxu0 0.0
  %3020 = vmatprep.subr.mxu0 0.0
  %3021 = vmatpush1.msra.mxu0 0.0
  %3022 = vmatprep.subr.mxu0 0.0
  %3023 = vmatpush1.msra.mxu0 0.0
  %3024 = vmatprep.subr.mxu0 0.0
  %3025 = vmatpush1.msra.mxu0 0.0
  %3026 = vmatprep.subr.mxu0 0.0
  %3027 = vmatpush1.msra.mxu0 0.0
  %3028 = vmatprep.subr.mxu0 0.0
  %3029 = vmatpush1.msra.mxu0 0.0
  %3030 = vmatprep.subr.mxu0 0.0
  %3031 = vmatpush1.msra.mxu0 0.0
  %3032 = vmatprep.subr.mxu0 0.0
  %3033 = vmatpush1.msra.mxu0 0.0
  %3034 = vmatprep.subr.mxu0 0.0
  %3035 = vmatpush1.msra.mxu0 0.0
  %3036 = vmatprep.subr.mxu0 0.0
  %3037 = vmatpush1.msra.mxu0 0.0
  %3038 = vmatprep.subr.mxu0 0.0
  %3039 = vmatpush1.msra.mxu0 0.0
  %3040 = vmatprep.subr.mxu0 0.0
  %3041 = vmatpush1.msra.mxu0 0.0
  %3042 = vmatprep.subr.mxu0 0.0
  %3043 = vmatpush1.msra.mxu0 0.0
  %3044 = vmatprep.subr.mxu0 0.0
  %3045 = vmatpush1.msra.mxu0 0.0
  %3046 = vmatprep.subr.mxu0 0.0
  %3047 = vmatpush1.msra.mxu0 0.0
  %3048 = vmatprep.subr.mxu0 0.0
  %3049 = vmatpush1.msra.mxu0 0.0
  %3050 = vmatprep.subr.mxu0 0.0
  %3051 = vmatpush1.msra.mxu0 0.0
  %3052 = vmatprep.subr.mxu0 0.0
  %3053 = vmatpush1.msra.mxu0 0.0
  %3054 = vmatprep.subr.mxu0 0.0
  %3055 = vmatpush1.msra.mxu0 0.0
  %3056 = vmatprep.subr.mxu0 0.0
  %3057 = vmatpush1.msra.mxu0 0.0
  %3058 = vmatprep.subr.mxu0 0.0
  %3059 = vmatpush1.msra.mxu0 0.0
  %3060 = vmatprep.mubr.f32.mxu0 0.0
  %3061 = vmatmul.mubr.f32.gmra.mrb[0].mxu0 %v2991
  %v3062 = vpop.f32.mrb[0].mxu0
  %v3063 = vadd.f32 0.0, %v3062
  %v3064 = vpop.f32.mrb[0].mxu0
  %3065 = vmatprep.mubr.f32.mxu0 0.0
  %3066 = vmatmul.mubr.f32.gmra.mrb[0].mxu0 %v2994
  %v3067 = vpop.f32.mrb[0].mxu0
  %v3068 = vadd.f32 0.0, %v3067
  %v3069 = vpop.f32.mrb[0].mxu0
  %3070 = vdwg.mxu0
  %v3072 = vsel %vm1863, %v2161, 0
  %v3075 = vsel %vm1863, %v2163, 0
  %3077 = vmatprep.subr.mxu0 0.0
  %3078 = vmatpush1.msra.mxu0 %v302
  %3079 = vmatprep.subr.mxu0 0.0
  %3080 = vmatpush1.msra.mxu0 %v307
  %3081 = vmatprep.subr.mxu0 0.0
  %3082 = vmatpush1.msra.mxu0 0.0
  %3083 = vmatprep.subr.mxu0 0.0
  %3084 = vmatpush1.msra.mxu0 0.0
  %3085 = vmatprep.subr.mxu0 0.0
  %3086 = vmatpush1.msra.mxu0 0.0
  %3087 = vmatprep.subr.mxu0 0.0
  %3088 = vmatpush1.msra.mxu0 0.0
  %3089 = vmatprep.subr.mxu0 0.0
  %3090 = vmatpush1.msra.mxu0 0.0
  %3091 = vmatprep.subr.mxu0 0.0
  %3092 = vmatpush1.msra.mxu0 0.0
  %3093 = vmatprep.subr.mxu0 0.0
  %3094 = vmatpush1.msra.mxu0 0.0
  %3095 = vmatprep.subr.mxu0 0.0
  %3096 = vmatpush1.msra.mxu0 0.0
  %3097 = vmatprep.subr.mxu0 0.0
  %3098 = vmatpush1.msra.mxu0 0.0
  %3099 = vmatprep.subr.mxu0 0.0
  %3100 = vmatpush1.msra.mxu0 0.0
  %3101 = vmatprep.subr.mxu0 0.0
  %3102 = vmatpush1.msra.mxu0 0.0
  %3103 = vmatprep.subr.mxu0 0.0
  %3104 = vmatpush1.msra.mxu0 0.0
  %3105 = vmatprep.subr.mxu0 0.0
  %3106 = vmatpush1.msra.mxu0 0.0
  %3107 = vmatprep.subr.mxu0 0.0
  %3108 = vmatpush1.msra.mxu0 0.0
  %3109 = vmatprep.subr.mxu0 0.0
  %3110 = vmatpush1.msra.mxu0 0.0
  %3111 = vmatprep.subr.mxu0 0.0
  %3112 = vmatpush1.msra.mxu0 0.0
  %3113 = vmatprep.subr.mxu0 0.0
  %3114 = vmatpush1.msra.mxu0 0.0
  %3115 = vmatprep.subr.mxu0 0.0
  %3116 = vmatpush1.msra.mxu0 0.0
  %3117 = vmatprep.subr.mxu0 0.0
  %3118 = vmatpush1.msra.mxu0 0.0
  %3119 = vmatprep.subr.mxu0 0.0
  %3120 = vmatpush1.msra.mxu0 0.0
  %3121 = vmatprep.subr.mxu0 0.0
  %3122 = vmatpush1.msra.mxu0 0.0
  %3123 = vmatprep.subr.mxu0 0.0
  %3124 = vmatpush1.msra.mxu0 0.0
  %3125 = vmatprep.subr.mxu0 0.0
  %3126 = vmatpush1.msra.mxu0 0.0
  %3127 = vmatprep.subr.mxu0 0.0
  %3128 = vmatpush1.msra.mxu0 0.0
  %3129 = vmatprep.subr.mxu0 0.0
  %3130 = vmatpush1.msra.mxu0 0.0
  %3131 = vmatprep.subr.mxu0 0.0
  %3132 = vmatpush1.msra.mxu0 0.0
  %3133 = vmatprep.subr.mxu0 0.0
  %3134 = vmatpush1.msra.mxu0 0.0
  %3135 = vmatprep.subr.mxu0 0.0
  %3136 = vmatpush1.msra.mxu0 0.0
  %3137 = vmatprep.subr.mxu0 0.0
  %3138 = vmatpush1.msra.mxu0 0.0
  %3139 = vmatprep.subr.mxu0 0.0
  %3140 = vmatpush1.msra.mxu0 0.0
  %3141 = vmatprep.mubr.f32.mxu0 0.0
  %3142 = vmatmul.mubr.f32.gmra.mrb[0].mxu0 %v3072
  %v3143 = vpop.f32.mrb[0].mxu0
  %v3144 = vadd.f32 0.0, %v3143
  %v3145 = vpop.f32.mrb[0].mxu0
  %3146 = vmatprep.mubr.f32.mxu0 0.0
  %3147 = vmatmul.mubr.f32.gmra.mrb[0].mxu0 %v3075
  %v3148 = vpop.f32.mrb[0].mxu0
  %v3149 = vadd.f32 0.0, %v3148
  %v3150 = vpop.f32.mrb[0].mxu0
  %3151 = vdwg.mxu0
  %v3153 = vsel %vm1863, %v2165, 0
  %v3156 = vsel %vm1863, %v2167, 0
  %3158 = vmatprep.subr.mxu0 0.0
  %3159 = vmatpush1.msra.mxu0 %v312
  %3160 = vmatprep.subr.mxu0 0.0
  %3161 = vmatpush1.msra.mxu0 %v317
  %3162 = vmatprep.subr.mxu0 0.0
  %3163 = vmatpush1.msra.mxu0 0.0
  %3164 = vmatprep.subr.mxu0 0.0
  %3165 = vmatpush1.msra.mxu0 0.0
  %3166 = vmatprep.subr.mxu0 0.0
  %3167 = vmatpush1.msra.mxu0 0.0
  %3168 = vmatprep.subr.mxu0 0.0
  %3169 = vmatpush1.msra.mxu0 0.0
  %3170 = vmatprep.subr.mxu0 0.0
  %3171 = vmatpush1.msra.mxu0 0.0
  %3172 = vmatprep.subr.mxu0 0.0
  %3173 = vmatpush1.msra.mxu0 0.0
  %3174 = vmatprep.subr.mxu0 0.0
  %3175 = vmatpush1.msra.mxu0 0.0
  %3176 = vmatprep.subr.mxu0 0.0
  %3177 = vmatpush1.msra.mxu0 0.0
  %3178 = vmatprep.subr.mxu0 0.0
  %3179 = vmatpush1.msra.mxu0 0.0
  %3180 = vmatprep.subr.mxu0 0.0
  %3181 = vmatpush1.msra.mxu0 0.0
  %3182 = vmatprep.subr.mxu0 0.0
  %3183 = vmatpush1.msra.mxu0 0.0
  %3184 = vmatprep.subr.mxu0 0.0
  %3185 = vmatpush1.msra.mxu0 0.0
  %3186 = vmatprep.subr.mxu0 0.0
  %3187 = vmatpush1.msra.mxu0 0.0
  %3188 = vmatprep.subr.mxu0 0.0
  %3189 = vmatpush1.msra.mxu0 0.0
  %3190 = vmatprep.subr.mxu0 0.0
  %3191 = vmatpush1.msra.mxu0 0.0
  %3192 = vmatprep.subr.mxu0 0.0
  %3193 = vmatpush1.msra.mxu0 0.0
  %3194 = vmatprep.subr.mxu0 0.0
  %3195 = vmatpush1.msra.mxu0 0.0
  %3196 = vmatprep.subr.mxu0 0.0
  %3197 = vmatpush1.msra.mxu0 0.0
  %3198 = vmatprep.subr.mxu0 0.0
  %3199 = vmatpush1.msra.mxu0 0.0
  %3200 = vmatprep.subr.mxu0 0.0
  %3201 = vmatpush1.msra.mxu0 0.0
  %3202 = vmatprep.subr.mxu0 0.0
  %3203 = vmatpush1.msra.mxu0 0.0
  %3204 = vmatprep.subr.mxu0 0.0
  %3205 = vmatpush1.msra.mxu0 0.0
  %3206 = vmatprep.subr.mxu0 0.0
  %3207 = vmatpush1.msra.mxu0 0.0
  %3208 = vmatprep.subr.mxu0 0.0
  %3209 = vmatpush1.msra.mxu0 0.0
  %3210 = vmatprep.subr.mxu0 0.0
  %3211 = vmatpush1.msra.mxu0 0.0
  %3212 = vmatprep.subr.mxu0 0.0
  %3213 = vmatpush1.msra.mxu0 0.0
  %3214 = vmatprep.subr.mxu0 0.0
  %3215 = vmatpush1.msra.mxu0 0.0
  %3216 = vmatprep.subr.mxu0 0.0
  %3217 = vmatpush1.msra.mxu0 0.0
  %3218 = vmatprep.subr.mxu0 0.0
  %3219 = vmatpush1.msra.mxu0 0.0
  %3220 = vmatprep.subr.mxu0 0.0
  %3221 = vmatpush1.msra.mxu0 0.0
  %3222 = vmatprep.mubr.f32.mxu0 0.0
  %3223 = vmatmul.mubr.f32.gmra.mrb[0].mxu0 %v3153
  %v3224 = vpop.f32.mrb[0].mxu0
  %v3225 = vadd.f32 0.0, %v3224
  %v3226 = vpop.f32.mrb[0].mxu0
  %3227 = vmatprep.mubr.f32.mxu0 0.0
  %3228 = vmatmul.mubr.f32.gmra.mrb[0].mxu0 %v3156
  %v3229 = vpop.f32.mrb[0].mxu0
  %v3230 = vadd.f32 0.0, %v3229
  %v3231 = vpop.f32.mrb[0].mxu0
  %3232 = vdwg.mxu0
  %v3234 = vsel %vm1863, %v2169, 0
  %v3237 = vsel %vm1863, %v2171, 0
  %3239 = vmatprep.subr.mxu0 0.0
  %3240 = vmatpush1.msra.mxu0 %v385
  %3241 = vmatprep.subr.mxu0 0.0
  %3242 = vmatpush1.msra.mxu0 %v387
  %3243 = vmatprep.subr.mxu0 0.0
  %3244 = vmatpush1.msra.mxu0 0.0
  %3245 = vmatprep.subr.mxu0 0.0
  %3246 = vmatpush1.msra.mxu0 0.0
  %3247 = vmatprep.subr.mxu0 0.0
  %3248 = vmatpush1.msra.mxu0 0.0
  %3249 = vmatprep.subr.mxu0 0.0
  %3250 = vmatpush1.msra.mxu0 0.0
  %3251 = vmatprep.subr.mxu0 0.0
  %3252 = vmatpush1.msra.mxu0 0.0
  %3253 = vmatprep.subr.mxu0 0.0
  %3254 = vmatpush1.msra.mxu0 0.0
  %3255 = vmatprep.subr.mxu0 0.0
  %3256 = vmatpush1.msra.mxu0 0.0
  %3257 = vmatprep.subr.mxu0 0.0
  %3258 = vmatpush1.msra.mxu0 0.0
  %3259 = vmatprep.subr.mxu0 0.0
  %3260 = vmatpush1.msra.mxu0 0.0
  %3261 = vmatprep.subr.mxu0 0.0
  %3262 = vmatpush1.msra.mxu0 0.0
  %3263 = vmatprep.subr.mxu0 0.0
  %3264 = vmatpush1.msra.mxu0 0.0
  %3265 = vmatprep.subr.mxu0 0.0
  %3266 = vmatpush1.msra.mxu0 0.0
  %3267 = vmatprep.subr.mxu0 0.0
  %3268 = vmatpush1.msra.mxu0 0.0
  %3269 = vmatprep.subr.mxu0 0.0
  %3270 = vmatpush1.msra.mxu0 0.0
  %3271 = vmatprep.subr.mxu0 0.0
  %3272 = vmatpush1.msra.mxu0 0.0
  %3273 = vmatprep.subr.mxu0 0.0
  %3274 = vmatpush1.msra.mxu0 0.0
  %3275 = vmatprep.subr.mxu0 0.0
  %3276 = vmatpush1.msra.mxu0 0.0
  %3277 = vmatprep.subr.mxu0 0.0
  %3278 = vmatpush1.msra.mxu0 0.0
  %3279 = vmatprep.subr.mxu0 0.0
  %3280 = vmatpush1.msra.mxu0 0.0
  %3281 = vmatprep.subr.mxu0 0.0
  %3282 = vmatpush1.msra.mxu0 0.0
  %3283 = vmatprep.subr.mxu0 0.0
  %3284 = vmatpush1.msra.mxu0 0.0
  %3285 = vmatprep.subr.mxu0 0.0
  %3286 = vmatpush1.msra.mxu0 0.0
  %3287 = vmatprep.subr.mxu0 0.0
  %3288 = vmatpush1.msra.mxu0 0.0
  %3289 = vmatprep.subr.mxu0 0.0
  %3290 = vmatpush1.msra.mxu0 0.0
  %3291 = vmatprep.subr.mxu0 0.0
  %3292 = vmatpush1.msra.mxu0 0.0
  %3293 = vmatprep.subr.mxu0 0.0
  %3294 = vmatpush1.msra.mxu0 0.0
  %3295 = vmatprep.subr.mxu0 0.0
  %3296 = vmatpush1.msra.mxu0 0.0
  %3297 = vmatprep.subr.mxu0 0.0
  %3298 = vmatpush1.msra.mxu0 0.0
  %3299 = vmatprep.subr.mxu0 0.0
  %3300 = vmatpush1.msra.mxu0 0.0
  %3301 = vmatprep.subr.mxu0 0.0
  %3302 = vmatpush1.msra.mxu0 0.0
  %3303 = vmatprep.mubr.f32.mxu0 0.0
  %3304 = vmatmul.mubr.f32.gmra.mrb[0].mxu0 %v3234
  %v3305 = vpop.f32.mrb[0].mxu0
  %v3306 = vadd.f32 0.0, %v3305
  %v3307 = vpop.f32.mrb[0].mxu0
  %3308 = vmatprep.mubr.f32.mxu0 0.0
  %3309 = vmatmul.mubr.f32.gmra.mrb[0].mxu0 %v3237
  %v3310 = vpop.f32.mrb[0].mxu0
  %v3311 = vadd.f32 0.0, %v3310
  %v3312 = vpop.f32.mrb[0].mxu0
  %3313 = vdwg.mxu0
  %v3315 = vsel %vm1863, %v2173, 0
  %v3318 = vsel %vm1863, %v2175, 0
  %3320 = vmatprep.subr.mxu0 0.0
  %3321 = vmatpush1.msra.mxu0 %v389
  %3322 = vmatprep.subr.mxu0 0.0
  %3323 = vmatpush1.msra.mxu0 %v391
  %3324 = vmatprep.subr.mxu0 0.0
  %3325 = vmatpush1.msra.mxu0 0.0
  %3326 = vmatprep.subr.mxu0 0.0
  %3327 = vmatpush1.msra.mxu0 0.0
  %3328 = vmatprep.subr.mxu0 0.0
  %3329 = vmatpush1.msra.mxu0 0.0
  %3330 = vmatprep.subr.mxu0 0.0
  %3331 = vmatpush1.msra.mxu0 0.0
  %3332 = vmatprep.subr.mxu0 0.0
  %3333 = vmatpush1.msra.mxu0 0.0
  %3334 = vmatprep.subr.mxu0 0.0
  %3335 = vmatpush1.msra.mxu0 0.0
  %3336 = vmatprep.subr.mxu0 0.0
  %3337 = vmatpush1.msra.mxu0 0.0
  %3338 = vmatprep.subr.mxu0 0.0
  %3339 = vmatpush1.msra.mxu0 0.0
  %3340 = vmatprep.subr.mxu0 0.0
  %3341 = vmatpush1.msra.mxu0 0.0
  %3342 = vmatprep.subr.mxu0 0.0
  %3343 = vmatpush1.msra.mxu0 0.0
  %3344 = vmatprep.subr.mxu0 0.0
  %3345 = vmatpush1.msra.mxu0 0.0
  %3346 = vmatprep.subr.mxu0 0.0
  %3347 = vmatpush1.msra.mxu0 0.0
  %3348 = vmatprep.subr.mxu0 0.0
  %3349 = vmatpush1.msra.mxu0 0.0
  %3350 = vmatprep.subr.mxu0 0.0
  %3351 = vmatpush1.msra.mxu0 0.0
  %3352 = vmatprep.subr.mxu0 0.0
  %3353 = vmatpush1.msra.mxu0 0.0
  %3354 = vmatprep.subr.mxu0 0.0
  %3355 = vmatpush1.msra.mxu0 0.0
  %3356 = vmatprep.subr.mxu0 0.0
  %3357 = vmatpush1.msra.mxu0 0.0
  %3358 = vmatprep.subr.mxu0 0.0
  %3359 = vmatpush1.msra.mxu0 0.0
  %3360 = vmatprep.subr.mxu0 0.0
  %3361 = vmatpush1.msra.mxu0 0.0
  %3362 = vmatprep.subr.mxu0 0.0
  %3363 = vmatpush1.msra.mxu0 0.0
  %3364 = vmatprep.subr.mxu0 0.0
  %3365 = vmatpush1.msra.mxu0 0.0
  %3366 = vmatprep.subr.mxu0 0.0
  %3367 = vmatpush1.msra.mxu0 0.0
  %3368 = vmatprep.subr.mxu0 0.0
  %3369 = vmatpush1.msra.mxu0 0.0
  %3370 = vmatprep.subr.mxu0 0.0
  %3371 = vmatpush1.msra.mxu0 0.0
  %3372 = vmatprep.subr.mxu0 0.0
  %3373 = vmatpush1.msra.mxu0 0.0
  %3374 = vmatprep.subr.mxu0 0.0
  %3375 = vmatpush1.msra.mxu0 0.0
  %3376 = vmatprep.subr.mxu0 0.0
  %3377 = vmatpush1.msra.mxu0 0.0
  %3378 = vmatprep.subr.mxu0 0.0
  %3379 = vmatpush1.msra.mxu0 0.0
  %3380 = vmatprep.subr.mxu0 0.0
  %3381 = vmatpush1.msra.mxu0 0.0
  %3382 = vmatprep.subr.mxu0 0.0
  %3383 = vmatpush1.msra.mxu0 0.0
  %3384 = vmatprep.mubr.f32.mxu0 0.0
  %3385 = vmatmul.mubr.f32.gmra.mrb[0].mxu0 %v3315
  %v3386 = vpop.f32.mrb[0].mxu0
  %v3387 = vadd.f32 0.0, %v3386
  %v3388 = vpop.f32.mrb[0].mxu0
  %3389 = vmatprep.mubr.f32.mxu0 0.0
  %3390 = vmatmul.mubr.f32.gmra.mrb[0].mxu0 %v3318
  %v3391 = vpop.f32.mrb[0].mxu0
  %v3392 = vadd.f32 0.0, %v3391
  %v3393 = vpop.f32.mrb[0].mxu0
  %3394 = vdwg.mxu0
  %v3396 = vsel %vm1863, %v2177, 0
  %v3399 = vsel %vm1863, %v2179, 0
  %3401 = vmatprep.subr.mxu0 0.0
  %3402 = vmatpush1.msra.mxu0 %v393
  %3403 = vmatprep.subr.mxu0 0.0
  %3404 = vmatpush1.msra.mxu0 %v395
  %3405 = vmatprep.subr.mxu0 0.0
  %3406 = vmatpush1.msra.mxu0 0.0
  %3407 = vmatprep.subr.mxu0 0.0
  %3408 = vmatpush1.msra.mxu0 0.0
  %3409 = vmatprep.subr.mxu0 0.0
  %3410 = vmatpush1.msra.mxu0 0.0
  %3411 = vmatprep.subr.mxu0 0.0
  %3412 = vmatpush1.msra.mxu0 0.0
  %3413 = vmatprep.subr.mxu0 0.0
  %3414 = vmatpush1.msra.mxu0 0.0
  %3415 = vmatprep.subr.mxu0 0.0
  %3416 = vmatpush1.msra.mxu0 0.0
  %3417 = vmatprep.subr.mxu0 0.0
  %3418 = vmatpush1.msra.mxu0 0.0
  %3419 = vmatprep.subr.mxu0 0.0
  %3420 = vmatpush1.msra.mxu0 0.0
  %3421 = vmatprep.subr.mxu0 0.0
  %3422 = vmatpush1.msra.mxu0 0.0
  %3423 = vmatprep.subr.mxu0 0.0
  %3424 = vmatpush1.msra.mxu0 0.0
  %3425 = vmatprep.subr.mxu0 0.0
  %3426 = vmatpush1.msra.mxu0 0.0
  %3427 = vmatprep.subr.mxu0 0.0
  %3428 = vmatpush1.msra.mxu0 0.0
  %3429 = vmatprep.subr.mxu0 0.0
  %3430 = vmatpush1.msra.mxu0 0.0
  %3431 = vmatprep.subr.mxu0 0.0
  %3432 = vmatpush1.msra.mxu0 0.0
  %3433 = vmatprep.subr.mxu0 0.0
  %3434 = vmatpush1.msra.mxu0 0.0
  %3435 = vmatprep.subr.mxu0 0.0
  %3436 = vmatpush1.msra.mxu0 0.0
  %3437 = vmatprep.subr.mxu0 0.0
  %3438 = vmatpush1.msra.mxu0 0.0
  %3439 = vmatprep.subr.mxu0 0.0
  %3440 = vmatpush1.msra.mxu0 0.0
  %3441 = vmatprep.subr.mxu0 0.0
  %3442 = vmatpush1.msra.mxu0 0.0
  %3443 = vmatprep.subr.mxu0 0.0
  %3444 = vmatpush1.msra.mxu0 0.0
  %3445 = vmatprep.subr.mxu0 0.0
  %3446 = vmatpush1.msra.mxu0 0.0
  %3447 = vmatprep.subr.mxu0 0.0
  %3448 = vmatpush1.msra.mxu0 0.0
  %3449 = vmatprep.subr.mxu0 0.0
  %3450 = vmatpush1.msra.mxu0 0.0
  %3451 = vmatprep.subr.mxu0 0.0
  %3452 = vmatpush1.msra.mxu0 0.0
  %3453 = vmatprep.subr.mxu0 0.0
  %3454 = vmatpush1.msra.mxu0 0.0
  %3455 = vmatprep.subr.mxu0 0.0
  %3456 = vmatpush1.msra.mxu0 0.0
  %3457 = vmatprep.subr.mxu0 0.0
  %3458 = vmatpush1.msra.mxu0 0.0
  %3459 = vmatprep.subr.mxu0 0.0
  %3460 = vmatpush1.msra.mxu0 0.0
  %3461 = vmatprep.subr.mxu0 0.0
  %3462 = vmatpush1.msra.mxu0 0.0
  %3463 = vmatprep.subr.mxu0 0.0
  %3464 = vmatpush1.msra.mxu0 0.0
  %3465 = vmatprep.mubr.f32.mxu0 0.0
  %3466 = vmatmul.mubr.f32.gmra.mrb[0].mxu0 %v3396
  %v3467 = vpop.f32.mrb[0].mxu0
  %v3468 = vadd.f32 0.0, %v3467
  %v3469 = vpop.f32.mrb[0].mxu0
  %3470 = vmatprep.mubr.f32.mxu0 0.0
  %3471 = vmatmul.mubr.f32.gmra.mrb[0].mxu0 %v3399
  %v3472 = vpop.f32.mrb[0].mxu0
  %v3473 = vadd.f32 0.0, %v3472
  %v3474 = vpop.f32.mrb[0].mxu0
  %3475 = vdwg.mxu0
  %v3477 = vsel %vm1863, %v2181, 0
  %v3480 = vsel %vm1863, %v2183, 0
  %3482 = vmatprep.subr.mxu0 0.0
  %3483 = vmatpush1.msra.mxu0 %v397
  %3484 = vmatprep.subr.mxu0 0.0
  %3485 = vmatpush1.msra.mxu0 %v399
  %3486 = vmatprep.subr.mxu0 0.0
  %3487 = vmatpush1.msra.mxu0 0.0
  %3488 = vmatprep.subr.mxu0 0.0
  %3489 = vmatpush1.msra.mxu0 0.0
  %3490 = vmatprep.subr.mxu0 0.0
  %3491 = vmatpush1.msra.mxu0 0.0
  %3492 = vmatprep.subr.mxu0 0.0
  %3493 = vmatpush1.msra.mxu0 0.0
  %3494 = vmatprep.subr.mxu0 0.0
  %3495 = vmatpush1.msra.mxu0 0.0
  %3496 = vmatprep.subr.mxu0 0.0
  %3497 = vmatpush1.msra.mxu0 0.0
  %3498 = vmatprep.subr.mxu0 0.0
  %3499 = vmatpush1.msra.mxu0 0.0
  %3500 = vmatprep.subr.mxu0 0.0
  %3501 = vmatpush1.msra.mxu0 0.0
  %3502 = vmatprep.subr.mxu0 0.0
  %3503 = vmatpush1.msra.mxu0 0.0
  %3504 = vmatprep.subr.mxu0 0.0
  %3505 = vmatpush1.msra.mxu0 0.0
  %3506 = vmatprep.subr.mxu0 0.0
  %3507 = vmatpush1.msra.mxu0 0.0
  %3508 = vmatprep.subr.mxu0 0.0
  %3509 = vmatpush1.msra.mxu0 0.0
  %3510 = vmatprep.subr.mxu0 0.0
  %3511 = vmatpush1.msra.mxu0 0.0
  %3512 = vmatprep.subr.mxu0 0.0
  %3513 = vmatpush1.msra.mxu0 0.0
  %3514 = vmatprep.subr.mxu0 0.0
  %3515 = vmatpush1.msra.mxu0 0.0
  %3516 = vmatprep.subr.mxu0 0.0
  %3517 = vmatpush1.msra.mxu0 0.0
  %3518 = vmatprep.subr.mxu0 0.0
  %3519 = vmatpush1.msra.mxu0 0.0
  %3520 = vmatprep.subr.mxu0 0.0
  %3521 = vmatpush1.msra.mxu0 0.0
  %3522 = vmatprep.subr.mxu0 0.0
  %3523 = vmatpush1.msra.mxu0 0.0
  %3524 = vmatprep.subr.mxu0 0.0
  %3525 = vmatpush1.msra.mxu0 0.0
  %3526 = vmatprep.subr.mxu0 0.0
  %3527 = vmatpush1.msra.mxu0 0.0
  %3528 = vmatprep.subr.mxu0 0.0
  %3529 = vmatpush1.msra.mxu0 0.0
  %3530 = vmatprep.subr.mxu0 0.0
  %3531 = vmatpush1.msra.mxu0 0.0
  %3532 = vmatprep.subr.mxu0 0.0
  %3533 = vmatpush1.msra.mxu0 0.0
  %3534 = vmatprep.subr.mxu0 0.0
  %3535 = vmatpush1.msra.mxu0 0.0
  %3536 = vmatprep.subr.mxu0 0.0
  %3537 = vmatpush1.msra.mxu0 0.0
  %3538 = vmatprep.subr.mxu0 0.0
  %3539 = vmatpush1.msra.mxu0 0.0
  %3540 = vmatprep.subr.mxu0 0.0
  %3541 = vmatpush1.msra.mxu0 0.0
  %3542 = vmatprep.subr.mxu0 0.0
  %3543 = vmatpush1.msra.mxu0 0.0
  %3544 = vmatprep.subr.mxu0 0.0
  %3545 = vmatpush1.msra.mxu0 0.0
  %3546 = vmatprep.mubr.f32.mxu0 0.0
  %3547 = vmatmul.mubr.f32.gmra.mrb[0].mxu0 %v3477
  %v3548 = vpop.f32.mrb[0].mxu0
  %v3549 = vadd.f32 0.0, %v3548
  %v3550 = vpop.f32.mrb[0].mxu0
  %3551 = vmatprep.mubr.f32.mxu0 0.0
  %3552 = vmatmul.mubr.f32.gmra.mrb[0].mxu0 %v3480
  %v3553 = vpop.f32.mrb[0].mxu0
  %v3554 = vadd.f32 0.0, %v3553
  %v3555 = vpop.f32.mrb[0].mxu0
  %3556 = vdwg.mxu0
  %v3558 = vsel %vm1863, %v2185, 0
  %v3561 = vsel %vm1863, %v2187, 0
  %3563 = vmatprep.subr.mxu0 0.0
  %3564 = vmatpush1.msra.mxu0 %v409
  %3565 = vmatprep.subr.mxu0 0.0
  %3566 = vmatpush1.msra.mxu0 %v411
  %3567 = vmatprep.subr.mxu0 0.0
  %3568 = vmatpush1.msra.mxu0 0.0
  %3569 = vmatprep.subr.mxu0 0.0
  %3570 = vmatpush1.msra.mxu0 0.0
  %3571 = vmatprep.subr.mxu0 0.0
  %3572 = vmatpush1.msra.mxu0 0.0
  %3573 = vmatprep.subr.mxu0 0.0
  %3574 = vmatpush1.msra.mxu0 0.0
  %3575 = vmatprep.subr.mxu0 0.0
  %3576 = vmatpush1.msra.mxu0 0.0
  %3577 = vmatprep.subr.mxu0 0.0
  %3578 = vmatpush1.msra.mxu0 0.0
  %3579 = vmatprep.subr.mxu0 0.0
  %3580 = vmatpush1.msra.mxu0 0.0
  %3581 = vmatprep.subr.mxu0 0.0
  %3582 = vmatpush1.msra.mxu0 0.0
  %3583 = vmatprep.subr.mxu0 0.0
  %3584 = vmatpush1.msra.mxu0 0.0
  %3585 = vmatprep.subr.mxu0 0.0
  %3586 = vmatpush1.msra.mxu0 0.0
  %3587 = vmatprep.subr.mxu0 0.0
  %3588 = vmatpush1.msra.mxu0 0.0
  %3589 = vmatprep.subr.mxu0 0.0
  %3590 = vmatpush1.msra.mxu0 0.0
  %3591 = vmatprep.subr.mxu0 0.0
  %3592 = vmatpush1.msra.mxu0 0.0
  %3593 = vmatprep.subr.mxu0 0.0
  %3594 = vmatpush1.msra.mxu0 0.0
  %3595 = vmatprep.subr.mxu0 0.0
  %3596 = vmatpush1.msra.mxu0 0.0
  %3597 = vmatprep.subr.mxu0 0.0
  %3598 = vmatpush1.msra.mxu0 0.0
  %3599 = vmatprep.subr.mxu0 0.0
  %3600 = vmatpush1.msra.mxu0 0.0
  %3601 = vmatprep.subr.mxu0 0.0
  %3602 = vmatpush1.msra.mxu0 0.0
  %3603 = vmatprep.subr.mxu0 0.0
  %3604 = vmatpush1.msra.mxu0 0.0
  %3605 = vmatprep.subr.mxu0 0.0
  %3606 = vmatpush1.msra.mxu0 0.0
  %3607 = vmatprep.subr.mxu0 0.0
  %3608 = vmatpush1.msra.mxu0 0.0
  %3609 = vmatprep.subr.mxu0 0.0
  %3610 = vmatpush1.msra.mxu0 0.0
  %3611 = vmatprep.subr.mxu0 0.0
  %3612 = vmatpush1.msra.mxu0 0.0
  %3613 = vmatprep.subr.mxu0 0.0
  %3614 = vmatpush1.msra.mxu0 0.0
  %3615 = vmatprep.subr.mxu0 0.0
  %3616 = vmatpush1.msra.mxu0 0.0
  %3617 = vmatprep.subr.mxu0 0.0
  %3618 = vmatpush1.msra.mxu0 0.0
  %3619 = vmatprep.subr.mxu0 0.0
  %3620 = vmatpush1.msra.mxu0 0.0
  %3621 = vmatprep.subr.mxu0 0.0
  %3622 = vmatpush1.msra.mxu0 0.0
  %3623 = vmatprep.subr.mxu0 0.0
  %3624 = vmatpush1.msra.mxu0 0.0
  %3625 = vmatprep.subr.mxu0 0.0
  %3626 = vmatpush1.msra.mxu0 0.0
  %3627 = vmatprep.mubr.f32.mxu0 0.0
  %3628 = vmatmul.mubr.f32.gmra.mrb[0].mxu0 %v3558
  %v3629 = vpop.f32.mrb[0].mxu0
  %v3630 = vadd.f32 0.0, %v3629
  %v3631 = vpop.f32.mrb[0].mxu0
  %3632 = vmatprep.mubr.f32.mxu0 0.0
  %3633 = vmatmul.mubr.f32.gmra.mrb[0].mxu0 %v3561
  %v3634 = vpop.f32.mrb[0].mxu0
  %v3635 = vadd.f32 0.0, %v3634
  %v3636 = vpop.f32.mrb[0].mxu0
  %3637 = vdwg.mxu0
  %v3639 = vsel %vm1863, %v2189, 0
  %v3642 = vsel %vm1863, %v2191, 0
  %3644 = vmatprep.subr.mxu0 0.0
  %3645 = vmatpush1.msra.mxu0 %v413
  %3646 = vmatprep.subr.mxu0 0.0
  %3647 = vmatpush1.msra.mxu0 %v415
  %3648 = vmatprep.subr.mxu0 0.0
  %3649 = vmatpush1.msra.mxu0 0.0
  %3650 = vmatprep.subr.mxu0 0.0
  %3651 = vmatpush1.msra.mxu0 0.0
  %3652 = vmatprep.subr.mxu0 0.0
  %3653 = vmatpush1.msra.mxu0 0.0
  %3654 = vmatprep.subr.mxu0 0.0
  %3655 = vmatpush1.msra.mxu0 0.0
  %3656 = vmatprep.subr.mxu0 0.0
  %3657 = vmatpush1.msra.mxu0 0.0
  %3658 = vmatprep.subr.mxu0 0.0
  %3659 = vmatpush1.msra.mxu0 0.0
  %3660 = vmatprep.subr.mxu0 0.0
  %3661 = vmatpush1.msra.mxu0 0.0
  %3662 = vmatprep.subr.mxu0 0.0
  %3663 = vmatpush1.msra.mxu0 0.0
  %3664 = vmatprep.subr.mxu0 0.0
  %3665 = vmatpush1.msra.mxu0 0.0
  %3666 = vmatprep.subr.mxu0 0.0
  %3667 = vmatpush1.msra.mxu0 0.0
  %3668 = vmatprep.subr.mxu0 0.0
  %3669 = vmatpush1.msra.mxu0 0.0
  %3670 = vmatprep.subr.mxu0 0.0
  %3671 = vmatpush1.msra.mxu0 0.0
  %3672 = vmatprep.subr.mxu0 0.0
  %3673 = vmatpush1.msra.mxu0 0.0
  %3674 = vmatprep.subr.mxu0 0.0
  %3675 = vmatpush1.msra.mxu0 0.0
  %3676 = vmatprep.subr.mxu0 0.0
  %3677 = vmatpush1.msra.mxu0 0.0
  %3678 = vmatprep.subr.mxu0 0.0
  %3679 = vmatpush1.msra.mxu0 0.0
  %3680 = vmatprep.subr.mxu0 0.0
  %3681 = vmatpush1.msra.mxu0 0.0
  %3682 = vmatprep.subr.mxu0 0.0
  %3683 = vmatpush1.msra.mxu0 0.0
  %3684 = vmatprep.subr.mxu0 0.0
  %3685 = vmatpush1.msra.mxu0 0.0
  %3686 = vmatprep.subr.mxu0 0.0
  %3687 = vmatpush1.msra.mxu0 0.0
  %3688 = vmatprep.subr.mxu0 0.0
  %3689 = vmatpush1.msra.mxu0 0.0
  %3690 = vmatprep.subr.mxu0 0.0
  %3691 = vmatpush1.msra.mxu0 0.0
  %3692 = vmatprep.subr.mxu0 0.0
  %3693 = vmatpush1.msra.mxu0 0.0
  %3694 = vmatprep.subr.mxu0 0.0
  %3695 = vmatpush1.msra.mxu0 0.0
  %3696 = vmatprep.subr.mxu0 0.0
  %3697 = vmatpush1.msra.mxu0 0.0
  %3698 = vmatprep.subr.mxu0 0.0
  %3699 = vmatpush1.msra.mxu0 0.0
  %3700 = vmatprep.subr.mxu0 0.0
  %3701 = vmatpush1.msra.mxu0 0.0
  %3702 = vmatprep.subr.mxu0 0.0
  %3703 = vmatpush1.msra.mxu0 0.0
  %3704 = vmatprep.subr.mxu0 0.0
  %3705 = vmatpush1.msra.mxu0 0.0
  %3706 = vmatprep.subr.mxu0 0.0
  %3707 = vmatpush1.msra.mxu0 0.0
  %3708 = vmatprep.mubr.f32.mxu0 0.0
  %3709 = vmatmul.mubr.f32.gmra.mrb[0].mxu0 %v3639
  %v3710 = vpop.f32.mrb[0].mxu0
  %v3711 = vadd.f32 0.0, %v3710
  %v3712 = vpop.f32.mrb[0].mxu0
  %3713 = vmatprep.mubr.f32.mxu0 0.0
  %3714 = vmatmul.mubr.f32.gmra.mrb[0].mxu0 %v3642
  %v3715 = vpop.f32.mrb[0].mxu0
  %v3716 = vadd.f32 0.0, %v3715
  %v3717 = vpop.f32.mrb[0].mxu0
  %3718 = vdwg.mxu0
  %v3720 = vsel %vm1863, %v2193, 0
  %v3723 = vsel %vm1863, %v2195, 0
  %3725 = vmatprep.subr.mxu0 0.0
  %3726 = vmatpush1.msra.mxu0 %v417
  %3727 = vmatprep.subr.mxu0 0.0
  %3728 = vmatpush1.msra.mxu0 %v419
  %3729 = vmatprep.subr.mxu0 0.0
  %3730 = vmatpush1.msra.mxu0 0.0
  %3731 = vmatprep.subr.mxu0 0.0
  %3732 = vmatpush1.msra.mxu0 0.0
  %3733 = vmatprep.subr.mxu0 0.0
  %3734 = vmatpush1.msra.mxu0 0.0
  %3735 = vmatprep.subr.mxu0 0.0
  %3736 = vmatpush1.msra.mxu0 0.0
  %3737 = vmatprep.subr.mxu0 0.0
  %3738 = vmatpush1.msra.mxu0 0.0
  %3739 = vmatprep.subr.mxu0 0.0
  %3740 = vmatpush1.msra.mxu0 0.0
  %3741 = vmatprep.subr.mxu0 0.0
  %3742 = vmatpush1.msra.mxu0 0.0
  %3743 = vmatprep.subr.mxu0 0.0
  %3744 = vmatpush1.msra.mxu0 0.0
  %3745 = vmatprep.subr.mxu0 0.0
  %3746 = vmatpush1.msra.mxu0 0.0
  %3747 = vmatprep.subr.mxu0 0.0
  %3748 = vmatpush1.msra.mxu0 0.0
  %3749 = vmatprep.subr.mxu0 0.0
  %3750 = vmatpush1.msra.mxu0 0.0
  %3751 = vmatprep.subr.mxu0 0.0
  %3752 = vmatpush1.msra.mxu0 0.0
  %3753 = vmatprep.subr.mxu0 0.0
  %3754 = vmatpush1.msra.mxu0 0.0
  %3755 = vmatprep.subr.mxu0 0.0
  %3756 = vmatpush1.msra.mxu0 0.0
  %3757 = vmatprep.subr.mxu0 0.0
  %3758 = vmatpush1.msra.mxu0 0.0
  %3759 = vmatprep.subr.mxu0 0.0
  %3760 = vmatpush1.msra.mxu0 0.0
  %3761 = vmatprep.subr.mxu0 0.0
  %3762 = vmatpush1.msra.mxu0 0.0
  %3763 = vmatprep.subr.mxu0 0.0
  %3764 = vmatpush1.msra.mxu0 0.0
  %3765 = vmatprep.subr.mxu0 0.0
  %3766 = vmatpush1.msra.mxu0 0.0
  %3767 = vmatprep.subr.mxu0 0.0
  %3768 = vmatpush1.msra.mxu0 0.0
  %3769 = vmatprep.subr.mxu0 0.0
  %3770 = vmatpush1.msra.mxu0 0.0
  %3771 = vmatprep.subr.mxu0 0.0
  %3772 = vmatpush1.msra.mxu0 0.0
  %3773 = vmatprep.subr.mxu0 0.0
  %3774 = vmatpush1.msra.mxu0 0.0
  %3775 = vmatprep.subr.mxu0 0.0
  %3776 = vmatpush1.msra.mxu0 0.0
  %3777 = vmatprep.subr.mxu0 0.0
  %3778 = vmatpush1.msra.mxu0 0.0
  %3779 = vmatprep.subr.mxu0 0.0
  %3780 = vmatpush1.msra.mxu0 0.0
  %3781 = vmatprep.subr.mxu0 0.0
  %3782 = vmatpush1.msra.mxu0 0.0
  %3783 = vmatprep.subr.mxu0 0.0
  %3784 = vmatpush1.msra.mxu0 0.0
  %3785 = vmatprep.subr.mxu0 0.0
  %3786 = vmatpush1.msra.mxu0 0.0
  %3787 = vmatprep.subr.mxu0 0.0
  %3788 = vmatpush1.msra.mxu0 0.0
  %3789 = vmatprep.mubr.f32.mxu0 0.0
  %3790 = vmatmul.mubr.f32.gmra.mrb[0].mxu0 %v3720
  %v3791 = vpop.f32.mrb[0].mxu0
  %v3792 = vadd.f32 0.0, %v3791
  %v3793 = vpop.f32.mrb[0].mxu0
  %3794 = vmatprep.mubr.f32.mxu0 0.0
  %3795 = vmatmul.mubr.f32.gmra.mrb[0].mxu0 %v3723
  %v3796 = vpop.f32.mrb[0].mxu0
  %v3797 = vadd.f32 0.0, %v3796
  %v3798 = vpop.f32.mrb[0].mxu0
  %3799 = vdwg.mxu0
  %v3801 = vsel %vm1863, %v2197, 0
  %v3804 = vsel %vm1863, %v2199, 0
  %3806 = vmatprep.subr.mxu0 0.0
  %3807 = vmatpush1.msra.mxu0 %v421
  %3808 = vmatprep.subr.mxu0 0.0
  %3809 = vmatpush1.msra.mxu0 %v423
  %3810 = vmatprep.subr.mxu0 0.0
  %3811 = vmatpush1.msra.mxu0 0.0
  %3812 = vmatprep.subr.mxu0 0.0
  %3813 = vmatpush1.msra.mxu0 0.0
  %3814 = vmatprep.subr.mxu0 0.0
  %3815 = vmatpush1.msra.mxu0 0.0
  %3816 = vmatprep.subr.mxu0 0.0
  %3817 = vmatpush1.msra.mxu0 0.0
  %3818 = vmatprep.subr.mxu0 0.0
  %3819 = vmatpush1.msra.mxu0 0.0
  %3820 = vmatprep.subr.mxu0 0.0
  %3821 = vmatpush1.msra.mxu0 0.0
  %3822 = vmatprep.subr.mxu0 0.0
  %3823 = vmatpush1.msra.mxu0 0.0
  %3824 = vmatprep.subr.mxu0 0.0
  %3825 = vmatpush1.msra.mxu0 0.0
  %3826 = vmatprep.subr.mxu0 0.0
  %3827 = vmatpush1.msra.mxu0 0.0
  %3828 = vmatprep.subr.mxu0 0.0
  %3829 = vmatpush1.msra.mxu0 0.0
  %3830 = vmatprep.subr.mxu0 0.0
  %3831 = vmatpush1.msra.mxu0 0.0
  %3832 = vmatprep.subr.mxu0 0.0
  %3833 = vmatpush1.msra.mxu0 0.0
  %3834 = vmatprep.subr.mxu0 0.0
  %3835 = vmatpush1.msra.mxu0 0.0
  %3836 = vmatprep.subr.mxu0 0.0
  %3837 = vmatpush1.msra.mxu0 0.0
  %3838 = vmatprep.subr.mxu0 0.0
  %3839 = vmatpush1.msra.mxu0 0.0
  %3840 = vmatprep.subr.mxu0 0.0
  %3841 = vmatpush1.msra.mxu0 0.0
  %3842 = vmatprep.subr.mxu0 0.0
  %3843 = vmatpush1.msra.mxu0 0.0
  %3844 = vmatprep.subr.mxu0 0.0
  %3845 = vmatpush1.msra.mxu0 0.0
  %3846 = vmatprep.subr.mxu0 0.0
  %3847 = vmatpush1.msra.mxu0 0.0
  %3848 = vmatprep.subr.mxu0 0.0
  %3849 = vmatpush1.msra.mxu0 0.0
  %3850 = vmatprep.subr.mxu0 0.0
  %3851 = vmatpush1.msra.mxu0 0.0
  %3852 = vmatprep.subr.mxu0 0.0
  %3853 = vmatpush1.msra.mxu0 0.0
  %3854 = vmatprep.subr.mxu0 0.0
  %3855 = vmatpush1.msra.mxu0 0.0
  %3856 = vmatprep.subr.mxu0 0.0
  %3857 = vmatpush1.msra.mxu0 0.0
  %3858 = vmatprep.subr.mxu0 0.0
  %3859 = vmatpush1.msra.mxu0 0.0
  %3860 = vmatprep.subr.mxu0 0.0
  %3861 = vmatpush1.msra.mxu0 0.0
  %3862 = vmatprep.subr.mxu0 0.0
  %3863 = vmatpush1.msra.mxu0 0.0
  %3864 = vmatprep.subr.mxu0 0.0
  %3865 = vmatpush1.msra.mxu0 0.0
  %3866 = vmatprep.subr.mxu0 0.0
  %3867 = vmatpush1.msra.mxu0 0.0
  %3868 = vmatprep.subr.mxu0 0.0
  %3869 = vmatpush1.msra.mxu0 0.0
  %3870 = vmatprep.mubr.f32.mxu0 0.0
  %3871 = vmatmul.mubr.f32.gmra.mrb[0].mxu0 %v3801
  %v3872 = vpop.f32.mrb[0].mxu0
  %v3873 = vadd.f32 0.0, %v3872
  %v3874 = vpop.f32.mrb[0].mxu0
  %3875 = vmatprep.mubr.f32.mxu0 0.0
  %3876 = vmatmul.mubr.f32.gmra.mrb[0].mxu0 %v3804
  %v3877 = vpop.f32.mrb[0].mxu0
  %v3878 = vadd.f32 0.0, %v3877
  %v3879 = vpop.f32.mrb[0].mxu0
  %3880 = vdwg.mxu0
  %v3882 = vsel %vm1863, %v2201, 0
  %v3885 = vsel %vm1863, %v2203, 0
  %3887 = vmatprep.subr.mxu0 0.0
  %3888 = vmatpush1.msra.mxu0 %v433
  %3889 = vmatprep.subr.mxu0 0.0
  %3890 = vmatpush1.msra.mxu0 %v435
  %3891 = vmatprep.subr.mxu0 0.0
  %3892 = vmatpush1.msra.mxu0 0.0
  %3893 = vmatprep.subr.mxu0 0.0
  %3894 = vmatpush1.msra.mxu0 0.0
  %3895 = vmatprep.subr.mxu0 0.0
  %3896 = vmatpush1.msra.mxu0 0.0
  %3897 = vmatprep.subr.mxu0 0.0
  %3898 = vmatpush1.msra.mxu0 0.0
  %3899 = vmatprep.subr.mxu0 0.0
  %3900 = vmatpush1.msra.mxu0 0.0
  %3901 = vmatprep.subr.mxu0 0.0
  %3902 = vmatpush1.msra.mxu0 0.0
  %3903 = vmatprep.subr.mxu0 0.0
  %3904 = vmatpush1.msra.mxu0 0.0
  %3905 = vmatprep.subr.mxu0 0.0
  %3906 = vmatpush1.msra.mxu0 0.0
  %3907 = vmatprep.subr.mxu0 0.0
  %3908 = vmatpush1.msra.mxu0 0.0
  %3909 = vmatprep.subr.mxu0 0.0
  %3910 = vmatpush1.msra.mxu0 0.0
  %3911 = vmatprep.subr.mxu0 0.0
  %3912 = vmatpush1.msra.mxu0 0.0
  %3913 = vmatprep.subr.mxu0 0.0
  %3914 = vmatpush1.msra.mxu0 0.0
  %3915 = vmatprep.subr.mxu0 0.0
  %3916 = vmatpush1.msra.mxu0 0.0
  %3917 = vmatprep.subr.mxu0 0.0
  %3918 = vmatpush1.msra.mxu0 0.0
  %3919 = vmatprep.subr.mxu0 0.0
  %3920 = vmatpush1.msra.mxu0 0.0
  %3921 = vmatprep.subr.mxu0 0.0
  %3922 = vmatpush1.msra.mxu0 0.0
  %3923 = vmatprep.subr.mxu0 0.0
  %3924 = vmatpush1.msra.mxu0 0.0
  %3925 = vmatprep.subr.mxu0 0.0
  %3926 = vmatpush1.msra.mxu0 0.0
  %3927 = vmatprep.subr.mxu0 0.0
  %3928 = vmatpush1.msra.mxu0 0.0
  %3929 = vmatprep.subr.mxu0 0.0
  %3930 = vmatpush1.msra.mxu0 0.0
  %3931 = vmatprep.subr.mxu0 0.0
  %3932 = vmatpush1.msra.mxu0 0.0
  %3933 = vmatprep.subr.mxu0 0.0
  %3934 = vmatpush1.msra.mxu0 0.0
  %3935 = vmatprep.subr.mxu0 0.0
  %3936 = vmatpush1.msra.mxu0 0.0
  %3937 = vmatprep.subr.mxu0 0.0
  %3938 = vmatpush1.msra.mxu0 0.0
  %3939 = vmatprep.subr.mxu0 0.0
  %3940 = vmatpush1.msra.mxu0 0.0
  %3941 = vmatprep.subr.mxu0 0.0
  %3942 = vmatpush1.msra.mxu0 0.0
  %3943 = vmatprep.subr.mxu0 0.0
  %3944 = vmatpush1.msra.mxu0 0.0
  %3945 = vmatprep.subr.mxu0 0.0
  %3946 = vmatpush1.msra.mxu0 0.0
  %3947 = vmatprep.subr.mxu0 0.0
  %3948 = vmatpush1.msra.mxu0 0.0
  %3949 = vmatprep.subr.mxu0 0.0
  %3950 = vmatpush1.msra.mxu0 0.0
  %3951 = vmatprep.mubr.f32.mxu0 0.0
  %3952 = vmatmul.mubr.f32.gmra.mrb[0].mxu0 %v3882
  %v3953 = vpop.f32.mrb[0].mxu0
  %v3954 = vadd.f32 0.0, %v3953
  %v3955 = vpop.f32.mrb[0].mxu0
  %3956 = vmatprep.mubr.f32.mxu0 0.0
  %3957 = vmatmul.mubr.f32.gmra.mrb[0].mxu0 %v3885
  %v3958 = vpop.f32.mrb[0].mxu0
  %v3959 = vadd.f32 0.0, %v3958
  %v3960 = vpop.f32.mrb[0].mxu0
  %3961 = vdwg.mxu0
  %v3963 = vsel %vm1863, %v2205, 0
  %v3966 = vsel %vm1863, %v2207, 0
  %3968 = vmatprep.subr.mxu0 0.0
  %3969 = vmatpush1.msra.mxu0 %v437
  %3970 = vmatprep.subr.mxu0 0.0
  %3971 = vmatpush1.msra.mxu0 %v439
  %3972 = vmatprep.subr.mxu0 0.0
  %3973 = vmatpush1.msra.mxu0 0.0
  %3974 = vmatprep.subr.mxu0 0.0
  %3975 = vmatpush1.msra.mxu0 0.0
  %3976 = vmatprep.subr.mxu0 0.0
  %3977 = vmatpush1.msra.mxu0 0.0
  %3978 = vmatprep.subr.mxu0 0.0
  %3979 = vmatpush1.msra.mxu0 0.0
  %3980 = vmatprep.subr.mxu0 0.0
  %3981 = vmatpush1.msra.mxu0 0.0
  %3982 = vmatprep.subr.mxu0 0.0
  %3983 = vmatpush1.msra.mxu0 0.0
  %3984 = vmatprep.subr.mxu0 0.0
  %3985 = vmatpush1.msra.mxu0 0.0
  %3986 = vmatprep.subr.mxu0 0.0
  %3987 = vmatpush1.msra.mxu0 0.0
  %3988 = vmatprep.subr.mxu0 0.0
  %3989 = vmatpush1.msra.mxu0 0.0
  %3990 = vmatprep.subr.mxu0 0.0
  %3991 = vmatpush1.msra.mxu0 0.0
  %3992 = vmatprep.subr.mxu0 0.0
  %3993 = vmatpush1.msra.mxu0 0.0
  %3994 = vmatprep.subr.mxu0 0.0
  %3995 = vmatpush1.msra.mxu0 0.0
  %3996 = vmatprep.subr.mxu0 0.0
  %3997 = vmatpush1.msra.mxu0 0.0
  %3998 = vmatprep.subr.mxu0 0.0
  %3999 = vmatpush1.msra.mxu0 0.0
  %4000 = vmatprep.subr.mxu0 0.0
  %4001 = vmatpush1.msra.mxu0 0.0
  %4002 = vmatprep.subr.mxu0 0.0
  %4003 = vmatpush1.msra.mxu0 0.0
  %4004 = vmatprep.subr.mxu0 0.0
  %4005 = vmatpush1.msra.mxu0 0.0
  %4006 = vmatprep.subr.mxu0 0.0
  %4007 = vmatpush1.msra.mxu0 0.0
  %4008 = vmatprep.subr.mxu0 0.0
  %4009 = vmatpush1.msra.mxu0 0.0
  %4010 = vmatprep.subr.mxu0 0.0
  %4011 = vmatpush1.msra.mxu0 0.0
  %4012 = vmatprep.subr.mxu0 0.0
  %4013 = vmatpush1.msra.mxu0 0.0
  %4014 = vmatprep.subr.mxu0 0.0
  %4015 = vmatpush1.msra.mxu0 0.0
  %4016 = vmatprep.subr.mxu0 0.0
  %4017 = vmatpush1.msra.mxu0 0.0
  %4018 = vmatprep.subr.mxu0 0.0
  %4019 = vmatpush1.msra.mxu0 0.0
  %4020 = vmatprep.subr.mxu0 0.0
  %4021 = vmatpush1.msra.mxu0 0.0
  %4022 = vmatprep.subr.mxu0 0.0
  %4023 = vmatpush1.msra.mxu0 0.0
  %4024 = vmatprep.subr.mxu0 0.0
  %4025 = vmatpush1.msra.mxu0 0.0
  %4026 = vmatprep.subr.mxu0 0.0
  %4027 = vmatpush1.msra.mxu0 0.0
  %4028 = vmatprep.subr.mxu0 0.0
  %4029 = vmatpush1.msra.mxu0 0.0
  %4030 = vmatprep.subr.mxu0 0.0
  %4031 = vmatpush1.msra.mxu0 0.0
  %4032 = vmatprep.mubr.f32.mxu0 0.0
  %4033 = vmatmul.mubr.f32.gmra.mrb[0].mxu0 %v3963
  %v4034 = vpop.f32.mrb[0].mxu0
  %v4035 = vadd.f32 0.0, %v4034
  %v4036 = vpop.f32.mrb[0].mxu0
  %4037 = vmatprep.mubr.f32.mxu0 0.0
  %4038 = vmatmul.mubr.f32.gmra.mrb[0].mxu0 %v3966
  %v4039 = vpop.f32.mrb[0].mxu0
  %v4040 = vadd.f32 0.0, %v4039
  %v4041 = vpop.f32.mrb[0].mxu0
  %4042 = vdwg.mxu0
  %v4044 = vsel %vm1863, %v2209, 0
  %v4047 = vsel %vm1863, %v2211, 0
  %4049 = vmatprep.subr.mxu0 0.0
  %4050 = vmatpush1.msra.mxu0 %v441
  %4051 = vmatprep.subr.mxu0 0.0
  %4052 = vmatpush1.msra.mxu0 %v443
  %4053 = vmatprep.subr.mxu0 0.0
  %4054 = vmatpush1.msra.mxu0 0.0
  %4055 = vmatprep.subr.mxu0 0.0
  %4056 = vmatpush1.msra.mxu0 0.0
  %4057 = vmatprep.subr.mxu0 0.0
  %4058 = vmatpush1.msra.mxu0 0.0
  %4059 = vmatprep.subr.mxu0 0.0
  %4060 = vmatpush1.msra.mxu0 0.0
  %4061 = vmatprep.subr.mxu0 0.0
  %4062 = vmatpush1.msra.mxu0 0.0
  %4063 = vmatprep.subr.mxu0 0.0
  %4064 = vmatpush1.msra.mxu0 0.0
  %4065 = vmatprep.subr.mxu0 0.0
  %4066 = vmatpush1.msra.mxu0 0.0
  %4067 = vmatprep.subr.mxu0 0.0
  %4068 = vmatpush1.msra.mxu0 0.0
  %4069 = vmatprep.subr.mxu0 0.0
  %4070 = vmatpush1.msra.mxu0 0.0
  %4071 = vmatprep.subr.mxu0 0.0
  %4072 = vmatpush1.msra.mxu0 0.0
  %4073 = vmatprep.subr.mxu0 0.0
  %4074 = vmatpush1.msra.mxu0 0.0
  %4075 = vmatprep.subr.mxu0 0.0
  %4076 = vmatpush1.msra.mxu0 0.0
  %4077 = vmatprep.subr.mxu0 0.0
  %4078 = vmatpush1.msra.mxu0 0.0
  %4079 = vmatprep.subr.mxu0 0.0
  %4080 = vmatpush1.msra.mxu0 0.0
  %4081 = vmatprep.subr.mxu0 0.0
  %4082 = vmatpush1.msra.mxu0 0.0
  %4083 = vmatprep.subr.mxu0 0.0
  %4084 = vmatpush1.msra.mxu0 0.0
  %4085 = vmatprep.subr.mxu0 0.0
  %4086 = vmatpush1.msra.mxu0 0.0
  %4087 = vmatprep.subr.mxu0 0.0
  %4088 = vmatpush1.msra.mxu0 0.0
  %4089 = vmatprep.subr.mxu0 0.0
  %4090 = vmatpush1.msra.mxu0 0.0
  %4091 = vmatprep.subr.mxu0 0.0
  %4092 = vmatpush1.msra.mxu0 0.0
  %4093 = vmatprep.subr.mxu0 0.0
  %4094 = vmatpush1.msra.mxu0 0.0
  %4095 = vmatprep.subr.mxu0 0.0
  %4096 = vmatpush1.msra.mxu0 0.0
  %4097 = vmatprep.subr.mxu0 0.0
  %4098 = vmatpush1.msra.mxu0 0.0
  %4099 = vmatprep.subr.mxu0 0.0
  %4100 = vmatpush1.msra.mxu0 0.0
  %4101 = vmatprep.subr.mxu0 0.0
  %4102 = vmatpush1.msra.mxu0 0.0
  %4103 = vmatprep.subr.mxu0 0.0
  %4104 = vmatpush1.msra.mxu0 0.0
  %4105 = vmatprep.subr.mxu0 0.0
  %4106 = vmatpush1.msra.mxu0 0.0
  %4107 = vmatprep.subr.mxu0 0.0
  %4108 = vmatpush1.msra.mxu0 0.0
  %4109 = vmatprep.subr.mxu0 0.0
  %4110 = vmatpush1.msra.mxu0 0.0
  %4111 = vmatprep.subr.mxu0 0.0
  %4112 = vmatpush1.msra.mxu0 0.0
  %4113 = vmatprep.mubr.f32.mxu0 0.0
  %4114 = vmatmul.mubr.f32.gmra.mrb[0].mxu0 %v4044
  %v4115 = vpop.f32.mrb[0].mxu0
  %v4116 = vadd.f32 0.0, %v4115
  %v4117 = vpop.f32.mrb[0].mxu0
  %4118 = vmatprep.mubr.f32.mxu0 0.0
  %4119 = vmatmul.mubr.f32.gmra.mrb[0].mxu0 %v4047
  %v4120 = vpop.f32.mrb[0].mxu0
  %v4121 = vadd.f32 0.0, %v4120
  %v4122 = vpop.f32.mrb[0].mxu0
  %4123 = vdwg.mxu0
  %v4125 = vsel %vm1863, %v2213, 0
  %v4128 = vsel %vm1863, %v2215, 0
  %4130 = vmatprep.subr.mxu0 0.0
  %4131 = vmatpush1.msra.mxu0 %v445
  %4132 = vmatprep.subr.mxu0 0.0
  %4133 = vmatpush1.msra.mxu0 %v447
  %4134 = vmatprep.subr.mxu0 0.0
  %4135 = vmatpush1.msra.mxu0 0.0
  %4136 = vmatprep.subr.mxu0 0.0
  %4137 = vmatpush1.msra.mxu0 0.0
  %4138 = vmatprep.subr.mxu0 0.0
  %4139 = vmatpush1.msra.mxu0 0.0
  %4140 = vmatprep.subr.mxu0 0.0
  %4141 = vmatpush1.msra.mxu0 0.0
  %4142 = vmatprep.subr.mxu0 0.0
  %4143 = vmatpush1.msra.mxu0 0.0
  %4144 = vmatprep.subr.mxu0 0.0
  %4145 = vmatpush1.msra.mxu0 0.0
  %4146 = vmatprep.subr.mxu0 0.0
  %4147 = vmatpush1.msra.mxu0 0.0
  %4148 = vmatprep.subr.mxu0 0.0
  %4149 = vmatpush1.msra.mxu0 0.0
  %4150 = vmatprep.subr.mxu0 0.0
  %4151 = vmatpush1.msra.mxu0 0.0
  %4152 = vmatprep.subr.mxu0 0.0
  %4153 = vmatpush1.msra.mxu0 0.0
  %4154 = vmatprep.subr.mxu0 0.0
  %4155 = vmatpush1.msra.mxu0 0.0
  %4156 = vmatprep.subr.mxu0 0.0
  %4157 = vmatpush1.msra.mxu0 0.0
  %4158 = vmatprep.subr.mxu0 0.0
  %4159 = vmatpush1.msra.mxu0 0.0
  %4160 = vmatprep.subr.mxu0 0.0
  %4161 = vmatpush1.msra.mxu0 0.0
  %4162 = vmatprep.subr.mxu0 0.0
  %4163 = vmatpush1.msra.mxu0 0.0
  %4164 = vmatprep.subr.mxu0 0.0
  %4165 = vmatpush1.msra.mxu0 0.0
  %4166 = vmatprep.subr.mxu0 0.0
  %4167 = vmatpush1.msra.mxu0 0.0
  %4168 = vmatprep.subr.mxu0 0.0
  %4169 = vmatpush1.msra.mxu0 0.0
  %4170 = vmatprep.subr.mxu0 0.0
  %4171 = vmatpush1.msra.mxu0 0.0
  %4172 = vmatprep.subr.mxu0 0.0
  %4173 = vmatpush1.msra.mxu0 0.0
  %4174 = vmatprep.subr.mxu0 0.0
  %4175 = vmatpush1.msra.mxu0 0.0
  %4176 = vmatprep.subr.mxu0 0.0
  %4177 = vmatpush1.msra.mxu0 0.0
  %4178 = vmatprep.subr.mxu0 0.0
  %4179 = vmatpush1.msra.mxu0 0.0
  %4180 = vmatprep.subr.mxu0 0.0
  %4181 = vmatpush1.msra.mxu0 0.0
  %4182 = vmatprep.subr.mxu0 0.0
  %4183 = vmatpush1.msra.mxu0 0.0
  %4184 = vmatprep.subr.mxu0 0.0
  %4185 = vmatpush1.msra.mxu0 0.0
  %4186 = vmatprep.subr.mxu0 0.0
  %4187 = vmatpush1.msra.mxu0 0.0
  %4188 = vmatprep.subr.mxu0 0.0
  %4189 = vmatpush1.msra.mxu0 0.0
  %4190 = vmatprep.subr.mxu0 0.0
  %4191 = vmatpush1.msra.mxu0 0.0
  %4192 = vmatprep.subr.mxu0 0.0
  %4193 = vmatpush1.msra.mxu0 0.0
  %4194 = vmatprep.mubr.f32.mxu0 0.0
  %4195 = vmatmul.mubr.f32.gmra.mrb[0].mxu0 %v4125
  %v4196 = vpop.f32.mrb[0].mxu0
  %v4197 = vadd.f32 0.0, %v4196
  %v4198 = vpop.f32.mrb[0].mxu0
  %4199 = vmatprep.mubr.f32.mxu0 0.0
  %4200 = vmatmul.mubr.f32.gmra.mrb[0].mxu0 %v4128
  %v4201 = vpop.f32.mrb[0].mxu0
  %v4202 = vadd.f32 0.0, %v4201
  %v4203 = vpop.f32.mrb[0].mxu0
  %4204 = vdwg.mxu0
  %v4205 = vld [vmem:[%s6] sm:$0xff]
  %v4206 = vld [vmem:[%s6 + $0x8] sm:$0xff]
  %v4207 = vld [vmem:[%s6 + $0x10] sm:$0xff]
  %v4208 = vld [vmem:[%s6 + $0x18] sm:$0xff]
  %v4210 = vsel %vm466, %v2982, 0
  %v4213 = vsel %vm466, %v2987, 0
  %v4216 = vsel %vm466, %v3063, 0
  %v4219 = vsel %vm466, %v3068, 0
  %v4222 = vsel %vm466, %v3144, 0
  %v4225 = vsel %vm466, %v3149, 0
  %v4228 = vsel %vm466, %v3225, 0
  %v4231 = vsel %vm466, %v3230, 0
  %4233 = vmatprep.subr.mxu0 0.0
  %4234 = vmatpush1.msra.mxu0 %v4205
  %4235 = vmatprep.subr.mxu0 0.0
  %4236 = vmatpush1.msra.mxu0 0.0
  %4237 = vmatprep.subr.mxu0 0.0
  %4238 = vmatpush1.msra.mxu0 0.0
  %4239 = vmatprep.subr.mxu0 0.0
  %4240 = vmatpush1.msra.mxu0 0.0
  %4241 = vmatprep.subr.mxu0 0.0
  %4242 = vmatpush1.msra.mxu0 0.0
  %4243 = vmatprep.subr.mxu0 0.0
  %4244 = vmatpush1.msra.mxu0 0.0
  %4245 = vmatprep.subr.mxu0 0.0
  %4246 = vmatpush1.msra.mxu0 0.0
  %4247 = vmatprep.subr.mxu0 0.0
  %4248 = vmatpush1.msra.mxu0 0.0
  %4249 = vmatprep.subr.mxu0 0.0
  %4250 = vmatpush1.msra.mxu0 0.0
  %4251 = vmatprep.subr.mxu0 0.0
  %4252 = vmatpush1.msra.mxu0 0.0
  %4253 = vmatprep.subr.mxu0 0.0
  %4254 = vmatpush1.msra.mxu0 0.0
  %4255 = vmatprep.subr.mxu0 0.0
  %4256 = vmatpush1.msra.mxu0 0.0
  %4257 = vmatprep.subr.mxu0 0.0
  %4258 = vmatpush1.msra.mxu0 0.0
  %4259 = vmatprep.subr.mxu0 0.0
  %4260 = vmatpush1.msra.mxu0 0.0
  %4261 = vmatprep.subr.mxu0 0.0
  %4262 = vmatpush1.msra.mxu0 0.0
  %4263 = vmatprep.subr.mxu0 0.0
  %4264 = vmatpush1.msra.mxu0 0.0
  %4265 = vmatprep.subr.mxu0 0.0
  %4266 = vmatpush1.msra.mxu0 0.0
  %4267 = vmatprep.subr.mxu0 0.0
  %4268 = vmatpush1.msra.mxu0 0.0
  %4269 = vmatprep.subr.mxu0 0.0
  %4270 = vmatpush1.msra.mxu0 0.0
  %4271 = vmatprep.subr.mxu0 0.0
  %4272 = vmatpush1.msra.mxu0 0.0
  %4273 = vmatprep.subr.mxu0 0.0
  %4274 = vmatpush1.msra.mxu0 0.0
  %4275 = vmatprep.subr.mxu0 0.0
  %4276 = vmatpush1.msra.mxu0 0.0
  %4277 = vmatprep.subr.mxu0 0.0
  %4278 = vmatpush1.msra.mxu0 0.0
  %4279 = vmatprep.subr.mxu0 0.0
  %4280 = vmatpush1.msra.mxu0 0.0
  %4281 = vmatprep.subr.mxu0 0.0
  %4282 = vmatpush1.msra.mxu0 0.0
  %4283 = vmatprep.subr.mxu0 0.0
  %4284 = vmatpush1.msra.mxu0 0.0
  %4285 = vmatprep.subr.mxu0 0.0
  %4286 = vmatpush1.msra.mxu0 0.0
  %4287 = vmatprep.subr.mxu0 0.0
  %4288 = vmatpush1.msra.mxu0 0.0
  %4289 = vmatprep.subr.mxu0 0.0
  %4290 = vmatpush1.msra.mxu0 0.0
  %4291 = vmatprep.subr.mxu0 0.0
  %4292 = vmatpush1.msra.mxu0 0.0
  %4293 = vmatprep.subr.mxu0 0.0
  %4294 = vmatpush1.msra.mxu0 0.0
  %4295 = vmatprep.subr.mxu0 0.0
  %4296 = vmatpush1.msra.mxu0 0.0
  %4297 = vmatprep.mubr.f32.mxu0 0.0
  %4298 = vmatmul.mubr.f32.gmra.mrb[0].mxu0 %v4210
  %v4299 = vpop.f32.mrb[0].mxu0
  %v4300 = vadd.f32 0.0, %v4299
  %v4301 = vpop.f32.mrb[0].mxu0
  %4302 = vmatprep.mubr.f32.mxu0 0.0
  %4303 = vmatmul.mubr.f32.gmra.mrb[0].mxu0 %v4213
  %v4304 = vpop.f32.mrb[0].mxu0
  %v4305 = vadd.f32 0.0, %v4304
  %v4306 = vpop.f32.mrb[0].mxu0
  %4307 = vmatprep.mubr.f32.mxu0 0.0
  %4308 = vmatmul.mubr.f32.gmra.mrb[0].mxu0 %v4216
  %v4309 = vpop.f32.mrb[0].mxu0
  %v4310 = vadd.f32 0.0, %v4309
  %v4311 = vpop.f32.mrb[0].mxu0
  %4312 = vmatprep.mubr.f32.mxu0 0.0
  %4313 = vmatmul.mubr.f32.gmra.mrb[0].mxu0 %v4219
  %v4314 = vpop.f32.mrb[0].mxu0
  %v4315 = vadd.f32 0.0, %v4314
  %v4316 = vpop.f32.mrb[0].mxu0
  %4317 = vmatprep.mubr.f32.mxu0 0.0
  %4318 = vmatmul.mubr.f32.gmra.mrb[0].mxu0 %v4222
  %v4319 = vpop.f32.mrb[0].mxu0
  %v4320 = vadd.f32 0.0, %v4319
  %v4321 = vpop.f32.mrb[0].mxu0
  %4322 = vmatprep.mubr.f32.mxu0 0.0
  %4323 = vmatmul.mubr.f32.gmra.mrb[0].mxu0 %v4225
  %v4324 = vpop.f32.mrb[0].mxu0
  %v4325 = vadd.f32 0.0, %v4324
  %v4326 = vpop.f32.mrb[0].mxu0
  %4327 = vmatprep.mubr.f32.mxu0 0.0
  %4328 = vmatmul.mubr.f32.gmra.mrb[0].mxu0 %v4228
  %v4329 = vpop.f32.mrb[0].mxu0
  %v4330 = vadd.f32 0.0, %v4329
  %v4331 = vpop.f32.mrb[0].mxu0
  %4332 = vmatprep.mubr.f32.mxu0 0.0
  %4333 = vmatmul.mubr.f32.gmra.mrb[0].mxu0 %v4231
  %v4334 = vpop.f32.mrb[0].mxu0
  %v4335 = vadd.f32 0.0, %v4334
  %v4336 = vpop.f32.mrb[0].mxu0
  %4337 = vdwg.mxu0
  %v4339 = vsel %vm466, %v3306, 0
  %v4342 = vsel %vm466, %v3311, 0
  %v4345 = vsel %vm466, %v3387, 0
  %v4348 = vsel %vm466, %v3392, 0
  %v4351 = vsel %vm466, %v3468, 0
  %v4354 = vsel %vm466, %v3473, 0
  %v4357 = vsel %vm466, %v3549, 0
  %v4360 = vsel %vm466, %v3554, 0
  %4362 = vmatprep.subr.mxu0 0.0
  %4363 = vmatpush1.msra.mxu0 %v4206
  %4364 = vmatprep.subr.mxu0 0.0
  %4365 = vmatpush1.msra.mxu0 0.0
  %4366 = vmatprep.subr.mxu0 0.0
  %4367 = vmatpush1.msra.mxu0 0.0
  %4368 = vmatprep.subr.mxu0 0.0
  %4369 = vmatpush1.msra.mxu0 0.0
  %4370 = vmatprep.subr.mxu0 0.0
  %4371 = vmatpush1.msra.mxu0 0.0
  %4372 = vmatprep.subr.mxu0 0.0
  %4373 = vmatpush1.msra.mxu0 0.0
  %4374 = vmatprep.subr.mxu0 0.0
  %4375 = vmatpush1.msra.mxu0 0.0
  %4376 = vmatprep.subr.mxu0 0.0
  %4377 = vmatpush1.msra.mxu0 0.0
  %4378 = vmatprep.subr.mxu0 0.0
  %4379 = vmatpush1.msra.mxu0 0.0
  %4380 = vmatprep.subr.mxu0 0.0
  %4381 = vmatpush1.msra.mxu0 0.0
  %4382 = vmatprep.subr.mxu0 0.0
  %4383 = vmatpush1.msra.mxu0 0.0
  %4384 = vmatprep.subr.mxu0 0.0
  %4385 = vmatpush1.msra.mxu0 0.0
  %4386 = vmatprep.subr.mxu0 0.0
  %4387 = vmatpush1.msra.mxu0 0.0
  %4388 = vmatprep.subr.mxu0 0.0
  %4389 = vmatpush1.msra.mxu0 0.0
  %4390 = vmatprep.subr.mxu0 0.0
  %4391 = vmatpush1.msra.mxu0 0.0
  %4392 = vmatprep.subr.mxu0 0.0
  %4393 = vmatpush1.msra.mxu0 0.0
  %4394 = vmatprep.subr.mxu0 0.0
  %4395 = vmatpush1.msra.mxu0 0.0
  %4396 = vmatprep.subr.mxu0 0.0
  %4397 = vmatpush1.msra.mxu0 0.0
  %4398 = vmatprep.subr.mxu0 0.0
  %4399 = vmatpush1.msra.mxu0 0.0
  %4400 = vmatprep.subr.mxu0 0.0
  %4401 = vmatpush1.msra.mxu0 0.0
  %4402 = vmatprep.subr.mxu0 0.0
  %4403 = vmatpush1.msra.mxu0 0.0
  %4404 = vmatprep.subr.mxu0 0.0
  %4405 = vmatpush1.msra.mxu0 0.0
  %4406 = vmatprep.subr.mxu0 0.0
  %4407 = vmatpush1.msra.mxu0 0.0
  %4408 = vmatprep.subr.mxu0 0.0
  %4409 = vmatpush1.msra.mxu0 0.0
  %4410 = vmatprep.subr.mxu0 0.0
  %4411 = vmatpush1.msra.mxu0 0.0
  %4412 = vmatprep.subr.mxu0 0.0
  %4413 = vmatpush1.msra.mxu0 0.0
  %4414 = vmatprep.subr.mxu0 0.0
  %4415 = vmatpush1.msra.mxu0 0.0
  %4416 = vmatprep.subr.mxu0 0.0
  %4417 = vmatpush1.msra.mxu0 0.0
  %4418 = vmatprep.subr.mxu0 0.0
  %4419 = vmatpush1.msra.mxu0 0.0
  %4420 = vmatprep.subr.mxu0 0.0
  %4421 = vmatpush1.msra.mxu0 0.0
  %4422 = vmatprep.subr.mxu0 0.0
  %4423 = vmatpush1.msra.mxu0 0.0
  %4424 = vmatprep.subr.mxu0 0.0
  %4425 = vmatpush1.msra.mxu0 0.0
  %4426 = vmatprep.mubr.f32.mxu0 0.0
  %4427 = vmatmul.mubr.f32.gmra.mrb[0].mxu0 %v4339
  %v4428 = vpop.f32.mrb[0].mxu0
  %v4429 = vadd.f32 0.0, %v4428
  %v4430 = vpop.f32.mrb[0].mxu0
  %4431 = vmatprep.mubr.f32.mxu0 0.0
  %4432 = vmatmul.mubr.f32.gmra.mrb[0].mxu0 %v4342
  %v4433 = vpop.f32.mrb[0].mxu0
  %v4434 = vadd.f32 0.0, %v4433
  %v4435 = vpop.f32.mrb[0].mxu0
  %4436 = vmatprep.mubr.f32.mxu0 0.0
  %4437 = vmatmul.mubr.f32.gmra.mrb[0].mxu0 %v4345
  %v4438 = vpop.f32.mrb[0].mxu0
  %v4439 = vadd.f32 0.0, %v4438
  %v4440 = vpop.f32.mrb[0].mxu0
  %4441 = vmatprep.mubr.f32.mxu0 0.0
  %4442 = vmatmul.mubr.f32.gmra.mrb[0].mxu0 %v4348
  %v4443 = vpop.f32.mrb[0].mxu0
  %v4444 = vadd.f32 0.0, %v4443
  %v4445 = vpop.f32.mrb[0].mxu0
  %4446 = vmatprep.mubr.f32.mxu0 0.0
  %4447 = vmatmul.mubr.f32.gmra.mrb[0].mxu0 %v4351
  %v4448 = vpop.f32.mrb[0].mxu0
  %v4449 = vadd.f32 0.0, %v4448
  %v4450 = vpop.f32.mrb[0].mxu0
  %4451 = vmatprep.mubr.f32.mxu0 0.0
  %4452 = vmatmul.mubr.f32.gmra.mrb[0].mxu0 %v4354
  %v4453 = vpop.f32.mrb[0].mxu0
  %v4454 = vadd.f32 0.0, %v4453
  %v4455 = vpop.f32.mrb[0].mxu0
  %4456 = vmatprep.mubr.f32.mxu0 0.0
  %4457 = vmatmul.mubr.f32.gmra.mrb[0].mxu0 %v4357
  %v4458 = vpop.f32.mrb[0].mxu0
  %v4459 = vadd.f32 0.0, %v4458
  %v4460 = vpop.f32.mrb[0].mxu0
  %4461 = vmatprep.mubr.f32.mxu0 0.0
  %4462 = vmatmul.mubr.f32.gmra.mrb[0].mxu0 %v4360
  %v4463 = vpop.f32.mrb[0].mxu0
  %v4464 = vadd.f32 0.0, %v4463
  %v4465 = vpop.f32.mrb[0].mxu0
  %4466 = vdwg.mxu0
  %v4468 = vsel %vm466, %v3630, 0
  %v4471 = vsel %vm466, %v3635, 0
  %v4474 = vsel %vm466, %v3711, 0
  %v4477 = vsel %vm466, %v3716, 0
  %v4480 = vsel %vm466, %v3792, 0
  %v4483 = vsel %vm466, %v3797, 0
  %v4486 = vsel %vm466, %v3873, 0
  %v4489 = vsel %vm466, %v3878, 0
  %4491 = vmatprep.subr.mxu0 0.0
  %4492 = vmatpush1.msra.mxu0 %v4207
  %4493 = vmatprep.subr.mxu0 0.0
  %4494 = vmatpush1.msra.mxu0 0.0
  %4495 = vmatprep.subr.mxu0 0.0
  %4496 = vmatpush1.msra.mxu0 0.0
  %4497 = vmatprep.subr.mxu0 0.0
  %4498 = vmatpush1.msra.mxu0 0.0
  %4499 = vmatprep.subr.mxu0 0.0
  %4500 = vmatpush1.msra.mxu0 0.0
  %4501 = vmatprep.subr.mxu0 0.0
  %4502 = vmatpush1.msra.mxu0 0.0
  %4503 = vmatprep.subr.mxu0 0.0
  %4504 = vmatpush1.msra.mxu0 0.0
  %4505 = vmatprep.subr.mxu0 0.0
  %4506 = vmatpush1.msra.mxu0 0.0
  %4507 = vmatprep.subr.mxu0 0.0
  %4508 = vmatpush1.msra.mxu0 0.0
  %4509 = vmatprep.subr.mxu0 0.0
  %4510 = vmatpush1.msra.mxu0 0.0
  %4511 = vmatprep.subr.mxu0 0.0
  %4512 = vmatpush1.msra.mxu0 0.0
  %4513 = vmatprep.subr.mxu0 0.0
  %4514 = vmatpush1.msra.mxu0 0.0
  %4515 = vmatprep.subr.mxu0 0.0
  %4516 = vmatpush1.msra.mxu0 0.0
  %4517 = vmatprep.subr.mxu0 0.0
  %4518 = vmatpush1.msra.mxu0 0.0
  %4519 = vmatprep.subr.mxu0 0.0
  %4520 = vmatpush1.msra.mxu0 0.0
  %4521 = vmatprep.subr.mxu0 0.0
  %4522 = vmatpush1.msra.mxu0 0.0
  %4523 = vmatprep.subr.mxu0 0.0
  %4524 = vmatpush1.msra.mxu0 0.0
  %4525 = vmatprep.subr.mxu0 0.0
  %4526 = vmatpush1.msra.mxu0 0.0
  %4527 = vmatprep.subr.mxu0 0.0
  %4528 = vmatpush1.msra.mxu0 0.0
  %4529 = vmatprep.subr.mxu0 0.0
  %4530 = vmatpush1.msra.mxu0 0.0
  %4531 = vmatprep.subr.mxu0 0.0
  %4532 = vmatpush1.msra.mxu0 0.0
  %4533 = vmatprep.subr.mxu0 0.0
  %4534 = vmatpush1.msra.mxu0 0.0
  %4535 = vmatprep.subr.mxu0 0.0
  %4536 = vmatpush1.msra.mxu0 0.0
  %4537 = vmatprep.subr.mxu0 0.0
  %4538 = vmatpush1.msra.mxu0 0.0
  %4539 = vmatprep.subr.mxu0 0.0
  %4540 = vmatpush1.msra.mxu0 0.0
  %4541 = vmatprep.subr.mxu0 0.0
  %4542 = vmatpush1.msra.mxu0 0.0
  %4543 = vmatprep.subr.mxu0 0.0
  %4544 = vmatpush1.msra.mxu0 0.0
  %4545 = vmatprep.subr.mxu0 0.0
  %4546 = vmatpush1.msra.mxu0 0.0
  %4547 = vmatprep.subr.mxu0 0.0
  %4548 = vmatpush1.msra.mxu0 0.0
  %4549 = vmatprep.subr.mxu0 0.0
  %4550 = vmatpush1.msra.mxu0 0.0
  %4551 = vmatprep.subr.mxu0 0.0
  %4552 = vmatpush1.msra.mxu0 0.0
  %4553 = vmatprep.subr.mxu0 0.0
  %4554 = vmatpush1.msra.mxu0 0.0
  %4555 = vmatprep.mubr.f32.mxu0 0.0
  %4556 = vmatmul.mubr.f32.gmra.mrb[0].mxu0 %v4468
  %v4557 = vpop.f32.mrb[0].mxu0
  %v4558 = vadd.f32 0.0, %v4557
  %v4559 = vpop.f32.mrb[0].mxu0
  %4560 = vmatprep.mubr.f32.mxu0 0.0
  %4561 = vmatmul.mubr.f32.gmra.mrb[0].mxu0 %v4471
  %v4562 = vpop.f32.mrb[0].mxu0
  %v4563 = vadd.f32 0.0, %v4562
  %v4564 = vpop.f32.mrb[0].mxu0
  %4565 = vmatprep.mubr.f32.mxu0 0.0
  %4566 = vmatmul.mubr.f32.gmra.mrb[0].mxu0 %v4474
  %v4567 = vpop.f32.mrb[0].mxu0
  %v4568 = vadd.f32 0.0, %v4567
  %v4569 = vpop.f32.mrb[0].mxu0
  %4570 = vmatprep.mubr.f32.mxu0 0.0
  %4571 = vmatmul.mubr.f32.gmra.mrb[0].mxu0 %v4477
  %v4572 = vpop.f32.mrb[0].mxu0
  %v4573 = vadd.f32 0.0, %v4572
  %v4574 = vpop.f32.mrb[0].mxu0
  %4575 = vmatprep.mubr.f32.mxu0 0.0
  %4576 = vmatmul.mubr.f32.gmra.mrb[0].mxu0 %v4480
  %v4577 = vpop.f32.mrb[0].mxu0
  %v4578 = vadd.f32 0.0, %v4577
  %v4579 = vpop.f32.mrb[0].mxu0
  %4580 = vmatprep.mubr.f32.mxu0 0.0
  %4581 = vmatmul.mubr.f32.gmra.mrb[0].mxu0 %v4483
  %v4582 = vpop.f32.mrb[0].mxu0
  %v4583 = vadd.f32 0.0, %v4582
  %v4584 = vpop.f32.mrb[0].mxu0
  %4585 = vmatprep.mubr.f32.mxu0 0.0
  %4586 = vmatmul.mubr.f32.gmra.mrb[0].mxu0 %v4486
  %v4587 = vpop.f32.mrb[0].mxu0
  %v4588 = vadd.f32 0.0, %v4587
  %v4589 = vpop.f32.mrb[0].mxu0
  %4590 = vmatprep.mubr.f32.mxu0 0.0
  %4591 = vmatmul.mubr.f32.gmra.mrb[0].mxu0 %v4489
  %v4592 = vpop.f32.mrb[0].mxu0
  %v4593 = vadd.f32 0.0, %v4592
  %v4594 = vpop.f32.mrb[0].mxu0
  %4595 = vdwg.mxu0
  %v4597 = vsel %vm466, %v3954, 0
  %v4600 = vsel %vm466, %v3959, 0
  %v4603 = vsel %vm466, %v4035, 0
  %v4606 = vsel %vm466, %v4040, 0
  %v4609 = vsel %vm466, %v4116, 0
  %v4612 = vsel %vm466, %v4121, 0
  %v4615 = vsel %vm466, %v4197, 0
  %v4618 = vsel %vm466, %v4202, 0
  %4620 = vmatprep.subr.mxu0 0.0
  %4621 = vmatpush1.msra.mxu0 %v4208
  %4622 = vmatprep.subr.mxu0 0.0
  %4623 = vmatpush1.msra.mxu0 0.0
  %4624 = vmatprep.subr.mxu0 0.0
  %4625 = vmatpush1.msra.mxu0 0.0
  %4626 = vmatprep.subr.mxu0 0.0
  %4627 = vmatpush1.msra.mxu0 0.0
  %4628 = vmatprep.subr.mxu0 0.0
  %4629 = vmatpush1.msra.mxu0 0.0
  %4630 = vmatprep.subr.mxu0 0.0
  %4631 = vmatpush1.msra.mxu0 0.0
  %4632 = vmatprep.subr.mxu0 0.0
  %4633 = vmatpush1.msra.mxu0 0.0
  %4634 = vmatprep.subr.mxu0 0.0
  %4635 = vmatpush1.msra.mxu0 0.0
  %4636 = vmatprep.subr.mxu0 0.0
  %4637 = vmatpush1.msra.mxu0 0.0
  %4638 = vmatprep.subr.mxu0 0.0
  %4639 = vmatpush1.msra.mxu0 0.0
  %4640 = vmatprep.subr.mxu0 0.0
  %4641 = vmatpush1.msra.mxu0 0.0
  %4642 = vmatprep.subr.mxu0 0.0
  %4643 = vmatpush1.msra.mxu0 0.0
  %4644 = vmatprep.subr.mxu0 0.0
  %4645 = vmatpush1.msra.mxu0 0.0
  %4646 = vmatprep.subr.mxu0 0.0
  %4647 = vmatpush1.msra.mxu0 0.0
  %4648 = vmatprep.subr.mxu0 0.0
  %4649 = vmatpush1.msra.mxu0 0.0
  %4650 = vmatprep.subr.mxu0 0.0
  %4651 = vmatpush1.msra.mxu0 0.0
  %4652 = vmatprep.subr.mxu0 0.0
  %4653 = vmatpush1.msra.mxu0 0.0
  %4654 = vmatprep.subr.mxu0 0.0
  %4655 = vmatpush1.msra.mxu0 0.0
  %4656 = vmatprep.subr.mxu0 0.0
  %4657 = vmatpush1.msra.mxu0 0.0
  %4658 = vmatprep.subr.mxu0 0.0
  %4659 = vmatpush1.msra.mxu0 0.0
  %4660 = vmatprep.subr.mxu0 0.0
  %4661 = vmatpush1.msra.mxu0 0.0
  %4662 = vmatprep.subr.mxu0 0.0
  %4663 = vmatpush1.msra.mxu0 0.0
  %4664 = vmatprep.subr.mxu0 0.0
  %4665 = vmatpush1.msra.mxu0 0.0
  %4666 = vmatprep.subr.mxu0 0.0
  %4667 = vmatpush1.msra.mxu0 0.0
  %4668 = vmatprep.subr.mxu0 0.0
  %4669 = vmatpush1.msra.mxu0 0.0
  %4670 = vmatprep.subr.mxu0 0.0
  %4671 = vmatpush1.msra.mxu0 0.0
  %4672 = vmatprep.subr.mxu0 0.0
  %4673 = vmatpush1.msra.mxu0 0.0
  %4674 = vmatprep.subr.mxu0 0.0
  %4675 = vmatpush1.msra.mxu0 0.0
  %4676 = vmatprep.subr.mxu0 0.0
  %4677 = vmatpush1.msra.mxu0 0.0
  %4678 = vmatprep.subr.mxu0 0.0
  %4679 = vmatpush1.msra.mxu0 0.0
  %4680 = vmatprep.subr.mxu0 0.0
  %4681 = vmatpush1.msra.mxu0 0.0
  %4682 = vmatprep.subr.mxu0 0.0
  %4683 = vmatpush1.msra.mxu0 0.0
  %4684 = vmatprep.mubr.f32.mxu0 0.0
  %4685 = vmatmul.mubr.f32.gmra.mrb[0].mxu0 %v4597
  %v4686 = vpop.f32.mrb[0].mxu0
  %v4687 = vadd.f32 0.0, %v4686
  %v4688 = vpop.f32.mrb[0].mxu0
  %4689 = vmatprep.mubr.f32.mxu0 0.0
  %4690 = vmatmul.mubr.f32.gmra.mrb[0].mxu0 %v4600
  %v4691 = vpop.f32.mrb[0].mxu0
  %v4692 = vadd.f32 0.0, %v4691
  %v4693 = vpop.f32.mrb[0].mxu0
  %4694 = vmatprep.mubr.f32.mxu0 0.0
  %4695 = vmatmul.mubr.f32.gmra.mrb[0].mxu0 %v4603
  %v4696 = vpop.f32.mrb[0].mxu0
  %v4697 = vadd.f32 0.0, %v4696
  %v4698 = vpop.f32.mrb[0].mxu0
  %4699 = vmatprep.mubr.f32.mxu0 0.0
  %4700 = vmatmul.mubr.f32.gmra.mrb[0].mxu0 %v4606
  %v4701 = vpop.f32.mrb[0].mxu0
  %v4702 = vadd.f32 0.0, %v4701
  %v4703 = vpop.f32.mrb[0].mxu0
  %4704 = vmatprep.mubr.f32.mxu0 0.0
  %4705 = vmatmul.mubr.f32.gmra.mrb[0].mxu0 %v4609
  %v4706 = vpop.f32.mrb[0].mxu0
  %v4707 = vadd.f32 0.0, %v4706
  %v4708 = vpop.f32.mrb[0].mxu0
  %4709 = vmatprep.mubr.f32.mxu0 0.0
  %4710 = vmatmul.mubr.f32.gmra.mrb[0].mxu0 %v4612
  %v4711 = vpop.f32.mrb[0].mxu0
  %v4712 = vadd.f32 0.0, %v4711
  %v4713 = vpop.f32.mrb[0].mxu0
  %4714 = vmatprep.mubr.f32.mxu0 0.0
  %4715 = vmatmul.mubr.f32.gmra.mrb[0].mxu0 %v4615
  %v4716 = vpop.f32.mrb[0].mxu0
  %v4717 = vadd.f32 0.0, %v4716
  %v4718 = vpop.f32.mrb[0].mxu0
  %4719 = vmatprep.mubr.f32.mxu0 0.0
  %4720 = vmatmul.mubr.f32.gmra.mrb[0].mxu0 %v4618
  %v4721 = vpop.f32.mrb[0].mxu0
  %v4722 = vadd.f32 0.0, %v4721
  %v4723 = vpop.f32.mrb[0].mxu0
  %4724 = vdwg.mxu0
  %v4725 = vsel %vm74, %v4300, 0.0
  %v4726 = vsel %vm74, %v4429, 0.0
  %v4727 = vadd.f32 %v4725, %v4726
  %v4728 = vsel %vm74, %v4558, 0.0
  %v4729 = vadd.f32 %v4727, %v4728
  %v4730 = vsel %vm74, %v4687, 0.0
  %v4731 = vadd.f32 %v4729, %v4730
  %v4732 = vsel %vm74, %v4305, 0.0
  %v4733 = vsel %vm74, %v4434, 0.0
  %v4734 = vadd.f32 %v4732, %v4733
  %v4735 = vsel %vm74, %v4563, 0.0
  %v4736 = vadd.f32 %v4734, %v4735
  %v4737 = vsel %vm74, %v4692, 0.0
  %v4738 = vadd.f32 %v4736, %v4737
  %v4739 = vsel %vm74, %v4310, 0.0
  %v4740 = vsel %vm74, %v4439, 0.0
  %v4741 = vadd.f32 %v4739, %v4740
  %v4742 = vsel %vm74, %v4568, 0.0
  %v4743 = vadd.f32 %v4741, %v4742
  %v4744 = vsel %vm74, %v4697, 0.0
  %v4745 = vadd.f32 %v4743, %v4744
  %v4746 = vsel %vm74, %v4315, 0.0
  %v4747 = vsel %vm74, %v4444, 0.0
  %v4748 = vadd.f32 %v4746, %v4747
  %v4749 = vsel %vm74, %v4573, 0.0
  %v4750 = vadd.f32 %v4748, %v4749
  %v4751 = vsel %vm74, %v4702, 0.0
  %v4752 = vadd.f32 %v4750, %v4751
  %v4753 = vsel %vm74, %v4320, 0.0
  %v4754 = vsel %vm74, %v4449, 0.0
  %v4755 = vadd.f32 %v4753, %v4754
  %v4756 = vsel %vm74, %v4578, 0.0
  %v4757 = vadd.f32 %v4755, %v4756
  %v4758 = vsel %vm74, %v4707, 0.0
  %v4759 = vadd.f32 %v4757, %v4758
  %v4760 = vsel %vm74, %v4325, 0.0
  %v4761 = vsel %vm74, %v4454, 0.0
  %v4762 = vadd.f32 %v4760, %v4761
  %v4763 = vsel %vm74, %v4583, 0.0
  %v4764 = vadd.f32 %v4762, %v4763
  %v4765 = vsel %vm74, %v4712, 0.0
  %v4766 = vadd.f32 %v4764, %v4765
  %v4767 = vsel %vm74, %v4330, 0.0
  %v4768 = vsel %vm74, %v4459, 0.0
  %v4769 = vadd.f32 %v4767, %v4768
  %v4770 = vsel %vm74, %v4588, 0.0
  %v4771 = vadd.f32 %v4769, %v4770
  %v4772 = vsel %vm74, %v4717, 0.0
  %v4773 = vadd.f32 %v4771, %v4772
  %v4774 = vsel %vm74, %v4335, 0.0
  %v4775 = vsel %vm74, %v4464, 0.0
  %v4776 = vadd.f32 %v4774, %v4775
  %v4777 = vsel %vm74, %v4593, 0.0
  %v4778 = vadd.f32 %v4776, %v4777
  %v4779 = vsel %vm74, %v4722, 0.0
  %v4780 = vadd.f32 %v4778, %v4779
  %v4781 = vld [vmem:[%s7] sm:$0x1]
  %v4783 = vlaneseq
  %v4784 = vshrl.u32 %v4783, 7
  %v4785 = vsub.s32 0, %v4784
  %v4786 = vrot.slane %v4781, %v4785
  %v4788 = vadd.f32 %v4731, %v4786
  %v4789 = vadd.f32 %v4738, %v4786
  %v4790 = vadd.f32 %v4745, %v4786
  %v4791 = vadd.f32 %v4752, %v4786
  %v4792 = vadd.f32 %v4759, %v4786
  %v4793 = vadd.f32 %v4766, %v4786
  %v4794 = vadd.f32 %v4773, %v4786
  %v4795 = vadd.f32 %v4780, %v4786
  %v4796 = vadd.f32 %v55, %v4788
  %v4797 = vadd.f32 %v56, %v4789
  %v4798 = vadd.f32 %v57, %v4790
  %v4799 = vadd.f32 %v58, %v4791
  %v4800 = vadd.f32 %v59, %v4792
  %v4801 = vadd.f32 %v60, %v4793
  %v4802 = vadd.f32 %v61, %v4794
  %v4803 = vadd.f32 %v62, %v4795
  %v4804 = vld [vmem:[%s8] sm:$0x1]
  %v4805 = vld [vmem:[%s9] sm:$0x1]
  %v4806 = vsel %vm74, %v4796, 0.0
  %4807 = vadd.xlane.f32.xlu0 %v4806
  %v4808 = vpop.xlane.xlu0 %4807
  %v4809 = vsel %vm74, %v4797, 0.0
  %4810 = vadd.xlane.f32.xlu0 %v4809
  %v4811 = vpop.xlane.xlu0 %4810
  %v4812 = vsel %vm74, %v4798, 0.0
  %4813 = vadd.xlane.f32.xlu0 %v4812
  %v4814 = vpop.xlane.xlu0 %4813
  %v4815 = vsel %vm74, %v4799, 0.0
  %4816 = vadd.xlane.f32.xlu0 %v4815
  %v4817 = vpop.xlane.xlu0 %4816
  %v4818 = vsel %vm74, %v4800, 0.0
  %4819 = vadd.xlane.f32.xlu0 %v4818
  %v4820 = vpop.xlane.xlu0 %4819
  %v4821 = vsel %vm74, %v4801, 0.0
  %4822 = vadd.xlane.f32.xlu0 %v4821
  %v4823 = vpop.xlane.xlu0 %4822
  %v4824 = vsel %vm74, %v4802, 0.0
  %4825 = vadd.xlane.f32.xlu0 %v4824
  %v4826 = vpop.xlane.xlu0 %4825
  %v4827 = vsel %vm74, %v4803, 0.0
  %4828 = vadd.xlane.f32.xlu0 %v4827
  %v4829 = vpop.xlane.xlu0 %4828
  %v4830 = vrcp.pop 32.0
  %v4831 = vmul.f32 %v4808, %v4830
  %v4832 = vmul.f32 %v4811, %v4830
  %v4833 = vmul.f32 %v4814, %v4830
  %v4834 = vmul.f32 %v4817, %v4830
  %v4835 = vmul.f32 %v4820, %v4830
  %v4836 = vmul.f32 %v4823, %v4830
  %v4837 = vmul.f32 %v4826, %v4830
  %v4838 = vmul.f32 %v4829, %v4830
  %v4839 = vsub.f32 %v4796, %v4831
  %v4840 = vsub.f32 %v4797, %v4832
  %v4841 = vsub.f32 %v4798, %v4833
  %v4842 = vsub.f32 %v4799, %v4834
  %v4843 = vsub.f32 %v4800, %v4835
  %v4844 = vsub.f32 %v4801, %v4836
  %v4845 = vsub.f32 %v4802, %v4837
  %v4846 = vsub.f32 %v4803, %v4838
  %v4847 = vmul.f32 %v4839, %v4839
  %v4848 = vmul.f32 %v4840, %v4840
  %v4849 = vmul.f32 %v4841, %v4841
  %v4850 = vmul.f32 %v4842, %v4842
  %v4851 = vmul.f32 %v4843, %v4843
  %v4852 = vmul.f32 %v4844, %v4844
  %v4853 = vmul.f32 %v4845, %v4845
  %v4854 = vmul.f32 %v4846, %v4846
  %v4855 = vsel %vm74, %v4847, 0.0
  %4856 = vadd.xlane.f32.xlu0 %v4855
  %v4857 = vpop.xlane.xlu0 %4856
  %v4858 = vsel %vm74, %v4848, 0.0
  %4859 = vadd.xlane.f32.xlu0 %v4858
  %v4860 = vpop.xlane.xlu0 %4859
  %v4861 = vsel %vm74, %v4849, 0.0
  %4862 = vadd.xlane.f32.xlu0 %v4861
  %v4863 = vpop.xlane.xlu0 %4862
  %v4864 = vsel %vm74, %v4850, 0.0
  %4865 = vadd.xlane.f32.xlu0 %v4864
  %v4866 = vpop.xlane.xlu0 %4865
  %v4867 = vsel %vm74, %v4851, 0.0
  %4868 = vadd.xlane.f32.xlu0 %v4867
  %v4869 = vpop.xlane.xlu0 %4868
  %v4870 = vsel %vm74, %v4852, 0.0
  %4871 = vadd.xlane.f32.xlu0 %v4870
  %v4872 = vpop.xlane.xlu0 %4871
  %v4873 = vsel %vm74, %v4853, 0.0
  %4874 = vadd.xlane.f32.xlu0 %v4873
  %v4875 = vpop.xlane.xlu0 %4874
  %v4876 = vsel %vm74, %v4854, 0.0
  %4877 = vadd.xlane.f32.xlu0 %v4876
  %v4878 = vpop.xlane.xlu0 %4877
  %v4879 = vmul.f32 %v4857, %v4830
  %v4880 = vmul.f32 %v4860, %v4830
  %v4881 = vmul.f32 %v4863, %v4830
  %v4882 = vmul.f32 %v4866, %v4830
  %v4883 = vmul.f32 %v4869, %v4830
  %v4884 = vmul.f32 %v4872, %v4830
  %v4885 = vmul.f32 %v4875, %v4830
  %v4886 = vmul.f32 %v4878, %v4830
  %v4887 = vadd.f32 %v4879, 1e-05
  %v4888 = vadd.f32 %v4880, 1e-05
  %v4889 = vadd.f32 %v4881, 1e-05
  %v4890 = vadd.f32 %v4882, 1e-05
  %v4891 = vadd.f32 %v4883, 1e-05
  %v4892 = vadd.f32 %v4884, 1e-05
  %v4893 = vadd.f32 %v4885, 1e-05
  %v4894 = vadd.f32 %v4886, 1e-05
  %v4895 = vrsqrt.pop %v4887
  %v4896 = vrsqrt.pop %v4888
  %v4897 = vrsqrt.pop %v4889
  %v4898 = vrsqrt.pop %v4890
  %v4899 = vrsqrt.pop %v4891
  %v4900 = vrsqrt.pop %v4892
  %v4901 = vrsqrt.pop %v4893
  %v4902 = vrsqrt.pop %v4894
  %v4903 = vmul.f32 %v4839, %v4895
  %v4904 = vmul.f32 %v4840, %v4896
  %v4905 = vmul.f32 %v4841, %v4897
  %v4906 = vmul.f32 %v4842, %v4898
  %v4907 = vmul.f32 %v4843, %v4899
  %v4908 = vmul.f32 %v4844, %v4900
  %v4909 = vmul.f32 %v4845, %v4901
  %v4910 = vmul.f32 %v4846, %v4902
  %v4912 = vlaneseq
  %v4913 = vshrl.u32 %v4912, 7
  %v4914 = vsub.s32 0, %v4913
  %v4915 = vrot.slane %v4804, %v4914
  %v4917 = vmul.f32 %v4903, %v4915
  %v4918 = vmul.f32 %v4904, %v4915
  %v4919 = vmul.f32 %v4905, %v4915
  %v4920 = vmul.f32 %v4906, %v4915
  %v4921 = vmul.f32 %v4907, %v4915
  %v4922 = vmul.f32 %v4908, %v4915
  %v4923 = vmul.f32 %v4909, %v4915
  %v4924 = vmul.f32 %v4910, %v4915
  %v4926 = vlaneseq
  %v4927 = vshrl.u32 %v4926, 7
  %v4928 = vsub.s32 0, %v4927
  %v4929 = vrot.slane %v4805, %v4928
  %v4931 = vadd.f32 %v4917, %v4929
  %v4932 = vadd.f32 %v4918, %v4929
  %v4933 = vadd.f32 %v4919, %v4929
  %v4934 = vadd.f32 %v4920, %v4929
  %v4935 = vadd.f32 %v4921, %v4929
  %v4936 = vadd.f32 %v4922, %v4929
  %v4937 = vadd.f32 %v4923, %v4929
  %v4938 = vadd.f32 %v4924, %v4929
  %v4939 = vld [vmem:[%s10] sm:$0xff]
  %v4940 = vld [vmem:[%s10 + $0x8] sm:$0xff]
  %v4941 = vld [vmem:[%s10 + $0x10] sm:$0xff]
  %v4942 = vld [vmem:[%s10 + $0x18] sm:$0xff]
  %v4943 = vld [vmem:[%s11] sm:$0x1]
  %v4945 = vlaneseq
  %v4946 = vshrl.u32 %v4945, 7
  %v4947 = vsub.s32 0, %v4946
  %v4948 = vrot.slane %v4943, %v4947
  %v4951 = vsel %vm74, %v4931, 0
  %v4954 = vsel %vm74, %v4932, 0
  %v4957 = vsel %vm74, %v4933, 0
  %v4960 = vsel %vm74, %v4934, 0
  %v4963 = vsel %vm74, %v4935, 0
  %v4966 = vsel %vm74, %v4936, 0
  %v4969 = vsel %vm74, %v4937, 0
  %v4972 = vsel %vm74, %v4938, 0
  %4974 = vmatprep.subr.mxu0 0.0
  %4975 = vmatpush1.msra.mxu0 %v4939
  %4976 = vmatprep.subr.mxu0 0.0
  %4977 = vmatpush1.msra.mxu0 %v4940
  %4978 = vmatprep.subr.mxu0 0.0
  %4979 = vmatpush1.msra.mxu0 %v4941
  %4980 = vmatprep.subr.mxu0 0.0
  %4981 = vmatpush1.msra.mxu0 %v4942
  %4982 = vmatprep.subr.mxu0 0.0
  %4983 = vmatpush1.msra.mxu0 0.0
  %4984 = vmatprep.subr.mxu0 0.0
  %4985 = vmatpush1.msra.mxu0 0.0
  %4986 = vmatprep.subr.mxu0 0.0
  %4987 = vmatpush1.msra.mxu0 0.0
  %4988 = vmatprep.subr.mxu0 0.0
  %4989 = vmatpush1.msra.mxu0 0.0
  %4990 = vmatprep.subr.mxu0 0.0
  %4991 = vmatpush1.msra.mxu0 0.0
  %4992 = vmatprep.subr.mxu0 0.0
  %4993 = vmatpush1.msra.mxu0 0.0
  %4994 = vmatprep.subr.mxu0 0.0
  %4995 = vmatpush1.msra.mxu0 0.0
  %4996 = vmatprep.subr.mxu0 0.0
  %4997 = vmatpush1.msra.mxu0 0.0
  %4998 = vmatprep.subr.mxu0 0.0
  %4999 = vmatpush1.msra.mxu0 0.0
  %5000 = vmatprep.subr.mxu0 0.0
  %5001 = vmatpush1.msra.mxu0 0.0
  %5002 = vmatprep.subr.mxu0 0.0
  %5003 = vmatpush1.msra.mxu0 0.0
  %5004 = vmatprep.subr.mxu0 0.0
  %5005 = vmatpush1.msra.mxu0 0.0
  %5006 = vmatprep.subr.mxu0 0.0
  %5007 = vmatpush1.msra.mxu0 0.0
  %5008 = vmatprep.subr.mxu0 0.0
  %5009 = vmatpush1.msra.mxu0 0.0
  %5010 = vmatprep.subr.mxu0 0.0
  %5011 = vmatpush1.msra.mxu0 0.0
  %5012 = vmatprep.subr.mxu0 0.0
  %5013 = vmatpush1.msra.mxu0 0.0
  %5014 = vmatprep.subr.mxu0 0.0
  %5015 = vmatpush1.msra.mxu0 0.0
  %5016 = vmatprep.subr.mxu0 0.0
  %5017 = vmatpush1.msra.mxu0 0.0
  %5018 = vmatprep.subr.mxu0 0.0
  %5019 = vmatpush1.msra.mxu0 0.0
  %5020 = vmatprep.subr.mxu0 0.0
  %5021 = vmatpush1.msra.mxu0 0.0
  %5022 = vmatprep.subr.mxu0 0.0
  %5023 = vmatpush1.msra.mxu0 0.0
  %5024 = vmatprep.subr.mxu0 0.0
  %5025 = vmatpush1.msra.mxu0 0.0
  %5026 = vmatprep.subr.mxu0 0.0
  %5027 = vmatpush1.msra.mxu0 0.0
  %5028 = vmatprep.subr.mxu0 0.0
  %5029 = vmatpush1.msra.mxu0 0.0
  %5030 = vmatprep.subr.mxu0 0.0
  %5031 = vmatpush1.msra.mxu0 0.0
  %5032 = vmatprep.subr.mxu0 0.0
  %5033 = vmatpush1.msra.mxu0 0.0
  %5034 = vmatprep.subr.mxu0 0.0
  %5035 = vmatpush1.msra.mxu0 0.0
  %5036 = vmatprep.subr.mxu0 0.0
  %5037 = vmatpush1.msra.mxu0 0.0
  %5038 = vmatprep.mubr.f32.mxu0 0.0
  %5039 = vmatmul.mubr.f32.gmra.mrb[0].mxu0 %v4951
  %v5040 = vpop.f32.mrb[0].mxu0
  %v5041 = vadd.f32 %v4948, %v5040
  %v5042 = vpop.f32.mrb[0].mxu0
  %5043 = vmatprep.mubr.f32.mxu0 0.0
  %5044 = vmatmul.mubr.f32.gmra.mrb[0].mxu0 %v4954
  %v5045 = vpop.f32.mrb[0].mxu0
  %v5046 = vadd.f32 %v4948, %v5045
  %v5047 = vpop.f32.mrb[0].mxu0
  %5048 = vmatprep.mubr.f32.mxu0 0.0
  %5049 = vmatmul.mubr.f32.gmra.mrb[0].mxu0 %v4957
  %v5050 = vpop.f32.mrb[0].mxu0
  %v5051 = vadd.f32 %v4948, %v5050
  %v5052 = vpop.f32.mrb[0].mxu0
  %5053 = vmatprep.mubr.f32.mxu0 0.0
  %5054 = vmatmul.mubr.f32.gmra.mrb[0].mxu0 %v4960
  %v5055 = vpop.f32.mrb[0].mxu0
  %v5056 = vadd.f32 %v4948, %v5055
  %v5057 = vpop.f32.mrb[0].mxu0
  %5058 = vmatprep.mubr.f32.mxu0 0.0
  %5059 = vmatmul.mubr.f32.gmra.mrb[0].mxu0 %v4963
  %v5060 = vpop.f32.mrb[0].mxu0
  %v5061 = vadd.f32 %v4948, %v5060
  %v5062 = vpop.f32.mrb[0].mxu0
  %5063 = vmatprep.mubr.f32.mxu0 0.0
  %5064 = vmatmul.mubr.f32.gmra.mrb[0].mxu0 %v4966
  %v5065 = vpop.f32.mrb[0].mxu0
  %v5066 = vadd.f32 %v4948, %v5065
  %v5067 = vpop.f32.mrb[0].mxu0
  %5068 = vmatprep.mubr.f32.mxu0 0.0
  %5069 = vmatmul.mubr.f32.gmra.mrb[0].mxu0 %v4969
  %v5070 = vpop.f32.mrb[0].mxu0
  %v5071 = vadd.f32 %v4948, %v5070
  %v5072 = vpop.f32.mrb[0].mxu0
  %5073 = vmatprep.mubr.f32.mxu0 0.0
  %5074 = vmatmul.mubr.f32.gmra.mrb[0].mxu0 %v4972
  %v5075 = vpop.f32.mrb[0].mxu0
  %v5076 = vadd.f32 %v4948, %v5075
  %v5077 = vpop.f32.mrb[0].mxu0
  %5078 = vdwg.mxu0
  %v5079 = vmax.f32 %v5041, 0.0
  %v5080 = vmax.f32 %v5046, 0.0
  %v5081 = vmax.f32 %v5051, 0.0
  %v5082 = vmax.f32 %v5056, 0.0
  %v5083 = vmax.f32 %v5061, 0.0
  %v5084 = vmax.f32 %v5066, 0.0
  %v5085 = vmax.f32 %v5071, 0.0
  %v5086 = vmax.f32 %v5076, 0.0
  %v5087 = vld [vmem:[%s12] sm:$0xff]
  %v5088 = vld [vmem:[%s12 + $0x8] sm:$0xff]
  %v5089 = vld [vmem:[%s12 + $0x10] sm:$0xff]
  %v5090 = vld [vmem:[%s12 + $0x18] sm:$0xff]
  %v5091 = vld [vmem:[%s12 + $0x20] sm:$0xff]
  %v5092 = vld [vmem:[%s12 + $0x28] sm:$0xff]
  %v5093 = vld [vmem:[%s12 + $0x30] sm:$0xff]
  %v5094 = vld [vmem:[%s12 + $0x38] sm:$0xff]
  %v5095 = vld [vmem:[%s13] sm:$0x1]
  %v5097 = vlaneseq
  %v5098 = vshrl.u32 %v5097, 7
  %v5099 = vsub.s32 0, %v5098
  %v5100 = vrot.slane %v5095, %v5099
  %v5103 = vsel %vm2879, %v5079, 0
  %v5106 = vsel %vm2879, %v5080, 0
  %v5109 = vsel %vm2879, %v5081, 0
  %v5112 = vsel %vm2879, %v5082, 0
  %v5115 = vsel %vm2879, %v5083, 0
  %v5118 = vsel %vm2879, %v5084, 0
  %v5121 = vsel %vm2879, %v5085, 0
  %v5124 = vsel %vm2879, %v5086, 0
  %5126 = vmatprep.subr.mxu0 0.0
  %5127 = vmatpush1.msra.mxu0 %v5087
  %5128 = vmatprep.subr.mxu0 0.0
  %5129 = vmatpush1.msra.mxu0 %v5088
  %5130 = vmatprep.subr.mxu0 0.0
  %5131 = vmatpush1.msra.mxu0 %v5089
  %5132 = vmatprep.subr.mxu0 0.0
  %5133 = vmatpush1.msra.mxu0 %v5090
  %5134 = vmatprep.subr.mxu0 0.0
  %5135 = vmatpush1.msra.mxu0 %v5091
  %5136 = vmatprep.subr.mxu0 0.0
  %5137 = vmatpush1.msra.mxu0 %v5092
  %5138 = vmatprep.subr.mxu0 0.0
  %5139 = vmatpush1.msra.mxu0 %v5093
  %5140 = vmatprep.subr.mxu0 0.0
  %5141 = vmatpush1.msra.mxu0 %v5094
  %5142 = vmatprep.subr.mxu0 0.0
  %5143 = vmatpush1.msra.mxu0 0.0
  %5144 = vmatprep.subr.mxu0 0.0
  %5145 = vmatpush1.msra.mxu0 0.0
  %5146 = vmatprep.subr.mxu0 0.0
  %5147 = vmatpush1.msra.mxu0 0.0
  %5148 = vmatprep.subr.mxu0 0.0
  %5149 = vmatpush1.msra.mxu0 0.0
  %5150 = vmatprep.subr.mxu0 0.0
  %5151 = vmatpush1.msra.mxu0 0.0
  %5152 = vmatprep.subr.mxu0 0.0
  %5153 = vmatpush1.msra.mxu0 0.0
  %5154 = vmatprep.subr.mxu0 0.0
  %5155 = vmatpush1.msra.mxu0 0.0
  %5156 = vmatprep.subr.mxu0 0.0
  %5157 = vmatpush1.msra.mxu0 0.0
  %5158 = vmatprep.subr.mxu0 0.0
  %5159 = vmatpush1.msra.mxu0 0.0
  %5160 = vmatprep.subr.mxu0 0.0
  %5161 = vmatpush1.msra.mxu0 0.0
  %5162 = vmatprep.subr.mxu0 0.0
  %5163 = vmatpush1.msra.mxu0 0.0
  %5164 = vmatprep.subr.mxu0 0.0
  %5165 = vmatpush1.msra.mxu0 0.0
  %5166 = vmatprep.subr.mxu0 0.0
  %5167 = vmatpush1.msra.mxu0 0.0
  %5168 = vmatprep.subr.mxu0 0.0
  %5169 = vmatpush1.msra.mxu0 0.0
  %5170 = vmatprep.subr.mxu0 0.0
  %5171 = vmatpush1.msra.mxu0 0.0
  %5172 = vmatprep.subr.mxu0 0.0
  %5173 = vmatpush1.msra.mxu0 0.0
  %5174 = vmatprep.subr.mxu0 0.0
  %5175 = vmatpush1.msra.mxu0 0.0
  %5176 = vmatprep.subr.mxu0 0.0
  %5177 = vmatpush1.msra.mxu0 0.0
  %5178 = vmatprep.subr.mxu0 0.0
  %5179 = vmatpush1.msra.mxu0 0.0
  %5180 = vmatprep.subr.mxu0 0.0
  %5181 = vmatpush1.msra.mxu0 0.0
  %5182 = vmatprep.subr.mxu0 0.0
  %5183 = vmatpush1.msra.mxu0 0.0
  %5184 = vmatprep.subr.mxu0 0.0
  %5185 = vmatpush1.msra.mxu0 0.0
  %5186 = vmatprep.subr.mxu0 0.0
  %5187 = vmatpush1.msra.mxu0 0.0
  %5188 = vmatprep.subr.mxu0 0.0
  %5189 = vmatpush1.msra.mxu0 0.0
  %5190 = vmatprep.mubr.f32.mxu0 0.0
  %5191 = vmatmul.mubr.f32.gmra.mrb[0].mxu0 %v5103
  %v5192 = vpop.f32.mrb[0].mxu0
  %v5193 = vadd.f32 %v5100, %v5192
  %v5194 = vpop.f32.mrb[0].mxu0
  %5195 = vmatprep.mubr.f32.mxu0 0.0
  %5196 = vmatmul.mubr.f32.gmra.mrb[0].mxu0 %v5106
  %v5197 = vpop.f32.mrb[0].mxu0
  %v5198 = vadd.f32 %v5100, %v5197
  %v5199 = vpop.f32.mrb[0].mxu0
  %5200 = vmatprep.mubr.f32.mxu0 0.0
  %5201 = vmatmul.mubr.f32.gmra.mrb[0].mxu0 %v5109
  %v5202 = vpop.f32.mrb[0].mxu0
  %v5203 = vadd.f32 %v5100, %v5202
  %v5204 = vpop.f32.mrb[0].mxu0
  %5205 = vmatprep.mubr.f32.mxu0 0.0
  %5206 = vmatmul.mubr.f32.gmra.mrb[0].mxu0 %v5112
  %v5207 = vpop.f32.mrb[0].mxu0
  %v5208 = vadd.f32 %v5100, %v5207
  %v5209 = vpop.f32.mrb[0].mxu0
  %5210 = vmatprep.mubr.f32.mxu0 0.0
  %5211 = vmatmul.mubr.f32.gmra.mrb[0].mxu0 %v5115
  %v5212 = vpop.f32.mrb[0].mxu0
  %v5213 = vadd.f32 %v5100, %v5212
  %v5214 = vpop.f32.mrb[0].mxu0
  %5215 = vmatprep.mubr.f32.mxu0 0.0
  %5216 = vmatmul.mubr.f32.gmra.mrb[0].mxu0 %v5118
  %v5217 = vpop.f32.mrb[0].mxu0
  %v5218 = vadd.f32 %v5100, %v5217
  %v5219 = vpop.f32.mrb[0].mxu0
  %5220 = vmatprep.mubr.f32.mxu0 0.0
  %5221 = vmatmul.mubr.f32.gmra.mrb[0].mxu0 %v5121
  %v5222 = vpop.f32.mrb[0].mxu0
  %v5223 = vadd.f32 %v5100, %v5222
  %v5224 = vpop.f32.mrb[0].mxu0
  %5225 = vmatprep.mubr.f32.mxu0 0.0
  %5226 = vmatmul.mubr.f32.gmra.mrb[0].mxu0 %v5124
  %v5227 = vpop.f32.mrb[0].mxu0
  %v5228 = vadd.f32 %v5100, %v5227
  %v5229 = vpop.f32.mrb[0].mxu0
  %5230 = vdwg.mxu0
  %v5231 = vadd.f32 %v4931, %v5193
  %v5232 = vadd.f32 %v4932, %v5198
  %v5233 = vadd.f32 %v4933, %v5203
  %v5234 = vadd.f32 %v4934, %v5208
  %v5235 = vadd.f32 %v4935, %v5213
  %v5236 = vadd.f32 %v4936, %v5218
  %v5237 = vadd.f32 %v4937, %v5223
  %v5238 = vadd.f32 %v4938, %v5228
  %v5239 = vld [vmem:[%s14] sm:$0x1]
  %v5240 = vld [vmem:[%s15] sm:$0x1]
  %v5241 = vsel %vm74, %v5231, 0.0
  %5242 = vadd.xlane.f32.xlu0 %v5241
  %v5243 = vpop.xlane.xlu0 %5242
  %v5244 = vsel %vm74, %v5232, 0.0
  %5245 = vadd.xlane.f32.xlu0 %v5244
  %v5246 = vpop.xlane.xlu0 %5245
  %v5247 = vsel %vm74, %v5233, 0.0
  %5248 = vadd.xlane.f32.xlu0 %v5247
  %v5249 = vpop.xlane.xlu0 %5248
  %v5250 = vsel %vm74, %v5234, 0.0
  %5251 = vadd.xlane.f32.xlu0 %v5250
  %v5252 = vpop.xlane.xlu0 %5251
  %v5253 = vsel %vm74, %v5235, 0.0
  %5254 = vadd.xlane.f32.xlu0 %v5253
  %v5255 = vpop.xlane.xlu0 %5254
  %v5256 = vsel %vm74, %v5236, 0.0
  %5257 = vadd.xlane.f32.xlu0 %v5256
  %v5258 = vpop.xlane.xlu0 %5257
  %v5259 = vsel %vm74, %v5237, 0.0
  %5260 = vadd.xlane.f32.xlu0 %v5259
  %v5261 = vpop.xlane.xlu0 %5260
  %v5262 = vsel %vm74, %v5238, 0.0
  %5263 = vadd.xlane.f32.xlu0 %v5262
  %v5264 = vpop.xlane.xlu0 %5263
  %v5265 = vmul.f32 %v5243, %v4830
  %v5266 = vmul.f32 %v5246, %v4830
  %v5267 = vmul.f32 %v5249, %v4830
  %v5268 = vmul.f32 %v5252, %v4830
  %v5269 = vmul.f32 %v5255, %v4830
  %v5270 = vmul.f32 %v5258, %v4830
  %v5271 = vmul.f32 %v5261, %v4830
  %v5272 = vmul.f32 %v5264, %v4830
  %v5273 = vsub.f32 %v5231, %v5265
  %v5274 = vsub.f32 %v5232, %v5266
  %v5275 = vsub.f32 %v5233, %v5267
  %v5276 = vsub.f32 %v5234, %v5268
  %v5277 = vsub.f32 %v5235, %v5269
  %v5278 = vsub.f32 %v5236, %v5270
  %v5279 = vsub.f32 %v5237, %v5271
  %v5280 = vsub.f32 %v5238, %v5272
  %v5281 = vmul.f32 %v5273, %v5273
  %v5282 = vmul.f32 %v5274, %v5274
  %v5283 = vmul.f32 %v5275, %v5275
  %v5284 = vmul.f32 %v5276, %v5276
  %v5285 = vmul.f32 %v5277, %v5277
  %v5286 = vmul.f32 %v5278, %v5278
  %v5287 = vmul.f32 %v5279, %v5279
  %v5288 = vmul.f32 %v5280, %v5280
  %v5289 = vsel %vm74, %v5281, 0.0
  %5290 = vadd.xlane.f32.xlu0 %v5289
  %v5291 = vpop.xlane.xlu0 %5290
  %v5292 = vsel %vm74, %v5282, 0.0
  %5293 = vadd.xlane.f32.xlu0 %v5292
  %v5294 = vpop.xlane.xlu0 %5293
  %v5295 = vsel %vm74, %v5283, 0.0
  %5296 = vadd.xlane.f32.xlu0 %v5295
  %v5297 = vpop.xlane.xlu0 %5296
  %v5298 = vsel %vm74, %v5284, 0.0
  %5299 = vadd.xlane.f32.xlu0 %v5298
  %v5300 = vpop.xlane.xlu0 %5299
  %v5301 = vsel %vm74, %v5285, 0.0
  %5302 = vadd.xlane.f32.xlu0 %v5301
  %v5303 = vpop.xlane.xlu0 %5302
  %v5304 = vsel %vm74, %v5286, 0.0
  %5305 = vadd.xlane.f32.xlu0 %v5304
  %v5306 = vpop.xlane.xlu0 %5305
  %v5307 = vsel %vm74, %v5287, 0.0
  %5308 = vadd.xlane.f32.xlu0 %v5307
  %v5309 = vpop.xlane.xlu0 %5308
  %v5310 = vsel %vm74, %v5288, 0.0
  %5311 = vadd.xlane.f32.xlu0 %v5310
  %v5312 = vpop.xlane.xlu0 %5311
  %v5313 = vmul.f32 %v5291, %v4830
  %v5314 = vmul.f32 %v5294, %v4830
  %v5315 = vmul.f32 %v5297, %v4830
  %v5316 = vmul.f32 %v5300, %v4830
  %v5317 = vmul.f32 %v5303, %v4830
  %v5318 = vmul.f32 %v5306, %v4830
  %v5319 = vmul.f32 %v5309, %v4830
  %v5320 = vmul.f32 %v5312, %v4830
  %v5321 = vadd.f32 %v5313, 1e-05
  %v5322 = vadd.f32 %v5314, 1e-05
  %v5323 = vadd.f32 %v5315, 1e-05
  %v5324 = vadd.f32 %v5316, 1e-05
  %v5325 = vadd.f32 %v5317, 1e-05
  %v5326 = vadd.f32 %v5318, 1e-05
  %v5327 = vadd.f32 %v5319, 1e-05
  %v5328 = vadd.f32 %v5320, 1e-05
  %v5329 = vrsqrt.pop %v5321
  %v5330 = vrsqrt.pop %v5322
  %v5331 = vrsqrt.pop %v5323
  %v5332 = vrsqrt.pop %v5324
  %v5333 = vrsqrt.pop %v5325
  %v5334 = vrsqrt.pop %v5326
  %v5335 = vrsqrt.pop %v5327
  %v5336 = vrsqrt.pop %v5328
  %v5337 = vmul.f32 %v5273, %v5329
  %v5338 = vmul.f32 %v5274, %v5330
  %v5339 = vmul.f32 %v5275, %v5331
  %v5340 = vmul.f32 %v5276, %v5332
  %v5341 = vmul.f32 %v5277, %v5333
  %v5342 = vmul.f32 %v5278, %v5334
  %v5343 = vmul.f32 %v5279, %v5335
  %v5344 = vmul.f32 %v5280, %v5336
  %v5346 = vlaneseq
  %v5347 = vshrl.u32 %v5346, 7
  %v5348 = vsub.s32 0, %v5347
  %v5349 = vrot.slane %v5239, %v5348
  %v5351 = vmul.f32 %v5337, %v5349
  %v5352 = vmul.f32 %v5338, %v5349
  %v5353 = vmul.f32 %v5339, %v5349
  %v5354 = vmul.f32 %v5340, %v5349
  %v5355 = vmul.f32 %v5341, %v5349
  %v5356 = vmul.f32 %v5342, %v5349
  %v5357 = vmul.f32 %v5343, %v5349
  %v5358 = vmul.f32 %v5344, %v5349
  %v5360 = vlaneseq
  %v5361 = vshrl.u32 %v5360, 7
  %v5362 = vsub.s32 0, %v5361
  %v5363 = vrot.slane %v5240, %v5362
  %v5365 = vadd.f32 %v5351, %v5363
  %v5366 = vadd.f32 %v5352, %v5363
  %v5367 = vadd.f32 %v5353, %v5363
  %v5368 = vadd.f32 %v5354, %v5363
  %v5369 = vadd.f32 %v5355, %v5363
  %v5370 = vadd.f32 %v5356, %v5363
  %v5371 = vadd.f32 %v5357, %v5363
  %v5372 = vadd.f32 %v5358, %v5363
  %5373 = vst.msk [vmem:[%s16] sm:$0xff] %vm74, %v5365
  %5374 = vst.msk [vmem:[%s16 + $0x8] sm:$0xff] %vm74, %v5366
  %5375 = vst.msk [vmem:[%s16 + $0x10] sm:$0xff] %vm74, %v5367
  %5376 = vst.msk [vmem:[%s16 + $0x18] sm:$0xff] %vm74, %v5368
  %5377 = vst.msk [vmem:[%s16 + $0x20] sm:$0xff] %vm74, %v5369
  %5378 = vst.msk [vmem:[%s16 + $0x28] sm:$0xff] %vm74, %v5370
  %5379 = vst.msk [vmem:[%s16 + $0x30] sm:$0xff] %vm74, %v5371
  %5380 = vst.msk [vmem:[%s16 + $0x38] sm:$0xff] %vm74, %v5372
  // Predicated region
  $region66: #{clgadn_forward.10} parent=0 // pred_check
    _
  $region67: #{clgadn_forward.10} parent=0 // pred_check_branch
    %5382 = sbr.rel (0) target = $region69
  $region68: #{clgadn_forward.10} parent=0 // pred_region
    _
  $region69: #{clgadn_forward.10} parent=0 // pred_fallthru
    _
  // Predicated region
  $region70: #{clgadn_forward.10} parent=0 // pred_check
    _
  $region71: #{clgadn_forward.10} parent=0 // pred_check_branch
    %5384 = sbr.rel (0) target = $region73
  $region72: #{clgadn_forward.10} parent=0 // pred_region
    _
  $region73: #{clgadn_forward.10} parent=0 // pred_fallthru
    _
  // Predicated region
  $region74: #{clgadn_forward.10} parent=0 // pred_check
    _
  $region75: #{clgadn_forward.10} parent=0 // pred_check_branch
    %5386 = sbr.rel (0) target = $region77
  $region76: #{clgadn_forward.10} parent=0 // pred_region
    _
  $region77: #{clgadn_forward.10} parent=0 // pred_fallthru
    _
  // Predicated region
  $region78: #{clgadn_forward.10} parent=0 // pred_check
    _
  $region79: #{clgadn_forward.10} parent=0 // pred_check_branch
    %5388 = sbr.rel (0) target = $region81
  $region80: #{clgadn_forward.10} parent=0 // pred_region
    _
  $region81: #{clgadn_forward.10} parent=0 // pred_fallthru
    _

// kernel: clgadn_forward.11
$region0: #{clgadn_forward.11}
  #allocation0 [shape = 'u32[]', space=smem, size = 0x4, offset = 0x4, fixed_abs, tag = 'smem constant byte address 0x4 - core index']
  #allocation1 [shape = 'u32[144,128]{1,0:T(1,128)}', space=vmem, size = 0x12000, scoped, tag = 'internal scratch']
  #allocation2 [shape = 'f32[1,1]{1,0:T(1,128)S(1)}', space=vmem, size = 0x200, scoped, tag = 'scoped memory for clgadn_forward.11']
  %s0 = inlined_call_operand.vmem [shape: f32[4,320], index: 0, kind: input, shape index: {}]
  %s1 = inlined_call_operand.vmem [shape: f32[320,1024], index: 1, kind: input, shape index: {}]
  %s2 = inlined_call_operand.vmem [shape: f32[1,1024], index: 2, kind: input, shape index: {}]
  %s3 = inlined_call_operand.vmem [shape: f32[1024,512], index: 3, kind: input, shape index: {}]
  %s4 = inlined_call_operand.vmem [shape: f32[1,512], index: 4, kind: input, shape index: {}]
  %s5 = inlined_call_operand.vmem [shape: f32[512,256], index: 5, kind: input, shape index: {}]
  %s6 = inlined_call_operand.vmem [shape: f32[1,256], index: 6, kind: input, shape index: {}]
  %s7 = inlined_call_operand.vmem [shape: f32[1,256], index: 7, kind: input, shape index: {}]
  %s8 = inlined_call_operand.<no memory space> [shape: f32[1,1], index: 8, kind: input, shape index: {}]
  %s9 = inlined_call_operand.hbm [shape: f32[1,4], index: 9, kind: output, shape index: {}]
  %s10 = sld [smem:[#allocation0]]
  $region46: #{clgadn_forward.11} parent=0
    _
  %s12 = ssub.s32 1, %s10
  %s13 = scalar_select 0, %s12, %s10
  %v14 = vstv %s8
  %15 = vst [vmem:[#allocation2] sm:$0x1] %v14
  $region1: #{clgadn_forward.11} parent=0
    #allocation3 [shape = 'u8[512]{0}', space=vmem, size = 0x400, scoped, tag = 'output window, operand 0, single buffered']
    #allocation4 [shape = 's32[1]{0}', space=sflag, size = 0x4, scoped, tag = 'scoped memory for clgadn_forward.11']
    %16 = vsyncpa [#allocation4], 0
    // Predicated region
    $region2: #{clgadn_forward.11} parent=1 // pred_check
      _
    $region3: #{clgadn_forward.11} parent=1 // pred_check_branch
      %18 = sbr.rel (0) target = $region5
    $region4: #{clgadn_forward.11} parent=1 // pred_region
      _
    $region5: #{clgadn_forward.11} parent=1 // pred_fallthru
      _
    // Predicated region
    $region6: #{clgadn_forward.11} parent=1 // pred_check
      _
    $region7: #{clgadn_forward.11} parent=1 // pred_check_branch
      %20 = sbr.rel (0) target = $region9
    $region8: #{clgadn_forward.11} parent=1 // pred_region
      _
    $region9: #{clgadn_forward.11} parent=1 // pred_fallthru
      _
    // Predicated region
    $region10: #{clgadn_forward.11} parent=1 // pred_check
      _
    $region11: #{clgadn_forward.11} parent=1 // pred_check_branch
      %22 = sbr.rel (0) target = $region13
    $region12: #{clgadn_forward.11} parent=1 // pred_region
      _
    $region13: #{clgadn_forward.11} parent=1 // pred_fallthru
      _
    // Predicated region
    $region14: #{clgadn_forward.11} parent=1 // pred_check
      _
    $region15: #{clgadn_forward.11} parent=1 // pred_check_branch
      %24 = sbr.rel (0) target = $region17
    $region16: #{clgadn_forward.11} parent=1 // pred_region
      _
    $region17: #{clgadn_forward.11} parent=1 // pred_fallthru
      _
    // Predicated region
    $region18: #{clgadn_forward.11} parent=1 // pred_check
      _
    $region19: #{clgadn_forward.11} parent=1 // pred_check_branch
      %26 = sbr.rel (0) target = $region21
    $region20: #{clgadn_forward.11} parent=1 // pred_region
      _
    $region21: #{clgadn_forward.11} parent=1 // pred_fallthru
      _
    // Predicated region
    $region22: #{clgadn_forward.11} parent=1 // pred_check
      _
    $region23: #{clgadn_forward.11} parent=1 // pred_check_branch
      %28 = sbr.rel (0) target = $region25
    $region24: #{clgadn_forward.11} parent=1 // pred_region
      _
    $region25: #{clgadn_forward.11} parent=1 // pred_fallthru
      _
    // Predicated region
    $region26: #{clgadn_forward.11} parent=1 // pred_check
      _
    $region27: #{clgadn_forward.11} parent=1 // pred_check_branch
      %30 = sbr.rel (0) target = $region29
    $region28: #{clgadn_forward.11} parent=1 // pred_region
      _
    $region29: #{clgadn_forward.11} parent=1 // pred_fallthru
      _
    // Predicated region
    $region30: #{clgadn_forward.11} parent=1 // pred_check
      _
    $region31: #{clgadn_forward.11} parent=1 // pred_check_branch
      %32 = sbr.rel (0) target = $region33
    $region32: #{clgadn_forward.11} parent=1 // pred_region
      _
    $region33: #{clgadn_forward.11} parent=1 // pred_fallthru
      _
    // Predicated region
    $region34: #{clgadn_forward.11} parent=1 // pred_check
      _
    $region35: #{clgadn_forward.11} parent=1 // pred_check_branch
      %34 = sbr.rel (0) target = $region37
    $region36: #{clgadn_forward.11} parent=1 // pred_region
      _
    $region37: #{clgadn_forward.11} parent=1 // pred_fallthru
      _
    %v35 = vld [vmem:[%s0] sm:$0xff]
    %v36 = vld [vmem:[%s0 + $0x8] sm:$0xf]
    %v37 = vld [vmem:[%s1] sm:$0xff]
    %v38 = vld [vmem:[%s1 + $0x8] sm:$0xff]
    %v39 = vld [vmem:[%s1 + $0x10] sm:$0xff]
    %v40 = vld [vmem:[%s1 + $0x18] sm:$0xff]
    %v41 = vld [vmem:[%s1 + $0x20] sm:$0xff]
    %v42 = vld [vmem:[%s1 + $0x28] sm:$0xff]
    %v43 = vld [vmem:[%s1 + $0x30] sm:$0xff]
    %v44 = vld [vmem:[%s1 + $0x38] sm:$0xff]
    %v45 = vld [vmem:[%s1 + $0x40] sm:$0xff]
    %v46 = vld [vmem:[%s1 + $0x48] sm:$0xff]
    %v47 = vld [vmem:[%s1 + $0x50] sm:$0xff]
    %v48 = vld [vmem:[%s1 + $0x58] sm:$0xff]
    %v49 = vld [vmem:[%s1 + $0x60] sm:$0xff]
    %v50 = vld [vmem:[%s1 + $0x68] sm:$0xff]
    %v51 = vld [vmem:[%s1 + $0x70] sm:$0xff]
    %v52 = vld [vmem:[%s1 + $0x78] sm:$0xff]
    %v53 = vld [vmem:[%s1 + $0x80] sm:$0xff]
    %v54 = vld [vmem:[%s1 + $0x88] sm:$0xff]
    %v55 = vld [vmem:[%s1 + $0x90] sm:$0xff]
    %v56 = vld [vmem:[%s1 + $0x98] sm:$0xff]
    %v57 = vld [vmem:[%s1 + $0xa0] sm:$0xff]
    %v58 = vld [vmem:[%s1 + $0xa8] sm:$0xff]
    %v59 = vld [vmem:[%s1 + $0xb0] sm:$0xff]
    %v60 = vld [vmem:[%s1 + $0xb8] sm:$0xff]
    %v61 = vld [vmem:[%s1 + $0xc0] sm:$0xff]
    %v62 = vld [vmem:[%s1 + $0xc8] sm:$0xff]
    %v63 = vld [vmem:[%s1 + $0xd0] sm:$0xff]
    %v64 = vld [vmem:[%s1 + $0xd8] sm:$0xff]
    %v65 = vld [vmem:[%s1 + $0xe0] sm:$0xff]
    %v66 = vld [vmem:[%s1 + $0xe8] sm:$0xff]
    %v67 = vld [vmem:[%s1 + $0xf0] sm:$0xff]
    %v68 = vld [vmem:[%s1 + $0xf8] sm:$0xff]
    %v69 = vld [vmem:[%s1 + $0x100] sm:$0xff]
    %v70 = vld [vmem:[%s1 + $0x108] sm:$0xff]
    %v71 = vld [vmem:[%s1 + $0x110] sm:$0xff]
    %v72 = vld [vmem:[%s1 + $0x118] sm:$0xff]
    %v73 = vld [vmem:[%s1 + $0x120] sm:$0xff]
    %v74 = vld [vmem:[%s1 + $0x128] sm:$0xff]
    %v75 = vld [vmem:[%s1 + $0x130] sm:$0xff]
    %v76 = vld [vmem:[%s1 + $0x138] sm:$0xff]
    %v77 = vld [vmem:[%s1 + $0x140] sm:$0xff]
    %v78 = vld [vmem:[%s1 + $0x148] sm:$0xff]
    %v79 = vld [vmem:[%s1 + $0x150] sm:$0xff]
    %v80 = vld [vmem:[%s1 + $0x158] sm:$0xff]
    %v81 = vld [vmem:[%s1 + $0x160] sm:$0xff]
    %v82 = vld [vmem:[%s1 + $0x168] sm:$0xff]
    %v83 = vld [vmem:[%s1 + $0x170] sm:$0xff]
    %v84 = vld [vmem:[%s1 + $0x178] sm:$0xff]
    %v85 = vld [vmem:[%s1 + $0x180] sm:$0xff]
    %v86 = vld [vmem:[%s1 + $0x188] sm:$0xff]
    %v87 = vld [vmem:[%s1 + $0x190] sm:$0xff]
    %v88 = vld [vmem:[%s1 + $0x198] sm:$0xff]
    %v89 = vld [vmem:[%s1 + $0x1a0] sm:$0xff]
    %v90 = vld [vmem:[%s1 + $0x1a8] sm:$0xff]
    %v91 = vld [vmem:[%s1 + $0x1b0] sm:$0xff]
    %v92 = vld [vmem:[%s1 + $0x1b8] sm:$0xff]
    %v93 = vld [vmem:[%s1 + $0x1c0] sm:$0xff]
    %v94 = vld [vmem:[%s1 + $0x1c8] sm:$0xff]
    %v95 = vld [vmem:[%s1 + $0x1d0] sm:$0xff]
    %v96 = vld [vmem:[%s1 + $0x1d8] sm:$0xff]
    %v97 = vld [vmem:[%s1 + $0x1e0] sm:$0xff]
    %v98 = vld [vmem:[%s1 + $0x1e8] sm:$0xff]
    %v99 = vld [vmem:[%s1 + $0x1f0] sm:$0xff]
    %v100 = vld [vmem:[%s1 + $0x1f8] sm:$0xff]
    %v101 = vld [vmem:[%s1 + $0x200] sm:$0xff]
    %v102 = vld [vmem:[%s1 + $0x208] sm:$0xff]
    %v103 = vld [vmem:[%s1 + $0x210] sm:$0xff]
    %v104 = vld [vmem:[%s1 + $0x218] sm:$0xff]
    %v105 = vld [vmem:[%s1 + $0x220] sm:$0xff]
    %v106 = vld [vmem:[%s1 + $0x228] sm:$0xff]
    %v107 = vld [vmem:[%s1 + $0x230] sm:$0xff]
    %v108 = vld [vmem:[%s1 + $0x238] sm:$0xff]
    %v109 = vld [vmem:[%s1 + $0x240] sm:$0xff]
    %v110 = vld [vmem:[%s1 + $0x248] sm:$0xff]
    %v111 = vld [vmem:[%s1 + $0x250] sm:$0xff]
    %v112 = vld [vmem:[%s1 + $0x258] sm:$0xff]
    %v113 = vld [vmem:[%s1 + $0x260] sm:$0xff]
    %v114 = vld [vmem:[%s1 + $0x268] sm:$0xff]
    %v115 = vld [vmem:[%s1 + $0x270] sm:$0xff]
    %v116 = vld [vmem:[%s1 + $0x278] sm:$0xff]
    %v117 = vld [vmem:[%s1 + $0x280] sm:$0xff]
    %v118 = vld [vmem:[%s1 + $0x288] sm:$0xff]
    %v119 = vld [vmem:[%s1 + $0x290] sm:$0xff]
    %v120 = vld [vmem:[%s1 + $0x298] sm:$0xff]
    %v121 = vld [vmem:[%s1 + $0x2a0] sm:$0xff]
    %v122 = vld [vmem:[%s1 + $0x2a8] sm:$0xff]
    %v123 = vld [vmem:[%s1 + $0x2b0] sm:$0xff]
    %v124 = vld [vmem:[%s1 + $0x2b8] sm:$0xff]
    %v125 = vld [vmem:[%s1 + $0x2c0] sm:$0xff]
    %v126 = vld [vmem:[%s1 + $0x2c8] sm:$0xff]
    %v127 = vld [vmem:[%s1 + $0x2d0] sm:$0xff]
    %v128 = vld [vmem:[%s1 + $0x2d8] sm:$0xff]
    %v129 = vld [vmem:[%s1 + $0x2e0] sm:$0xff]
    %v130 = vld [vmem:[%s1 + $0x2e8] sm:$0xff]
    %v131 = vld [vmem:[%s1 + $0x2f0] sm:$0xff]
    %v132 = vld [vmem:[%s1 + $0x2f8] sm:$0xff]
    %v133 = vld [vmem:[%s1 + $0x300] sm:$0xff]
    %v134 = vld [vmem:[%s1 + $0x308] sm:$0xff]
    %v135 = vld [vmem:[%s1 + $0x310] sm:$0xff]
    %v136 = vld [vmem:[%s1 + $0x318] sm:$0xff]
    %v137 = vld [vmem:[%s1 + $0x320] sm:$0xff]
    %v138 = vld [vmem:[%s1 + $0x328] sm:$0xff]
    %v139 = vld [vmem:[%s1 + $0x330] sm:$0xff]
    %v140 = vld [vmem:[%s1 + $0x338] sm:$0xff]
    %v141 = vld [vmem:[%s1 + $0x340] sm:$0xff]
    %v142 = vld [vmem:[%s1 + $0x348] sm:$0xff]
    %v143 = vld [vmem:[%s1 + $0x350] sm:$0xff]
    %v144 = vld [vmem:[%s1 + $0x358] sm:$0xff]
    %v145 = vld [vmem:[%s1 + $0x360] sm:$0xff]
    %v146 = vld [vmem:[%s1 + $0x368] sm:$0xff]
    %v147 = vld [vmem:[%s1 + $0x370] sm:$0xff]
    %v148 = vld [vmem:[%s1 + $0x378] sm:$0xff]
    %v149 = vld [vmem:[%s1 + $0x380] sm:$0xff]
    %v150 = vld [vmem:[%s1 + $0x388] sm:$0xff]
    %v151 = vld [vmem:[%s1 + $0x390] sm:$0xff]
    %v152 = vld [vmem:[%s1 + $0x398] sm:$0xff]
    %v153 = vld [vmem:[%s1 + $0x3a0] sm:$0xff]
    %v154 = vld [vmem:[%s1 + $0x3a8] sm:$0xff]
    %v155 = vld [vmem:[%s1 + $0x3b0] sm:$0xff]
    %v156 = vld [vmem:[%s1 + $0x3b8] sm:$0xff]
    %v157 = vld [vmem:[%s1 + $0x3c0] sm:$0xff]
    %v158 = vld [vmem:[%s1 + $0x3c8] sm:$0xff]
    %v159 = vld [vmem:[%s1 + $0x3d0] sm:$0xff]
    %v160 = vld [vmem:[%s1 + $0x3d8] sm:$0xff]
    %v161 = vld [vmem:[%s1 + $0x3e0] sm:$0xff]
    %v162 = vld [vmem:[%s1 + $0x3e8] sm:$0xff]
    %v163 = vld [vmem:[%s1 + $0x3f0] sm:$0xff]
    %v164 = vld [vmem:[%s1 + $0x3f8] sm:$0xff]
    %v165 = vld [vmem:[%s1 + $0x400] sm:$0xff]
    %v166 = vld [vmem:[%s1 + $0x408] sm:$0xff]
    %v167 = vld [vmem:[%s1 + $0x410] sm:$0xff]
    %v168 = vld [vmem:[%s1 + $0x418] sm:$0xff]
    %v169 = vld [vmem:[%s1 + $0x420] sm:$0xff]
    %v170 = vld [vmem:[%s1 + $0x428] sm:$0xff]
    %v171 = vld [vmem:[%s1 + $0x430] sm:$0xff]
    %v172 = vld [vmem:[%s1 + $0x438] sm:$0xff]
    %v173 = vld [vmem:[%s1 + $0x440] sm:$0xff]
    %v174 = vld [vmem:[%s1 + $0x448] sm:$0xff]
    %v175 = vld [vmem:[%s1 + $0x450] sm:$0xff]
    %v176 = vld [vmem:[%s1 + $0x458] sm:$0xff]
    %v177 = vld [vmem:[%s1 + $0x460] sm:$0xff]
    %v178 = vld [vmem:[%s1 + $0x468] sm:$0xff]
    %v179 = vld [vmem:[%s1 + $0x470] sm:$0xff]
    %v180 = vld [vmem:[%s1 + $0x478] sm:$0xff]
    %v181 = vld [vmem:[%s1 + $0x480] sm:$0xff]
    %v182 = vld [vmem:[%s1 + $0x488] sm:$0xff]
    %v183 = vld [vmem:[%s1 + $0x490] sm:$0xff]
    %v184 = vld [vmem:[%s1 + $0x498] sm:$0xff]
    %v185 = vld [vmem:[%s1 + $0x4a0] sm:$0xff]
    %v186 = vld [vmem:[%s1 + $0x4a8] sm:$0xff]
    %v187 = vld [vmem:[%s1 + $0x4b0] sm:$0xff]
    %v188 = vld [vmem:[%s1 + $0x4b8] sm:$0xff]
    %v189 = vld [vmem:[%s1 + $0x4c0] sm:$0xff]
    %v190 = vld [vmem:[%s1 + $0x4c8] sm:$0xff]
    %v191 = vld [vmem:[%s1 + $0x4d0] sm:$0xff]
    %v192 = vld [vmem:[%s1 + $0x4d8] sm:$0xff]
    %v193 = vld [vmem:[%s1 + $0x4e0] sm:$0xff]
    %v194 = vld [vmem:[%s1 + $0x4e8] sm:$0xff]
    %v195 = vld [vmem:[%s1 + $0x4f0] sm:$0xff]
    %v196 = vld [vmem:[%s1 + $0x4f8] sm:$0xff]
    %v197 = vld [vmem:[%s1 + $0x500] sm:$0xff]
    %v198 = vld [vmem:[%s1 + $0x508] sm:$0xff]
    %v199 = vld [vmem:[%s1 + $0x510] sm:$0xff]
    %v200 = vld [vmem:[%s1 + $0x518] sm:$0xff]
    %v201 = vld [vmem:[%s1 + $0x520] sm:$0xff]
    %v202 = vld [vmem:[%s1 + $0x528] sm:$0xff]
    %v203 = vld [vmem:[%s1 + $0x530] sm:$0xff]
    %v204 = vld [vmem:[%s1 + $0x538] sm:$0xff]
    %v205 = vld [vmem:[%s1 + $0x540] sm:$0xff]
    %v206 = vld [vmem:[%s1 + $0x548] sm:$0xff]
    %v207 = vld [vmem:[%s1 + $0x550] sm:$0xff]
    %v208 = vld [vmem:[%s1 + $0x558] sm:$0xff]
    %v209 = vld [vmem:[%s1 + $0x560] sm:$0xff]
    %v210 = vld [vmem:[%s1 + $0x568] sm:$0xff]
    %v211 = vld [vmem:[%s1 + $0x570] sm:$0xff]
    %v212 = vld [vmem:[%s1 + $0x578] sm:$0xff]
    %v213 = vld [vmem:[%s1 + $0x580] sm:$0xff]
    %v214 = vld [vmem:[%s1 + $0x588] sm:$0xff]
    %v215 = vld [vmem:[%s1 + $0x590] sm:$0xff]
    %v216 = vld [vmem:[%s1 + $0x598] sm:$0xff]
    %v217 = vld [vmem:[%s1 + $0x5a0] sm:$0xff]
    %v218 = vld [vmem:[%s1 + $0x5a8] sm:$0xff]
    %v219 = vld [vmem:[%s1 + $0x5b0] sm:$0xff]
    %v220 = vld [vmem:[%s1 + $0x5b8] sm:$0xff]
    %v221 = vld [vmem:[%s1 + $0x5c0] sm:$0xff]
    %v222 = vld [vmem:[%s1 + $0x5c8] sm:$0xff]
    %v223 = vld [vmem:[%s1 + $0x5d0] sm:$0xff]
    %v224 = vld [vmem:[%s1 + $0x5d8] sm:$0xff]
    %v225 = vld [vmem:[%s1 + $0x5e0] sm:$0xff]
    %v226 = vld [vmem:[%s1 + $0x5e8] sm:$0xff]
    %v227 = vld [vmem:[%s1 + $0x5f0] sm:$0xff]
    %v228 = vld [vmem:[%s1 + $0x5f8] sm:$0xff]
    %v229 = vld [vmem:[%s1 + $0x600] sm:$0xff]
    %v230 = vld [vmem:[%s1 + $0x608] sm:$0xff]
    %v231 = vld [vmem:[%s1 + $0x610] sm:$0xff]
    %v232 = vld [vmem:[%s1 + $0x618] sm:$0xff]
    %v233 = vld [vmem:[%s1 + $0x620] sm:$0xff]
    %v234 = vld [vmem:[%s1 + $0x628] sm:$0xff]
    %v235 = vld [vmem:[%s1 + $0x630] sm:$0xff]
    %v236 = vld [vmem:[%s1 + $0x638] sm:$0xff]
    %v237 = vld [vmem:[%s1 + $0x640] sm:$0xff]
    %v238 = vld [vmem:[%s1 + $0x648] sm:$0xff]
    %v239 = vld [vmem:[%s1 + $0x650] sm:$0xff]
    %v240 = vld [vmem:[%s1 + $0x658] sm:$0xff]
    %v241 = vld [vmem:[%s1 + $0x660] sm:$0xff]
    %v242 = vld [vmem:[%s1 + $0x668] sm:$0xff]
    %v243 = vld [vmem:[%s1 + $0x670] sm:$0xff]
    %v244 = vld [vmem:[%s1 + $0x678] sm:$0xff]
    %v245 = vld [vmem:[%s1 + $0x680] sm:$0xff]
    %v246 = vld [vmem:[%s1 + $0x688] sm:$0xff]
    %v247 = vld [vmem:[%s1 + $0x690] sm:$0xff]
    %v248 = vld [vmem:[%s1 + $0x698] sm:$0xff]
    %v249 = vld [vmem:[%s1 + $0x6a0] sm:$0xff]
    %v250 = vld [vmem:[%s1 + $0x6a8] sm:$0xff]
    %v251 = vld [vmem:[%s1 + $0x6b0] sm:$0xff]
    %v252 = vld [vmem:[%s1 + $0x6b8] sm:$0xff]
    %v253 = vld [vmem:[%s1 + $0x6c0] sm:$0xff]
    %v254 = vld [vmem:[%s1 + $0x6c8] sm:$0xff]
    %v255 = vld [vmem:[%s1 + $0x6d0] sm:$0xff]
    %v256 = vld [vmem:[%s1 + $0x6d8] sm:$0xff]
    %v257 = vld [vmem:[%s1 + $0x6e0] sm:$0xff]
    %v258 = vld [vmem:[%s1 + $0x6e8] sm:$0xff]
    %v259 = vld [vmem:[%s1 + $0x6f0] sm:$0xff]
    %v260 = vld [vmem:[%s1 + $0x6f8] sm:$0xff]
    %v261 = vld [vmem:[%s1 + $0x700] sm:$0xff]
    %v262 = vld [vmem:[%s1 + $0x708] sm:$0xff]
    %v263 = vld [vmem:[%s1 + $0x710] sm:$0xff]
    %v264 = vld [vmem:[%s1 + $0x718] sm:$0xff]
    %v265 = vld [vmem:[%s1 + $0x720] sm:$0xff]
    %v266 = vld [vmem:[%s1 + $0x728] sm:$0xff]
    %v267 = vld [vmem:[%s1 + $0x730] sm:$0xff]
    %v268 = vld [vmem:[%s1 + $0x738] sm:$0xff]
    %v269 = vld [vmem:[%s1 + $0x740] sm:$0xff]
    %v270 = vld [vmem:[%s1 + $0x748] sm:$0xff]
    %v271 = vld [vmem:[%s1 + $0x750] sm:$0xff]
    %v272 = vld [vmem:[%s1 + $0x758] sm:$0xff]
    %v273 = vld [vmem:[%s1 + $0x760] sm:$0xff]
    %v274 = vld [vmem:[%s1 + $0x768] sm:$0xff]
    %v275 = vld [vmem:[%s1 + $0x770] sm:$0xff]
    %v276 = vld [vmem:[%s1 + $0x778] sm:$0xff]
    %v277 = vld [vmem:[%s1 + $0x780] sm:$0xff]
    %v278 = vld [vmem:[%s1 + $0x788] sm:$0xff]
    %v279 = vld [vmem:[%s1 + $0x790] sm:$0xff]
    %v280 = vld [vmem:[%s1 + $0x798] sm:$0xff]
    %v281 = vld [vmem:[%s1 + $0x7a0] sm:$0xff]
    %v282 = vld [vmem:[%s1 + $0x7a8] sm:$0xff]
    %v283 = vld [vmem:[%s1 + $0x7b0] sm:$0xff]
    %v284 = vld [vmem:[%s1 + $0x7b8] sm:$0xff]
    %v285 = vld [vmem:[%s1 + $0x7c0] sm:$0xff]
    %v286 = vld [vmem:[%s1 + $0x7c8] sm:$0xff]
    %v287 = vld [vmem:[%s1 + $0x7d0] sm:$0xff]
    %v288 = vld [vmem:[%s1 + $0x7d8] sm:$0xff]
    %v289 = vld [vmem:[%s1 + $0x7e0] sm:$0xff]
    %v290 = vld [vmem:[%s1 + $0x7e8] sm:$0xff]
    %v291 = vld [vmem:[%s1 + $0x7f0] sm:$0xff]
    %v292 = vld [vmem:[%s1 + $0x7f8] sm:$0xff]
    %v293 = vld [vmem:[%s1 + $0x800] sm:$0xff]
    %v294 = vld [vmem:[%s1 + $0x808] sm:$0xff]
    %v295 = vld [vmem:[%s1 + $0x810] sm:$0xff]
    %v296 = vld [vmem:[%s1 + $0x818] sm:$0xff]
    %v297 = vld [vmem:[%s1 + $0x820] sm:$0xff]
    %v298 = vld [vmem:[%s1 + $0x828] sm:$0xff]
    %v299 = vld [vmem:[%s1 + $0x830] sm:$0xff]
    %v300 = vld [vmem:[%s1 + $0x838] sm:$0xff]
    %v301 = vld [vmem:[%s1 + $0x840] sm:$0xff]
    %v302 = vld [vmem:[%s1 + $0x848] sm:$0xff]
    %v303 = vld [vmem:[%s1 + $0x850] sm:$0xff]
    %v304 = vld [vmem:[%s1 + $0x858] sm:$0xff]
    %v305 = vld [vmem:[%s1 + $0x860] sm:$0xff]
    %v306 = vld [vmem:[%s1 + $0x868] sm:$0xff]
    %v307 = vld [vmem:[%s1 + $0x870] sm:$0xff]
    %v308 = vld [vmem:[%s1 + $0x878] sm:$0xff]
    %v309 = vld [vmem:[%s1 + $0x880] sm:$0xff]
    %v310 = vld [vmem:[%s1 + $0x888] sm:$0xff]
    %v311 = vld [vmem:[%s1 + $0x890] sm:$0xff]
    %v312 = vld [vmem:[%s1 + $0x898] sm:$0xff]
    %v313 = vld [vmem:[%s1 + $0x8a0] sm:$0xff]
    %v314 = vld [vmem:[%s1 + $0x8a8] sm:$0xff]
    %v315 = vld [vmem:[%s1 + $0x8b0] sm:$0xff]
    %v316 = vld [vmem:[%s1 + $0x8b8] sm:$0xff]
    %v317 = vld [vmem:[%s1 + $0x8c0] sm:$0xff]
    %v318 = vld [vmem:[%s1 + $0x8c8] sm:$0xff]
    %v319 = vld [vmem:[%s1 + $0x8d0] sm:$0xff]
    %v320 = vld [vmem:[%s1 + $0x8d8] sm:$0xff]
    %v321 = vld [vmem:[%s1 + $0x8e0] sm:$0xff]
    %v322 = vld [vmem:[%s1 + $0x8e8] sm:$0xff]
    %v323 = vld [vmem:[%s1 + $0x8f0] sm:$0xff]
    %v324 = vld [vmem:[%s1 + $0x8f8] sm:$0xff]
    %v325 = vld [vmem:[%s1 + $0x900] sm:$0xff]
    %v326 = vld [vmem:[%s1 + $0x908] sm:$0xff]
    %v327 = vld [vmem:[%s1 + $0x910] sm:$0xff]
    %v328 = vld [vmem:[%s1 + $0x918] sm:$0xff]
    %v329 = vld [vmem:[%s1 + $0x920] sm:$0xff]
    %v330 = vld [vmem:[%s1 + $0x928] sm:$0xff]
    %v331 = vld [vmem:[%s1 + $0x930] sm:$0xff]
    %v332 = vld [vmem:[%s1 + $0x938] sm:$0xff]
    %v333 = vld [vmem:[%s1 + $0x940] sm:$0xff]
    %v334 = vld [vmem:[%s1 + $0x948] sm:$0xff]
    %v335 = vld [vmem:[%s1 + $0x950] sm:$0xff]
    %v336 = vld [vmem:[%s1 + $0x958] sm:$0xff]
    %v337 = vld [vmem:[%s1 + $0x960] sm:$0xff]
    %v338 = vld [vmem:[%s1 + $0x968] sm:$0xff]
    %v339 = vld [vmem:[%s1 + $0x970] sm:$0xff]
    %v340 = vld [vmem:[%s1 + $0x978] sm:$0xff]
    %v341 = vld [vmem:[%s1 + $0x980] sm:$0xff]
    %v342 = vld [vmem:[%s1 + $0x988] sm:$0xff]
    %v343 = vld [vmem:[%s1 + $0x990] sm:$0xff]
    %v344 = vld [vmem:[%s1 + $0x998] sm:$0xff]
    %v345 = vld [vmem:[%s1 + $0x9a0] sm:$0xff]
    %v346 = vld [vmem:[%s1 + $0x9a8] sm:$0xff]
    %v347 = vld [vmem:[%s1 + $0x9b0] sm:$0xff]
    %v348 = vld [vmem:[%s1 + $0x9b8] sm:$0xff]
    %v349 = vld [vmem:[%s1 + $0x9c0] sm:$0xff]
    %v350 = vld [vmem:[%s1 + $0x9c8] sm:$0xff]
    %v351 = vld [vmem:[%s1 + $0x9d0] sm:$0xff]
    %v352 = vld [vmem:[%s1 + $0x9d8] sm:$0xff]
    %v353 = vld [vmem:[%s1 + $0x9e0] sm:$0xff]
    %v354 = vld [vmem:[%s1 + $0x9e8] sm:$0xff]
    %v355 = vld [vmem:[%s1 + $0x9f0] sm:$0xff]
    %v356 = vld [vmem:[%s1 + $0x9f8] sm:$0xff]
    %v357 = vld [vmem:[%s2] sm:$0xff]
    %v359 = vlaneseq
    %v360 = vshrl.u32 %v359, 7
    %v361 = vsub.s32 0, %v360
    %v362 = vrot.slane %v357, %v361
    %v363 = vlaneseq
    %v364 = vshrl.u32 %v363, 7
    %v365 = vsub.s32 1, %v364
    %v366 = vrot.slane %v357, %v365
    %v367 = vlaneseq
    %v368 = vshrl.u32 %v367, 7
    %v369 = vsub.s32 2, %v368
    %v370 = vrot.slane %v357, %v369
    %v371 = vlaneseq
    %v372 = vshrl.u32 %v371, 7
    %v373 = vsub.s32 3, %v372
    %v374 = vrot.slane %v357, %v373
    %v375 = vlaneseq
    %v376 = vshrl.u32 %v375, 7
    %v377 = vsub.s32 4, %v376
    %v378 = vrot.slane %v357, %v377
    %v379 = vlaneseq
    %v380 = vshrl.u32 %v379, 7
    %v381 = vsub.s32 5, %v380
    %v382 = vrot.slane %v357, %v381
    %v383 = vlaneseq
    %v384 = vshrl.u32 %v383, 7
    %v385 = vsub.s32 6, %v384
    %v386 = vrot.slane %v357, %v385
    %v387 = vlaneseq
    %v388 = vshrl.u32 %v387, 7
    %v389 = vsub.s32 7, %v388
    %v390 = vrot.slane %v357, %v389
    %v401 = vcombine.high %v35, %v35
    %vm403 = vcmask 523264
    %v404 = vsel %vm403, %v36, 0
    %406 = vmatprep.subr.mxu0 %v38
    %407 = vmatpush1.msra.mxu0 %v37
    %408 = vmatprep.subr.mxu0 %v46
    %409 = vmatpush1.msra.mxu0 %v45
    %410 = vmatprep.subr.mxu0 %v54
    %411 = vmatpush1.msra.mxu0 %v53
    %412 = vmatprep.subr.mxu0 %v62
    %413 = vmatpush1.msra.mxu0 %v61
    %414 = vmatprep.subr.mxu0 %v70
    %415 = vmatpush1.msra.mxu0 %v69
    %416 = vmatprep.subr.mxu0 %v78
    %417 = vmatpush1.msra.mxu0 %v77
    %418 = vmatprep.subr.mxu0 %v86
    %419 = vmatpush1.msra.mxu0 %v85
    %420 = vmatprep.subr.mxu0 %v94
    %421 = vmatpush1.msra.mxu0 %v93
    %422 = vmatprep.subr.mxu0 %v102
    %423 = vmatpush1.msra.mxu0 %v101
    %424 = vmatprep.subr.mxu0 %v110
    %425 = vmatpush1.msra.mxu0 %v109
    %426 = vmatprep.subr.mxu0 %v118
    %427 = vmatpush1.msra.mxu0 %v117
    %428 = vmatprep.subr.mxu0 %v126
    %429 = vmatpush1.msra.mxu0 %v125
    %430 = vmatprep.subr.mxu0 %v134
    %431 = vmatpush1.msra.mxu0 %v133
    %432 = vmatprep.subr.mxu0 %v142
    %433 = vmatpush1.msra.mxu0 %v141
    %434 = vmatprep.subr.mxu0 %v150
    %435 = vmatpush1.msra.mxu0 %v149
    %436 = vmatprep.subr.mxu0 %v158
    %437 = vmatpush1.msra.mxu0 %v157
    %438 = vmatprep.subr.mxu0 %v166
    %439 = vmatpush1.msra.mxu0 %v165
    %440 = vmatprep.subr.mxu0 %v174
    %441 = vmatpush1.msra.mxu0 %v173
    %442 = vmatprep.subr.mxu0 %v182
    %443 = vmatpush1.msra.mxu0 %v181
    %444 = vmatprep.subr.mxu0 %v190
    %445 = vmatpush1.msra.mxu0 %v189
    %446 = vmatprep.subr.mxu0 %v198
    %447 = vmatpush1.msra.mxu0 %v197
    %448 = vmatprep.subr.mxu0 %v206
    %449 = vmatpush1.msra.mxu0 %v205
    %450 = vmatprep.subr.mxu0 %v214
    %451 = vmatpush1.msra.mxu0 %v213
    %452 = vmatprep.subr.mxu0 %v222
    %453 = vmatpush1.msra.mxu0 %v221
    %454 = vmatprep.subr.mxu0 %v230
    %455 = vmatpush1.msra.mxu0 %v229
    %456 = vmatprep.subr.mxu0 %v238
    %457 = vmatpush1.msra.mxu0 %v237
    %458 = vmatprep.subr.mxu0 %v246
    %459 = vmatpush1.msra.mxu0 %v245
    %460 = vmatprep.subr.mxu0 %v254
    %461 = vmatpush1.msra.mxu0 %v253
    %462 = vmatprep.subr.mxu0 %v262
    %463 = vmatpush1.msra.mxu0 %v261
    %464 = vmatprep.subr.mxu0 %v270
    %465 = vmatpush1.msra.mxu0 %v269
    %466 = vmatprep.subr.mxu0 %v278
    %467 = vmatpush1.msra.mxu0 %v277
    %468 = vmatprep.subr.mxu0 %v286
    %469 = vmatpush1.msra.mxu0 %v285
    %470 = vmatprep.mubr.f32.mxu0 %v401
    %471 = vmatmul.mubr.f32.gmra.mrb[0].mxu0 %v35
    %v472 = vpop.f32.mrb[0].mxu0
    %v473 = vadd.f32 %v362, %v472
    %v474 = vpop.f32.mrb[0].mxu0
    %v475 = vadd.f32 %v366, %v474
    %476 = vdwg.mxu0
    %477 = vmatprep.subr.mxu0 %v294
    %478 = vmatpush1.msra.mxu0 %v293
    %479 = vmatprep.subr.mxu0 %v302
    %480 = vmatpush1.msra.mxu0 %v301
    %481 = vmatprep.subr.mxu0 %v310
    %482 = vmatpush1.msra.mxu0 %v309
    %483 = vmatprep.subr.mxu0 %v318
    %484 = vmatpush1.msra.mxu0 %v317
    %485 = vmatprep.subr.mxu0 %v326
    %486 = vmatpush1.msra.mxu0 %v325
    %487 = vmatprep.subr.mxu0 %v334
    %488 = vmatpush1.msra.mxu0 %v333
    %489 = vmatprep.subr.mxu0 %v342
    %490 = vmatpush1.msra.mxu0 %v341
    %491 = vmatprep.subr.mxu0 %v350
    %492 = vmatpush1.msra.mxu0 %v349
    %493 = vmatprep.subr.mxu0 0.0
    %494 = vmatpush1.msra.mxu0 0.0
    %495 = vmatprep.subr.mxu0 0.0
    %496 = vmatpush1.msra.mxu0 0.0
    %497 = vmatprep.subr.mxu0 0.0
    %498 = vmatpush1.msra.mxu0 0.0
    %499 = vmatprep.subr.mxu0 0.0
    %500 = vmatpush1.msra.mxu0 0.0
    %501 = vmatprep.subr.mxu0 0.0
    %502 = vmatpush1.msra.mxu0 0.0
    %503 = vmatprep.subr.mxu0 0.0
    %504 = vmatpush1.msra.mxu0 0.0
    %505 = vmatprep.subr.mxu0 0.0
    %506 = vmatpush1.msra.mxu0 0.0
    %507 = vmatprep.subr.mxu0 0.0
    %508 = vmatpush1.msra.mxu0 0.0
    %509 = vmatprep.subr.mxu0 0.0
    %510 = vmatpush1.msra.mxu0 0.0
    %511 = vmatprep.subr.mxu0 0.0
    %512 = vmatpush1.msra.mxu0 0.0
    %513 = vmatprep.subr.mxu0 0.0
    %514 = vmatpush1.msra.mxu0 0.0
    %515 = vmatprep.subr.mxu0 0.0
    %516 = vmatpush1.msra.mxu0 0.0
    %517 = vmatprep.subr.mxu0 0.0
    %518 = vmatpush1.msra.mxu0 0.0
    %519 = vmatprep.subr.mxu0 0.0
    %520 = vmatpush1.msra.mxu0 0.0
    %521 = vmatprep.subr.mxu0 0.0
    %522 = vmatpush1.msra.mxu0 0.0
    %523 = vmatprep.subr.mxu0 0.0
    %524 = vmatpush1.msra.mxu0 0.0
    %525 = vmatprep.subr.mxu0 0.0
    %526 = vmatpush1.msra.mxu0 0.0
    %527 = vmatprep.subr.mxu0 0.0
    %528 = vmatpush1.msra.mxu0 0.0
    %529 = vmatprep.subr.mxu0 0.0
    %530 = vmatpush1.msra.mxu0 0.0
    %531 = vmatprep.subr.mxu0 0.0
    %532 = vmatpush1.msra.mxu0 0.0
    %533 = vmatprep.subr.mxu0 0.0
    %534 = vmatpush1.msra.mxu0 0.0
    %535 = vmatprep.subr.mxu0 0.0
    %536 = vmatpush1.msra.mxu0 0.0
    %537 = vmatprep.subr.mxu0 0.0
    %538 = vmatpush1.msra.mxu0 0.0
    %539 = vmatprep.subr.mxu0 0.0
    %540 = vmatpush1.msra.mxu0 0.0
    %541 = vmatprep.mubr.f32.mxu0 0.0
    %542 = vmatmul.mubr.f32.gmra.mrb[0].mxu0 %v404
    %v543 = vpop.f32.mrb[0].mxu0
    %v544 = vadd.f32 %v473, %v543
    %v545 = vpop.f32.mrb[0].mxu0
    %v546 = vadd.f32 %v475, %v545
    %547 = vdwg.mxu0
    %548 = vmatprep.subr.mxu0 %v40
    %549 = vmatpush1.msra.mxu0 %v39
    %550 = vmatprep.subr.mxu0 %v48
    %551 = vmatpush1.msra.mxu0 %v47
    %552 = vmatprep.subr.mxu0 %v56
    %553 = vmatpush1.msra.mxu0 %v55
    %554 = vmatprep.subr.mxu0 %v64
    %555 = vmatpush1.msra.mxu0 %v63
    %556 = vmatprep.subr.mxu0 %v72
    %557 = vmatpush1.msra.mxu0 %v71
    %558 = vmatprep.subr.mxu0 %v80
    %559 = vmatpush1.msra.mxu0 %v79
    %560 = vmatprep.subr.mxu0 %v88
    %561 = vmatpush1.msra.mxu0 %v87
    %562 = vmatprep.subr.mxu0 %v96
    %563 = vmatpush1.msra.mxu0 %v95
    %564 = vmatprep.subr.mxu0 %v104
    %565 = vmatpush1.msra.mxu0 %v103
    %566 = vmatprep.subr.mxu0 %v112
    %567 = vmatpush1.msra.mxu0 %v111
    %568 = vmatprep.subr.mxu0 %v120
    %569 = vmatpush1.msra.mxu0 %v119
    %570 = vmatprep.subr.mxu0 %v128
    %571 = vmatpush1.msra.mxu0 %v127
    %572 = vmatprep.subr.mxu0 %v136
    %573 = vmatpush1.msra.mxu0 %v135
    %574 = vmatprep.subr.mxu0 %v144
    %575 = vmatpush1.msra.mxu0 %v143
    %576 = vmatprep.subr.mxu0 %v152
    %577 = vmatpush1.msra.mxu0 %v151
    %578 = vmatprep.subr.mxu0 %v160
    %579 = vmatpush1.msra.mxu0 %v159
    %580 = vmatprep.subr.mxu0 %v168
    %581 = vmatpush1.msra.mxu0 %v167
    %582 = vmatprep.subr.mxu0 %v176
    %583 = vmatpush1.msra.mxu0 %v175
    %584 = vmatprep.subr.mxu0 %v184
    %585 = vmatpush1.msra.mxu0 %v183
    %586 = vmatprep.subr.mxu0 %v192
    %587 = vmatpush1.msra.mxu0 %v191
    %588 = vmatprep.subr.mxu0 %v200
    %589 = vmatpush1.msra.mxu0 %v199
    %590 = vmatprep.subr.mxu0 %v208
    %591 = vmatpush1.msra.mxu0 %v207
    %592 = vmatprep.subr.mxu0 %v216
    %593 = vmatpush1.msra.mxu0 %v215
    %594 = vmatprep.subr.mxu0 %v224
    %595 = vmatpush1.msra.mxu0 %v223
    %596 = vmatprep.subr.mxu0 %v232
    %597 = vmatpush1.msra.mxu0 %v231
    %598 = vmatprep.subr.mxu0 %v240
    %599 = vmatpush1.msra.mxu0 %v239
    %600 = vmatprep.subr.mxu0 %v248
    %601 = vmatpush1.msra.mxu0 %v247
    %602 = vmatprep.subr.mxu0 %v256
    %603 = vmatpush1.msra.mxu0 %v255
    %604 = vmatprep.subr.mxu0 %v264
    %605 = vmatpush1.msra.mxu0 %v263
    %606 = vmatprep.subr.mxu0 %v272
    %607 = vmatpush1.msra.mxu0 %v271
    %608 = vmatprep.subr.mxu0 %v280
    %609 = vmatpush1.msra.mxu0 %v279
    %610 = vmatprep.subr.mxu0 %v288
    %611 = vmatpush1.msra.mxu0 %v287
    %612 = vmatprep.mubr.f32.mxu0 %v401
    %613 = vmatmul.mubr.f32.gmra.mrb[0].mxu0 %v35
    %v614 = vpop.f32.mrb[0].mxu0
    %v615 = vadd.f32 %v370, %v614
    %v616 = vpop.f32.mrb[0].mxu0
    %v617 = vadd.f32 %v374, %v616
    %618 = vdwg.mxu0
    %619 = vmatprep.subr.mxu0 %v296
    %620 = vmatpush1.msra.mxu0 %v295
    %621 = vmatprep.subr.mxu0 %v304
    %622 = vmatpush1.msra.mxu0 %v303
    %623 = vmatprep.subr.mxu0 %v312
    %624 = vmatpush1.msra.mxu0 %v311
    %625 = vmatprep.subr.mxu0 %v320
    %626 = vmatpush1.msra.mxu0 %v319
    %627 = vmatprep.subr.mxu0 %v328
    %628 = vmatpush1.msra.mxu0 %v327
    %629 = vmatprep.subr.mxu0 %v336
    %630 = vmatpush1.msra.mxu0 %v335
    %631 = vmatprep.subr.mxu0 %v344
    %632 = vmatpush1.msra.mxu0 %v343
    %633 = vmatprep.subr.mxu0 %v352
    %634 = vmatpush1.msra.mxu0 %v351
    %635 = vmatprep.subr.mxu0 0.0
    %636 = vmatpush1.msra.mxu0 0.0
    %637 = vmatprep.subr.mxu0 0.0
    %638 = vmatpush1.msra.mxu0 0.0
    %639 = vmatprep.subr.mxu0 0.0
    %640 = vmatpush1.msra.mxu0 0.0
    %641 = vmatprep.subr.mxu0 0.0
    %642 = vmatpush1.msra.mxu0 0.0
    %643 = vmatprep.subr.mxu0 0.0
    %644 = vmatpush1.msra.mxu0 0.0
    %645 = vmatprep.subr.mxu0 0.0
    %646 = vmatpush1.msra.mxu0 0.0
    %647 = vmatprep.subr.mxu0 0.0
    %648 = vmatpush1.msra.mxu0 0.0
    %649 = vmatprep.subr.mxu0 0.0
    %650 = vmatpush1.msra.mxu0 0.0
    %651 = vmatprep.subr.mxu0 0.0
    %652 = vmatpush1.msra.mxu0 0.0
    %653 = vmatprep.subr.mxu0 0.0
    %654 = vmatpush1.msra.mxu0 0.0
    %655 = vmatprep.subr.mxu0 0.0
    %656 = vmatpush1.msra.mxu0 0.0
    %657 = vmatprep.subr.mxu0 0.0
    %658 = vmatpush1.msra.mxu0 0.0
    %659 = vmatprep.subr.mxu0 0.0
    %660 = vmatpush1.msra.mxu0 0.0
    %661 = vmatprep.subr.mxu0 0.0
    %662 = vmatpush1.msra.mxu0 0.0
    %663 = vmatprep.subr.mxu0 0.0
    %664 = vmatpush1.msra.mxu0 0.0
    %665 = vmatprep.subr.mxu0 0.0
    %666 = vmatpush1.msra.mxu0 0.0
    %667 = vmatprep.subr.mxu0 0.0
    %668 = vmatpush1.msra.mxu0 0.0
    %669 = vmatprep.subr.mxu0 0.0
    %670 = vmatpush1.msra.mxu0 0.0
    %671 = vmatprep.subr.mxu0 0.0
    %672 = vmatpush1.msra.mxu0 0.0
    %673 = vmatprep.subr.mxu0 0.0
    %674 = vmatpush1.msra.mxu0 0.0
    %675 = vmatprep.subr.mxu0 0.0
    %676 = vmatpush1.msra.mxu0 0.0
    %677 = vmatprep.subr.mxu0 0.0
    %678 = vmatpush1.msra.mxu0 0.0
    %679 = vmatprep.subr.mxu0 0.0
    %680 = vmatpush1.msra.mxu0 0.0
    %681 = vmatprep.subr.mxu0 0.0
    %682 = vmatpush1.msra.mxu0 0.0
    %683 = vmatprep.mubr.f32.mxu0 0.0
    %684 = vmatmul.mubr.f32.gmra.mrb[0].mxu0 %v404
    %v685 = vpop.f32.mrb[0].mxu0
    %v686 = vadd.f32 %v615, %v685
    %v687 = vpop.f32.mrb[0].mxu0
    %v688 = vadd.f32 %v617, %v687
    %689 = vdwg.mxu0
    %690 = vmatprep.subr.mxu0 %v42
    %691 = vmatpush1.msra.mxu0 %v41
    %692 = vmatprep.subr.mxu0 %v50
    %693 = vmatpush1.msra.mxu0 %v49
    %694 = vmatprep.subr.mxu0 %v58
    %695 = vmatpush1.msra.mxu0 %v57
    %696 = vmatprep.subr.mxu0 %v66
    %697 = vmatpush1.msra.mxu0 %v65
    %698 = vmatprep.subr.mxu0 %v74
    %699 = vmatpush1.msra.mxu0 %v73
    %700 = vmatprep.subr.mxu0 %v82
    %701 = vmatpush1.msra.mxu0 %v81
    %702 = vmatprep.subr.mxu0 %v90
    %703 = vmatpush1.msra.mxu0 %v89
    %704 = vmatprep.subr.mxu0 %v98
    %705 = vmatpush1.msra.mxu0 %v97
    %706 = vmatprep.subr.mxu0 %v106
    %707 = vmatpush1.msra.mxu0 %v105
    %708 = vmatprep.subr.mxu0 %v114
    %709 = vmatpush1.msra.mxu0 %v113
    %710 = vmatprep.subr.mxu0 %v122
    %711 = vmatpush1.msra.mxu0 %v121
    %712 = vmatprep.subr.mxu0 %v130
    %713 = vmatpush1.msra.mxu0 %v129
    %714 = vmatprep.subr.mxu0 %v138
    %715 = vmatpush1.msra.mxu0 %v137
    %716 = vmatprep.subr.mxu0 %v146
    %717 = vmatpush1.msra.mxu0 %v145
    %718 = vmatprep.subr.mxu0 %v154
    %719 = vmatpush1.msra.mxu0 %v153
    %720 = vmatprep.subr.mxu0 %v162
    %721 = vmatpush1.msra.mxu0 %v161
    %722 = vmatprep.subr.mxu0 %v170
    %723 = vmatpush1.msra.mxu0 %v169
    %724 = vmatprep.subr.mxu0 %v178
    %725 = vmatpush1.msra.mxu0 %v177
    %726 = vmatprep.subr.mxu0 %v186
    %727 = vmatpush1.msra.mxu0 %v185
    %728 = vmatprep.subr.mxu0 %v194
    %729 = vmatpush1.msra.mxu0 %v193
    %730 = vmatprep.subr.mxu0 %v202
    %731 = vmatpush1.msra.mxu0 %v201
    %732 = vmatprep.subr.mxu0 %v210
    %733 = vmatpush1.msra.mxu0 %v209
    %734 = vmatprep.subr.mxu0 %v218
    %735 = vmatpush1.msra.mxu0 %v217
    %736 = vmatprep.subr.mxu0 %v226
    %737 = vmatpush1.msra.mxu0 %v225
    %738 = vmatprep.subr.mxu0 %v234
    %739 = vmatpush1.msra.mxu0 %v233
    %740 = vmatprep.subr.mxu0 %v242
    %741 = vmatpush1.msra.mxu0 %v241
    %742 = vmatprep.subr.mxu0 %v250
    %743 = vmatpush1.msra.mxu0 %v249
    %744 = vmatprep.subr.mxu0 %v258
    %745 = vmatpush1.msra.mxu0 %v257
    %746 = vmatprep.subr.mxu0 %v266
    %747 = vmatpush1.msra.mxu0 %v265
    %748 = vmatprep.subr.mxu0 %v274
    %749 = vmatpush1.msra.mxu0 %v273
    %750 = vmatprep.subr.mxu0 %v282
    %751 = vmatpush1.msra.mxu0 %v281
    %752 = vmatprep.subr.mxu0 %v290
    %753 = vmatpush1.msra.mxu0 %v289
    %754 = vmatprep.mubr.f32.mxu0 %v401
    %755 = vmatmul.mubr.f32.gmra.mrb[0].mxu0 %v35
    %v756 = vpop.f32.mrb[0].mxu0
    %v757 = vadd.f32 %v378, %v756
    %v758 = vpop.f32.mrb[0].mxu0
    %v759 = vadd.f32 %v382, %v758
    %760 = vdwg.mxu0
    %761 = vmatprep.subr.mxu0 %v298
    %762 = vmatpush1.msra.mxu0 %v297
    %763 = vmatprep.subr.mxu0 %v306
    %764 = vmatpush1.msra.mxu0 %v305
    %765 = vmatprep.subr.mxu0 %v314
    %766 = vmatpush1.msra.mxu0 %v313
    %767 = vmatprep.subr.mxu0 %v322
    %768 = vmatpush1.msra.mxu0 %v321
    %769 = vmatprep.subr.mxu0 %v330
    %770 = vmatpush1.msra.mxu0 %v329
    %771 = vmatprep.subr.mxu0 %v338
    %772 = vmatpush1.msra.mxu0 %v337
    %773 = vmatprep.subr.mxu0 %v346
    %774 = vmatpush1.msra.mxu0 %v345
    %775 = vmatprep.subr.mxu0 %v354
    %776 = vmatpush1.msra.mxu0 %v353
    %777 = vmatprep.subr.mxu0 0.0
    %778 = vmatpush1.msra.mxu0 0.0
    %779 = vmatprep.subr.mxu0 0.0
    %780 = vmatpush1.msra.mxu0 0.0
    %781 = vmatprep.subr.mxu0 0.0
    %782 = vmatpush1.msra.mxu0 0.0
    %783 = vmatprep.subr.mxu0 0.0
    %784 = vmatpush1.msra.mxu0 0.0
    %785 = vmatprep.subr.mxu0 0.0
    %786 = vmatpush1.msra.mxu0 0.0
    %787 = vmatprep.subr.mxu0 0.0
    %788 = vmatpush1.msra.mxu0 0.0
    %789 = vmatprep.subr.mxu0 0.0
    %790 = vmatpush1.msra.mxu0 0.0
    %791 = vmatprep.subr.mxu0 0.0
    %792 = vmatpush1.msra.mxu0 0.0
    %793 = vmatprep.subr.mxu0 0.0
    %794 = vmatpush1.msra.mxu0 0.0
    %795 = vmatprep.subr.mxu0 0.0
    %796 = vmatpush1.msra.mxu0 0.0
    %797 = vmatprep.subr.mxu0 0.0
    %798 = vmatpush1.msra.mxu0 0.0
    %799 = vmatprep.subr.mxu0 0.0
    %800 = vmatpush1.msra.mxu0 0.0
    %801 = vmatprep.subr.mxu0 0.0
    %802 = vmatpush1.msra.mxu0 0.0
    %803 = vmatprep.subr.mxu0 0.0
    %804 = vmatpush1.msra.mxu0 0.0
    %805 = vmatprep.subr.mxu0 0.0
    %806 = vmatpush1.msra.mxu0 0.0
    %807 = vmatprep.subr.mxu0 0.0
    %808 = vmatpush1.msra.mxu0 0.0
    %809 = vmatprep.subr.mxu0 0.0
    %810 = vmatpush1.msra.mxu0 0.0
    %811 = vmatprep.subr.mxu0 0.0
    %812 = vmatpush1.msra.mxu0 0.0
    %813 = vmatprep.subr.mxu0 0.0
    %814 = vmatpush1.msra.mxu0 0.0
    %815 = vmatprep.subr.mxu0 0.0
    %816 = vmatpush1.msra.mxu0 0.0
    %817 = vmatprep.subr.mxu0 0.0
    %818 = vmatpush1.msra.mxu0 0.0
    %819 = vmatprep.subr.mxu0 0.0
    %820 = vmatpush1.msra.mxu0 0.0
    %821 = vmatprep.subr.mxu0 0.0
    %822 = vmatpush1.msra.mxu0 0.0
    %823 = vmatprep.subr.mxu0 0.0
    %824 = vmatpush1.msra.mxu0 0.0
    %825 = vmatprep.mubr.f32.mxu0 0.0
    %826 = vmatmul.mubr.f32.gmra.mrb[0].mxu0 %v404
    %v827 = vpop.f32.mrb[0].mxu0
    %v828 = vadd.f32 %v757, %v827
    %v829 = vpop.f32.mrb[0].mxu0
    %v830 = vadd.f32 %v759, %v829
    %831 = vdwg.mxu0
    %832 = vmatprep.subr.mxu0 %v44
    %833 = vmatpush1.msra.mxu0 %v43
    %834 = vmatprep.subr.mxu0 %v52
    %835 = vmatpush1.msra.mxu0 %v51
    %836 = vmatprep.subr.mxu0 %v60
    %837 = vmatpush1.msra.mxu0 %v59
    %838 = vmatprep.subr.mxu0 %v68
    %839 = vmatpush1.msra.mxu0 %v67
    %840 = vmatprep.subr.mxu0 %v76
    %841 = vmatpush1.msra.mxu0 %v75
    %842 = vmatprep.subr.mxu0 %v84
    %843 = vmatpush1.msra.mxu0 %v83
    %844 = vmatprep.subr.mxu0 %v92
    %845 = vmatpush1.msra.mxu0 %v91
    %846 = vmatprep.subr.mxu0 %v100
    %847 = vmatpush1.msra.mxu0 %v99
    %848 = vmatprep.subr.mxu0 %v108
    %849 = vmatpush1.msra.mxu0 %v107
    %850 = vmatprep.subr.mxu0 %v116
    %851 = vmatpush1.msra.mxu0 %v115
    %852 = vmatprep.subr.mxu0 %v124
    %853 = vmatpush1.msra.mxu0 %v123
    %854 = vmatprep.subr.mxu0 %v132
    %855 = vmatpush1.msra.mxu0 %v131
    %856 = vmatprep.subr.mxu0 %v140
    %857 = vmatpush1.msra.mxu0 %v139
    %858 = vmatprep.subr.mxu0 %v148
    %859 = vmatpush1.msra.mxu0 %v147
    %860 = vmatprep.subr.mxu0 %v156
    %861 = vmatpush1.msra.mxu0 %v155
    %862 = vmatprep.subr.mxu0 %v164
    %863 = vmatpush1.msra.mxu0 %v163
    %864 = vmatprep.subr.mxu0 %v172
    %865 = vmatpush1.msra.mxu0 %v171
    %866 = vmatprep.subr.mxu0 %v180
    %867 = vmatpush1.msra.mxu0 %v179
    %868 = vmatprep.subr.mxu0 %v188
    %869 = vmatpush1.msra.mxu0 %v187
    %870 = vmatprep.subr.mxu0 %v196
    %871 = vmatpush1.msra.mxu0 %v195
    %872 = vmatprep.subr.mxu0 %v204
    %873 = vmatpush1.msra.mxu0 %v203
    %874 = vmatprep.subr.mxu0 %v212
    %875 = vmatpush1.msra.mxu0 %v211
    %876 = vmatprep.subr.mxu0 %v220
    %877 = vmatpush1.msra.mxu0 %v219
    %878 = vmatprep.subr.mxu0 %v228
    %879 = vmatpush1.msra.mxu0 %v227
    %880 = vmatprep.subr.mxu0 %v236
    %881 = vmatpush1.msra.mxu0 %v235
    %882 = vmatprep.subr.mxu0 %v244
    %883 = vmatpush1.msra.mxu0 %v243
    %884 = vmatprep.subr.mxu0 %v252
    %885 = vmatpush1.msra.mxu0 %v251
    %886 = vmatprep.subr.mxu0 %v260
    %887 = vmatpush1.msra.mxu0 %v259
    %888 = vmatprep.subr.mxu0 %v268
    %889 = vmatpush1.msra.mxu0 %v267
    %890 = vmatprep.subr.mxu0 %v276
    %891 = vmatpush1.msra.mxu0 %v275
    %892 = vmatprep.subr.mxu0 %v284
    %893 = vmatpush1.msra.mxu0 %v283
    %894 = vmatprep.subr.mxu0 %v292
    %895 = vmatpush1.msra.mxu0 %v291
    %896 = vmatprep.mubr.f32.mxu0 %v401
    %897 = vmatmul.mubr.f32.gmra.mrb[0].mxu0 %v35
    %v898 = vpop.f32.mrb[0].mxu0
    %v899 = vadd.f32 %v386, %v898
    %v900 = vpop.f32.mrb[0].mxu0
    %v901 = vadd.f32 %v390, %v900
    %902 = vdwg.mxu0
    %903 = vmatprep.subr.mxu0 %v300
    %904 = vmatpush1.msra.mxu0 %v299
    %905 = vmatprep.subr.mxu0 %v308
    %906 = vmatpush1.msra.mxu0 %v307
    %907 = vmatprep.subr.mxu0 %v316
    %908 = vmatpush1.msra.mxu0 %v315
    %909 = vmatprep.subr.mxu0 %v324
    %910 = vmatpush1.msra.mxu0 %v323
    %911 = vmatprep.subr.mxu0 %v332
    %912 = vmatpush1.msra.mxu0 %v331
    %913 = vmatprep.subr.mxu0 %v340
    %914 = vmatpush1.msra.mxu0 %v339
    %915 = vmatprep.subr.mxu0 %v348
    %916 = vmatpush1.msra.mxu0 %v347
    %917 = vmatprep.subr.mxu0 %v356
    %918 = vmatpush1.msra.mxu0 %v355
    %919 = vmatprep.subr.mxu0 0.0
    %920 = vmatpush1.msra.mxu0 0.0
    %921 = vmatprep.subr.mxu0 0.0
    %922 = vmatpush1.msra.mxu0 0.0
    %923 = vmatprep.subr.mxu0 0.0
    %924 = vmatpush1.msra.mxu0 0.0
    %925 = vmatprep.subr.mxu0 0.0
    %926 = vmatpush1.msra.mxu0 0.0
    %927 = vmatprep.subr.mxu0 0.0
    %928 = vmatpush1.msra.mxu0 0.0
    %929 = vmatprep.subr.mxu0 0.0
    %930 = vmatpush1.msra.mxu0 0.0
    %931 = vmatprep.subr.mxu0 0.0
    %932 = vmatpush1.msra.mxu0 0.0
    %933 = vmatprep.subr.mxu0 0.0
    %934 = vmatpush1.msra.mxu0 0.0
    %935 = vmatprep.subr.mxu0 0.0
    %936 = vmatpush1.msra.mxu0 0.0
    %937 = vmatprep.subr.mxu0 0.0
    %938 = vmatpush1.msra.mxu0 0.0
    %939 = vmatprep.subr.mxu0 0.0
    %940 = vmatpush1.msra.mxu0 0.0
    %941 = vmatprep.subr.mxu0 0.0
    %942 = vmatpush1.msra.mxu0 0.0
    %943 = vmatprep.subr.mxu0 0.0
    %944 = vmatpush1.msra.mxu0 0.0
    %945 = vmatprep.subr.mxu0 0.0
    %946 = vmatpush1.msra.mxu0 0.0
    %947 = vmatprep.subr.mxu0 0.0
    %948 = vmatpush1.msra.mxu0 0.0
    %949 = vmatprep.subr.mxu0 0.0
    %950 = vmatpush1.msra.mxu0 0.0
    %951 = vmatprep.subr.mxu0 0.0
    %952 = vmatpush1.msra.mxu0 0.0
    %953 = vmatprep.subr.mxu0 0.0
    %954 = vmatpush1.msra.mxu0 0.0
    %955 = vmatprep.subr.mxu0 0.0
    %956 = vmatpush1.msra.mxu0 0.0
    %957 = vmatprep.subr.mxu0 0.0
    %958 = vmatpush1.msra.mxu0 0.0
    %959 = vmatprep.subr.mxu0 0.0
    %960 = vmatpush1.msra.mxu0 0.0
    %961 = vmatprep.subr.mxu0 0.0
    %962 = vmatpush1.msra.mxu0 0.0
    %963 = vmatprep.subr.mxu0 0.0
    %964 = vmatpush1.msra.mxu0 0.0
    %965 = vmatprep.subr.mxu0 0.0
    %966 = vmatpush1.msra.mxu0 0.0
    %967 = vmatprep.mubr.f32.mxu0 0.0
    %968 = vmatmul.mubr.f32.gmra.mrb[0].mxu0 %v404
    %v969 = vpop.f32.mrb[0].mxu0
    %v970 = vadd.f32 %v899, %v969
    %v971 = vpop.f32.mrb[0].mxu0
    %v972 = vadd.f32 %v901, %v971
    %973 = vdwg.mxu0
    %vm974 = vcmp.ge.f32.partialorder %v544, 0.0
    %vm975 = vcmp.ge.f32.partialorder %v546, 0.0
    %vm976 = vcmp.ge.f32.partialorder %v686, 0.0
    %vm977 = vcmp.ge.f32.partialorder %v688, 0.0
    %vm978 = vcmp.ge.f32.partialorder %v828, 0.0
    %vm979 = vcmp.ge.f32.partialorder %v830, 0.0
    %vm980 = vcmp.ge.f32.partialorder %v970, 0.0
    %vm981 = vcmp.ge.f32.partialorder %v972, 0.0
    %v982 = vmul.f32 %v544, 0.01
    %v983 = vmul.f32 %v546, 0.01
    %v984 = vmul.f32 %v686, 0.01
    %v985 = vmul.f32 %v688, 0.01
    %v986 = vmul.f32 %v828, 0.01
    %v987 = vmul.f32 %v830, 0.01
    %v988 = vmul.f32 %v970, 0.01
    %v989 = vmul.f32 %v972, 0.01
    %v990 = vsel %vm974, %v544, %v982
    %v991 = vsel %vm975, %v546, %v983
    %v992 = vsel %vm976, %v686, %v984
    %v993 = vsel %vm977, %v688, %v985
    %v994 = vsel %vm978, %v828, %v986
    %v995 = vsel %vm979, %v830, %v987
    %v996 = vsel %vm980, %v970, %v988
    %v997 = vsel %vm981, %v972, %v989
    %v998 = vld [vmem:[%s3] sm:$0xff]
    %v999 = vld [vmem:[%s3 + $0x8] sm:$0xff]
    %v1000 = vld [vmem:[%s3 + $0x10] sm:$0xff]
    %v1001 = vld [vmem:[%s3 + $0x18] sm:$0xff]
    %v1002 = vld [vmem:[%s3 + $0x20] sm:$0xff]
    %v1003 = vld [vmem:[%s3 + $0x28] sm:$0xff]
    %v1004 = vld [vmem:[%s3 + $0x30] sm:$0xff]
    %v1005 = vld [vmem:[%s3 + $0x38] sm:$0xff]
    %v1006 = vld [vmem:[%s3 + $0x40] sm:$0xff]
    %v1007 = vld [vmem:[%s3 + $0x48] sm:$0xff]
    %v1008 = vld [vmem:[%s3 + $0x50] sm:$0xff]
    %v1009 = vld [vmem:[%s3 + $0x58] sm:$0xff]
    %v1010 = vld [vmem:[%s3 + $0x60] sm:$0xff]
    %v1011 = vld [vmem:[%s3 + $0x68] sm:$0xff]
    %v1012 = vld [vmem:[%s3 + $0x70] sm:$0xff]
    %v1013 = vld [vmem:[%s3 + $0x78] sm:$0xff]
    %v1014 = vld [vmem:[%s3 + $0x80] sm:$0xff]
    %v1015 = vld [vmem:[%s3 + $0x88] sm:$0xff]
    %v1016 = vld [vmem:[%s3 + $0x90] sm:$0xff]
    %v1017 = vld [vmem:[%s3 + $0x98] sm:$0xff]
    %v1018 = vld [vmem:[%s3 + $0xa0] sm:$0xff]
    %v1019 = vld [vmem:[%s3 + $0xa8] sm:$0xff]
    %v1020 = vld [vmem:[%s3 + $0xb0] sm:$0xff]
    %v1021 = vld [vmem:[%s3 + $0xb8] sm:$0xff]
    %v1022 = vld [vmem:[%s3 + $0xc0] sm:$0xff]
    %v1023 = vld [vmem:[%s3 + $0xc8] sm:$0xff]
    %v1024 = vld [vmem:[%s3 + $0xd0] sm:$0xff]
    %v1025 = vld [vmem:[%s3 + $0xd8] sm:$0xff]
    %v1026 = vld [vmem:[%s3 + $0xe0] sm:$0xff]
    %v1027 = vld [vmem:[%s3 + $0xe8] sm:$0xff]
    %v1028 = vld [vmem:[%s3 + $0xf0] sm:$0xff]
    %v1029 = vld [vmem:[%s3 + $0xf8] sm:$0xff]
    %v1030 = vld [vmem:[%s3 + $0x100] sm:$0xff]
    %v1031 = vld [vmem:[%s3 + $0x108] sm:$0xff]
    %v1032 = vld [vmem:[%s3 + $0x110] sm:$0xff]
    %v1033 = vld [vmem:[%s3 + $0x118] sm:$0xff]
    %v1034 = vld [vmem:[%s3 + $0x120] sm:$0xff]
    %v1035 = vld [vmem:[%s3 + $0x128] sm:$0xff]
    %v1036 = vld [vmem:[%s3 + $0x130] sm:$0xff]
    %v1037 = vld [vmem:[%s3 + $0x138] sm:$0xff]
    %v1038 = vld [vmem:[%s3 + $0x140] sm:$0xff]
    %v1039 = vld [vmem:[%s3 + $0x148] sm:$0xff]
    %v1040 = vld [vmem:[%s3 + $0x150] sm:$0xff]
    %v1041 = vld [vmem:[%s3 + $0x158] sm:$0xff]
    %v1042 = vld [vmem:[%s3 + $0x160] sm:$0xff]
    %v1043 = vld [vmem:[%s3 + $0x168] sm:$0xff]
    %v1044 = vld [vmem:[%s3 + $0x170] sm:$0xff]
    %v1045 = vld [vmem:[%s3 + $0x178] sm:$0xff]
    %v1046 = vld [vmem:[%s3 + $0x180] sm:$0xff]
    %v1047 = vld [vmem:[%s3 + $0x188] sm:$0xff]
    %v1048 = vld [vmem:[%s3 + $0x190] sm:$0xff]
    %v1049 = vld [vmem:[%s3 + $0x198] sm:$0xff]
    %v1050 = vld [vmem:[%s3 + $0x1a0] sm:$0xff]
    %v1051 = vld [vmem:[%s3 + $0x1a8] sm:$0xff]
    %v1052 = vld [vmem:[%s3 + $0x1b0] sm:$0xff]
    %v1053 = vld [vmem:[%s3 + $0x1b8] sm:$0xff]
    %v1054 = vld [vmem:[%s3 + $0x1c0] sm:$0xff]
    %v1055 = vld [vmem:[%s3 + $0x1c8] sm:$0xff]
    %v1056 = vld [vmem:[%s3 + $0x1d0] sm:$0xff]
    %v1057 = vld [vmem:[%s3 + $0x1d8] sm:$0xff]
    %v1058 = vld [vmem:[%s3 + $0x1e0] sm:$0xff]
    %v1059 = vld [vmem:[%s3 + $0x1e8] sm:$0xff]
    %v1060 = vld [vmem:[%s3 + $0x1f0] sm:$0xff]
    %v1061 = vld [vmem:[%s3 + $0x1f8] sm:$0xff]
    %v1062 = vld [vmem:[%s3 + $0x200] sm:$0xff]
    %v1063 = vld [vmem:[%s3 + $0x208] sm:$0xff]
    %v1064 = vld [vmem:[%s3 + $0x210] sm:$0xff]
    %v1065 = vld [vmem:[%s3 + $0x218] sm:$0xff]
    %v1066 = vld [vmem:[%s3 + $0x220] sm:$0xff]
    %v1067 = vld [vmem:[%s3 + $0x228] sm:$0xff]
    %v1068 = vld [vmem:[%s3 + $0x230] sm:$0xff]
    %v1069 = vld [vmem:[%s3 + $0x238] sm:$0xff]
    %v1070 = vld [vmem:[%s3 + $0x240] sm:$0xff]
    %v1071 = vld [vmem:[%s3 + $0x248] sm:$0xff]
    %v1072 = vld [vmem:[%s3 + $0x250] sm:$0xff]
    %v1073 = vld [vmem:[%s3 + $0x258] sm:$0xff]
    %v1074 = vld [vmem:[%s3 + $0x260] sm:$0xff]
    %v1075 = vld [vmem:[%s3 + $0x268] sm:$0xff]
    %v1076 = vld [vmem:[%s3 + $0x270] sm:$0xff]
    %v1077 = vld [vmem:[%s3 + $0x278] sm:$0xff]
    %v1078 = vld [vmem:[%s3 + $0x280] sm:$0xff]
    %v1079 = vld [vmem:[%s3 + $0x288] sm:$0xff]
    %v1080 = vld [vmem:[%s3 + $0x290] sm:$0xff]
    %v1081 = vld [vmem:[%s3 + $0x298] sm:$0xff]
    %v1082 = vld [vmem:[%s3 + $0x2a0] sm:$0xff]
    %v1083 = vld [vmem:[%s3 + $0x2a8] sm:$0xff]
    %v1084 = vld [vmem:[%s3 + $0x2b0] sm:$0xff]
    %v1085 = vld [vmem:[%s3 + $0x2b8] sm:$0xff]
    %v1086 = vld [vmem:[%s3 + $0x2c0] sm:$0xff]
    %v1087 = vld [vmem:[%s3 + $0x2c8] sm:$0xff]
    %v1088 = vld [vmem:[%s3 + $0x2d0] sm:$0xff]
    %v1089 = vld [vmem:[%s3 + $0x2d8] sm:$0xff]
    %v1090 = vld [vmem:[%s3 + $0x2e0] sm:$0xff]
    %v1091 = vld [vmem:[%s3 + $0x2e8] sm:$0xff]
    %v1092 = vld [vmem:[%s3 + $0x2f0] sm:$0xff]
    %v1093 = vld [vmem:[%s3 + $0x2f8] sm:$0xff]
    %v1094 = vld [vmem:[%s3 + $0x300] sm:$0xff]
    %v1095 = vld [vmem:[%s3 + $0x308] sm:$0xff]
    %v1096 = vld [vmem:[%s3 + $0x310] sm:$0xff]
    %v1097 = vld [vmem:[%s3 + $0x318] sm:$0xff]
    %v1098 = vld [vmem:[%s3 + $0x320] sm:$0xff]
    %v1099 = vld [vmem:[%s3 + $0x328] sm:$0xff]
    %v1100 = vld [vmem:[%s3 + $0x330] sm:$0xff]
    %v1101 = vld [vmem:[%s3 + $0x338] sm:$0xff]
    %v1102 = vld [vmem:[%s3 + $0x340] sm:$0xff]
    %v1103 = vld [vmem:[%s3 + $0x348] sm:$0xff]
    %v1104 = vld [vmem:[%s3 + $0x350] sm:$0xff]
    %v1105 = vld [vmem:[%s3 + $0x358] sm:$0xff]
    %v1106 = vld [vmem:[%s3 + $0x360] sm:$0xff]
    %v1107 = vld [vmem:[%s3 + $0x368] sm:$0xff]
    %v1108 = vld [vmem:[%s3 + $0x370] sm:$0xff]
    %v1109 = vld [vmem:[%s3 + $0x378] sm:$0xff]
    %v1110 = vld [vmem:[%s3 + $0x380] sm:$0xff]
    %v1111 = vld [vmem:[%s3 + $0x388] sm:$0xff]
    %v1112 = vld [vmem:[%s3 + $0x390] sm:$0xff]
    %v1113 = vld [vmem:[%s3 + $0x398] sm:$0xff]
    %v1114 = vld [vmem:[%s3 + $0x3a0] sm:$0xff]
    %v1115 = vld [vmem:[%s3 + $0x3a8] sm:$0xff]
    %v1116 = vld [vmem:[%s3 + $0x3b0] sm:$0xff]
    %v1117 = vld [vmem:[%s3 + $0x3b8] sm:$0xff]
    %v1118 = vld [vmem:[%s3 + $0x3c0] sm:$0xff]
    %v1119 = vld [vmem:[%s3 + $0x3c8] sm:$0xff]
    %v1120 = vld [vmem:[%s3 + $0x3d0] sm:$0xff]
    %v1121 = vld [vmem:[%s3 + $0x3d8] sm:$0xff]
    %v1122 = vld [vmem:[%s3 + $0x3e0] sm:$0xff]
    %v1123 = vld [vmem:[%s3 + $0x3e8] sm:$0xff]
    %v1124 = vld [vmem:[%s3 + $0x3f0] sm:$0xff]
    %v1125 = vld [vmem:[%s3 + $0x3f8] sm:$0xff]
    %v1126 = vld [vmem:[%s3 + $0x400] sm:$0xff]
    %v1127 = vld [vmem:[%s3 + $0x408] sm:$0xff]
    %v1128 = vld [vmem:[%s3 + $0x410] sm:$0xff]
    %v1129 = vld [vmem:[%s3 + $0x418] sm:$0xff]
    %v1130 = vld [vmem:[%s3 + $0x420] sm:$0xff]
    %v1131 = vld [vmem:[%s3 + $0x428] sm:$0xff]
    %v1132 = vld [vmem:[%s3 + $0x430] sm:$0xff]
    %v1133 = vld [vmem:[%s3 + $0x438] sm:$0xff]
    %v1134 = vld [vmem:[%s3 + $0x440] sm:$0xff]
    %v1135 = vld [vmem:[%s3 + $0x448] sm:$0xff]
    %v1136 = vld [vmem:[%s3 + $0x450] sm:$0xff]
    %v1137 = vld [vmem:[%s3 + $0x458] sm:$0xff]
    %v1138 = vld [vmem:[%s3 + $0x460] sm:$0xff]
    %v1139 = vld [vmem:[%s3 + $0x468] sm:$0xff]
    %v1140 = vld [vmem:[%s3 + $0x470] sm:$0xff]
    %v1141 = vld [vmem:[%s3 + $0x478] sm:$0xff]
    %v1142 = vld [vmem:[%s3 + $0x480] sm:$0xff]
    %v1143 = vld [vmem:[%s3 + $0x488] sm:$0xff]
    %v1144 = vld [vmem:[%s3 + $0x490] sm:$0xff]
    %v1145 = vld [vmem:[%s3 + $0x498] sm:$0xff]
    %v1146 = vld [vmem:[%s3 + $0x4a0] sm:$0xff]
    %v1147 = vld [vmem:[%s3 + $0x4a8] sm:$0xff]
    %v1148 = vld [vmem:[%s3 + $0x4b0] sm:$0xff]
    %v1149 = vld [vmem:[%s3 + $0x4b8] sm:$0xff]
    %v1150 = vld [vmem:[%s3 + $0x4c0] sm:$0xff]
    %v1151 = vld [vmem:[%s3 + $0x4c8] sm:$0xff]
    %v1152 = vld [vmem:[%s3 + $0x4d0] sm:$0xff]
    %v1153 = vld [vmem:[%s3 + $0x4d8] sm:$0xff]
    %v1154 = vld [vmem:[%s3 + $0x4e0] sm:$0xff]
    %v1155 = vld [vmem:[%s3 + $0x4e8] sm:$0xff]
    %v1156 = vld [vmem:[%s3 + $0x4f0] sm:$0xff]
    %v1157 = vld [vmem:[%s3 + $0x4f8] sm:$0xff]
    %v1158 = vld [vmem:[%s3 + $0x500] sm:$0xff]
    %v1159 = vld [vmem:[%s3 + $0x508] sm:$0xff]
    %v1160 = vld [vmem:[%s3 + $0x510] sm:$0xff]
    %v1161 = vld [vmem:[%s3 + $0x518] sm:$0xff]
    %v1162 = vld [vmem:[%s3 + $0x520] sm:$0xff]
    %v1163 = vld [vmem:[%s3 + $0x528] sm:$0xff]
    %v1164 = vld [vmem:[%s3 + $0x530] sm:$0xff]
    %v1165 = vld [vmem:[%s3 + $0x538] sm:$0xff]
    %v1166 = vld [vmem:[%s3 + $0x540] sm:$0xff]
    %v1167 = vld [vmem:[%s3 + $0x548] sm:$0xff]
    %v1168 = vld [vmem:[%s3 + $0x550] sm:$0xff]
    %v1169 = vld [vmem:[%s3 + $0x558] sm:$0xff]
    %v1170 = vld [vmem:[%s3 + $0x560] sm:$0xff]
    %v1171 = vld [vmem:[%s3 + $0x568] sm:$0xff]
    %v1172 = vld [vmem:[%s3 + $0x570] sm:$0xff]
    %v1173 = vld [vmem:[%s3 + $0x578] sm:$0xff]
    %v1174 = vld [vmem:[%s3 + $0x580] sm:$0xff]
    %v1175 = vld [vmem:[%s3 + $0x588] sm:$0xff]
    %v1176 = vld [vmem:[%s3 + $0x590] sm:$0xff]
    %v1177 = vld [vmem:[%s3 + $0x598] sm:$0xff]
    %v1178 = vld [vmem:[%s3 + $0x5a0] sm:$0xff]
    %v1179 = vld [vmem:[%s3 + $0x5a8] sm:$0xff]
    %v1180 = vld [vmem:[%s3 + $0x5b0] sm:$0xff]
    %v1181 = vld [vmem:[%s3 + $0x5b8] sm:$0xff]
    %v1182 = vld [vmem:[%s3 + $0x5c0] sm:$0xff]
    %v1183 = vld [vmem:[%s3 + $0x5c8] sm:$0xff]
    %v1184 = vld [vmem:[%s3 + $0x5d0] sm:$0xff]
    %v1185 = vld [vmem:[%s3 + $0x5d8] sm:$0xff]
    %v1186 = vld [vmem:[%s3 + $0x5e0] sm:$0xff]
    %v1187 = vld [vmem:[%s3 + $0x5e8] sm:$0xff]
    %v1188 = vld [vmem:[%s3 + $0x5f0] sm:$0xff]
    %v1189 = vld [vmem:[%s3 + $0x5f8] sm:$0xff]
    %v1190 = vld [vmem:[%s3 + $0x600] sm:$0xff]
    %v1191 = vld [vmem:[%s3 + $0x608] sm:$0xff]
    %v1192 = vld [vmem:[%s3 + $0x610] sm:$0xff]
    %v1193 = vld [vmem:[%s3 + $0x618] sm:$0xff]
    %v1194 = vld [vmem:[%s3 + $0x620] sm:$0xff]
    %v1195 = vld [vmem:[%s3 + $0x628] sm:$0xff]
    %v1196 = vld [vmem:[%s3 + $0x630] sm:$0xff]
    %v1197 = vld [vmem:[%s3 + $0x638] sm:$0xff]
    %v1198 = vld [vmem:[%s3 + $0x640] sm:$0xff]
    %v1199 = vld [vmem:[%s3 + $0x648] sm:$0xff]
    %v1200 = vld [vmem:[%s3 + $0x650] sm:$0xff]
    %v1201 = vld [vmem:[%s3 + $0x658] sm:$0xff]
    %v1202 = vld [vmem:[%s3 + $0x660] sm:$0xff]
    %v1203 = vld [vmem:[%s3 + $0x668] sm:$0xff]
    %v1204 = vld [vmem:[%s3 + $0x670] sm:$0xff]
    %v1205 = vld [vmem:[%s3 + $0x678] sm:$0xff]
    %v1206 = vld [vmem:[%s3 + $0x680] sm:$0xff]
    %v1207 = vld [vmem:[%s3 + $0x688] sm:$0xff]
    %v1208 = vld [vmem:[%s3 + $0x690] sm:$0xff]
    %v1209 = vld [vmem:[%s3 + $0x698] sm:$0xff]
    %v1210 = vld [vmem:[%s3 + $0x6a0] sm:$0xff]
    %v1211 = vld [vmem:[%s3 + $0x6a8] sm:$0xff]
    %v1212 = vld [vmem:[%s3 + $0x6b0] sm:$0xff]
    %v1213 = vld [vmem:[%s3 + $0x6b8] sm:$0xff]
    %v1214 = vld [vmem:[%s3 + $0x6c0] sm:$0xff]
    %v1215 = vld [vmem:[%s3 + $0x6c8] sm:$0xff]
    %v1216 = vld [vmem:[%s3 + $0x6d0] sm:$0xff]
    %v1217 = vld [vmem:[%s3 + $0x6d8] sm:$0xff]
    %v1218 = vld [vmem:[%s3 + $0x6e0] sm:$0xff]
    %v1219 = vld [vmem:[%s3 + $0x6e8] sm:$0xff]
    %v1220 = vld [vmem:[%s3 + $0x6f0] sm:$0xff]
    %v1221 = vld [vmem:[%s3 + $0x6f8] sm:$0xff]
    %v1222 = vld [vmem:[%s3 + $0x700] sm:$0xff]
    %v1223 = vld [vmem:[%s3 + $0x708] sm:$0xff]
    %v1224 = vld [vmem:[%s3 + $0x710] sm:$0xff]
    %v1225 = vld [vmem:[%s3 + $0x718] sm:$0xff]
    %v1226 = vld [vmem:[%s3 + $0x720] sm:$0xff]
    %v1227 = vld [vmem:[%s3 + $0x728] sm:$0xff]
    %v1228 = vld [vmem:[%s3 + $0x730] sm:$0xff]
    %v1229 = vld [vmem:[%s3 + $0x738] sm:$0xff]
    %v1230 = vld [vmem:[%s3 + $0x740] sm:$0xff]
    %v1231 = vld [vmem:[%s3 + $0x748] sm:$0xff]
    %v1232 = vld [vmem:[%s3 + $0x750] sm:$0xff]
    %v1233 = vld [vmem:[%s3 + $0x758] sm:$0xff]
    %v1234 = vld [vmem:[%s3 + $0x760] sm:$0xff]
    %v1235 = vld [vmem:[%s3 + $0x768] sm:$0xff]
    %v1236 = vld [vmem:[%s3 + $0x770] sm:$0xff]
    %v1237 = vld [vmem:[%s3 + $0x778] sm:$0xff]
    %v1238 = vld [vmem:[%s3 + $0x780] sm:$0xff]
    %v1239 = vld [vmem:[%s3 + $0x788] sm:$0xff]
    %v1240 = vld [vmem:[%s3 + $0x790] sm:$0xff]
    %v1241 = vld [vmem:[%s3 + $0x798] sm:$0xff]
    %v1242 = vld [vmem:[%s3 + $0x7a0] sm:$0xff]
    %v1243 = vld [vmem:[%s3 + $0x7a8] sm:$0xff]
    %v1244 = vld [vmem:[%s3 + $0x7b0] sm:$0xff]
    %v1245 = vld [vmem:[%s3 + $0x7b8] sm:$0xff]
    %v1246 = vld [vmem:[%s3 + $0x7c0] sm:$0xff]
    %v1247 = vld [vmem:[%s3 + $0x7c8] sm:$0xff]
    %v1248 = vld [vmem:[%s3 + $0x7d0] sm:$0xff]
    %v1249 = vld [vmem:[%s3 + $0x7d8] sm:$0xff]
    %v1250 = vld [vmem:[%s3 + $0x7e0] sm:$0xff]
    %v1251 = vld [vmem:[%s3 + $0x7e8] sm:$0xff]
    %v1252 = vld [vmem:[%s3 + $0x7f0] sm:$0xff]
    %v1253 = vld [vmem:[%s3 + $0x7f8] sm:$0xff]
    %v1254 = vld [vmem:[%s3 + $0x800] sm:$0xff]
    %v1255 = vld [vmem:[%s3 + $0x808] sm:$0xff]
    %v1256 = vld [vmem:[%s3 + $0x810] sm:$0xff]
    %v1257 = vld [vmem:[%s3 + $0x818] sm:$0xff]
    %v1258 = vld [vmem:[%s3 + $0x820] sm:$0xff]
    %v1259 = vld [vmem:[%s3 + $0x828] sm:$0xff]
    %v1260 = vld [vmem:[%s3 + $0x830] sm:$0xff]
    %v1261 = vld [vmem:[%s3 + $0x838] sm:$0xff]
    %v1262 = vld [vmem:[%s3 + $0x840] sm:$0xff]
    %v1263 = vld [vmem:[%s3 + $0x848] sm:$0xff]
    %v1264 = vld [vmem:[%s3 + $0x850] sm:$0xff]
    %v1265 = vld [vmem:[%s3 + $0x858] sm:$0xff]
    %v1266 = vld [vmem:[%s3 + $0x860] sm:$0xff]
    %v1267 = vld [vmem:[%s3 + $0x868] sm:$0xff]
    %v1268 = vld [vmem:[%s3 + $0x870] sm:$0xff]
    %v1269 = vld [vmem:[%s3 + $0x878] sm:$0xff]
    %v1270 = vld [vmem:[%s3 + $0x880] sm:$0xff]
    %v1271 = vld [vmem:[%s3 + $0x888] sm:$0xff]
    %v1272 = vld [vmem:[%s3 + $0x890] sm:$0xff]
    %v1273 = vld [vmem:[%s3 + $0x898] sm:$0xff]
    %v1274 = vld [vmem:[%s3 + $0x8a0] sm:$0xff]
    %v1275 = vld [vmem:[%s3 + $0x8a8] sm:$0xff]
    %v1276 = vld [vmem:[%s3 + $0x8b0] sm:$0xff]
    %v1277 = vld [vmem:[%s3 + $0x8b8] sm:$0xff]
    %v1278 = vld [vmem:[%s3 + $0x8c0] sm:$0xff]
    %v1279 = vld [vmem:[%s3 + $0x8c8] sm:$0xff]
    %v1280 = vld [vmem:[%s3 + $0x8d0] sm:$0xff]
    %v1281 = vld [vmem:[%s3 + $0x8d8] sm:$0xff]
    %v1282 = vld [vmem:[%s3 + $0x8e0] sm:$0xff]
    %v1283 = vld [vmem:[%s3 + $0x8e8] sm:$0xff]
    %v1284 = vld [vmem:[%s3 + $0x8f0] sm:$0xff]
    %v1285 = vld [vmem:[%s3 + $0x8f8] sm:$0xff]
    %v1286 = vld [vmem:[%s3 + $0x900] sm:$0xff]
    %v1287 = vld [vmem:[%s3 + $0x908] sm:$0xff]
    %v1288 = vld [vmem:[%s3 + $0x910] sm:$0xff]
    %v1289 = vld [vmem:[%s3 + $0x918] sm:$0xff]
    %v1290 = vld [vmem:[%s3 + $0x920] sm:$0xff]
    %v1291 = vld [vmem:[%s3 + $0x928] sm:$0xff]
    %v1292 = vld [vmem:[%s3 + $0x930] sm:$0xff]
    %v1293 = vld [vmem:[%s3 + $0x938] sm:$0xff]
    %v1294 = vld [vmem:[%s3 + $0x940] sm:$0xff]
    %v1295 = vld [vmem:[%s3 + $0x948] sm:$0xff]
    %v1296 = vld [vmem:[%s3 + $0x950] sm:$0xff]
    %v1297 = vld [vmem:[%s3 + $0x958] sm:$0xff]
    %v1298 = vld [vmem:[%s3 + $0x960] sm:$0xff]
    %v1299 = vld [vmem:[%s3 + $0x968] sm:$0xff]
    %v1300 = vld [vmem:[%s3 + $0x970] sm:$0xff]
    %v1301 = vld [vmem:[%s3 + $0x978] sm:$0xff]
    %v1302 = vld [vmem:[%s3 + $0x980] sm:$0xff]
    %v1303 = vld [vmem:[%s3 + $0x988] sm:$0xff]
    %v1304 = vld [vmem:[%s3 + $0x990] sm:$0xff]
    %v1305 = vld [vmem:[%s3 + $0x998] sm:$0xff]
    %v1306 = vld [vmem:[%s3 + $0x9a0] sm:$0xff]
    %v1307 = vld [vmem:[%s3 + $0x9a8] sm:$0xff]
    %v1308 = vld [vmem:[%s3 + $0x9b0] sm:$0xff]
    %v1309 = vld [vmem:[%s3 + $0x9b8] sm:$0xff]
    %v1310 = vld [vmem:[%s3 + $0x9c0] sm:$0xff]
    %v1311 = vld [vmem:[%s3 + $0x9c8] sm:$0xff]
    %v1312 = vld [vmem:[%s3 + $0x9d0] sm:$0xff]
    %v1313 = vld [vmem:[%s3 + $0x9d8] sm:$0xff]
    %v1314 = vld [vmem:[%s3 + $0x9e0] sm:$0xff]
    %v1315 = vld [vmem:[%s3 + $0x9e8] sm:$0xff]
    %v1316 = vld [vmem:[%s3 + $0x9f0] sm:$0xff]
    %v1317 = vld [vmem:[%s3 + $0x9f8] sm:$0xff]
    %v1318 = vld [vmem:[%s3 + $0xa00] sm:$0xff]
    %v1319 = vld [vmem:[%s3 + $0xa08] sm:$0xff]
    %v1320 = vld [vmem:[%s3 + $0xa10] sm:$0xff]
    %v1321 = vld [vmem:[%s3 + $0xa18] sm:$0xff]
    %v1322 = vld [vmem:[%s3 + $0xa20] sm:$0xff]
    %v1323 = vld [vmem:[%s3 + $0xa28] sm:$0xff]
    %v1324 = vld [vmem:[%s3 + $0xa30] sm:$0xff]
    %v1325 = vld [vmem:[%s3 + $0xa38] sm:$0xff]
    %v1326 = vld [vmem:[%s3 + $0xa40] sm:$0xff]
    %v1327 = vld [vmem:[%s3 + $0xa48] sm:$0xff]
    %v1328 = vld [vmem:[%s3 + $0xa50] sm:$0xff]
    %v1329 = vld [vmem:[%s3 + $0xa58] sm:$0xff]
    %v1330 = vld [vmem:[%s3 + $0xa60] sm:$0xff]
    %v1331 = vld [vmem:[%s3 + $0xa68] sm:$0xff]
    %v1332 = vld [vmem:[%s3 + $0xa70] sm:$0xff]
    %v1333 = vld [vmem:[%s3 + $0xa78] sm:$0xff]
    %v1334 = vld [vmem:[%s3 + $0xa80] sm:$0xff]
    %v1335 = vld [vmem:[%s3 + $0xa88] sm:$0xff]
    %v1336 = vld [vmem:[%s3 + $0xa90] sm:$0xff]
    %v1337 = vld [vmem:[%s3 + $0xa98] sm:$0xff]
    %v1338 = vld [vmem:[%s3 + $0xaa0] sm:$0xff]
    %v1339 = vld [vmem:[%s3 + $0xaa8] sm:$0xff]
    %v1340 = vld [vmem:[%s3 + $0xab0] sm:$0xff]
    %v1341 = vld [vmem:[%s3 + $0xab8] sm:$0xff]
    %v1342 = vld [vmem:[%s3 + $0xac0] sm:$0xff]
    %v1343 = vld [vmem:[%s3 + $0xac8] sm:$0xff]
    %v1344 = vld [vmem:[%s3 + $0xad0] sm:$0xff]
    %v1345 = vld [vmem:[%s3 + $0xad8] sm:$0xff]
    %v1346 = vld [vmem:[%s3 + $0xae0] sm:$0xff]
    %v1347 = vld [vmem:[%s3 + $0xae8] sm:$0xff]
    %v1348 = vld [vmem:[%s3 + $0xaf0] sm:$0xff]
    %v1349 = vld [vmem:[%s3 + $0xaf8] sm:$0xff]
    %v1350 = vld [vmem:[%s3 + $0xb00] sm:$0xff]
    %v1351 = vld [vmem:[%s3 + $0xb08] sm:$0xff]
    %v1352 = vld [vmem:[%s3 + $0xb10] sm:$0xff]
    %v1353 = vld [vmem:[%s3 + $0xb18] sm:$0xff]
    %v1354 = vld [vmem:[%s3 + $0xb20] sm:$0xff]
    %v1355 = vld [vmem:[%s3 + $0xb28] sm:$0xff]
    %v1356 = vld [vmem:[%s3 + $0xb30] sm:$0xff]
    %v1357 = vld [vmem:[%s3 + $0xb38] sm:$0xff]
    %v1358 = vld [vmem:[%s3 + $0xb40] sm:$0xff]
    %v1359 = vld [vmem:[%s3 + $0xb48] sm:$0xff]
    %v1360 = vld [vmem:[%s3 + $0xb50] sm:$0xff]
    %v1361 = vld [vmem:[%s3 + $0xb58] sm:$0xff]
    %v1362 = vld [vmem:[%s3 + $0xb60] sm:$0xff]
    %v1363 = vld [vmem:[%s3 + $0xb68] sm:$0xff]
    %v1364 = vld [vmem:[%s3 + $0xb70] sm:$0xff]
    %v1365 = vld [vmem:[%s3 + $0xb78] sm:$0xff]
    %v1366 = vld [vmem:[%s3 + $0xb80] sm:$0xff]
    %v1367 = vld [vmem:[%s3 + $0xb88] sm:$0xff]
    %v1368 = vld [vmem:[%s3 + $0xb90] sm:$0xff]
    %v1369 = vld [vmem:[%s3 + $0xb98] sm:$0xff]
    %v1370 = vld [vmem:[%s3 + $0xba0] sm:$0xff]
    %v1371 = vld [vmem:[%s3 + $0xba8] sm:$0xff]
    %v1372 = vld [vmem:[%s3 + $0xbb0] sm:$0xff]
    %v1373 = vld [vmem:[%s3 + $0xbb8] sm:$0xff]
    %v1374 = vld [vmem:[%s3 + $0xbc0] sm:$0xff]
    %v1375 = vld [vmem:[%s3 + $0xbc8] sm:$0xff]
    %v1376 = vld [vmem:[%s3 + $0xbd0] sm:$0xff]
    %v1377 = vld [vmem:[%s3 + $0xbd8] sm:$0xff]
    %v1378 = vld [vmem:[%s3 + $0xbe0] sm:$0xff]
    %v1379 = vld [vmem:[%s3 + $0xbe8] sm:$0xff]
    %v1380 = vld [vmem:[%s3 + $0xbf0] sm:$0xff]
    %v1381 = vld [vmem:[%s3 + $0xbf8] sm:$0xff]
    %v1382 = vld [vmem:[%s3 + $0xc00] sm:$0xff]
    %v1383 = vld [vmem:[%s3 + $0xc08] sm:$0xff]
    %v1384 = vld [vmem:[%s3 + $0xc10] sm:$0xff]
    %v1385 = vld [vmem:[%s3 + $0xc18] sm:$0xff]
    %v1386 = vld [vmem:[%s3 + $0xc20] sm:$0xff]
    %v1387 = vld [vmem:[%s3 + $0xc28] sm:$0xff]
    %v1388 = vld [vmem:[%s3 + $0xc30] sm:$0xff]
    %v1389 = vld [vmem:[%s3 + $0xc38] sm:$0xff]
    %v1390 = vld [vmem:[%s3 + $0xc40] sm:$0xff]
    %v1391 = vld [vmem:[%s3 + $0xc48] sm:$0xff]
    %v1392 = vld [vmem:[%s3 + $0xc50] sm:$0xff]
    %v1393 = vld [vmem:[%s3 + $0xc58] sm:$0xff]
    %v1394 = vld [vmem:[%s3 + $0xc60] sm:$0xff]
    %v1395 = vld [vmem:[%s3 + $0xc68] sm:$0xff]
    %v1396 = vld [vmem:[%s3 + $0xc70] sm:$0xff]
    %v1397 = vld [vmem:[%s3 + $0xc78] sm:$0xff]
    %v1398 = vld [vmem:[%s3 + $0xc80] sm:$0xff]
    %v1399 = vld [vmem:[%s3 + $0xc88] sm:$0xff]
    %v1400 = vld [vmem:[%s3 + $0xc90] sm:$0xff]
    %v1401 = vld [vmem:[%s3 + $0xc98] sm:$0xff]
    %v1402 = vld [vmem:[%s3 + $0xca0] sm:$0xff]
    %v1403 = vld [vmem:[%s3 + $0xca8] sm:$0xff]
    %v1404 = vld [vmem:[%s3 + $0xcb0] sm:$0xff]
    %v1405 = vld [vmem:[%s3 + $0xcb8] sm:$0xff]
    %v1406 = vld [vmem:[%s3 + $0xcc0] sm:$0xff]
    %v1407 = vld [vmem:[%s3 + $0xcc8] sm:$0xff]
    %v1408 = vld [vmem:[%s3 + $0xcd0] sm:$0xff]
    %v1409 = vld [vmem:[%s3 + $0xcd8] sm:$0xff]
    %v1410 = vld [vmem:[%s3 + $0xce0] sm:$0xff]
    %v1411 = vld [vmem:[%s3 + $0xce8] sm:$0xff]
    %v1412 = vld [vmem:[%s3 + $0xcf0] sm:$0xff]
    %v1413 = vld [vmem:[%s3 + $0xcf8] sm:$0xff]
    %v1414 = vld [vmem:[%s3 + $0xd00] sm:$0xff]
    %v1415 = vld [vmem:[%s3 + $0xd08] sm:$0xff]
    %v1416 = vld [vmem:[%s3 + $0xd10] sm:$0xff]
    %v1417 = vld [vmem:[%s3 + $0xd18] sm:$0xff]
    %v1418 = vld [vmem:[%s3 + $0xd20] sm:$0xff]
    %v1419 = vld [vmem:[%s3 + $0xd28] sm:$0xff]
    %v1420 = vld [vmem:[%s3 + $0xd30] sm:$0xff]
    %v1421 = vld [vmem:[%s3 + $0xd38] sm:$0xff]
    %v1422 = vld [vmem:[%s3 + $0xd40] sm:$0xff]
    %v1423 = vld [vmem:[%s3 + $0xd48] sm:$0xff]
    %v1424 = vld [vmem:[%s3 + $0xd50] sm:$0xff]
    %v1425 = vld [vmem:[%s3 + $0xd58] sm:$0xff]
    %v1426 = vld [vmem:[%s3 + $0xd60] sm:$0xff]
    %v1427 = vld [vmem:[%s3 + $0xd68] sm:$0xff]
    %v1428 = vld [vmem:[%s3 + $0xd70] sm:$0xff]
    %v1429 = vld [vmem:[%s3 + $0xd78] sm:$0xff]
    %v1430 = vld [vmem:[%s3 + $0xd80] sm:$0xff]
    %v1431 = vld [vmem:[%s3 + $0xd88] sm:$0xff]
    %v1432 = vld [vmem:[%s3 + $0xd90] sm:$0xff]
    %v1433 = vld [vmem:[%s3 + $0xd98] sm:$0xff]
    %v1434 = vld [vmem:[%s3 + $0xda0] sm:$0xff]
    %v1435 = vld [vmem:[%s3 + $0xda8] sm:$0xff]
    %v1436 = vld [vmem:[%s3 + $0xdb0] sm:$0xff]
    %v1437 = vld [vmem:[%s3 + $0xdb8] sm:$0xff]
    %v1438 = vld [vmem:[%s3 + $0xdc0] sm:$0xff]
    %v1439 = vld [vmem:[%s3 + $0xdc8] sm:$0xff]
    %v1440 = vld [vmem:[%s3 + $0xdd0] sm:$0xff]
    %v1441 = vld [vmem:[%s3 + $0xdd8] sm:$0xff]
    %v1442 = vld [vmem:[%s3 + $0xde0] sm:$0xff]
    %v1443 = vld [vmem:[%s3 + $0xde8] sm:$0xff]
    %v1444 = vld [vmem:[%s3 + $0xdf0] sm:$0xff]
    %v1445 = vld [vmem:[%s3 + $0xdf8] sm:$0xff]
    %v1446 = vld [vmem:[%s3 + $0xe00] sm:$0xff]
    %v1447 = vld [vmem:[%s3 + $0xe08] sm:$0xff]
    %v1448 = vld [vmem:[%s3 + $0xe10] sm:$0xff]
    %v1449 = vld [vmem:[%s3 + $0xe18] sm:$0xff]
    %v1450 = vld [vmem:[%s3 + $0xe20] sm:$0xff]
    %v1451 = vld [vmem:[%s3 + $0xe28] sm:$0xff]
    %v1452 = vld [vmem:[%s3 + $0xe30] sm:$0xff]
    %v1453 = vld [vmem:[%s3 + $0xe38] sm:$0xff]
    %v1454 = vld [vmem:[%s3 + $0xe40] sm:$0xff]
    %v1455 = vld [vmem:[%s3 + $0xe48] sm:$0xff]
    %v1456 = vld [vmem:[%s3 + $0xe50] sm:$0xff]
    %v1457 = vld [vmem:[%s3 + $0xe58] sm:$0xff]
    %v1458 = vld [vmem:[%s3 + $0xe60] sm:$0xff]
    %v1459 = vld [vmem:[%s3 + $0xe68] sm:$0xff]
    %v1460 = vld [vmem:[%s3 + $0xe70] sm:$0xff]
    %v1461 = vld [vmem:[%s3 + $0xe78] sm:$0xff]
    %v1462 = vld [vmem:[%s3 + $0xe80] sm:$0xff]
    %v1463 = vld [vmem:[%s3 + $0xe88] sm:$0xff]
    %v1464 = vld [vmem:[%s3 + $0xe90] sm:$0xff]
    %v1465 = vld [vmem:[%s3 + $0xe98] sm:$0xff]
    %v1466 = vld [vmem:[%s3 + $0xea0] sm:$0xff]
    %v1467 = vld [vmem:[%s3 + $0xea8] sm:$0xff]
    %v1468 = vld [vmem:[%s3 + $0xeb0] sm:$0xff]
    %v1469 = vld [vmem:[%s3 + $0xeb8] sm:$0xff]
    %v1470 = vld [vmem:[%s3 + $0xec0] sm:$0xff]
    %v1471 = vld [vmem:[%s3 + $0xec8] sm:$0xff]
    %v1472 = vld [vmem:[%s3 + $0xed0] sm:$0xff]
    %v1473 = vld [vmem:[%s3 + $0xed8] sm:$0xff]
    %v1474 = vld [vmem:[%s3 + $0xee0] sm:$0xff]
    %v1475 = vld [vmem:[%s3 + $0xee8] sm:$0xff]
    %v1476 = vld [vmem:[%s3 + $0xef0] sm:$0xff]
    %v1477 = vld [vmem:[%s3 + $0xef8] sm:$0xff]
    %v1478 = vld [vmem:[%s3 + $0xf00] sm:$0xff]
    %v1479 = vld [vmem:[%s3 + $0xf08] sm:$0xff]
    %v1480 = vld [vmem:[%s3 + $0xf10] sm:$0xff]
    %v1481 = vld [vmem:[%s3 + $0xf18] sm:$0xff]
    %v1482 = vld [vmem:[%s3 + $0xf20] sm:$0xff]
    %v1483 = vld [vmem:[%s3 + $0xf28] sm:$0xff]
    %v1484 = vld [vmem:[%s3 + $0xf30] sm:$0xff]
    %v1485 = vld [vmem:[%s3 + $0xf38] sm:$0xff]
    %v1486 = vld [vmem:[%s3 + $0xf40] sm:$0xff]
    %v1487 = vld [vmem:[%s3 + $0xf48] sm:$0xff]
    %v1488 = vld [vmem:[%s3 + $0xf50] sm:$0xff]
    %v1489 = vld [vmem:[%s3 + $0xf58] sm:$0xff]
    %v1490 = vld [vmem:[%s3 + $0xf60] sm:$0xff]
    %v1491 = vld [vmem:[%s3 + $0xf68] sm:$0xff]
    %v1492 = vld [vmem:[%s3 + $0xf70] sm:$0xff]
    %v1493 = vld [vmem:[%s3 + $0xf78] sm:$0xff]
    %v1494 = vld [vmem:[%s3 + $0xf80] sm:$0xff]
    %v1495 = vld [vmem:[%s3 + $0xf88] sm:$0xff]
    %v1496 = vld [vmem:[%s3 + $0xf90] sm:$0xff]
    %v1497 = vld [vmem:[%s3 + $0xf98] sm:$0xff]
    %v1498 = vld [vmem:[%s3 + $0xfa0] sm:$0xff]
    %v1499 = vld [vmem:[%s3 + $0xfa8] sm:$0xff]
    %v1500 = vld [vmem:[%s3 + $0xfb0] sm:$0xff]
    %v1501 = vld [vmem:[%s3 + $0xfb8] sm:$0xff]
    %v1502 = vld [vmem:[%s3 + $0xfc0] sm:$0xff]
    %v1503 = vld [vmem:[%s3 + $0xfc8] sm:$0xff]
    %v1504 = vld [vmem:[%s3 + $0xfd0] sm:$0xff]
    %v1505 = vld [vmem:[%s3 + $0xfd8] sm:$0xff]
    %v1506 = vld [vmem:[%s3 + $0xfe0] sm:$0xff]
    %v1507 = vld [vmem:[%s3 + $0xfe8] sm:$0xff]
    %v1508 = vld [vmem:[%s3 + $0xff0] sm:$0xff]
    %v1509 = vld [vmem:[%s3 + $0xff8] sm:$0xff]
    %v1510 = vld [vmem:[%s4] sm:$0xf]
    %v1512 = vlaneseq
    %v1513 = vshrl.u32 %v1512, 7
    %v1514 = vsub.s32 0, %v1513
    %v1515 = vrot.slane %v1510, %v1514
    %v1516 = vlaneseq
    %v1517 = vshrl.u32 %v1516, 7
    %v1518 = vsub.s32 1, %v1517
    %v1519 = vrot.slane %v1510, %v1518
    %v1520 = vlaneseq
    %v1521 = vshrl.u32 %v1520, 7
    %v1522 = vsub.s32 2, %v1521
    %v1523 = vrot.slane %v1510, %v1522
    %v1524 = vlaneseq
    %v1525 = vshrl.u32 %v1524, 7
    %v1526 = vsub.s32 3, %v1525
    %v1527 = vrot.slane %v1510, %v1526
    %1532 = vmatprep.subr.mxu0 %v999
    %1533 = vmatpush1.msra.mxu0 %v998
    %1534 = vmatprep.subr.mxu0 %v1003
    %1535 = vmatpush1.msra.mxu0 %v1002
    %1536 = vmatprep.subr.mxu0 %v1007
    %1537 = vmatpush1.msra.mxu0 %v1006
    %1538 = vmatprep.subr.mxu0 %v1011
    %1539 = vmatpush1.msra.mxu0 %v1010
    %1540 = vmatprep.subr.mxu0 %v1015
    %1541 = vmatpush1.msra.mxu0 %v1014
    %1542 = vmatprep.subr.mxu0 %v1019
    %1543 = vmatpush1.msra.mxu0 %v1018
    %1544 = vmatprep.subr.mxu0 %v1023
    %1545 = vmatpush1.msra.mxu0 %v1022
    %1546 = vmatprep.subr.mxu0 %v1027
    %1547 = vmatpush1.msra.mxu0 %v1026
    %1548 = vmatprep.subr.mxu0 %v1031
    %1549 = vmatpush1.msra.mxu0 %v1030
    %1550 = vmatprep.subr.mxu0 %v1035
    %1551 = vmatpush1.msra.mxu0 %v1034
    %1552 = vmatprep.subr.mxu0 %v1039
    %1553 = vmatpush1.msra.mxu0 %v1038
    %1554 = vmatprep.subr.mxu0 %v1043
    %1555 = vmatpush1.msra.mxu0 %v1042
    %1556 = vmatprep.subr.mxu0 %v1047
    %1557 = vmatpush1.msra.mxu0 %v1046
    %1558 = vmatprep.subr.mxu0 %v1051
    %1559 = vmatpush1.msra.mxu0 %v1050
    %1560 = vmatprep.subr.mxu0 %v1055
    %1561 = vmatpush1.msra.mxu0 %v1054
    %1562 = vmatprep.subr.mxu0 %v1059
    %1563 = vmatpush1.msra.mxu0 %v1058
    %1564 = vmatprep.subr.mxu0 %v1063
    %1565 = vmatpush1.msra.mxu0 %v1062
    %1566 = vmatprep.subr.mxu0 %v1067
    %1567 = vmatpush1.msra.mxu0 %v1066
    %1568 = vmatprep.subr.mxu0 %v1071
    %1569 = vmatpush1.msra.mxu0 %v1070
    %1570 = vmatprep.subr.mxu0 %v1075
    %1571 = vmatpush1.msra.mxu0 %v1074
    %1572 = vmatprep.subr.mxu0 %v1079
    %1573 = vmatpush1.msra.mxu0 %v1078
    %1574 = vmatprep.subr.mxu0 %v1083
    %1575 = vmatpush1.msra.mxu0 %v1082
    %1576 = vmatprep.subr.mxu0 %v1087
    %1577 = vmatpush1.msra.mxu0 %v1086
    %1578 = vmatprep.subr.mxu0 %v1091
    %1579 = vmatpush1.msra.mxu0 %v1090
    %1580 = vmatprep.subr.mxu0 %v1095
    %1581 = vmatpush1.msra.mxu0 %v1094
    %1582 = vmatprep.subr.mxu0 %v1099
    %1583 = vmatpush1.msra.mxu0 %v1098
    %1584 = vmatprep.subr.mxu0 %v1103
    %1585 = vmatpush1.msra.mxu0 %v1102
    %1586 = vmatprep.subr.mxu0 %v1107
    %1587 = vmatpush1.msra.mxu0 %v1106
    %1588 = vmatprep.subr.mxu0 %v1111
    %1589 = vmatpush1.msra.mxu0 %v1110
    %1590 = vmatprep.subr.mxu0 %v1115
    %1591 = vmatpush1.msra.mxu0 %v1114
    %1592 = vmatprep.subr.mxu0 %v1119
    %1593 = vmatpush1.msra.mxu0 %v1118
    %1594 = vmatprep.subr.mxu0 %v1123
    %1595 = vmatpush1.msra.mxu0 %v1122
    %1596 = vmatprep.mubr.f32.mxu0 %v991
    %1597 = vmatmul.mubr.f32.gmra.mrb[0].mxu0 %v990
    %v1598 = vpop.f32.mrb[0].mxu0
    %v1599 = vadd.f32 %v1515, %v1598
    %v1600 = vpop.f32.mrb[0].mxu0
    %v1601 = vadd.f32 %v1519, %v1600
    %1602 = vdwg.mxu0
    %1603 = vmatprep.subr.mxu0 %v1127
    %1604 = vmatpush1.msra.mxu0 %v1126
    %1605 = vmatprep.subr.mxu0 %v1131
    %1606 = vmatpush1.msra.mxu0 %v1130
    %1607 = vmatprep.subr.mxu0 %v1135
    %1608 = vmatpush1.msra.mxu0 %v1134
    %1609 = vmatprep.subr.mxu0 %v1139
    %1610 = vmatpush1.msra.mxu0 %v1138
    %1611 = vmatprep.subr.mxu0 %v1143
    %1612 = vmatpush1.msra.mxu0 %v1142
    %1613 = vmatprep.subr.mxu0 %v1147
    %1614 = vmatpush1.msra.mxu0 %v1146
    %1615 = vmatprep.subr.mxu0 %v1151
    %1616 = vmatpush1.msra.mxu0 %v1150
    %1617 = vmatprep.subr.mxu0 %v1155
    %1618 = vmatpush1.msra.mxu0 %v1154
    %1619 = vmatprep.subr.mxu0 %v1159
    %1620 = vmatpush1.msra.mxu0 %v1158
    %1621 = vmatprep.subr.mxu0 %v1163
    %1622 = vmatpush1.msra.mxu0 %v1162
    %1623 = vmatprep.subr.mxu0 %v1167
    %1624 = vmatpush1.msra.mxu0 %v1166
    %1625 = vmatprep.subr.mxu0 %v1171
    %1626 = vmatpush1.msra.mxu0 %v1170
    %1627 = vmatprep.subr.mxu0 %v1175
    %1628 = vmatpush1.msra.mxu0 %v1174
    %1629 = vmatprep.subr.mxu0 %v1179
    %1630 = vmatpush1.msra.mxu0 %v1178
    %1631 = vmatprep.subr.mxu0 %v1183
    %1632 = vmatpush1.msra.mxu0 %v1182
    %1633 = vmatprep.subr.mxu0 %v1187
    %1634 = vmatpush1.msra.mxu0 %v1186
    %1635 = vmatprep.subr.mxu0 %v1191
    %1636 = vmatpush1.msra.mxu0 %v1190
    %1637 = vmatprep.subr.mxu0 %v1195
    %1638 = vmatpush1.msra.mxu0 %v1194
    %1639 = vmatprep.subr.mxu0 %v1199
    %1640 = vmatpush1.msra.mxu0 %v1198
    %1641 = vmatprep.subr.mxu0 %v1203
    %1642 = vmatpush1.msra.mxu0 %v1202
    %1643 = vmatprep.subr.mxu0 %v1207
    %1644 = vmatpush1.msra.mxu0 %v1206
    %1645 = vmatprep.subr.mxu0 %v1211
    %1646 = vmatpush1.msra.mxu0 %v1210
    %1647 = vmatprep.subr.mxu0 %v1215
    %1648 = vmatpush1.msra.mxu0 %v1214
    %1649 = vmatprep.subr.mxu0 %v1219
    %1650 = vmatpush1.msra.mxu0 %v1218
    %1651 = vmatprep.subr.mxu0 %v1223
    %1652 = vmatpush1.msra.mxu0 %v1222
    %1653 = vmatprep.subr.mxu0 %v1227
    %1654 = vmatpush1.msra.mxu0 %v1226
    %1655 = vmatprep.subr.mxu0 %v1231
    %1656 = vmatpush1.msra.mxu0 %v1230
    %1657 = vmatprep.subr.mxu0 %v1235
    %1658 = vmatpush1.msra.mxu0 %v1234
    %1659 = vmatprep.subr.mxu0 %v1239
    %1660 = vmatpush1.msra.mxu0 %v1238
    %1661 = vmatprep.subr.mxu0 %v1243
    %1662 = vmatpush1.msra.mxu0 %v1242
    %1663 = vmatprep.subr.mxu0 %v1247
    %1664 = vmatpush1.msra.mxu0 %v1246
    %1665 = vmatprep.subr.mxu0 %v1251
    %1666 = vmatpush1.msra.mxu0 %v1250
    %1667 = vmatprep.mubr.f32.mxu0 %v993
    %1668 = vmatmul.mubr.f32.gmra.mrb[0].mxu0 %v992
    %v1669 = vpop.f32.mrb[0].mxu0
    %v1670 = vadd.f32 %v1599, %v1669
    %v1671 = vpop.f32.mrb[0].mxu0
    %v1672 = vadd.f32 %v1601, %v1671
    %1673 = vdwg.mxu0
    %1674 = vmatprep.subr.mxu0 %v1255
    %1675 = vmatpush1.msra.mxu0 %v1254
    %1676 = vmatprep.subr.mxu0 %v1259
    %1677 = vmatpush1.msra.mxu0 %v1258
    %1678 = vmatprep.subr.mxu0 %v1263
    %1679 = vmatpush1.msra.mxu0 %v1262
    %1680 = vmatprep.subr.mxu0 %v1267
    %1681 = vmatpush1.msra.mxu0 %v1266
    %1682 = vmatprep.subr.mxu0 %v1271
    %1683 = vmatpush1.msra.mxu0 %v1270
    %1684 = vmatprep.subr.mxu0 %v1275
    %1685 = vmatpush1.msra.mxu0 %v1274
    %1686 = vmatprep.subr.mxu0 %v1279
    %1687 = vmatpush1.msra.mxu0 %v1278
    %1688 = vmatprep.subr.mxu0 %v1283
    %1689 = vmatpush1.msra.mxu0 %v1282
    %1690 = vmatprep.subr.mxu0 %v1287
    %1691 = vmatpush1.msra.mxu0 %v1286
    %1692 = vmatprep.subr.mxu0 %v1291
    %1693 = vmatpush1.msra.mxu0 %v1290
    %1694 = vmatprep.subr.mxu0 %v1295
    %1695 = vmatpush1.msra.mxu0 %v1294
    %1696 = vmatprep.subr.mxu0 %v1299
    %1697 = vmatpush1.msra.mxu0 %v1298
    %1698 = vmatprep.subr.mxu0 %v1303
    %1699 = vmatpush1.msra.mxu0 %v1302
    %1700 = vmatprep.subr.mxu0 %v1307
    %1701 = vmatpush1.msra.mxu0 %v1306
    %1702 = vmatprep.subr.mxu0 %v1311
    %1703 = vmatpush1.msra.mxu0 %v1310
    %1704 = vmatprep.subr.mxu0 %v1315
    %1705 = vmatpush1.msra.mxu0 %v1314
    %1706 = vmatprep.subr.mxu0 %v1319
    %1707 = vmatpush1.msra.mxu0 %v1318
    %1708 = vmatprep.subr.mxu0 %v1323
    %1709 = vmatpush1.msra.mxu0 %v1322
    %1710 = vmatprep.subr.mxu0 %v1327
    %1711 = vmatpush1.msra.mxu0 %v1326
    %1712 = vmatprep.subr.mxu0 %v1331
    %1713 = vmatpush1.msra.mxu0 %v1330
    %1714 = vmatprep.subr.mxu0 %v1335
    %1715 = vmatpush1.msra.mxu0 %v1334
    %1716 = vmatprep.subr.mxu0 %v1339
    %1717 = vmatpush1.msra.mxu0 %v1338
    %1718 = vmatprep.subr.mxu0 %v1343
    %1719 = vmatpush1.msra.mxu0 %v1342
    %1720 = vmatprep.subr.mxu0 %v1347
    %1721 = vmatpush1.msra.mxu0 %v1346
    %1722 = vmatprep.subr.mxu0 %v1351
    %1723 = vmatpush1.msra.mxu0 %v1350
    %1724 = vmatprep.subr.mxu0 %v1355
    %1725 = vmatpush1.msra.mxu0 %v1354
    %1726 = vmatprep.subr.mxu0 %v1359
    %1727 = vmatpush1.msra.mxu0 %v1358
    %1728 = vmatprep.subr.mxu0 %v1363
    %1729 = vmatpush1.msra.mxu0 %v1362
    %1730 = vmatprep.subr.mxu0 %v1367
    %1731 = vmatpush1.msra.mxu0 %v1366
    %1732 = vmatprep.subr.mxu0 %v1371
    %1733 = vmatpush1.msra.mxu0 %v1370
    %1734 = vmatprep.subr.mxu0 %v1375
    %1735 = vmatpush1.msra.mxu0 %v1374
    %1736 = vmatprep.subr.mxu0 %v1379
    %1737 = vmatpush1.msra.mxu0 %v1378
    %1738 = vmatprep.mubr.f32.mxu0 %v995
    %1739 = vmatmul.mubr.f32.gmra.mrb[0].mxu0 %v994
    %v1740 = vpop.f32.mrb[0].mxu0
    %v1741 = vadd.f32 %v1670, %v1740
    %v1742 = vpop.f32.mrb[0].mxu0
    %v1743 = vadd.f32 %v1672, %v1742
    %1744 = vdwg.mxu0
    %1745 = vmatprep.subr.mxu0 %v1383
    %1746 = vmatpush1.msra.mxu0 %v1382
    %1747 = vmatprep.subr.mxu0 %v1387
    %1748 = vmatpush1.msra.mxu0 %v1386
    %1749 = vmatprep.subr.mxu0 %v1391
    %1750 = vmatpush1.msra.mxu0 %v1390
    %1751 = vmatprep.subr.mxu0 %v1395
    %1752 = vmatpush1.msra.mxu0 %v1394
    %1753 = vmatprep.subr.mxu0 %v1399
    %1754 = vmatpush1.msra.mxu0 %v1398
    %1755 = vmatprep.subr.mxu0 %v1403
    %1756 = vmatpush1.msra.mxu0 %v1402
    %1757 = vmatprep.subr.mxu0 %v1407
    %1758 = vmatpush1.msra.mxu0 %v1406
    %1759 = vmatprep.subr.mxu0 %v1411
    %1760 = vmatpush1.msra.mxu0 %v1410
    %1761 = vmatprep.subr.mxu0 %v1415
    %1762 = vmatpush1.msra.mxu0 %v1414
    %1763 = vmatprep.subr.mxu0 %v1419
    %1764 = vmatpush1.msra.mxu0 %v1418
    %1765 = vmatprep.subr.mxu0 %v1423
    %1766 = vmatpush1.msra.mxu0 %v1422
    %1767 = vmatprep.subr.mxu0 %v1427
    %1768 = vmatpush1.msra.mxu0 %v1426
    %1769 = vmatprep.subr.mxu0 %v1431
    %1770 = vmatpush1.msra.mxu0 %v1430
    %1771 = vmatprep.subr.mxu0 %v1435
    %1772 = vmatpush1.msra.mxu0 %v1434
    %1773 = vmatprep.subr.mxu0 %v1439
    %1774 = vmatpush1.msra.mxu0 %v1438
    %1775 = vmatprep.subr.mxu0 %v1443
    %1776 = vmatpush1.msra.mxu0 %v1442
    %1777 = vmatprep.subr.mxu0 %v1447
    %1778 = vmatpush1.msra.mxu0 %v1446
    %1779 = vmatprep.subr.mxu0 %v1451
    %1780 = vmatpush1.msra.mxu0 %v1450
    %1781 = vmatprep.subr.mxu0 %v1455
    %1782 = vmatpush1.msra.mxu0 %v1454
    %1783 = vmatprep.subr.mxu0 %v1459
    %1784 = vmatpush1.msra.mxu0 %v1458
    %1785 = vmatprep.subr.mxu0 %v1463
    %1786 = vmatpush1.msra.mxu0 %v1462
    %1787 = vmatprep.subr.mxu0 %v1467
    %1788 = vmatpush1.msra.mxu0 %v1466
    %1789 = vmatprep.subr.mxu0 %v1471
    %1790 = vmatpush1.msra.mxu0 %v1470
    %1791 = vmatprep.subr.mxu0 %v1475
    %1792 = vmatpush1.msra.mxu0 %v1474
    %1793 = vmatprep.subr.mxu0 %v1479
    %1794 = vmatpush1.msra.mxu0 %v1478
    %1795 = vmatprep.subr.mxu0 %v1483
    %1796 = vmatpush1.msra.mxu0 %v1482
    %1797 = vmatprep.subr.mxu0 %v1487
    %1798 = vmatpush1.msra.mxu0 %v1486
    %1799 = vmatprep.subr.mxu0 %v1491
    %1800 = vmatpush1.msra.mxu0 %v1490
    %1801 = vmatprep.subr.mxu0 %v1495
    %1802 = vmatpush1.msra.mxu0 %v1494
    %1803 = vmatprep.subr.mxu0 %v1499
    %1804 = vmatpush1.msra.mxu0 %v1498
    %1805 = vmatprep.subr.mxu0 %v1503
    %1806 = vmatpush1.msra.mxu0 %v1502
    %1807 = vmatprep.subr.mxu0 %v1507
    %1808 = vmatpush1.msra.mxu0 %v1506
    %1809 = vmatprep.mubr.f32.mxu0 %v997
    %1810 = vmatmul.mubr.f32.gmra.mrb[0].mxu0 %v996
    %v1811 = vpop.f32.mrb[0].mxu0
    %v1812 = vadd.f32 %v1741, %v1811
    %v1813 = vpop.f32.mrb[0].mxu0
    %v1814 = vadd.f32 %v1743, %v1813
    %1815 = vdwg.mxu0
    %1816 = vmatprep.subr.mxu0 %v1001
    %1817 = vmatpush1.msra.mxu0 %v1000
    %1818 = vmatprep.subr.mxu0 %v1005
    %1819 = vmatpush1.msra.mxu0 %v1004
    %1820 = vmatprep.subr.mxu0 %v1009
    %1821 = vmatpush1.msra.mxu0 %v1008
    %1822 = vmatprep.subr.mxu0 %v1013
    %1823 = vmatpush1.msra.mxu0 %v1012
    %1824 = vmatprep.subr.mxu0 %v1017
    %1825 = vmatpush1.msra.mxu0 %v1016
    %1826 = vmatprep.subr.mxu0 %v1021
    %1827 = vmatpush1.msra.mxu0 %v1020
    %1828 = vmatprep.subr.mxu0 %v1025
    %1829 = vmatpush1.msra.mxu0 %v1024
    %1830 = vmatprep.subr.mxu0 %v1029
    %1831 = vmatpush1.msra.mxu0 %v1028
    %1832 = vmatprep.subr.mxu0 %v1033
    %1833 = vmatpush1.msra.mxu0 %v1032
    %1834 = vmatprep.subr.mxu0 %v1037
    %1835 = vmatpush1.msra.mxu0 %v1036
    %1836 = vmatprep.subr.mxu0 %v1041
    %1837 = vmatpush1.msra.mxu0 %v1040
    %1838 = vmatprep.subr.mxu0 %v1045
    %1839 = vmatpush1.msra.mxu0 %v1044
    %1840 = vmatprep.subr.mxu0 %v1049
    %1841 = vmatpush1.msra.mxu0 %v1048
    %1842 = vmatprep.subr.mxu0 %v1053
    %1843 = vmatpush1.msra.mxu0 %v1052
    %1844 = vmatprep.subr.mxu0 %v1057
    %1845 = vmatpush1.msra.mxu0 %v1056
    %1846 = vmatprep.subr.mxu0 %v1061
    %1847 = vmatpush1.msra.mxu0 %v1060
    %1848 = vmatprep.subr.mxu0 %v1065
    %1849 = vmatpush1.msra.mxu0 %v1064
    %1850 = vmatprep.subr.mxu0 %v1069
    %1851 = vmatpush1.msra.mxu0 %v1068
    %1852 = vmatprep.subr.mxu0 %v1073
    %1853 = vmatpush1.msra.mxu0 %v1072
    %1854 = vmatprep.subr.mxu0 %v1077
    %1855 = vmatpush1.msra.mxu0 %v1076
    %1856 = vmatprep.subr.mxu0 %v1081
    %1857 = vmatpush1.msra.mxu0 %v1080
    %1858 = vmatprep.subr.mxu0 %v1085
    %1859 = vmatpush1.msra.mxu0 %v1084
    %1860 = vmatprep.subr.mxu0 %v1089
    %1861 = vmatpush1.msra.mxu0 %v1088
    %1862 = vmatprep.subr.mxu0 %v1093
    %1863 = vmatpush1.msra.mxu0 %v1092
    %1864 = vmatprep.subr.mxu0 %v1097
    %1865 = vmatpush1.msra.mxu0 %v1096
    %1866 = vmatprep.subr.mxu0 %v1101
    %1867 = vmatpush1.msra.mxu0 %v1100
    %1868 = vmatprep.subr.mxu0 %v1105
    %1869 = vmatpush1.msra.mxu0 %v1104
    %1870 = vmatprep.subr.mxu0 %v1109
    %1871 = vmatpush1.msra.mxu0 %v1108
    %1872 = vmatprep.subr.mxu0 %v1113
    %1873 = vmatpush1.msra.mxu0 %v1112
    %1874 = vmatprep.subr.mxu0 %v1117
    %1875 = vmatpush1.msra.mxu0 %v1116
    %1876 = vmatprep.subr.mxu0 %v1121
    %1877 = vmatpush1.msra.mxu0 %v1120
    %1878 = vmatprep.subr.mxu0 %v1125
    %1879 = vmatpush1.msra.mxu0 %v1124
    %1880 = vmatprep.mubr.f32.mxu0 %v991
    %1881 = vmatmul.mubr.f32.gmra.mrb[0].mxu0 %v990
    %v1882 = vpop.f32.mrb[0].mxu0
    %v1883 = vadd.f32 %v1523, %v1882
    %v1884 = vpop.f32.mrb[0].mxu0
    %v1885 = vadd.f32 %v1527, %v1884
    %1886 = vdwg.mxu0
    %1887 = vmatprep.subr.mxu0 %v1129
    %1888 = vmatpush1.msra.mxu0 %v1128
    %1889 = vmatprep.subr.mxu0 %v1133
    %1890 = vmatpush1.msra.mxu0 %v1132
    %1891 = vmatprep.subr.mxu0 %v1137
    %1892 = vmatpush1.msra.mxu0 %v1136
    %1893 = vmatprep.subr.mxu0 %v1141
    %1894 = vmatpush1.msra.mxu0 %v1140
    %1895 = vmatprep.subr.mxu0 %v1145
    %1896 = vmatpush1.msra.mxu0 %v1144
    %1897 = vmatprep.subr.mxu0 %v1149
    %1898 = vmatpush1.msra.mxu0 %v1148
    %1899 = vmatprep.subr.mxu0 %v1153
    %1900 = vmatpush1.msra.mxu0 %v1152
    %1901 = vmatprep.subr.mxu0 %v1157
    %1902 = vmatpush1.msra.mxu0 %v1156
    %1903 = vmatprep.subr.mxu0 %v1161
    %1904 = vmatpush1.msra.mxu0 %v1160
    %1905 = vmatprep.subr.mxu0 %v1165
    %1906 = vmatpush1.msra.mxu0 %v1164
    %1907 = vmatprep.subr.mxu0 %v1169
    %1908 = vmatpush1.msra.mxu0 %v1168
    %1909 = vmatprep.subr.mxu0 %v1173
    %1910 = vmatpush1.msra.mxu0 %v1172
    %1911 = vmatprep.subr.mxu0 %v1177
    %1912 = vmatpush1.msra.mxu0 %v1176
    %1913 = vmatprep.subr.mxu0 %v1181
    %1914 = vmatpush1.msra.mxu0 %v1180
    %1915 = vmatprep.subr.mxu0 %v1185
    %1916 = vmatpush1.msra.mxu0 %v1184
    %1917 = vmatprep.subr.mxu0 %v1189
    %1918 = vmatpush1.msra.mxu0 %v1188
    %1919 = vmatprep.subr.mxu0 %v1193
    %1920 = vmatpush1.msra.mxu0 %v1192
    %1921 = vmatprep.subr.mxu0 %v1197
    %1922 = vmatpush1.msra.mxu0 %v1196
    %1923 = vmatprep.subr.mxu0 %v1201
    %1924 = vmatpush1.msra.mxu0 %v1200
    %1925 = vmatprep.subr.mxu0 %v1205
    %1926 = vmatpush1.msra.mxu0 %v1204
    %1927 = vmatprep.subr.mxu0 %v1209
    %1928 = vmatpush1.msra.mxu0 %v1208
    %1929 = vmatprep.subr.mxu0 %v1213
    %1930 = vmatpush1.msra.mxu0 %v1212
    %1931 = vmatprep.subr.mxu0 %v1217
    %1932 = vmatpush1.msra.mxu0 %v1216
    %1933 = vmatprep.subr.mxu0 %v1221
    %1934 = vmatpush1.msra.mxu0 %v1220
    %1935 = vmatprep.subr.mxu0 %v1225
    %1936 = vmatpush1.msra.mxu0 %v1224
    %1937 = vmatprep.subr.mxu0 %v1229
    %1938 = vmatpush1.msra.mxu0 %v1228
    %1939 = vmatprep.subr.mxu0 %v1233
    %1940 = vmatpush1.msra.mxu0 %v1232
    %1941 = vmatprep.subr.mxu0 %v1237
    %1942 = vmatpush1.msra.mxu0 %v1236
    %1943 = vmatprep.subr.mxu0 %v1241
    %1944 = vmatpush1.msra.mxu0 %v1240
    %1945 = vmatprep.subr.mxu0 %v1245
    %1946 = vmatpush1.msra.mxu0 %v1244
    %1947 = vmatprep.subr.mxu0 %v1249
    %1948 = vmatpush1.msra.mxu0 %v1248
    %1949 = vmatprep.subr.mxu0 %v1253
    %1950 = vmatpush1.msra.mxu0 %v1252
    %1951 = vmatprep.mubr.f32.mxu0 %v993
    %1952 = vmatmul.mubr.f32.gmra.mrb[0].mxu0 %v992
    %v1953 = vpop.f32.mrb[0].mxu0
    %v1954 = vadd.f32 %v1883, %v1953
    %v1955 = vpop.f32.mrb[0].mxu0
    %v1956 = vadd.f32 %v1885, %v1955
    %1957 = vdwg.mxu0
    %1958 = vmatprep.subr.mxu0 %v1257
    %1959 = vmatpush1.msra.mxu0 %v1256
    %1960 = vmatprep.subr.mxu0 %v1261
    %1961 = vmatpush1.msra.mxu0 %v1260
    %1962 = vmatprep.subr.mxu0 %v1265
    %1963 = vmatpush1.msra.mxu0 %v1264
    %1964 = vmatprep.subr.mxu0 %v1269
    %1965 = vmatpush1.msra.mxu0 %v1268
    %1966 = vmatprep.subr.mxu0 %v1273
    %1967 = vmatpush1.msra.mxu0 %v1272
    %1968 = vmatprep.subr.mxu0 %v1277
    %1969 = vmatpush1.msra.mxu0 %v1276
    %1970 = vmatprep.subr.mxu0 %v1281
    %1971 = vmatpush1.msra.mxu0 %v1280
    %1972 = vmatprep.subr.mxu0 %v1285
    %1973 = vmatpush1.msra.mxu0 %v1284
    %1974 = vmatprep.subr.mxu0 %v1289
    %1975 = vmatpush1.msra.mxu0 %v1288
    %1976 = vmatprep.subr.mxu0 %v1293
    %1977 = vmatpush1.msra.mxu0 %v1292
    %1978 = vmatprep.subr.mxu0 %v1297
    %1979 = vmatpush1.msra.mxu0 %v1296
    %1980 = vmatprep.subr.mxu0 %v1301
    %1981 = vmatpush1.msra.mxu0 %v1300
    %1982 = vmatprep.subr.mxu0 %v1305
    %1983 = vmatpush1.msra.mxu0 %v1304
    %1984 = vmatprep.subr.mxu0 %v1309
    %1985 = vmatpush1.msra.mxu0 %v1308
    %1986 = vmatprep.subr.mxu0 %v1313
    %1987 = vmatpush1.msra.mxu0 %v1312
    %1988 = vmatprep.subr.mxu0 %v1317
    %1989 = vmatpush1.msra.mxu0 %v1316
    %1990 = vmatprep.subr.mxu0 %v1321
    %1991 = vmatpush1.msra.mxu0 %v1320
    %1992 = vmatprep.subr.mxu0 %v1325
    %1993 = vmatpush1.msra.mxu0 %v1324
    %1994 = vmatprep.subr.mxu0 %v1329
    %1995 = vmatpush1.msra.mxu0 %v1328
    %1996 = vmatprep.subr.mxu0 %v1333
    %1997 = vmatpush1.msra.mxu0 %v1332
    %1998 = vmatprep.subr.mxu0 %v1337
    %1999 = vmatpush1.msra.mxu0 %v1336
    %2000 = vmatprep.subr.mxu0 %v1341
    %2001 = vmatpush1.msra.mxu0 %v1340
    %2002 = vmatprep.subr.mxu0 %v1345
    %2003 = vmatpush1.msra.mxu0 %v1344
    %2004 = vmatprep.subr.mxu0 %v1349
    %2005 = vmatpush1.msra.mxu0 %v1348
    %2006 = vmatprep.subr.mxu0 %v1353
    %2007 = vmatpush1.msra.mxu0 %v1352
    %2008 = vmatprep.subr.mxu0 %v1357
    %2009 = vmatpush1.msra.mxu0 %v1356
    %2010 = vmatprep.subr.mxu0 %v1361
    %2011 = vmatpush1.msra.mxu0 %v1360
    %2012 = vmatprep.subr.mxu0 %v1365
    %2013 = vmatpush1.msra.mxu0 %v1364
    %2014 = vmatprep.subr.mxu0 %v1369
    %2015 = vmatpush1.msra.mxu0 %v1368
    %2016 = vmatprep.subr.mxu0 %v1373
    %2017 = vmatpush1.msra.mxu0 %v1372
    %2018 = vmatprep.subr.mxu0 %v1377
    %2019 = vmatpush1.msra.mxu0 %v1376
    %2020 = vmatprep.subr.mxu0 %v1381
    %2021 = vmatpush1.msra.mxu0 %v1380
    %2022 = vmatprep.mubr.f32.mxu0 %v995
    %2023 = vmatmul.mubr.f32.gmra.mrb[0].mxu0 %v994
    %v2024 = vpop.f32.mrb[0].mxu0
    %v2025 = vadd.f32 %v1954, %v2024
    %v2026 = vpop.f32.mrb[0].mxu0
    %v2027 = vadd.f32 %v1956, %v2026
    %2028 = vdwg.mxu0
    %2029 = vmatprep.subr.mxu0 %v1385
    %2030 = vmatpush1.msra.mxu0 %v1384
    %2031 = vmatprep.subr.mxu0 %v1389
    %2032 = vmatpush1.msra.mxu0 %v1388
    %2033 = vmatprep.subr.mxu0 %v1393
    %2034 = vmatpush1.msra.mxu0 %v1392
    %2035 = vmatprep.subr.mxu0 %v1397
    %2036 = vmatpush1.msra.mxu0 %v1396
    %2037 = vmatprep.subr.mxu0 %v1401
    %2038 = vmatpush1.msra.mxu0 %v1400
    %2039 = vmatprep.subr.mxu0 %v1405
    %2040 = vmatpush1.msra.mxu0 %v1404
    %2041 = vmatprep.subr.mxu0 %v1409
    %2042 = vmatpush1.msra.mxu0 %v1408
    %2043 = vmatprep.subr.mxu0 %v1413
    %2044 = vmatpush1.msra.mxu0 %v1412
    %2045 = vmatprep.subr.mxu0 %v1417
    %2046 = vmatpush1.msra.mxu0 %v1416
    %2047 = vmatprep.subr.mxu0 %v1421
    %2048 = vmatpush1.msra.mxu0 %v1420
    %2049 = vmatprep.subr.mxu0 %v1425
    %2050 = vmatpush1.msra.mxu0 %v1424
    %2051 = vmatprep.subr.mxu0 %v1429
    %2052 = vmatpush1.msra.mxu0 %v1428
    %2053 = vmatprep.subr.mxu0 %v1433
    %2054 = vmatpush1.msra.mxu0 %v1432
    %2055 = vmatprep.subr.mxu0 %v1437
    %2056 = vmatpush1.msra.mxu0 %v1436
    %2057 = vmatprep.subr.mxu0 %v1441
    %2058 = vmatpush1.msra.mxu0 %v1440
    %2059 = vmatprep.subr.mxu0 %v1445
    %2060 = vmatpush1.msra.mxu0 %v1444
    %2061 = vmatprep.subr.mxu0 %v1449
    %2062 = vmatpush1.msra.mxu0 %v1448
    %2063 = vmatprep.subr.mxu0 %v1453
    %2064 = vmatpush1.msra.mxu0 %v1452
    %2065 = vmatprep.subr.mxu0 %v1457
    %2066 = vmatpush1.msra.mxu0 %v1456
    %2067 = vmatprep.subr.mxu0 %v1461
    %2068 = vmatpush1.msra.mxu0 %v1460
    %2069 = vmatprep.subr.mxu0 %v1465
    %2070 = vmatpush1.msra.mxu0 %v1464
    %2071 = vmatprep.subr.mxu0 %v1469
    %2072 = vmatpush1.msra.mxu0 %v1468
    %2073 = vmatprep.subr.mxu0 %v1473
    %2074 = vmatpush1.msra.mxu0 %v1472
    %2075 = vmatprep.subr.mxu0 %v1477
    %2076 = vmatpush1.msra.mxu0 %v1476
    %2077 = vmatprep.subr.mxu0 %v1481
    %2078 = vmatpush1.msra.mxu0 %v1480
    %2079 = vmatprep.subr.mxu0 %v1485
    %2080 = vmatpush1.msra.mxu0 %v1484
    %2081 = vmatprep.subr.mxu0 %v1489
    %2082 = vmatpush1.msra.mxu0 %v1488
    %2083 = vmatprep.subr.mxu0 %v1493
    %2084 = vmatpush1.msra.mxu0 %v1492
    %2085 = vmatprep.subr.mxu0 %v1497
    %2086 = vmatpush1.msra.mxu0 %v1496
    %2087 = vmatprep.subr.mxu0 %v1501
    %2088 = vmatpush1.msra.mxu0 %v1500
    %2089 = vmatprep.subr.mxu0 %v1505
    %2090 = vmatpush1.msra.mxu0 %v1504
    %2091 = vmatprep.subr.mxu0 %v1509
    %2092 = vmatpush1.msra.mxu0 %v1508
    %2093 = vmatprep.mubr.f32.mxu0 %v997
    %2094 = vmatmul.mubr.f32.gmra.mrb[0].mxu0 %v996
    %v2095 = vpop.f32.mrb[0].mxu0
    %v2096 = vadd.f32 %v2025, %v2095
    %v2097 = vpop.f32.mrb[0].mxu0
    %v2098 = vadd.f32 %v2027, %v2097
    %2099 = vdwg.mxu0
    %vm2100 = vcmp.ge.f32.partialorder %v1812, 0.0
    %vm2101 = vcmp.ge.f32.partialorder %v1814, 0.0
    %vm2102 = vcmp.ge.f32.partialorder %v2096, 0.0
    %vm2103 = vcmp.ge.f32.partialorder %v2098, 0.0
    %v2104 = vmul.f32 %v1812, 0.01
    %v2105 = vmul.f32 %v1814, 0.01
    %v2106 = vmul.f32 %v2096, 0.01
    %v2107 = vmul.f32 %v2098, 0.01
    %v2108 = vsel %vm2100, %v1812, %v2104
    %v2109 = vsel %vm2101, %v1814, %v2105
    %v2110 = vsel %vm2102, %v2096, %v2106
    %v2111 = vsel %vm2103, %v2098, %v2107
    %v2112 = vld [vmem:[%s5] sm:$0xff]
    %v2113 = vld [vmem:[%s5 + $0x8] sm:$0xff]
    %v2114 = vld [vmem:[%s5 + $0x10] sm:$0xff]
    %v2115 = vld [vmem:[%s5 + $0x18] sm:$0xff]
    %v2116 = vld [vmem:[%s5 + $0x20] sm:$0xff]
    %v2117 = vld [vmem:[%s5 + $0x28] sm:$0xff]
    %v2118 = vld [vmem:[%s5 + $0x30] sm:$0xff]
    %v2119 = vld [vmem:[%s5 + $0x38] sm:$0xff]
    %v2120 = vld [vmem:[%s5 + $0x40] sm:$0xff]
    %v2121 = vld [vmem:[%s5 + $0x48] sm:$0xff]
    %v2122 = vld [vmem:[%s5 + $0x50] sm:$0xff]
    %v2123 = vld [vmem:[%s5 + $0x58] sm:$0xff]
    %v2124 = vld [vmem:[%s5 + $0x60] sm:$0xff]
    %v2125 = vld [vmem:[%s5 + $0x68] sm:$0xff]
    %v2126 = vld [vmem:[%s5 + $0x70] sm:$0xff]
    %v2127 = vld [vmem:[%s5 + $0x78] sm:$0xff]
    %v2128 = vld [vmem:[%s5 + $0x80] sm:$0xff]
    %v2129 = vld [vmem:[%s5 + $0x88] sm:$0xff]
    %v2130 = vld [vmem:[%s5 + $0x90] sm:$0xff]
    %v2131 = vld [vmem:[%s5 + $0x98] sm:$0xff]
    %v2132 = vld [vmem:[%s5 + $0xa0] sm:$0xff]
    %v2133 = vld [vmem:[%s5 + $0xa8] sm:$0xff]
    %v2134 = vld [vmem:[%s5 + $0xb0] sm:$0xff]
    %v2135 = vld [vmem:[%s5 + $0xb8] sm:$0xff]
    %v2136 = vld [vmem:[%s5 + $0xc0] sm:$0xff]
    %v2137 = vld [vmem:[%s5 + $0xc8] sm:$0xff]
    %v2138 = vld [vmem:[%s5 + $0xd0] sm:$0xff]
    %v2139 = vld [vmem:[%s5 + $0xd8] sm:$0xff]
    %v2140 = vld [vmem:[%s5 + $0xe0] sm:$0xff]
    %v2141 = vld [vmem:[%s5 + $0xe8] sm:$0xff]
    %v2142 = vld [vmem:[%s5 + $0xf0] sm:$0xff]
    %v2143 = vld [vmem:[%s5 + $0xf8] sm:$0xff]
    %v2144 = vld [vmem:[%s5 + $0x100] sm:$0xff]
    %v2145 = vld [vmem:[%s5 + $0x108] sm:$0xff]
    %v2146 = vld [vmem:[%s5 + $0x110] sm:$0xff]
    %v2147 = vld [vmem:[%s5 + $0x118] sm:$0xff]
    %v2148 = vld [vmem:[%s5 + $0x120] sm:$0xff]
    %v2149 = vld [vmem:[%s5 + $0x128] sm:$0xff]
    %v2150 = vld [vmem:[%s5 + $0x130] sm:$0xff]
    %v2151 = vld [vmem:[%s5 + $0x138] sm:$0xff]
    %v2152 = vld [vmem:[%s5 + $0x140] sm:$0xff]
    %v2153 = vld [vmem:[%s5 + $0x148] sm:$0xff]
    %v2154 = vld [vmem:[%s5 + $0x150] sm:$0xff]
    %v2155 = vld [vmem:[%s5 + $0x158] sm:$0xff]
    %v2156 = vld [vmem:[%s5 + $0x160] sm:$0xff]
    %v2157 = vld [vmem:[%s5 + $0x168] sm:$0xff]
    %v2158 = vld [vmem:[%s5 + $0x170] sm:$0xff]
    %v2159 = vld [vmem:[%s5 + $0x178] sm:$0xff]
    %v2160 = vld [vmem:[%s5 + $0x180] sm:$0xff]
    %v2161 = vld [vmem:[%s5 + $0x188] sm:$0xff]
    %v2162 = vld [vmem:[%s5 + $0x190] sm:$0xff]
    %v2163 = vld [vmem:[%s5 + $0x198] sm:$0xff]
    %v2164 = vld [vmem:[%s5 + $0x1a0] sm:$0xff]
    %v2165 = vld [vmem:[%s5 + $0x1a8] sm:$0xff]
    %v2166 = vld [vmem:[%s5 + $0x1b0] sm:$0xff]
    %v2167 = vld [vmem:[%s5 + $0x1b8] sm:$0xff]
    %v2168 = vld [vmem:[%s5 + $0x1c0] sm:$0xff]
    %v2169 = vld [vmem:[%s5 + $0x1c8] sm:$0xff]
    %v2170 = vld [vmem:[%s5 + $0x1d0] sm:$0xff]
    %v2171 = vld [vmem:[%s5 + $0x1d8] sm:$0xff]
    %v2172 = vld [vmem:[%s5 + $0x1e0] sm:$0xff]
    %v2173 = vld [vmem:[%s5 + $0x1e8] sm:$0xff]
    %v2174 = vld [vmem:[%s5 + $0x1f0] sm:$0xff]
    %v2175 = vld [vmem:[%s5 + $0x1f8] sm:$0xff]
    %v2176 = vld [vmem:[%s5 + $0x200] sm:$0xff]
    %v2177 = vld [vmem:[%s5 + $0x208] sm:$0xff]
    %v2178 = vld [vmem:[%s5 + $0x210] sm:$0xff]
    %v2179 = vld [vmem:[%s5 + $0x218] sm:$0xff]
    %v2180 = vld [vmem:[%s5 + $0x220] sm:$0xff]
    %v2181 = vld [vmem:[%s5 + $0x228] sm:$0xff]
    %v2182 = vld [vmem:[%s5 + $0x230] sm:$0xff]
    %v2183 = vld [vmem:[%s5 + $0x238] sm:$0xff]
    %v2184 = vld [vmem:[%s5 + $0x240] sm:$0xff]
    %v2185 = vld [vmem:[%s5 + $0x248] sm:$0xff]
    %v2186 = vld [vmem:[%s5 + $0x250] sm:$0xff]
    %v2187 = vld [vmem:[%s5 + $0x258] sm:$0xff]
    %v2188 = vld [vmem:[%s5 + $0x260] sm:$0xff]
    %v2189 = vld [vmem:[%s5 + $0x268] sm:$0xff]
    %v2190 = vld [vmem:[%s5 + $0x270] sm:$0xff]
    %v2191 = vld [vmem:[%s5 + $0x278] sm:$0xff]
    %v2192 = vld [vmem:[%s5 + $0x280] sm:$0xff]
    %v2193 = vld [vmem:[%s5 + $0x288] sm:$0xff]
    %v2194 = vld [vmem:[%s5 + $0x290] sm:$0xff]
    %v2195 = vld [vmem:[%s5 + $0x298] sm:$0xff]
    %v2196 = vld [vmem:[%s5 + $0x2a0] sm:$0xff]
    %v2197 = vld [vmem:[%s5 + $0x2a8] sm:$0xff]
    %v2198 = vld [vmem:[%s5 + $0x2b0] sm:$0xff]
    %v2199 = vld [vmem:[%s5 + $0x2b8] sm:$0xff]
    %v2200 = vld [vmem:[%s5 + $0x2c0] sm:$0xff]
    %v2201 = vld [vmem:[%s5 + $0x2c8] sm:$0xff]
    %v2202 = vld [vmem:[%s5 + $0x2d0] sm:$0xff]
    %v2203 = vld [vmem:[%s5 + $0x2d8] sm:$0xff]
    %v2204 = vld [vmem:[%s5 + $0x2e0] sm:$0xff]
    %v2205 = vld [vmem:[%s5 + $0x2e8] sm:$0xff]
    %v2206 = vld [vmem:[%s5 + $0x2f0] sm:$0xff]
    %v2207 = vld [vmem:[%s5 + $0x2f8] sm:$0xff]
    %v2208 = vld [vmem:[%s5 + $0x300] sm:$0xff]
    %v2209 = vld [vmem:[%s5 + $0x308] sm:$0xff]
    %v2210 = vld [vmem:[%s5 + $0x310] sm:$0xff]
    %v2211 = vld [vmem:[%s5 + $0x318] sm:$0xff]
    %v2212 = vld [vmem:[%s5 + $0x320] sm:$0xff]
    %v2213 = vld [vmem:[%s5 + $0x328] sm:$0xff]
    %v2214 = vld [vmem:[%s5 + $0x330] sm:$0xff]
    %v2215 = vld [vmem:[%s5 + $0x338] sm:$0xff]
    %v2216 = vld [vmem:[%s5 + $0x340] sm:$0xff]
    %v2217 = vld [vmem:[%s5 + $0x348] sm:$0xff]
    %v2218 = vld [vmem:[%s5 + $0x350] sm:$0xff]
    %v2219 = vld [vmem:[%s5 + $0x358] sm:$0xff]
    %v2220 = vld [vmem:[%s5 + $0x360] sm:$0xff]
    %v2221 = vld [vmem:[%s5 + $0x368] sm:$0xff]
    %v2222 = vld [vmem:[%s5 + $0x370] sm:$0xff]
    %v2223 = vld [vmem:[%s5 + $0x378] sm:$0xff]
    %v2224 = vld [vmem:[%s5 + $0x380] sm:$0xff]
    %v2225 = vld [vmem:[%s5 + $0x388] sm:$0xff]
    %v2226 = vld [vmem:[%s5 + $0x390] sm:$0xff]
    %v2227 = vld [vmem:[%s5 + $0x398] sm:$0xff]
    %v2228 = vld [vmem:[%s5 + $0x3a0] sm:$0xff]
    %v2229 = vld [vmem:[%s5 + $0x3a8] sm:$0xff]
    %v2230 = vld [vmem:[%s5 + $0x3b0] sm:$0xff]
    %v2231 = vld [vmem:[%s5 + $0x3b8] sm:$0xff]
    %v2232 = vld [vmem:[%s5 + $0x3c0] sm:$0xff]
    %v2233 = vld [vmem:[%s5 + $0x3c8] sm:$0xff]
    %v2234 = vld [vmem:[%s5 + $0x3d0] sm:$0xff]
    %v2235 = vld [vmem:[%s5 + $0x3d8] sm:$0xff]
    %v2236 = vld [vmem:[%s5 + $0x3e0] sm:$0xff]
    %v2237 = vld [vmem:[%s5 + $0x3e8] sm:$0xff]
    %v2238 = vld [vmem:[%s5 + $0x3f0] sm:$0xff]
    %v2239 = vld [vmem:[%s5 + $0x3f8] sm:$0xff]
    %v2240 = vld [vmem:[%s6] sm:$0x3]
    %v2242 = vlaneseq
    %v2243 = vshrl.u32 %v2242, 7
    %v2244 = vsub.s32 0, %v2243
    %v2245 = vrot.slane %v2240, %v2244
    %v2246 = vlaneseq
    %v2247 = vshrl.u32 %v2246, 7
    %v2248 = vsub.s32 1, %v2247
    %v2249 = vrot.slane %v2240, %v2248
    %2252 = vmatprep.subr.mxu0 %v2113
    %2253 = vmatpush1.msra.mxu0 %v2112
    %2254 = vmatprep.subr.mxu0 %v2115
    %2255 = vmatpush1.msra.mxu0 %v2114
    %2256 = vmatprep.subr.mxu0 %v2117
    %2257 = vmatpush1.msra.mxu0 %v2116
    %2258 = vmatprep.subr.mxu0 %v2119
    %2259 = vmatpush1.msra.mxu0 %v2118
    %2260 = vmatprep.subr.mxu0 %v2121
    %2261 = vmatpush1.msra.mxu0 %v2120
    %2262 = vmatprep.subr.mxu0 %v2123
    %2263 = vmatpush1.msra.mxu0 %v2122
    %2264 = vmatprep.subr.mxu0 %v2125
    %2265 = vmatpush1.msra.mxu0 %v2124
    %2266 = vmatprep.subr.mxu0 %v2127
    %2267 = vmatpush1.msra.mxu0 %v2126
    %2268 = vmatprep.subr.mxu0 %v2129
    %2269 = vmatpush1.msra.mxu0 %v2128
    %2270 = vmatprep.subr.mxu0 %v2131
    %2271 = vmatpush1.msra.mxu0 %v2130
    %2272 = vmatprep.subr.mxu0 %v2133
    %2273 = vmatpush1.msra.mxu0 %v2132
    %2274 = vmatprep.subr.mxu0 %v2135
    %2275 = vmatpush1.msra.mxu0 %v2134
    %2276 = vmatprep.subr.mxu0 %v2137
    %2277 = vmatpush1.msra.mxu0 %v2136
    %2278 = vmatprep.subr.mxu0 %v2139
    %2279 = vmatpush1.msra.mxu0 %v2138
    %2280 = vmatprep.subr.mxu0 %v2141
    %2281 = vmatpush1.msra.mxu0 %v2140
    %2282 = vmatprep.subr.mxu0 %v2143
    %2283 = vmatpush1.msra.mxu0 %v2142
    %2284 = vmatprep.subr.mxu0 %v2145
    %2285 = vmatpush1.msra.mxu0 %v2144
    %2286 = vmatprep.subr.mxu0 %v2147
    %2287 = vmatpush1.msra.mxu0 %v2146
    %2288 = vmatprep.subr.mxu0 %v2149
    %2289 = vmatpush1.msra.mxu0 %v2148
    %2290 = vmatprep.subr.mxu0 %v2151
    %2291 = vmatpush1.msra.mxu0 %v2150
    %2292 = vmatprep.subr.mxu0 %v2153
    %2293 = vmatpush1.msra.mxu0 %v2152
    %2294 = vmatprep.subr.mxu0 %v2155
    %2295 = vmatpush1.msra.mxu0 %v2154
    %2296 = vmatprep.subr.mxu0 %v2157
    %2297 = vmatpush1.msra.mxu0 %v2156
    %2298 = vmatprep.subr.mxu0 %v2159
    %2299 = vmatpush1.msra.mxu0 %v2158
    %2300 = vmatprep.subr.mxu0 %v2161
    %2301 = vmatpush1.msra.mxu0 %v2160
    %2302 = vmatprep.subr.mxu0 %v2163
    %2303 = vmatpush1.msra.mxu0 %v2162
    %2304 = vmatprep.subr.mxu0 %v2165
    %2305 = vmatpush1.msra.mxu0 %v2164
    %2306 = vmatprep.subr.mxu0 %v2167
    %2307 = vmatpush1.msra.mxu0 %v2166
    %2308 = vmatprep.subr.mxu0 %v2169
    %2309 = vmatpush1.msra.mxu0 %v2168
    %2310 = vmatprep.subr.mxu0 %v2171
    %2311 = vmatpush1.msra.mxu0 %v2170
    %2312 = vmatprep.subr.mxu0 %v2173
    %2313 = vmatpush1.msra.mxu0 %v2172
    %2314 = vmatprep.subr.mxu0 %v2175
    %2315 = vmatpush1.msra.mxu0 %v2174
    %2316 = vmatprep.mubr.f32.mxu0 %v2109
    %2317 = vmatmul.mubr.f32.gmra.mrb[0].mxu0 %v2108
    %v2318 = vpop.f32.mrb[0].mxu0
    %v2319 = vadd.f32 %v2245, %v2318
    %v2320 = vpop.f32.mrb[0].mxu0
    %v2321 = vadd.f32 %v2249, %v2320
    %2322 = vdwg.mxu0
    %2323 = vmatprep.subr.mxu0 %v2177
    %2324 = vmatpush1.msra.mxu0 %v2176
    %2325 = vmatprep.subr.mxu0 %v2179
    %2326 = vmatpush1.msra.mxu0 %v2178
    %2327 = vmatprep.subr.mxu0 %v2181
    %2328 = vmatpush1.msra.mxu0 %v2180
    %2329 = vmatprep.subr.mxu0 %v2183
    %2330 = vmatpush1.msra.mxu0 %v2182
    %2331 = vmatprep.subr.mxu0 %v2185
    %2332 = vmatpush1.msra.mxu0 %v2184
    %2333 = vmatprep.subr.mxu0 %v2187
    %2334 = vmatpush1.msra.mxu0 %v2186
    %2335 = vmatprep.subr.mxu0 %v2189
    %2336 = vmatpush1.msra.mxu0 %v2188
    %2337 = vmatprep.subr.mxu0 %v2191
    %2338 = vmatpush1.msra.mxu0 %v2190
    %2339 = vmatprep.subr.mxu0 %v2193
    %2340 = vmatpush1.msra.mxu0 %v2192
    %2341 = vmatprep.subr.mxu0 %v2195
    %2342 = vmatpush1.msra.mxu0 %v2194
    %2343 = vmatprep.subr.mxu0 %v2197
    %2344 = vmatpush1.msra.mxu0 %v2196
    %2345 = vmatprep.subr.mxu0 %v2199
    %2346 = vmatpush1.msra.mxu0 %v2198
    %2347 = vmatprep.subr.mxu0 %v2201
    %2348 = vmatpush1.msra.mxu0 %v2200
    %2349 = vmatprep.subr.mxu0 %v2203
    %2350 = vmatpush1.msra.mxu0 %v2202
    %2351 = vmatprep.subr.mxu0 %v2205
    %2352 = vmatpush1.msra.mxu0 %v2204
    %2353 = vmatprep.subr.mxu0 %v2207
    %2354 = vmatpush1.msra.mxu0 %v2206
    %2355 = vmatprep.subr.mxu0 %v2209
    %2356 = vmatpush1.msra.mxu0 %v2208
    %2357 = vmatprep.subr.mxu0 %v2211
    %2358 = vmatpush1.msra.mxu0 %v2210
    %2359 = vmatprep.subr.mxu0 %v2213
    %2360 = vmatpush1.msra.mxu0 %v2212
    %2361 = vmatprep.subr.mxu0 %v2215
    %2362 = vmatpush1.msra.mxu0 %v2214
    %2363 = vmatprep.subr.mxu0 %v2217
    %2364 = vmatpush1.msra.mxu0 %v2216
    %2365 = vmatprep.subr.mxu0 %v2219
    %2366 = vmatpush1.msra.mxu0 %v2218
    %2367 = vmatprep.subr.mxu0 %v2221
    %2368 = vmatpush1.msra.mxu0 %v2220
    %2369 = vmatprep.subr.mxu0 %v2223
    %2370 = vmatpush1.msra.mxu0 %v2222
    %2371 = vmatprep.subr.mxu0 %v2225
    %2372 = vmatpush1.msra.mxu0 %v2224
    %2373 = vmatprep.subr.mxu0 %v2227
    %2374 = vmatpush1.msra.mxu0 %v2226
    %2375 = vmatprep.subr.mxu0 %v2229
    %2376 = vmatpush1.msra.mxu0 %v2228
    %2377 = vmatprep.subr.mxu0 %v2231
    %2378 = vmatpush1.msra.mxu0 %v2230
    %2379 = vmatprep.subr.mxu0 %v2233
    %2380 = vmatpush1.msra.mxu0 %v2232
    %2381 = vmatprep.subr.mxu0 %v2235
    %2382 = vmatpush1.msra.mxu0 %v2234
    %2383 = vmatprep.subr.mxu0 %v2237
    %2384 = vmatpush1.msra.mxu0 %v2236
    %2385 = vmatprep.subr.mxu0 %v2239
    %2386 = vmatpush1.msra.mxu0 %v2238
    %2387 = vmatprep.mubr.f32.mxu0 %v2111
    %2388 = vmatmul.mubr.f32.gmra.mrb[0].mxu0 %v2110
    %v2389 = vpop.f32.mrb[0].mxu0
    %v2390 = vadd.f32 %v2319, %v2389
    %v2391 = vpop.f32.mrb[0].mxu0
    %v2392 = vadd.f32 %v2321, %v2391
    %2393 = vdwg.mxu0
    %vm2394 = vcmp.ge.f32.partialorder %v2390, 0.0
    %vm2395 = vcmp.ge.f32.partialorder %v2392, 0.0
    %v2396 = vmul.f32 %v2390, 0.01
    %v2397 = vmul.f32 %v2392, 0.01
    %v2398 = vsel %vm2394, %v2390, %v2396
    %v2399 = vsel %vm2395, %v2392, %v2397
    %v2400 = vld [vmem:[%s7] sm:$0x3]
    %v2402 = vlaneseq
    %v2403 = vshrl.u32 %v2402, 7
    %v2404 = vsub.s32 0, %v2403
    %v2405 = vrot.slane %v2400, %v2404
    %v2406 = vlaneseq
    %v2407 = vshrl.u32 %v2406, 7
    %v2408 = vsub.s32 1, %v2407
    %v2409 = vrot.slane %v2400, %v2408
    %v2412 = vmul.f32 %v2398, %v2405
    %v2413 = vmul.f32 %v2399, %v2409
    %vm2414 = vcmask 1043456
    %v2415 = vsel %vm2414, %v2412, 0.0
    %v2416 = vsel %vm2414, %v2413, 0.0
    %v2417 = vadd.f32 %v2415, %v2416
    %2418 = vadd.xlane.f32.xlu0 %v2417
    %v2419 = vpop.xlane.xlu0 %2418
    %v2420 = vld [vmem:[#allocation2] sm:$0x1]
    %v2422 = vlaneseq
    %v2423 = vshrl.u32 %v2422, 7
    %v2424 = vsub.s32 0, %v2423
    %v2425 = vrot.slane %v2420, %v2424
    %v2427 = vadd.f32 %v2419, %v2425
    %v2428 = vsub.f32 0.0, %v2427
    %v2429 = vmul.f32 %v2428, 1.442695
    %v2430 = vpow.pop %v2429
    %v2431 = vadd.f32 %v2430, 1.0
    %v2432 = vrcp.pop %v2431
    %v2433 = vmul.f32 1.0, %v2432
    %2435 = vset.pattern.permute.xlu0 0
    %2436 = vperm.xlu0 %2435, %v2433
    %v2437 = vpop.permute.xlu0 %2436
    %v2438 = vlaneseq
    %v2439 = vand.u32 %v2438, 127
    %v2440 = vlaneseq
    %v2441 = vshrl.u32 %v2440, 7
    %v2442 = vsub.s32 %v2439, %v2441
    %v2443 = vrot.slane %v2437, %v2442
    %vm2445 = vcmask 24576
    %2446 = vst.msk [vmem:[#allocation3] sm:$0x1] %vm2445, %v2443
    // Predicated region
    $region38: #{clgadn_forward.11} parent=1 // pred_check
      _
    $region39: #{clgadn_forward.11} parent=1 // pred_check_branch
      %2448 = sbr.rel (0) target = $region41
    $region40: #{clgadn_forward.11} parent=1 // pred_region
      %s2450 = ssub.s32 16, 16
      %2451 = vsyncadd [#allocation4], %s2450
      %s2453 = sshll.u32 [#allocation3], 4
      %s2454 = int_to_ptr.vmem [resolvable:$true] %s2453
      %2456 = dma.vmem_to_hbm [thread:$0]  %s2454, 16, %s9, [#allocation4]
    $region41: #{clgadn_forward.11} parent=1 // pred_fallthru
      _
    // Predicated region
    $region42: #{clgadn_forward.11} parent=1 // pred_check
      _
    $region43: #{clgadn_forward.11} parent=1 // pred_check_branch
      %2458 = sbr.rel (0) target = $region45
    $region44: #{clgadn_forward.11} parent=1 // pred_region
      %2459 = dma.done [#allocation4], 16
    $region45: #{clgadn_forward.11} parent=1 // pred_fallthru
      _
    %2460 = vsyncpa [#allocation4], 1

</llo_original>
